<compile_context>
chip_gen: v7x
topology: tpu7x:2x2x1
jax: 0.10.0
libtpu: 0.0.40
codegen_flags: <defaults>
</compile_context>

<pallas_src>
import functools

import jax
import jax.numpy as jnp
from jax.experimental import pallas as pl
from jax.experimental.pallas import tpu as pltpu

# ----------------------------- configuration --------------------------------
IN_CHANNEL = 32
D_MODEL = 64
NHEAD = 8
HIDDEN_DIM = 128
NUM_LAYER = 2
LANG_DIM = 512          # USE_CLIP -> H = 512
F32 = jnp.float32
NEG_INF = -1e30
LN_EPS = 1e-5
PACK_WIDTH = 128        # lane width of the packed weight slab


def _round_up(x, m):
    return ((x + m - 1) // m) * m


# --------------------------- in-kernel helpers --------------------------------
def _layernorm(x, g, b, eps=LN_EPS):
    mu = jnp.mean(x, axis=-1, keepdims=True)
    var = jnp.mean(jnp.square(x - mu), axis=-1, keepdims=True)
    return (x - mu) * jax.lax.rsqrt(var + eps) * g + b


def _mha(x_q, x_kv, mask_bias, head_masks, W, pre, *, nhead):
    """Multi-head attention with head-stacked 2-D matmuls.

    x_q:(Nq,d)  x_kv:(Nk,d)  mask_bias:(1,Nk) additive (-1e30 on padded keys) or None.
    The 1/sqrt(head_dim) softmax scale is folded into wq/bq host-side.
    Per-head scores are computed in ONE matmul by stacking head-masked copies of the
    projected query along rows; per-head context is recovered by masking the columns
    of a single probs@V matmul and summing the row blocks.
    """
    d = x_q.shape[-1]
    nq = x_q.shape[0]
    qp = jnp.dot(x_q, W(pre + "_wq"), preferred_element_type=F32) + W(pre + "_bq")
    kvp = jnp.dot(x_kv, W(pre + "_wkv"), preferred_element_type=F32) + W(pre + "_bkv")
    kp = kvp[:, 0:d]
    vp = kvp[:, d:2 * d]
    # row block h = q projected, masked to head-h lanes  -> (nhead*Nq, d)
    q_stack = jnp.concatenate([qp * head_masks[h] for h in range(nhead)], axis=0)
    s = jax.lax.dot_general(q_stack, kp, (((1,), (1,)), ((), ())),
                            preferred_element_type=F32)              # (nhead*Nq, Nk)
    if mask_bias is not None:
        s = s + mask_bias                                             # applied once
    s = s - jnp.max(s, axis=-1, keepdims=True)
    e = jnp.exp(s)
    p = e / jnp.sum(e, axis=-1, keepdims=True)
    ctx_stack = jnp.dot(p, vp, preferred_element_type=F32)            # (nhead*Nq, d)
    ctx = ctx_stack[0:nq, :] * head_masks[0]
    for h in range(1, nhead):
        ctx = ctx + ctx_stack[h * nq:(h + 1) * nq, :] * head_masks[h]
    return jnp.dot(ctx, W(pre + "_wo"), preferred_element_type=F32) + W(pre + "_bo")


def _prediction_slab(query, mask_feats, W, pred_width):
    """out_norm + out_score + pred_masks + indi_embedding, packed lane-dense.

    Slab layout along lanes: [masks (M) | score (1) | indis (2) | zero-pad].
    """
    qn = _layernorm(query, W("out_norm_g"), W("out_norm_b"))          # local copy
    h = jnp.maximum(jnp.dot(qn, W("score_w1"), preferred_element_type=F32)
                    + W("score_b1"), 0.0)
    scores = jnp.dot(h, W("score_w2"), preferred_element_type=F32) + W("score_b2")
    masks = jax.lax.dot_general(qn, mask_feats, (((1,), (1,)), ((), ())),
                                preferred_element_type=F32)           # (Nq, M)
    hi = jnp.maximum(jnp.dot(query, W("indi_w1"), preferred_element_type=F32)
                     + W("indi_b1"), 0.0)
    indis = jnp.dot(hi, W("indi_w23"), preferred_element_type=F32) + W("indi_b23")
    nq = query.shape[0]
    used = masks.shape[1] + scores.shape[1] + indis.shape[1]
    parts = [masks, scores, indis]
    if pred_width > used:
        parts.append(jnp.zeros((nq, pred_width - used), F32))
    return jnp.concatenate(parts, axis=-1)                            # (Nq, pred_width)


# ------------------------------ fused kernel ----------------------------------
def _mdin_kernel(x_ref, valid_ref, lang_ref, seed_ref, bpad_ref, lpad_ref, w_ref, out_ref,
                 *, layout, nhead, num_layer, pred_width):
    def W(name):                                  # lazy, point-of-use weight slices
        off, r, c = layout[name]
        return w_ref[off:off + r, 0:c]

    xb = x_ref[0]                 # (M, C)
    valid = valid_ref[0]          # (M, 1)       1.0 = real superpoint
    lang_in = lang_ref[0]         # (n_lang, H)
    seeds = seed_ref[0]           # (Nq, 1)      int32 seed indices
    bpad_bias = bpad_ref[0]       # (1, M)       -1e30 on padded superpoints
    lpad_bias = lpad_ref[0]       # (1, n_lang)  -1e30 on padded lang tokens

    d = D_MODEL
    hd = d // nhead
    m_sp = xb.shape[0]
    n_q = seeds.shape[0]

    # per-head lane masks, hoisted once and reused by all attentions
    lane = jax.lax.broadcasted_iota(jnp.int32, (1, d), 1)
    head_masks = [((lane >= h * hd) & (lane < (h + 1) * hd)).astype(F32)
                  for h in range(nhead)]

    # ---- prep: input_proj (Linear+LN+ReLU), x_mask MLP, lang path, seed gather, query gen
    inst = jnp.dot(xb, W("inproj_w"), preferred_element_type=F32) + W("inproj_b")
    inst = jnp.maximum(_layernorm(inst, W("inproj_ln_g"), W("inproj_ln_b")), 0.0) * valid
    mf = jnp.maximum(jnp.dot(xb, W("xmask_w1"), preferred_element_type=F32)
                     + W("xmask_b1"), 0.0)
    mf = (jnp.dot(mf, W("xmask_w2"), preferred_element_type=F32) + W("xmask_b2")) * valid
    lang = _layernorm(jnp.dot(lang_in, W("lang_proj_w"), preferred_element_type=F32)
                      + W("lang_proj_b"), W("lang_norm_g"), W("lang_norm_b"))
    # seed gather via in-kernel one-hot (only Nq int32 indices cross HBM)
    # TODO(synk): for very large M replace the one-hot contraction with a manual DMA row gather.
    onehot = (seeds == jax.lax.broadcasted_iota(jnp.int32, (n_q, m_sp), 1)).astype(F32)
    seed = jnp.dot(onehot, inst, preferred_element_type=F32)
    q = jnp.maximum(jnp.dot(seed, W("qgen_w1"), preferred_element_type=F32)
                    + W("qgen_b1"), 0.0)
    q = jnp.maximum(jnp.dot(q, W("qgen_w2"), preferred_element_type=F32)
                    + W("qgen_b2"), 0.0)
    query = jnp.dot(q, W("qgen_w3"), preferred_element_type=F32) + W("qgen_b3")

    out_ref[0, 0] = _prediction_slab(query, mf, W, pred_width)        # initial prediction

    # ---- decoder layers, unrolled in-kernel (everything stays on-chip)
    for li in range(num_layer):
        pre = f"l{li}_"
        # qsa cross attention (reference computes+discards its LayerNorm -> residual only)
        q1 = _mha(query, inst, bpad_bias, head_masks, W, pre + "qsa", nhead=nhead) + query
        # qqa self attention + LayerNorm
        rra = _layernorm(_mha(q1, q1, None, head_masks, W, pre + "qqa", nhead=nhead) + q1,
                         W(pre + "qqa_ln_g"), W(pre + "qqa_ln_b"))
        # qla cross attention against language tokens (LayerNorm discarded)
        rla = _mha(q1, lang, lpad_bias, head_masks, W, pre + "qla", nhead=nhead) + q1
        q2 = q1 + rla + rra            # matches reference residual composition
        # FFN + residual + LayerNorm
        h = jnp.maximum(jnp.dot(q2, W(pre + "ffn_w1"), preferred_element_type=F32)
                        + W(pre + "ffn_b1"), 0.0)
        h = jnp.dot(h, W(pre + "ffn_w2"), preferred_element_type=F32) + W(pre + "ffn_b2")
        query = _layernorm(h + q2, W(pre + "ffn_ln_g"), W(pre + "ffn_ln_b"))
        out_ref[0, li + 1] = _prediction_slab(query, mf, W, pred_width)


# ------------------------------- call wrapper -----------------------------------
def _batched_spec(a):
    nd = a.ndim
    return pl.BlockSpec((1,) + a.shape[1:], lambda b, nd=nd: (b,) + (0,) * (nd - 1))


def run_mdin(w_slab, layout, x_pad, valid_col, lang_feats, seeds, bpad_bias, lpad_bias,
             pred_width):
    B, M, C = x_pad.shape
    n_lang = lang_feats.shape[1]
    Nq = seeds.shape[1]
    L1 = NUM_LAYER + 1
    d = D_MODEL

    batched = [x_pad, valid_col, lang_feats, seeds, bpad_bias, lpad_bias]
    in_specs = ([_batched_spec(a) for a in batched]
                + [pl.BlockSpec(w_slab.shape, lambda b: (0, 0))])

    # rough cost estimate so XLA schedules tightly around the (tiny) custom call
    def mha_flops(nk):
        return 2 * (Nq * d * d + nk * d * 2 * d + 2 * Nq * nk * d + Nq * d * d)
    pred_f = 2 * (2 * Nq * d * d + Nq * d * M + Nq * d * 2)
    layer_f = (mha_flops(M) + mha_flops(Nq) + mha_flops(n_lang)
               + 4 * Nq * d * HIDDEN_DIM + pred_f)
    prep_f = 2 * (n_lang * LANG_DIM * d + 2 * M * C * d + M * d * d + Nq * M * d
                  + 3 * Nq * d * d) + pred_f
    flops = int(B * (prep_f + NUM_LAYER * layer_f))
    transc = int(B * NUM_LAYER * NHEAD * Nq * (M + Nq + n_lang))
    bytes_acc = int(4 * (w_slab.size + x_pad.size + valid_col.size + lang_feats.size
                         + seeds.size + bpad_bias.size + lpad_bias.size
                         + B * L1 * Nq * pred_width))

    kernel = functools.partial(_mdin_kernel, layout=layout, nhead=NHEAD,
                               num_layer=NUM_LAYER, pred_width=pred_width)
    return pl.pallas_call(
        kernel,
        out_shape=jax.ShapeDtypeStruct((B, L1, Nq, pred_width), F32),
        grid=(B,),
        in_specs=in_specs,
        out_specs=pl.BlockSpec((1, L1, Nq, pred_width), lambda b: (b, 0, 0, 0)),
        compiler_params=pltpu.CompilerParams(dimension_semantics=("parallel",)),
        cost_estimate=pl.CostEstimate(flops=flops, transcendentals=transc,
                                      bytes_accessed=bytes_acc),
    )(*batched, w_slab)


# ------------------------------ parameters -------------------------------------
def init_params(key):
    keys = jax.random.split(key, 512)
    cnt = [0]

    def nk():
        k = keys[cnt[0]]
        cnt[0] += 1
        return k

    def lin(din, dout):
        return (jax.random.normal(nk(), (din, dout), F32) * 0.05,
                jnp.zeros((1, dout), F32))

    def mha():
        wq, bq = lin(D_MODEL, D_MODEL)
        wk, bk = lin(D_MODEL, D_MODEL)
        wv, bv = lin(D_MODEL, D_MODEL)
        wo, bo = lin(D_MODEL, D_MODEL)
        return {"wq": wq, "bq": bq, "wk": wk, "bk": bk,
                "wv": wv, "bv": bv, "wo": wo, "bo": bo}

    def ln():
        return jnp.ones((1, D_MODEL), F32), jnp.zeros((1, D_MODEL), F32)

    p = {}
    p["lang_proj_w"], p["lang_proj_b"] = lin(LANG_DIM, D_MODEL)
    p["lang_norm_g"], p["lang_norm_b"] = ln()
    p["inproj_w"], p["inproj_b"] = lin(IN_CHANNEL, D_MODEL)
    p["inproj_ln_g"], p["inproj_ln_b"] = ln()
    p["xmask_w1"], p["xmask_b1"] = lin(IN_CHANNEL, D_MODEL)
    p["xmask_w2"], p["xmask_b2"] = lin(D_MODEL, D_MODEL)
    p["qgen_w1"], p["qgen_b1"] = lin(D_MODEL, D_MODEL)
    p["qgen_w2"], p["qgen_b2"] = lin(D_MODEL, D_MODEL)
    p["qgen_w3"], p["qgen_b3"] = lin(D_MODEL, D_MODEL)
    p["out_norm_g"], p["out_norm_b"] = ln()
    p["score_w1"], p["score_b1"] = lin(D_MODEL, D_MODEL)
    p["score_w2"], p["score_b2"] = lin(D_MODEL, 1)
    p["indi_w1"], p["indi_b1"] = lin(D_MODEL, D_MODEL)
    p["indi_w2"], p["indi_b2"] = lin(D_MODEL, 2)
    p["indi_w3"], p["indi_b3"] = lin(2, 2)

    layers = []
    for _ in range(NUM_LAYER):
        lay = {"qsa": mha(), "qqa": mha(), "qla": mha()}
        lay["qqa_ln_g"], lay["qqa_ln_b"] = ln()
        lay["ffn_w1"], lay["ffn_b1"] = lin(D_MODEL, HIDDEN_DIM)
        lay["ffn_w2"], lay["ffn_b2"] = lin(HIDDEN_DIM, D_MODEL)
        lay["ffn_ln_g"], lay["ffn_ln_b"] = ln()
        layers.append(lay)
    p["layers"] = layers
    return p


def pack_weights(params):
    """Pack every weight/bias/LN param into ONE (R,128) f32 slab + static layout.

    Also folds the 1/sqrt(head_dim) softmax scale into wq/bq, fuses K|V projection
    matrices, and algebraically fuses the indi Linear(d,2)->Linear(2,2) tail.
    """
    layout = {}
    chunks = []
    off = 0

    def add(name, arr):
        nonlocal off
        a = jnp.asarray(arr, F32)
        if a.ndim == 1:
            a = a[None, :]
        r, c = a.shape
        layout[name] = (off, r, c)
        rp = _round_up(r, 8)
        chunks.append(jnp.pad(a, ((0, rp - r), (0, PACK_WIDTH - c))))
        off += rp

    p = params
    scale = 1.0 / ((D_MODEL // NHEAD) ** 0.5)

    add("inproj_w", p["inproj_w"]); add("inproj_b", p["inproj_b"])
    add("inproj_ln_g", p["inproj_ln_g"]); add("inproj_ln_b", p["inproj_ln_b"])
    add("xmask_w1", p["xmask_w1"]); add("xmask_b1", p["xmask_b1"])
    add("xmask_w2", p["xmask_w2"]); add("xmask_b2", p["xmask_b2"])
    add("lang_proj_w", p["lang_proj_w"]); add("lang_proj_b", p["lang_proj_b"])
    add("lang_norm_g", p["lang_norm_g"]); add("lang_norm_b", p["lang_norm_b"])
    for i in (1, 2, 3):
        add(f"qgen_w{i}", p[f"qgen_w{i}"]); add(f"qgen_b{i}", p[f"qgen_b{i}"])
    add("out_norm_g", p["out_norm_g"]); add("out_norm_b", p["out_norm_b"])
    add("score_w1", p["score_w1"]); add("score_b1", p["score_b1"])
    add("score_w2", p["score_w2"]); add("score_b2", p["score_b2"])
    add("indi_w1", p["indi_w1"]); add("indi_b1", p["indi_b1"])
    # fuse the bias-only Linear(2,2) tail (exact up to fp reassociation)
    add("indi_w23", p["indi_w2"] @ p["indi_w3"])
    add("indi_b23", p["indi_b2"] @ p["indi_w3"] + p["indi_b3"])

    for li, lay in enumerate(p["layers"]):
        pre = f"l{li}_"
        for att in ("qsa", "qqa", "qla"):
            m = lay[att]
            add(pre + att + "_wq", m["wq"] * scale)
            add(pre + att + "_bq", m["bq"] * scale)
            add(pre + att + "_wkv", jnp.concatenate([m["wk"], m["wv"]], axis=1))
            add(pre + att + "_bkv", jnp.concatenate([m["bk"], m["bv"]], axis=1))
            add(pre + att + "_wo", m["wo"])
            add(pre + att + "_bo", m["bo"])
        add(pre + "qqa_ln_g", lay["qqa_ln_g"]); add(pre + "qqa_ln_b", lay["qqa_ln_b"])
        add(pre + "ffn_w1", lay["ffn_w1"]); add(pre + "ffn_b1", lay["ffn_b1"])
        add(pre + "ffn_w2", lay["ffn_w2"]); add(pre + "ffn_b2", lay["ffn_b2"])
        add(pre + "ffn_ln_g", lay["ffn_ln_g"]); add(pre + "ffn_ln_b", lay["ffn_ln_b"])

    return jnp.concatenate(chunks, axis=0), layout


# ------------------------------- forward pass -----------------------------------
def mdin_forward(params, x, fps_seed_sp, batch_offsets, lang_feats, lang_masks):
    B = len(batch_offsets) - 1
    lens = [int(batch_offsets[i + 1] - batch_offsets[i]) for i in range(B)]
    M = max(lens)
    Nq = fps_seed_sp.shape[1]
    pred_width = _round_up(M + 3, 128)          # [masks | score | indis | pad], lane-dense

    # ---- host-side glue (static offsets): pad raw features; no projections here
    segs = []
    for i in range(B):
        seg = x[batch_offsets[i]:batch_offsets[i + 1]]
        if lens[i] < M:
            seg = jnp.pad(seg, ((0, M - lens[i]), (0, 0)))
        segs.append(seg)
    x_pad = jnp.stack(segs, axis=0).astype(F32)                           # (B, M, C)

    lens_arr = jnp.array(lens, jnp.int32)
    valid = jnp.arange(M, dtype=jnp.int32)[None, :] < lens_arr[:, None]   # True = real sp
    batch_mask = ~valid                                                   # True = padded
    valid_col = valid.astype(F32)[:, :, None]                             # (B, M, 1)
    bpad_bias = batch_mask.astype(F32)[:, None, :] * NEG_INF              # (B, 1, M)
    lpad_bias = (1.0 - lang_masks.astype(F32))[:, None, :] * NEG_INF      # (B, 1, n_lang)
    seeds = fps_seed_sp.astype(jnp.int32)[:, :, None]                     # (B, Nq, 1)
    lang_feats = lang_feats.astype(F32)

    w_slab, layout = pack_weights(params)       # one packed weight slab (cacheable)

    out = run_mdin(w_slab, layout, x_pad, valid_col, lang_feats, seeds,
                   bpad_bias, lpad_bias, pred_width)    # (B, L+1, Nq, pred_width)

    # ---- unpack lane-dense slabs: [masks | score | indis | pad]
    def split(level):
        s = out[:, level]
        return s[:, :, 0:M], s[:, :, M:M + 1], s[:, :, M + 1:M + 3]

    preds = [split(level) for level in range(NUM_LAYER + 1)]
    prediction_masks = [p[0] for p in preds]
    prediction_scores = [p[1] for p in preds]
    prediction_indis = [p[2] for p in preds]

    return {
        "masks": prediction_masks[-1],
        "batch_mask": batch_mask,
        "scores": prediction_scores[-1],
        "indis": prediction_indis[-1],
        "proj_queries": None,      # contrastive_align_loss=False
        "proj_tokens": None,
        "sample_inds": None,       # sampling_module=None
        "ref_scores": None,
        "ref_scores_kv": None,
        "aux_outputs": [
            {"masks": a, "scores": b, "proj_queries": None, "indis": c}
            for a, b, c in zip(prediction_masks[:-1],
                               prediction_scores[:-1],
                               prediction_indis[:-1])
        ],
    }


# --------------------------------- main ------------------------------------------
if __name__ == "__main__":
    key = jax.random.PRNGKey(0)
    kx, kl, ks = jax.random.split(key, 3)

    batch_offsets = [0, 12, 28]                     # two batches, lengths 12 and 16
    B = len(batch_offsets) - 1
    total = batch_offsets[-1]
    n_lang = 10
    n_seed = 8

    x = jax.random.normal(kx, (total, IN_CHANNEL), F32)              # [B*M, in_channel]
    lang_feats = jax.random.normal(kl, (B, n_lang, LANG_DIM), F32)   # [B, n_lang, 512]
    lang_masks = jnp.array([[1] * 7 + [0] * 3, [1] * 10], jnp.int32)  # 1 == valid token
    lens = jnp.array([12, 16], jnp.int32)
    fps_seed_sp = jax.random.randint(ks, (B, n_seed), 0, 10_000) % lens[:, None]

    params = init_params(jax.random.PRNGKey(42))

    out = mdin_forward(params, x, fps_seed_sp, batch_offsets, lang_feats, lang_masks)
    jax.block_until_ready((out["masks"], out["scores"], out["indis"]))

    assert out["masks"].shape == (B, n_seed, 16)
    assert out["scores"].shape == (B, n_seed, 1)
    assert out["indis"].shape == (B, n_seed, 2)
    assert len(out["aux_outputs"]) == NUM_LAYER
    print("KERNEL_OK")
</pallas_src>

<mosaic_0001>
module attributes {stable_mosaic.version = 11 : i64} {
  func.func @_mdin_kernel(%arg0: i32, %arg1: memref<1x16x32xf32, #tpu.memory_space<vmem>>, %arg2: memref<1x16x1xf32, #tpu.memory_space<vmem>>, %arg3: memref<1x10x512xf32, #tpu.memory_space<vmem>>, %arg4: memref<1x8x1xi32, #tpu.memory_space<vmem>>, %arg5: memref<1x1x16xf32, #tpu.memory_space<vmem>>, %arg6: memref<1x1x10xf32, #tpu.memory_space<vmem>>, %arg7: memref<3000x128xf32, #tpu.memory_space<vmem>>, %arg8: memref<1x3x8x128xf32, #tpu.memory_space<vmem>>) attributes {dimension_semantics = [#tpu.dimension_semantics<parallel>], iteration_bounds = array<i64: 2>, scalar_prefetch = 0 : i64, scratch_operands = 0 : i64, tpu.core_type = #tpu.core_type<tc>, window_params = [{transform_indices = @transform_0, window_bounds = array<i64: 1, 16, 32>}, {transform_indices = @transform_1, window_bounds = array<i64: 1, 16, 1>}, {transform_indices = @transform_2, window_bounds = array<i64: 1, 10, 512>}, {transform_indices = @transform_3, window_bounds = array<i64: 1, 8, 1>}, {transform_indices = @transform_4, window_bounds = array<i64: 1, 1, 16>}, {transform_indices = @transform_5, window_bounds = array<i64: 1, 1, 10>}, {pipeline_mode = #tpu.pipeline_mode<synchronous>, transform_indices = @transform_6, window_bounds = array<i64: 3000, 128>}, {transform_indices = @transform_7, window_bounds = array<i64: 1, 3, 8, 128>}]} {
    %c0 = arith.constant 0 : index
    %c0_0 = arith.constant 0 : index
    %c0_1 = arith.constant 0 : index
    %0 = vector.load %arg1[%c0, %c0_0, %c0_1] : memref<1x16x32xf32, #tpu.memory_space<vmem>>, vector<1x16x32xf32>
    %1 = vector.shape_cast %0 : vector<1x16x32xf32> to vector<16x32xf32>
    %c0_2 = arith.constant 0 : index
    %c0_3 = arith.constant 0 : index
    %c0_4 = arith.constant 0 : index
    %2 = vector.load %arg2[%c0_2, %c0_3, %c0_4] : memref<1x16x1xf32, #tpu.memory_space<vmem>>, vector<1x16x1xf32>
    %3 = vector.shape_cast %2 : vector<1x16x1xf32> to vector<16x1xf32>
    %c0_5 = arith.constant 0 : index
    %c0_6 = arith.constant 0 : index
    %c0_7 = arith.constant 0 : index
    %4 = vector.load %arg3[%c0_5, %c0_6, %c0_7] : memref<1x10x512xf32, #tpu.memory_space<vmem>>, vector<1x10x512xf32>
    %5 = vector.shape_cast %4 : vector<1x10x512xf32> to vector<10x512xf32>
    %c0_8 = arith.constant 0 : index
    %c0_9 = arith.constant 0 : index
    %c0_10 = arith.constant 0 : index
    %6 = vector.load %arg4[%c0_8, %c0_9, %c0_10] : memref<1x8x1xi32, #tpu.memory_space<vmem>>, vector<1x8x1xi32>
    %7 = vector.shape_cast %6 : vector<1x8x1xi32> to vector<8x1xi32>
    %c0_11 = arith.constant 0 : index
    %c0_12 = arith.constant 0 : index
    %c0_13 = arith.constant 0 : index
    %8 = vector.load %arg5[%c0_11, %c0_12, %c0_13] : memref<1x1x16xf32, #tpu.memory_space<vmem>>, vector<1x1x16xf32>
    %9 = vector.shape_cast %8 : vector<1x1x16xf32> to vector<1x16xf32>
    %c0_14 = arith.constant 0 : index
    %c0_15 = arith.constant 0 : index
    %c0_16 = arith.constant 0 : index
    %10 = vector.load %arg6[%c0_14, %c0_15, %c0_16] : memref<1x1x10xf32, #tpu.memory_space<vmem>>, vector<1x1x10xf32>
    %11 = vector.shape_cast %10 : vector<1x1x10xf32> to vector<1x10xf32>
    %12 = tpu.iota {dimensions = array<i32: 1>} : vector<1x64xi32>
    %c0_i32 = arith.constant 0 : i32
    %13 = vector.broadcast %c0_i32 : i32 to vector<1x64xi32>
    %14 = arith.cmpi sge, %12, %13 : vector<1x64xi32>
    %c8_i32 = arith.constant 8 : i32
    %15 = vector.broadcast %c8_i32 : i32 to vector<1x64xi32>
    %16 = arith.cmpi slt, %12, %15 : vector<1x64xi32>
    %17 = arith.andi %14, %16 : vector<1x64xi1>
    %18 = arith.extui %17 : vector<1x64xi1> to vector<1x64xi32>
    %19 = arith.sitofp %18 : vector<1x64xi32> to vector<1x64xf32>
    %c8_i32_17 = arith.constant 8 : i32
    %20 = vector.broadcast %c8_i32_17 : i32 to vector<1x64xi32>
    %21 = arith.cmpi sge, %12, %20 : vector<1x64xi32>
    %c16_i32 = arith.constant 16 : i32
    %22 = vector.broadcast %c16_i32 : i32 to vector<1x64xi32>
    %23 = arith.cmpi slt, %12, %22 : vector<1x64xi32>
    %24 = arith.andi %21, %23 : vector<1x64xi1>
    %25 = arith.extui %24 : vector<1x64xi1> to vector<1x64xi32>
    %26 = arith.sitofp %25 : vector<1x64xi32> to vector<1x64xf32>
    %c16_i32_18 = arith.constant 16 : i32
    %27 = vector.broadcast %c16_i32_18 : i32 to vector<1x64xi32>
    %28 = arith.cmpi sge, %12, %27 : vector<1x64xi32>
    %c24_i32 = arith.constant 24 : i32
    %29 = vector.broadcast %c24_i32 : i32 to vector<1x64xi32>
    %30 = arith.cmpi slt, %12, %29 : vector<1x64xi32>
    %31 = arith.andi %28, %30 : vector<1x64xi1>
    %32 = arith.extui %31 : vector<1x64xi1> to vector<1x64xi32>
    %33 = arith.sitofp %32 : vector<1x64xi32> to vector<1x64xf32>
    %c24_i32_19 = arith.constant 24 : i32
    %34 = vector.broadcast %c24_i32_19 : i32 to vector<1x64xi32>
    %35 = arith.cmpi sge, %12, %34 : vector<1x64xi32>
    %c32_i32 = arith.constant 32 : i32
    %36 = vector.broadcast %c32_i32 : i32 to vector<1x64xi32>
    %37 = arith.cmpi slt, %12, %36 : vector<1x64xi32>
    %38 = arith.andi %35, %37 : vector<1x64xi1>
    %39 = arith.extui %38 : vector<1x64xi1> to vector<1x64xi32>
    %40 = arith.sitofp %39 : vector<1x64xi32> to vector<1x64xf32>
    %c32_i32_20 = arith.constant 32 : i32
    %41 = vector.broadcast %c32_i32_20 : i32 to vector<1x64xi32>
    %42 = arith.cmpi sge, %12, %41 : vector<1x64xi32>
    %c40_i32 = arith.constant 40 : i32
    %43 = vector.broadcast %c40_i32 : i32 to vector<1x64xi32>
    %44 = arith.cmpi slt, %12, %43 : vector<1x64xi32>
    %45 = arith.andi %42, %44 : vector<1x64xi1>
    %46 = arith.extui %45 : vector<1x64xi1> to vector<1x64xi32>
    %47 = arith.sitofp %46 : vector<1x64xi32> to vector<1x64xf32>
    %c40_i32_21 = arith.constant 40 : i32
    %48 = vector.broadcast %c40_i32_21 : i32 to vector<1x64xi32>
    %49 = arith.cmpi sge, %12, %48 : vector<1x64xi32>
    %c48_i32 = arith.constant 48 : i32
    %50 = vector.broadcast %c48_i32 : i32 to vector<1x64xi32>
    %51 = arith.cmpi slt, %12, %50 : vector<1x64xi32>
    %52 = arith.andi %49, %51 : vector<1x64xi1>
    %53 = arith.extui %52 : vector<1x64xi1> to vector<1x64xi32>
    %54 = arith.sitofp %53 : vector<1x64xi32> to vector<1x64xf32>
    %c48_i32_22 = arith.constant 48 : i32
    %55 = vector.broadcast %c48_i32_22 : i32 to vector<1x64xi32>
    %56 = arith.cmpi sge, %12, %55 : vector<1x64xi32>
    %c56_i32 = arith.constant 56 : i32
    %57 = vector.broadcast %c56_i32 : i32 to vector<1x64xi32>
    %58 = arith.cmpi slt, %12, %57 : vector<1x64xi32>
    %59 = arith.andi %56, %58 : vector<1x64xi1>
    %60 = arith.extui %59 : vector<1x64xi1> to vector<1x64xi32>
    %61 = arith.sitofp %60 : vector<1x64xi32> to vector<1x64xf32>
    %c56_i32_23 = arith.constant 56 : i32
    %62 = vector.broadcast %c56_i32_23 : i32 to vector<1x64xi32>
    %63 = arith.cmpi sge, %12, %62 : vector<1x64xi32>
    %c64_i32 = arith.constant 64 : i32
    %64 = vector.broadcast %c64_i32 : i32 to vector<1x64xi32>
    %65 = arith.cmpi slt, %12, %64 : vector<1x64xi32>
    %66 = arith.andi %63, %65 : vector<1x64xi1>
    %67 = arith.extui %66 : vector<1x64xi1> to vector<1x64xi32>
    %68 = arith.sitofp %67 : vector<1x64xi32> to vector<1x64xf32>
    %c0_24 = arith.constant 0 : index
    %c0_25 = arith.constant 0 : index
    %69 = vector.load %arg7[%c0_24, %c0_25] : memref<3000x128xf32, #tpu.memory_space<vmem>>, vector<32x64xf32>
    %cst = arith.constant dense<0.000000e+00> : vector<16x64xf32>
    %70 = tpu.matmul %1, %69, %cst {dimension_numbers = #tpu.dot_dimension_numbers<[1], [0], [0], [1], [0, 0, 1, 1], [], []>} : vector<16x32xf32>, vector<32x64xf32>, vector<16x64xf32> -> vector<16x64xf32>
    %c32 = arith.constant 32 : index
    %c0_26 = arith.constant 0 : index
    %71 = vector.load %arg7[%c32, %c0_26] : memref<3000x128xf32, #tpu.memory_space<vmem>>, vector<1x64xf32>
    %72 = vector.broadcast %71 : vector<1x64xf32> to vector<16x64xf32>
    %73 = arith.addf %70, %72 : vector<16x64xf32>
    %c40 = arith.constant 40 : index
    %c0_27 = arith.constant 0 : index
    %74 = vector.load %arg7[%c40, %c0_27] : memref<3000x128xf32, #tpu.memory_space<vmem>>, vector<1x64xf32>
    %c48 = arith.constant 48 : index
    %c0_28 = arith.constant 0 : index
    %75 = vector.load %arg7[%c48, %c0_28] : memref<3000x128xf32, #tpu.memory_space<vmem>>, vector<1x64xf32>
    %cst_29 = arith.constant dense<0.000000e+00> : vector<16xf32>
    %76 = vector.multi_reduction <add>, %73, %cst_29 [1] : vector<16x64xf32> to vector<16xf32>
    %77 = vector.shape_cast %76 : vector<16xf32> to vector<16x1xf32>
    %cst_30 = arith.constant 6.400000e+01 : f32
    %78 = vector.broadcast %cst_30 : f32 to vector<16x1xf32>
    %79 = arith.divf %77, %78 : vector<16x1xf32>
    %80 = vector.broadcast %79 : vector<16x1xf32> to vector<16x64xf32>
    %81 = arith.subf %73, %80 : vector<16x64xf32>
    %82 = arith.mulf %81, %81 : vector<16x64xf32>
    %cst_31 = arith.constant dense<0.000000e+00> : vector<16xf32>
    %83 = vector.multi_reduction <add>, %82, %cst_31 [1] : vector<16x64xf32> to vector<16xf32>
    %84 = vector.shape_cast %83 : vector<16xf32> to vector<16x1xf32>
    %cst_32 = arith.constant 6.400000e+01 : f32
    %85 = vector.broadcast %cst_32 : f32 to vector<16x1xf32>
    %86 = arith.divf %84, %85 : vector<16x1xf32>
    %87 = vector.broadcast %79 : vector<16x1xf32> to vector<16x64xf32>
    %88 = arith.subf %73, %87 : vector<16x64xf32>
    %cst_33 = arith.constant 9.99999974E-6 : f32
    %89 = vector.broadcast %cst_33 : f32 to vector<16x1xf32>
    %90 = arith.addf %86, %89 : vector<16x1xf32>
    %91 = math.rsqrt %90 : vector<16x1xf32>
    %92 = vector.broadcast %91 : vector<16x1xf32> to vector<16x64xf32>
    %93 = arith.mulf %88, %92 : vector<16x64xf32>
    %94 = vector.broadcast %74 : vector<1x64xf32> to vector<16x64xf32>
    %95 = arith.mulf %93, %94 : vector<16x64xf32>
    %96 = vector.broadcast %75 : vector<1x64xf32> to vector<16x64xf32>
    %97 = arith.addf %95, %96 : vector<16x64xf32>
    %cst_34 = arith.constant 0.000000e+00 : f32
    %98 = vector.broadcast %cst_34 : f32 to vector<16x64xf32>
    %99 = arith.maximumf %97, %98 : vector<16x64xf32>
    %100 = vector.broadcast %3 : vector<16x1xf32> to vector<16x64xf32>
    %101 = arith.mulf %99, %100 : vector<16x64xf32>
    %c56 = arith.constant 56 : index
    %c0_35 = arith.constant 0 : index
    %102 = vector.load %arg7[%c56, %c0_35] : memref<3000x128xf32, #tpu.memory_space<vmem>>, vector<32x64xf32>
    %cst_36 = arith.constant dense<0.000000e+00> : vector<16x64xf32>
    %103 = tpu.matmul %1, %102, %cst_36 {dimension_numbers = #tpu.dot_dimension_numbers<[1], [0], [0], [1], [0, 0, 1, 1], [], []>} : vector<16x32xf32>, vector<32x64xf32>, vector<16x64xf32> -> vector<16x64xf32>
    %c88 = arith.constant 88 : index
    %c0_37 = arith.constant 0 : index
    %104 = vector.load %arg7[%c88, %c0_37] : memref<3000x128xf32, #tpu.memory_space<vmem>>, vector<1x64xf32>
    %105 = vector.broadcast %104 : vector<1x64xf32> to vector<16x64xf32>
    %106 = arith.addf %103, %105 : vector<16x64xf32>
    %cst_38 = arith.constant 0.000000e+00 : f32
    %107 = vector.broadcast %cst_38 : f32 to vector<16x64xf32>
    %108 = arith.maximumf %106, %107 : vector<16x64xf32>
    %c96 = arith.constant 96 : index
    %c0_39 = arith.constant 0 : index
    %109 = vector.load %arg7[%c96, %c0_39] : memref<3000x128xf32, #tpu.memory_space<vmem>>, vector<64x64xf32>
    %cst_40 = arith.constant dense<0.000000e+00> : vector<16x64xf32>
    %110 = tpu.matmul %108, %109, %cst_40 {dimension_numbers = #tpu.dot_dimension_numbers<[1], [0], [0], [1], [0, 0, 1, 1], [], []>} : vector<16x64xf32>, vector<64x64xf32>, vector<16x64xf32> -> vector<16x64xf32>
    %c160 = arith.constant 160 : index
    %c0_41 = arith.constant 0 : index
    %111 = vector.load %arg7[%c160, %c0_41] : memref<3000x128xf32, #tpu.memory_space<vmem>>, vector<1x64xf32>
    %112 = vector.broadcast %111 : vector<1x64xf32> to vector<16x64xf32>
    %113 = arith.addf %110, %112 : vector<16x64xf32>
    %114 = vector.broadcast %3 : vector<16x1xf32> to vector<16x64xf32>
    %115 = arith.mulf %113, %114 : vector<16x64xf32>
    %c168 = arith.constant 168 : index
    %c0_42 = arith.constant 0 : index
    %116 = vector.load %arg7[%c168, %c0_42] : memref<3000x128xf32, #tpu.memory_space<vmem>>, vector<512x64xf32>
    %cst_43 = arith.constant dense<0.000000e+00> : vector<10x64xf32>
    %117 = tpu.matmul %5, %116, %cst_43 {dimension_numbers = #tpu.dot_dimension_numbers<[1], [0], [0], [1], [0, 0, 1, 1], [], []>} : vector<10x512xf32>, vector<512x64xf32>, vector<10x64xf32> -> vector<10x64xf32>
    %c680 = arith.constant 680 : index
    %c0_44 = arith.constant 0 : index
    %118 = vector.load %arg7[%c680, %c0_44] : memref<3000x128xf32, #tpu.memory_space<vmem>>, vector<1x64xf32>
    %119 = vector.broadcast %118 : vector<1x64xf32> to vector<10x64xf32>
    %120 = arith.addf %117, %119 : vector<10x64xf32>
    %c688 = arith.constant 688 : index
    %c0_45 = arith.constant 0 : index
    %121 = vector.load %arg7[%c688, %c0_45] : memref<3000x128xf32, #tpu.memory_space<vmem>>, vector<1x64xf32>
    %c696 = arith.constant 696 : index
    %c0_46 = arith.constant 0 : index
    %122 = vector.load %arg7[%c696, %c0_46] : memref<3000x128xf32, #tpu.memory_space<vmem>>, vector<1x64xf32>
    %cst_47 = arith.constant dense<0.000000e+00> : vector<10xf32>
    %123 = vector.multi_reduction <add>, %120, %cst_47 [1] : vector<10x64xf32> to vector<10xf32>
    %124 = vector.shape_cast %123 : vector<10xf32> to vector<10x1xf32>
    %cst_48 = arith.constant 6.400000e+01 : f32
    %125 = vector.broadcast %cst_48 : f32 to vector<10x1xf32>
    %126 = arith.divf %124, %125 : vector<10x1xf32>
    %127 = vector.broadcast %126 : vector<10x1xf32> to vector<10x64xf32>
    %128 = arith.subf %120, %127 : vector<10x64xf32>
    %129 = arith.mulf %128, %128 : vector<10x64xf32>
    %cst_49 = arith.constant dense<0.000000e+00> : vector<10xf32>
    %130 = vector.multi_reduction <add>, %129, %cst_49 [1] : vector<10x64xf32> to vector<10xf32>
    %131 = vector.shape_cast %130 : vector<10xf32> to vector<10x1xf32>
    %cst_50 = arith.constant 6.400000e+01 : f32
    %132 = vector.broadcast %cst_50 : f32 to vector<10x1xf32>
    %133 = arith.divf %131, %132 : vector<10x1xf32>
    %134 = vector.broadcast %126 : vector<10x1xf32> to vector<10x64xf32>
    %135 = arith.subf %120, %134 : vector<10x64xf32>
    %cst_51 = arith.constant 9.99999974E-6 : f32
    %136 = vector.broadcast %cst_51 : f32 to vector<10x1xf32>
    %137 = arith.addf %133, %136 : vector<10x1xf32>
    %138 = math.rsqrt %137 : vector<10x1xf32>
    %139 = vector.broadcast %138 : vector<10x1xf32> to vector<10x64xf32>
    %140 = arith.mulf %135, %139 : vector<10x64xf32>
    %141 = vector.broadcast %121 : vector<1x64xf32> to vector<10x64xf32>
    %142 = arith.mulf %140, %141 : vector<10x64xf32>
    %143 = vector.broadcast %122 : vector<1x64xf32> to vector<10x64xf32>
    %144 = arith.addf %142, %143 : vector<10x64xf32>
    %145 = tpu.iota {dimensions = array<i32: 1>} : vector<8x16xi32>
    %146 = vector.broadcast %7 : vector<8x1xi32> to vector<8x16xi32>
    %147 = arith.cmpi eq, %146, %145 : vector<8x16xi32>
    %148 = arith.extui %147 : vector<8x16xi1> to vector<8x16xi32>
    %149 = arith.sitofp %148 : vector<8x16xi32> to vector<8x16xf32>
    %cst_52 = arith.constant dense<0.000000e+00> : vector<8x64xf32>
    %150 = tpu.matmul %149, %101, %cst_52 {dimension_numbers = #tpu.dot_dimension_numbers<[1], [0], [0], [1], [0, 0, 1, 1], [], []>} : vector<8x16xf32>, vector<16x64xf32>, vector<8x64xf32> -> vector<8x64xf32>
    %c704 = arith.constant 704 : index
    %c0_53 = arith.constant 0 : index
    %151 = vector.load %arg7[%c704, %c0_53] : memref<3000x128xf32, #tpu.memory_space<vmem>>, vector<64x64xf32>
    %cst_54 = arith.constant dense<0.000000e+00> : vector<8x64xf32>
    %152 = tpu.matmul %150, %151, %cst_54 {dimension_numbers = #tpu.dot_dimension_numbers<[1], [0], [0], [1], [0, 0, 1, 1], [], []>} : vector<8x64xf32>, vector<64x64xf32>, vector<8x64xf32> -> vector<8x64xf32>
    %c768 = arith.constant 768 : index
    %c0_55 = arith.constant 0 : index
    %153 = vector.load %arg7[%c768, %c0_55] : memref<3000x128xf32, #tpu.memory_space<vmem>>, vector<1x64xf32>
    %154 = vector.broadcast %153 : vector<1x64xf32> to vector<8x64xf32>
    %155 = arith.addf %152, %154 : vector<8x64xf32>
    %cst_56 = arith.constant 0.000000e+00 : f32
    %156 = vector.broadcast %cst_56 : f32 to vector<8x64xf32>
    %157 = arith.maximumf %155, %156 : vector<8x64xf32>
    %c776 = arith.constant 776 : index
    %c0_57 = arith.constant 0 : index
    %158 = vector.load %arg7[%c776, %c0_57] : memref<3000x128xf32, #tpu.memory_space<vmem>>, vector<64x64xf32>
    %cst_58 = arith.constant dense<0.000000e+00> : vector<8x64xf32>
    %159 = tpu.matmul %157, %158, %cst_58 {dimension_numbers = #tpu.dot_dimension_numbers<[1], [0], [0], [1], [0, 0, 1, 1], [], []>} : vector<8x64xf32>, vector<64x64xf32>, vector<8x64xf32> -> vector<8x64xf32>
    %c840 = arith.constant 840 : index
    %c0_59 = arith.constant 0 : index
    %160 = vector.load %arg7[%c840, %c0_59] : memref<3000x128xf32, #tpu.memory_space<vmem>>, vector<1x64xf32>
    %161 = vector.broadcast %160 : vector<1x64xf32> to vector<8x64xf32>
    %162 = arith.addf %159, %161 : vector<8x64xf32>
    %cst_60 = arith.constant 0.000000e+00 : f32
    %163 = vector.broadcast %cst_60 : f32 to vector<8x64xf32>
    %164 = arith.maximumf %162, %163 : vector<8x64xf32>
    %c848 = arith.constant 848 : index
    %c0_61 = arith.constant 0 : index
    %165 = vector.load %arg7[%c848, %c0_61] : memref<3000x128xf32, #tpu.memory_space<vmem>>, vector<64x64xf32>
    %cst_62 = arith.constant dense<0.000000e+00> : vector<8x64xf32>
    %166 = tpu.matmul %164, %165, %cst_62 {dimension_numbers = #tpu.dot_dimension_numbers<[1], [0], [0], [1], [0, 0, 1, 1], [], []>} : vector<8x64xf32>, vector<64x64xf32>, vector<8x64xf32> -> vector<8x64xf32>
    %c912 = arith.constant 912 : index
    %c0_63 = arith.constant 0 : index
    %167 = vector.load %arg7[%c912, %c0_63] : memref<3000x128xf32, #tpu.memory_space<vmem>>, vector<1x64xf32>
    %168 = vector.broadcast %167 : vector<1x64xf32> to vector<8x64xf32>
    %169 = arith.addf %166, %168 : vector<8x64xf32>
    %c920 = arith.constant 920 : index
    %c0_64 = arith.constant 0 : index
    %170 = vector.load %arg7[%c920, %c0_64] : memref<3000x128xf32, #tpu.memory_space<vmem>>, vector<1x64xf32>
    %c928 = arith.constant 928 : index
    %c0_65 = arith.constant 0 : index
    %171 = vector.load %arg7[%c928, %c0_65] : memref<3000x128xf32, #tpu.memory_space<vmem>>, vector<1x64xf32>
    %cst_66 = arith.constant dense<0.000000e+00> : vector<8xf32>
    %172 = vector.multi_reduction <add>, %169, %cst_66 [1] : vector<8x64xf32> to vector<8xf32>
    %173 = vector.shape_cast %172 : vector<8xf32> to vector<8x1xf32>
    %cst_67 = arith.constant 6.400000e+01 : f32
    %174 = vector.broadcast %cst_67 : f32 to vector<8x1xf32>
    %175 = arith.divf %173, %174 : vector<8x1xf32>
    %176 = vector.broadcast %175 : vector<8x1xf32> to vector<8x64xf32>
    %177 = arith.subf %169, %176 : vector<8x64xf32>
    %178 = arith.mulf %177, %177 : vector<8x64xf32>
    %cst_68 = arith.constant dense<0.000000e+00> : vector<8xf32>
    %179 = vector.multi_reduction <add>, %178, %cst_68 [1] : vector<8x64xf32> to vector<8xf32>
    %180 = vector.shape_cast %179 : vector<8xf32> to vector<8x1xf32>
    %cst_69 = arith.constant 6.400000e+01 : f32
    %181 = vector.broadcast %cst_69 : f32 to vector<8x1xf32>
    %182 = arith.divf %180, %181 : vector<8x1xf32>
    %183 = vector.broadcast %175 : vector<8x1xf32> to vector<8x64xf32>
    %184 = arith.subf %169, %183 : vector<8x64xf32>
    %cst_70 = arith.constant 9.99999974E-6 : f32
    %185 = vector.broadcast %cst_70 : f32 to vector<8x1xf32>
    %186 = arith.addf %182, %185 : vector<8x1xf32>
    %187 = math.rsqrt %186 : vector<8x1xf32>
    %188 = vector.broadcast %187 : vector<8x1xf32> to vector<8x64xf32>
    %189 = arith.mulf %184, %188 : vector<8x64xf32>
    %190 = vector.broadcast %170 : vector<1x64xf32> to vector<8x64xf32>
    %191 = arith.mulf %189, %190 : vector<8x64xf32>
    %192 = vector.broadcast %171 : vector<1x64xf32> to vector<8x64xf32>
    %193 = arith.addf %191, %192 : vector<8x64xf32>
    %c936 = arith.constant 936 : index
    %c0_71 = arith.constant 0 : index
    %194 = vector.load %arg7[%c936, %c0_71] : memref<3000x128xf32, #tpu.memory_space<vmem>>, vector<64x64xf32>
    %cst_72 = arith.constant dense<0.000000e+00> : vector<8x64xf32>
    %195 = tpu.matmul %193, %194, %cst_72 {dimension_numbers = #tpu.dot_dimension_numbers<[1], [0], [0], [1], [0, 0, 1, 1], [], []>} : vector<8x64xf32>, vector<64x64xf32>, vector<8x64xf32> -> vector<8x64xf32>
    %c1000 = arith.constant 1000 : index
    %c0_73 = arith.constant 0 : index
    %196 = vector.load %arg7[%c1000, %c0_73] : memref<3000x128xf32, #tpu.memory_space<vmem>>, vector<1x64xf32>
    %197 = vector.broadcast %196 : vector<1x64xf32> to vector<8x64xf32>
    %198 = arith.addf %195, %197 : vector<8x64xf32>
    %cst_74 = arith.constant 0.000000e+00 : f32
    %199 = vector.broadcast %cst_74 : f32 to vector<8x64xf32>
    %200 = arith.maximumf %198, %199 : vector<8x64xf32>
    %c1008 = arith.constant 1008 : index
    %c0_75 = arith.constant 0 : index
    %201 = vector.load %arg7[%c1008, %c0_75] : memref<3000x128xf32, #tpu.memory_space<vmem>>, vector<64x1xf32>
    %cst_76 = arith.constant dense<0.000000e+00> : vector<8x1xf32>
    %202 = tpu.matmul %200, %201, %cst_76 {dimension_numbers = #tpu.dot_dimension_numbers<[1], [0], [0], [1], [0, 0, 1, 1], [], []>} : vector<8x64xf32>, vector<64x1xf32>, vector<8x1xf32> -> vector<8x1xf32>
    %c1072 = arith.constant 1072 : index
    %c0_77 = arith.constant 0 : index
    %203 = vector.load %arg7[%c1072, %c0_77] : memref<3000x128xf32, #tpu.memory_space<vmem>>, vector<1x1xf32>
    %204 = vector.broadcast %203 : vector<1x1xf32> to vector<8x1xf32>
    %205 = arith.addf %202, %204 : vector<8x1xf32>
    %cst_78 = arith.constant dense<0.000000e+00> : vector<8x16xf32>
    %206 = tpu.matmul %193, %115, %cst_78 {dimension_numbers = #tpu.dot_dimension_numbers<[1], [1], [0], [0], [0, 0, 1, 0], [], []>} : vector<8x64xf32>, vector<16x64xf32>, vector<8x16xf32> -> vector<8x16xf32>
    %c1080 = arith.constant 1080 : index
    %c0_79 = arith.constant 0 : index
    %207 = vector.load %arg7[%c1080, %c0_79] : memref<3000x128xf32, #tpu.memory_space<vmem>>, vector<64x64xf32>
    %cst_80 = arith.constant dense<0.000000e+00> : vector<8x64xf32>
    %208 = tpu.matmul %169, %207, %cst_80 {dimension_numbers = #tpu.dot_dimension_numbers<[1], [0], [0], [1], [0, 0, 1, 1], [], []>} : vector<8x64xf32>, vector<64x64xf32>, vector<8x64xf32> -> vector<8x64xf32>
    %c1144 = arith.constant 1144 : index
    %c0_81 = arith.constant 0 : index
    %209 = vector.load %arg7[%c1144, %c0_81] : memref<3000x128xf32, #tpu.memory_space<vmem>>, vector<1x64xf32>
    %210 = vector.broadcast %209 : vector<1x64xf32> to vector<8x64xf32>
    %211 = arith.addf %208, %210 : vector<8x64xf32>
    %cst_82 = arith.constant 0.000000e+00 : f32
    %212 = vector.broadcast %cst_82 : f32 to vector<8x64xf32>
    %213 = arith.maximumf %211, %212 : vector<8x64xf32>
    %c1152 = arith.constant 1152 : index
    %c0_83 = arith.constant 0 : index
    %214 = vector.load %arg7[%c1152, %c0_83] : memref<3000x128xf32, #tpu.memory_space<vmem>>, vector<64x2xf32>
    %cst_84 = arith.constant dense<0.000000e+00> : vector<8x2xf32>
    %215 = tpu.matmul %213, %214, %cst_84 {dimension_numbers = #tpu.dot_dimension_numbers<[1], [0], [0], [1], [0, 0, 1, 1], [], []>} : vector<8x64xf32>, vector<64x2xf32>, vector<8x2xf32> -> vector<8x2xf32>
    %c1216 = arith.constant 1216 : index
    %c0_85 = arith.constant 0 : index
    %216 = vector.load %arg7[%c1216, %c0_85] : memref<3000x128xf32, #tpu.memory_space<vmem>>, vector<1x2xf32>
    %217 = vector.broadcast %216 : vector<1x2xf32> to vector<8x2xf32>
    %218 = arith.addf %215, %217 : vector<8x2xf32>
    %cst_86 = arith.constant 0.000000e+00 : f32
    %219 = vector.broadcast %cst_86 : f32 to vector<8x109xf32>
    %220 = tpu.concatenate %206, %205, %218, %219 in 1 : vector<8x16xf32>, vector<8x1xf32>, vector<8x2xf32>, vector<8x109xf32> -> vector<8x128xf32>
    %c0_87 = arith.constant 0 : index
    %c0_88 = arith.constant 0 : index
    %c0_89 = arith.constant 0 : index
    %c0_90 = arith.constant 0 : index
    %221 = vector.load %arg8[%c0_87, %c0_88, %c0_89, %c0_90] : memref<1x3x8x128xf32, #tpu.memory_space<vmem>>, vector<1x1x8x128xf32>
    %222 = vector.shape_cast %221 : vector<1x1x8x128xf32> to vector<8x128xf32>
    %223 = vector.shape_cast %220 : vector<8x128xf32> to vector<1x1x8x128xf32>
    tpu.vector_store %arg8[%c0_87, %c0_88, %c0_89, %c0_90], %223 {strides = array<i32>} : memref<1x3x8x128xf32, #tpu.memory_space<vmem>>, vector<1x1x8x128xf32>,
    %c1224 = arith.constant 1224 : index
    %c0_91 = arith.constant 0 : index
    %224 = vector.load %arg7[%c1224, %c0_91] : memref<3000x128xf32, #tpu.memory_space<vmem>>, vector<64x64xf32>
    %cst_92 = arith.constant dense<0.000000e+00> : vector<8x64xf32>
    %225 = tpu.matmul %169, %224, %cst_92 {dimension_numbers = #tpu.dot_dimension_numbers<[1], [0], [0], [1], [0, 0, 1, 1], [], []>} : vector<8x64xf32>, vector<64x64xf32>, vector<8x64xf32> -> vector<8x64xf32>
    %c1288 = arith.constant 1288 : index
    %c0_93 = arith.constant 0 : index
    %226 = vector.load %arg7[%c1288, %c0_93] : memref<3000x128xf32, #tpu.memory_space<vmem>>, vector<1x64xf32>
    %227 = vector.broadcast %226 : vector<1x64xf32> to vector<8x64xf32>
    %228 = arith.addf %225, %227 : vector<8x64xf32>
    %c1296 = arith.constant 1296 : index
    %c0_94 = arith.constant 0 : index
    %229 = vector.load %arg7[%c1296, %c0_94] : memref<3000x128xf32, #tpu.memory_space<vmem>>, vector<64x128xf32>
    %cst_95 = arith.constant dense<0.000000e+00> : vector<16x128xf32>
    %230 = tpu.matmul %101, %229, %cst_95 {dimension_numbers = #tpu.dot_dimension_numbers<[1], [0], [0], [1], [0, 0, 1, 1], [], []>} : vector<16x64xf32>, vector<64x128xf32>, vector<16x128xf32> -> vector<16x128xf32>
    %c1360 = arith.constant 1360 : index
    %c0_96 = arith.constant 0 : index
    %231 = vector.load %arg7[%c1360, %c0_96] : memref<3000x128xf32, #tpu.memory_space<vmem>>, vector<1x128xf32>
    %232 = vector.broadcast %231 : vector<1x128xf32> to vector<16x128xf32>
    %233 = arith.addf %230, %232 : vector<16x128xf32>
    %234 = vector.extract_strided_slice %233 {offsets = [0, 0], sizes = [16, 64], strides = [1, 1]} : vector<16x128xf32> to vector<16x64xf32>
    %235 = vector.extract_strided_slice %233 {offsets = [0, 64], sizes = [16, 64], strides = [1, 1]} : vector<16x128xf32> to vector<16x64xf32>
    %236 = vector.broadcast %19 : vector<1x64xf32> to vector<8x64xf32>
    %237 = arith.mulf %228, %236 : vector<8x64xf32>
    %238 = vector.broadcast %26 : vector<1x64xf32> to vector<8x64xf32>
    %239 = arith.mulf %228, %238 : vector<8x64xf32>
    %240 = vector.broadcast %33 : vector<1x64xf32> to vector<8x64xf32>
    %241 = arith.mulf %228, %240 : vector<8x64xf32>
    %242 = vector.broadcast %40 : vector<1x64xf32> to vector<8x64xf32>
    %243 = arith.mulf %228, %242 : vector<8x64xf32>
    %244 = vector.broadcast %47 : vector<1x64xf32> to vector<8x64xf32>
    %245 = arith.mulf %228, %244 : vector<8x64xf32>
    %246 = vector.broadcast %54 : vector<1x64xf32> to vector<8x64xf32>
    %247 = arith.mulf %228, %246 : vector<8x64xf32>
    %248 = vector.broadcast %61 : vector<1x64xf32> to vector<8x64xf32>
    %249 = arith.mulf %228, %248 : vector<8x64xf32>
    %250 = vector.broadcast %68 : vector<1x64xf32> to vector<8x64xf32>
    %251 = arith.mulf %228, %250 : vector<8x64xf32>
    %252 = tpu.concatenate %237, %239, %241, %243, %245, %247, %249, %251 in 0 : vector<8x64xf32>, vector<8x64xf32>, vector<8x64xf32>, vector<8x64xf32>, vector<8x64xf32>, vector<8x64xf32>, vector<8x64xf32>, vector<8x64xf32> -> vector<64x64xf32>
    %cst_97 = arith.constant dense<0.000000e+00> : vector<64x16xf32>
    %253 = tpu.matmul %252, %234, %cst_97 {dimension_numbers = #tpu.dot_dimension_numbers<[1], [1], [0], [0], [0, 0, 1, 0], [], []>} : vector<64x64xf32>, vector<16x64xf32>, vector<64x16xf32> -> vector<64x16xf32>
    %254 = vector.broadcast %9 : vector<1x16xf32> to vector<64x16xf32>
    %255 = arith.addf %253, %254 : vector<64x16xf32>
    %cst_98 = arith.constant dense<0xFF800000> : vector<64xf32>
    %256 = vector.multi_reduction <maximumf>, %255, %cst_98 [1] : vector<64x16xf32> to vector<64xf32>
    %257 = vector.shape_cast %256 : vector<64xf32> to vector<64x1xf32>
    %258 = vector.broadcast %257 : vector<64x1xf32> to vector<64x16xf32>
    %259 = arith.subf %255, %258 : vector<64x16xf32>
    %260 = math.exp %259 : vector<64x16xf32>
    %cst_99 = arith.constant dense<0.000000e+00> : vector<64xf32>
    %261 = vector.multi_reduction <add>, %260, %cst_99 [1] : vector<64x16xf32> to vector<64xf32>
    %262 = vector.shape_cast %261 : vector<64xf32> to vector<64x1xf32>
    %263 = vector.broadcast %262 : vector<64x1xf32> to vector<64x16xf32>
    %264 = arith.divf %260, %263 : vector<64x16xf32>
    %cst_100 = arith.constant dense<0.000000e+00> : vector<64x64xf32>
    %265 = tpu.matmul %264, %235, %cst_100 {dimension_numbers = #tpu.dot_dimension_numbers<[1], [0], [0], [1], [0, 0, 1, 1], [], []>} : vector<64x16xf32>, vector<16x64xf32>, vector<64x64xf32> -> vector<64x64xf32>
    %266 = vector.extract_strided_slice %265 {offsets = [0, 0], sizes = [8, 64], strides = [1, 1]} : vector<64x64xf32> to vector<8x64xf32>
    %267 = vector.broadcast %19 : vector<1x64xf32> to vector<8x64xf32>
    %268 = arith.mulf %266, %267 : vector<8x64xf32>
    %269 = vector.extract_strided_slice %265 {offsets = [8, 0], sizes = [8, 64], strides = [1, 1]} : vector<64x64xf32> to vector<8x64xf32>
    %270 = vector.broadcast %26 : vector<1x64xf32> to vector<8x64xf32>
    %271 = arith.mulf %269, %270 : vector<8x64xf32>
    %272 = arith.addf %268, %271 : vector<8x64xf32>
    %273 = vector.extract_strided_slice %265 {offsets = [16, 0], sizes = [8, 64], strides = [1, 1]} : vector<64x64xf32> to vector<8x64xf32>
    %274 = vector.broadcast %33 : vector<1x64xf32> to vector<8x64xf32>
    %275 = arith.mulf %273, %274 : vector<8x64xf32>
    %276 = arith.addf %272, %275 : vector<8x64xf32>
    %277 = vector.extract_strided_slice %265 {offsets = [24, 0], sizes = [8, 64], strides = [1, 1]} : vector<64x64xf32> to vector<8x64xf32>
    %278 = vector.broadcast %40 : vector<1x64xf32> to vector<8x64xf32>
    %279 = arith.mulf %277, %278 : vector<8x64xf32>
    %280 = arith.addf %276, %279 : vector<8x64xf32>
    %281 = vector.extract_strided_slice %265 {offsets = [32, 0], sizes = [8, 64], strides = [1, 1]} : vector<64x64xf32> to vector<8x64xf32>
    %282 = vector.broadcast %47 : vector<1x64xf32> to vector<8x64xf32>
    %283 = arith.mulf %281, %282 : vector<8x64xf32>
    %284 = arith.addf %280, %283 : vector<8x64xf32>
    %285 = vector.extract_strided_slice %265 {offsets = [40, 0], sizes = [8, 64], strides = [1, 1]} : vector<64x64xf32> to vector<8x64xf32>
    %286 = vector.broadcast %54 : vector<1x64xf32> to vector<8x64xf32>
    %287 = arith.mulf %285, %286 : vector<8x64xf32>
    %288 = arith.addf %284, %287 : vector<8x64xf32>
    %289 = vector.extract_strided_slice %265 {offsets = [48, 0], sizes = [8, 64], strides = [1, 1]} : vector<64x64xf32> to vector<8x64xf32>
    %290 = vector.broadcast %61 : vector<1x64xf32> to vector<8x64xf32>
    %291 = arith.mulf %289, %290 : vector<8x64xf32>
    %292 = arith.addf %288, %291 : vector<8x64xf32>
    %293 = vector.extract_strided_slice %265 {offsets = [56, 0], sizes = [8, 64], strides = [1, 1]} : vector<64x64xf32> to vector<8x64xf32>
    %294 = vector.broadcast %68 : vector<1x64xf32> to vector<8x64xf32>
    %295 = arith.mulf %293, %294 : vector<8x64xf32>
    %296 = arith.addf %292, %295 : vector<8x64xf32>
    %c1368 = arith.constant 1368 : index
    %c0_101 = arith.constant 0 : index
    %297 = vector.load %arg7[%c1368, %c0_101] : memref<3000x128xf32, #tpu.memory_space<vmem>>, vector<64x64xf32>
    %cst_102 = arith.constant dense<0.000000e+00> : vector<8x64xf32>
    %298 = tpu.matmul %296, %297, %cst_102 {dimension_numbers = #tpu.dot_dimension_numbers<[1], [0], [0], [1], [0, 0, 1, 1], [], []>} : vector<8x64xf32>, vector<64x64xf32>, vector<8x64xf32> -> vector<8x64xf32>
    %c1432 = arith.constant 1432 : index
    %c0_103 = arith.constant 0 : index
    %299 = vector.load %arg7[%c1432, %c0_103] : memref<3000x128xf32, #tpu.memory_space<vmem>>, vector<1x64xf32>
    %300 = vector.broadcast %299 : vector<1x64xf32> to vector<8x64xf32>
    %301 = arith.addf %298, %300 : vector<8x64xf32>
    %302 = arith.addf %301, %169 : vector<8x64xf32>
    %c1440 = arith.constant 1440 : index
    %c0_104 = arith.constant 0 : index
    %303 = vector.load %arg7[%c1440, %c0_104] : memref<3000x128xf32, #tpu.memory_space<vmem>>, vector<64x64xf32>
    %cst_105 = arith.constant dense<0.000000e+00> : vector<8x64xf32>
    %304 = tpu.matmul %302, %303, %cst_105 {dimension_numbers = #tpu.dot_dimension_numbers<[1], [0], [0], [1], [0, 0, 1, 1], [], []>} : vector<8x64xf32>, vector<64x64xf32>, vector<8x64xf32> -> vector<8x64xf32>
    %c1504 = arith.constant 1504 : index
    %c0_106 = arith.constant 0 : index
    %305 = vector.load %arg7[%c1504, %c0_106] : memref<3000x128xf32, #tpu.memory_space<vmem>>, vector<1x64xf32>
    %306 = vector.broadcast %305 : vector<1x64xf32> to vector<8x64xf32>
    %307 = arith.addf %304, %306 : vector<8x64xf32>
    %c1512 = arith.constant 1512 : index
    %c0_107 = arith.constant 0 : index
    %308 = vector.load %arg7[%c1512, %c0_107] : memref<3000x128xf32, #tpu.memory_space<vmem>>, vector<64x128xf32>
    %cst_108 = arith.constant dense<0.000000e+00> : vector<8x128xf32>
    %309 = tpu.matmul %302, %308, %cst_108 {dimension_numbers = #tpu.dot_dimension_numbers<[1], [0], [0], [1], [0, 0, 1, 1], [], []>} : vector<8x64xf32>, vector<64x128xf32>, vector<8x128xf32> -> vector<8x128xf32>
    %c1576 = arith.constant 1576 : index
    %c0_109 = arith.constant 0 : index
    %310 = vector.load %arg7[%c1576, %c0_109] : memref<3000x128xf32, #tpu.memory_space<vmem>>, vector<1x128xf32>
    %311 = vector.broadcast %310 : vector<1x128xf32> to vector<8x128xf32>
    %312 = arith.addf %309, %311 : vector<8x128xf32>
    %313 = vector.extract_strided_slice %312 {offsets = [0, 0], sizes = [8, 64], strides = [1, 1]} : vector<8x128xf32> to vector<8x64xf32>
    %314 = vector.extract_strided_slice %312 {offsets = [0, 64], sizes = [8, 64], strides = [1, 1]} : vector<8x128xf32> to vector<8x64xf32>
    %315 = vector.broadcast %19 : vector<1x64xf32> to vector<8x64xf32>
    %316 = arith.mulf %307, %315 : vector<8x64xf32>
    %317 = vector.broadcast %26 : vector<1x64xf32> to vector<8x64xf32>
    %318 = arith.mulf %307, %317 : vector<8x64xf32>
    %319 = vector.broadcast %33 : vector<1x64xf32> to vector<8x64xf32>
    %320 = arith.mulf %307, %319 : vector<8x64xf32>
    %321 = vector.broadcast %40 : vector<1x64xf32> to vector<8x64xf32>
    %322 = arith.mulf %307, %321 : vector<8x64xf32>
    %323 = vector.broadcast %47 : vector<1x64xf32> to vector<8x64xf32>
    %324 = arith.mulf %307, %323 : vector<8x64xf32>
    %325 = vector.broadcast %54 : vector<1x64xf32> to vector<8x64xf32>
    %326 = arith.mulf %307, %325 : vector<8x64xf32>
    %327 = vector.broadcast %61 : vector<1x64xf32> to vector<8x64xf32>
    %328 = arith.mulf %307, %327 : vector<8x64xf32>
    %329 = vector.broadcast %68 : vector<1x64xf32> to vector<8x64xf32>
    %330 = arith.mulf %307, %329 : vector<8x64xf32>
    %331 = tpu.concatenate %316, %318, %320, %322, %324, %326, %328, %330 in 0 : vector<8x64xf32>, vector<8x64xf32>, vector<8x64xf32>, vector<8x64xf32>, vector<8x64xf32>, vector<8x64xf32>, vector<8x64xf32>, vector<8x64xf32> -> vector<64x64xf32>
    %cst_110 = arith.constant dense<0.000000e+00> : vector<64x8xf32>
    %332 = tpu.matmul %331, %313, %cst_110 {dimension_numbers = #tpu.dot_dimension_numbers<[1], [1], [0], [0], [0, 0, 1, 0], [], []>} : vector<64x64xf32>, vector<8x64xf32>, vector<64x8xf32> -> vector<64x8xf32>
    %cst_111 = arith.constant dense<0xFF800000> : vector<64xf32>
    %333 = vector.multi_reduction <maximumf>, %332, %cst_111 [1] : vector<64x8xf32> to vector<64xf32>
    %334 = vector.shape_cast %333 : vector<64xf32> to vector<64x1xf32>
    %335 = vector.broadcast %334 : vector<64x1xf32> to vector<64x8xf32>
    %336 = arith.subf %332, %335 : vector<64x8xf32>
    %337 = math.exp %336 : vector<64x8xf32>
    %cst_112 = arith.constant dense<0.000000e+00> : vector<64xf32>
    %338 = vector.multi_reduction <add>, %337, %cst_112 [1] : vector<64x8xf32> to vector<64xf32>
    %339 = vector.shape_cast %338 : vector<64xf32> to vector<64x1xf32>
    %340 = vector.broadcast %339 : vector<64x1xf32> to vector<64x8xf32>
    %341 = arith.divf %337, %340 : vector<64x8xf32>
    %cst_113 = arith.constant dense<0.000000e+00> : vector<64x64xf32>
    %342 = tpu.matmul %341, %314, %cst_113 {dimension_numbers = #tpu.dot_dimension_numbers<[1], [0], [0], [1], [0, 0, 1, 1], [], []>} : vector<64x8xf32>, vector<8x64xf32>, vector<64x64xf32> -> vector<64x64xf32>
    %343 = vector.extract_strided_slice %342 {offsets = [0, 0], sizes = [8, 64], strides = [1, 1]} : vector<64x64xf32> to vector<8x64xf32>
    %344 = vector.broadcast %19 : vector<1x64xf32> to vector<8x64xf32>
    %345 = arith.mulf %343, %344 : vector<8x64xf32>
    %346 = vector.extract_strided_slice %342 {offsets = [8, 0], sizes = [8, 64], strides = [1, 1]} : vector<64x64xf32> to vector<8x64xf32>
    %347 = vector.broadcast %26 : vector<1x64xf32> to vector<8x64xf32>
    %348 = arith.mulf %346, %347 : vector<8x64xf32>
    %349 = arith.addf %345, %348 : vector<8x64xf32>
    %350 = vector.extract_strided_slice %342 {offsets = [16, 0], sizes = [8, 64], strides = [1, 1]} : vector<64x64xf32> to vector<8x64xf32>
    %351 = vector.broadcast %33 : vector<1x64xf32> to vector<8x64xf32>
    %352 = arith.mulf %350, %351 : vector<8x64xf32>
    %353 = arith.addf %349, %352 : vector<8x64xf32>
    %354 = vector.extract_strided_slice %342 {offsets = [24, 0], sizes = [8, 64], strides = [1, 1]} : vector<64x64xf32> to vector<8x64xf32>
    %355 = vector.broadcast %40 : vector<1x64xf32> to vector<8x64xf32>
    %356 = arith.mulf %354, %355 : vector<8x64xf32>
    %357 = arith.addf %353, %356 : vector<8x64xf32>
    %358 = vector.extract_strided_slice %342 {offsets = [32, 0], sizes = [8, 64], strides = [1, 1]} : vector<64x64xf32> to vector<8x64xf32>
    %359 = vector.broadcast %47 : vector<1x64xf32> to vector<8x64xf32>
    %360 = arith.mulf %358, %359 : vector<8x64xf32>
    %361 = arith.addf %357, %360 : vector<8x64xf32>
    %362 = vector.extract_strided_slice %342 {offsets = [40, 0], sizes = [8, 64], strides = [1, 1]} : vector<64x64xf32> to vector<8x64xf32>
    %363 = vector.broadcast %54 : vector<1x64xf32> to vector<8x64xf32>
    %364 = arith.mulf %362, %363 : vector<8x64xf32>
    %365 = arith.addf %361, %364 : vector<8x64xf32>
    %366 = vector.extract_strided_slice %342 {offsets = [48, 0], sizes = [8, 64], strides = [1, 1]} : vector<64x64xf32> to vector<8x64xf32>
    %367 = vector.broadcast %61 : vector<1x64xf32> to vector<8x64xf32>
    %368 = arith.mulf %366, %367 : vector<8x64xf32>
    %369 = arith.addf %365, %368 : vector<8x64xf32>
    %370 = vector.extract_strided_slice %342 {offsets = [56, 0], sizes = [8, 64], strides = [1, 1]} : vector<64x64xf32> to vector<8x64xf32>
    %371 = vector.broadcast %68 : vector<1x64xf32> to vector<8x64xf32>
    %372 = arith.mulf %370, %371 : vector<8x64xf32>
    %373 = arith.addf %369, %372 : vector<8x64xf32>
    %c1584 = arith.constant 1584 : index
    %c0_114 = arith.constant 0 : index
    %374 = vector.load %arg7[%c1584, %c0_114] : memref<3000x128xf32, #tpu.memory_space<vmem>>, vector<64x64xf32>
    %cst_115 = arith.constant dense<0.000000e+00> : vector<8x64xf32>
    %375 = tpu.matmul %373, %374, %cst_115 {dimension_numbers = #tpu.dot_dimension_numbers<[1], [0], [0], [1], [0, 0, 1, 1], [], []>} : vector<8x64xf32>, vector<64x64xf32>, vector<8x64xf32> -> vector<8x64xf32>
    %c1648 = arith.constant 1648 : index
    %c0_116 = arith.constant 0 : index
    %376 = vector.load %arg7[%c1648, %c0_116] : memref<3000x128xf32, #tpu.memory_space<vmem>>, vector<1x64xf32>
    %377 = vector.broadcast %376 : vector<1x64xf32> to vector<8x64xf32>
    %378 = arith.addf %375, %377 : vector<8x64xf32>
    %379 = arith.addf %378, %302 : vector<8x64xf32>
    %c1872 = arith.constant 1872 : index
    %c0_117 = arith.constant 0 : index
    %380 = vector.load %arg7[%c1872, %c0_117] : memref<3000x128xf32, #tpu.memory_space<vmem>>, vector<1x64xf32>
    %c1880 = arith.constant 1880 : index
    %c0_118 = arith.constant 0 : index
    %381 = vector.load %arg7[%c1880, %c0_118] : memref<3000x128xf32, #tpu.memory_space<vmem>>, vector<1x64xf32>
    %cst_119 = arith.constant dense<0.000000e+00> : vector<8xf32>
    %382 = vector.multi_reduction <add>, %379, %cst_119 [1] : vector<8x64xf32> to vector<8xf32>
    %383 = vector.shape_cast %382 : vector<8xf32> to vector<8x1xf32>
    %cst_120 = arith.constant 6.400000e+01 : f32
    %384 = vector.broadcast %cst_120 : f32 to vector<8x1xf32>
    %385 = arith.divf %383, %384 : vector<8x1xf32>
    %386 = vector.broadcast %385 : vector<8x1xf32> to vector<8x64xf32>
    %387 = arith.subf %379, %386 : vector<8x64xf32>
    %388 = arith.mulf %387, %387 : vector<8x64xf32>
    %cst_121 = arith.constant dense<0.000000e+00> : vector<8xf32>
    %389 = vector.multi_reduction <add>, %388, %cst_121 [1] : vector<8x64xf32> to vector<8xf32>
    %390 = vector.shape_cast %389 : vector<8xf32> to vector<8x1xf32>
    %cst_122 = arith.constant 6.400000e+01 : f32
    %391 = vector.broadcast %cst_122 : f32 to vector<8x1xf32>
    %392 = arith.divf %390, %391 : vector<8x1xf32>
    %393 = vector.broadcast %385 : vector<8x1xf32> to vector<8x64xf32>
    %394 = arith.subf %379, %393 : vector<8x64xf32>
    %cst_123 = arith.constant 9.99999974E-6 : f32
    %395 = vector.broadcast %cst_123 : f32 to vector<8x1xf32>
    %396 = arith.addf %392, %395 : vector<8x1xf32>
    %397 = math.rsqrt %396 : vector<8x1xf32>
    %398 = vector.broadcast %397 : vector<8x1xf32> to vector<8x64xf32>
    %399 = arith.mulf %394, %398 : vector<8x64xf32>
    %400 = vector.broadcast %380 : vector<1x64xf32> to vector<8x64xf32>
    %401 = arith.mulf %399, %400 : vector<8x64xf32>
    %402 = vector.broadcast %381 : vector<1x64xf32> to vector<8x64xf32>
    %403 = arith.addf %401, %402 : vector<8x64xf32>
    %c1656 = arith.constant 1656 : index
    %c0_124 = arith.constant 0 : index
    %404 = vector.load %arg7[%c1656, %c0_124] : memref<3000x128xf32, #tpu.memory_space<vmem>>, vector<64x64xf32>
    %cst_125 = arith.constant dense<0.000000e+00> : vector<8x64xf32>
    %405 = tpu.matmul %302, %404, %cst_125 {dimension_numbers = #tpu.dot_dimension_numbers<[1], [0], [0], [1], [0, 0, 1, 1], [], []>} : vector<8x64xf32>, vector<64x64xf32>, vector<8x64xf32> -> vector<8x64xf32>
    %c1720 = arith.constant 1720 : index
    %c0_126 = arith.constant 0 : index
    %406 = vector.load %arg7[%c1720, %c0_126] : memref<3000x128xf32, #tpu.memory_space<vmem>>, vector<1x64xf32>
    %407 = vector.broadcast %406 : vector<1x64xf32> to vector<8x64xf32>
    %408 = arith.addf %405, %407 : vector<8x64xf32>
    %c1728 = arith.constant 1728 : index
    %c0_127 = arith.constant 0 : index
    %409 = vector.load %arg7[%c1728, %c0_127] : memref<3000x128xf32, #tpu.memory_space<vmem>>, vector<64x128xf32>
    %cst_128 = arith.constant dense<0.000000e+00> : vector<10x128xf32>
    %410 = tpu.matmul %144, %409, %cst_128 {dimension_numbers = #tpu.dot_dimension_numbers<[1], [0], [0], [1], [0, 0, 1, 1], [], []>} : vector<10x64xf32>, vector<64x128xf32>, vector<10x128xf32> -> vector<10x128xf32>
    %c1792 = arith.constant 1792 : index
    %c0_129 = arith.constant 0 : index
    %411 = vector.load %arg7[%c1792, %c0_129] : memref<3000x128xf32, #tpu.memory_space<vmem>>, vector<1x128xf32>
    %412 = vector.broadcast %411 : vector<1x128xf32> to vector<10x128xf32>
    %413 = arith.addf %410, %412 : vector<10x128xf32>
    %414 = vector.extract_strided_slice %413 {offsets = [0, 0], sizes = [10, 64], strides = [1, 1]} : vector<10x128xf32> to vector<10x64xf32>
    %415 = vector.extract_strided_slice %413 {offsets = [0, 64], sizes = [10, 64], strides = [1, 1]} : vector<10x128xf32> to vector<10x64xf32>
    %416 = vector.broadcast %19 : vector<1x64xf32> to vector<8x64xf32>
    %417 = arith.mulf %408, %416 : vector<8x64xf32>
    %418 = vector.broadcast %26 : vector<1x64xf32> to vector<8x64xf32>
    %419 = arith.mulf %408, %418 : vector<8x64xf32>
    %420 = vector.broadcast %33 : vector<1x64xf32> to vector<8x64xf32>
    %421 = arith.mulf %408, %420 : vector<8x64xf32>
    %422 = vector.broadcast %40 : vector<1x64xf32> to vector<8x64xf32>
    %423 = arith.mulf %408, %422 : vector<8x64xf32>
    %424 = vector.broadcast %47 : vector<1x64xf32> to vector<8x64xf32>
    %425 = arith.mulf %408, %424 : vector<8x64xf32>
    %426 = vector.broadcast %54 : vector<1x64xf32> to vector<8x64xf32>
    %427 = arith.mulf %408, %426 : vector<8x64xf32>
    %428 = vector.broadcast %61 : vector<1x64xf32> to vector<8x64xf32>
    %429 = arith.mulf %408, %428 : vector<8x64xf32>
    %430 = vector.broadcast %68 : vector<1x64xf32> to vector<8x64xf32>
    %431 = arith.mulf %408, %430 : vector<8x64xf32>
    %432 = tpu.concatenate %417, %419, %421, %423, %425, %427, %429, %431 in 0 : vector<8x64xf32>, vector<8x64xf32>, vector<8x64xf32>, vector<8x64xf32>, vector<8x64xf32>, vector<8x64xf32>, vector<8x64xf32>, vector<8x64xf32> -> vector<64x64xf32>
    %cst_130 = arith.constant dense<0.000000e+00> : vector<64x10xf32>
    %433 = tpu.matmul %432, %414, %cst_130 {dimension_numbers = #tpu.dot_dimension_numbers<[1], [1], [0], [0], [0, 0, 1, 0], [], []>} : vector<64x64xf32>, vector<10x64xf32>, vector<64x10xf32> -> vector<64x10xf32>
    %434 = vector.broadcast %11 : vector<1x10xf32> to vector<64x10xf32>
    %435 = arith.addf %433, %434 : vector<64x10xf32>
    %cst_131 = arith.constant dense<0xFF800000> : vector<64xf32>
    %436 = vector.multi_reduction <maximumf>, %435, %cst_131 [1] : vector<64x10xf32> to vector<64xf32>
    %437 = vector.shape_cast %436 : vector<64xf32> to vector<64x1xf32>
    %438 = vector.broadcast %437 : vector<64x1xf32> to vector<64x10xf32>
    %439 = arith.subf %435, %438 : vector<64x10xf32>
    %440 = math.exp %439 : vector<64x10xf32>
    %cst_132 = arith.constant dense<0.000000e+00> : vector<64xf32>
    %441 = vector.multi_reduction <add>, %440, %cst_132 [1] : vector<64x10xf32> to vector<64xf32>
    %442 = vector.shape_cast %441 : vector<64xf32> to vector<64x1xf32>
    %443 = vector.broadcast %442 : vector<64x1xf32> to vector<64x10xf32>
    %444 = arith.divf %440, %443 : vector<64x10xf32>
    %cst_133 = arith.constant dense<0.000000e+00> : vector<64x64xf32>
    %445 = tpu.matmul %444, %415, %cst_133 {dimension_numbers = #tpu.dot_dimension_numbers<[1], [0], [0], [1], [0, 0, 1, 1], [], []>} : vector<64x10xf32>, vector<10x64xf32>, vector<64x64xf32> -> vector<64x64xf32>
    %446 = vector.extract_strided_slice %445 {offsets = [0, 0], sizes = [8, 64], strides = [1, 1]} : vector<64x64xf32> to vector<8x64xf32>
    %447 = vector.broadcast %19 : vector<1x64xf32> to vector<8x64xf32>
    %448 = arith.mulf %446, %447 : vector<8x64xf32>
    %449 = vector.extract_strided_slice %445 {offsets = [8, 0], sizes = [8, 64], strides = [1, 1]} : vector<64x64xf32> to vector<8x64xf32>
    %450 = vector.broadcast %26 : vector<1x64xf32> to vector<8x64xf32>
    %451 = arith.mulf %449, %450 : vector<8x64xf32>
    %452 = arith.addf %448, %451 : vector<8x64xf32>
    %453 = vector.extract_strided_slice %445 {offsets = [16, 0], sizes = [8, 64], strides = [1, 1]} : vector<64x64xf32> to vector<8x64xf32>
    %454 = vector.broadcast %33 : vector<1x64xf32> to vector<8x64xf32>
    %455 = arith.mulf %453, %454 : vector<8x64xf32>
    %456 = arith.addf %452, %455 : vector<8x64xf32>
    %457 = vector.extract_strided_slice %445 {offsets = [24, 0], sizes = [8, 64], strides = [1, 1]} : vector<64x64xf32> to vector<8x64xf32>
    %458 = vector.broadcast %40 : vector<1x64xf32> to vector<8x64xf32>
    %459 = arith.mulf %457, %458 : vector<8x64xf32>
    %460 = arith.addf %456, %459 : vector<8x64xf32>
    %461 = vector.extract_strided_slice %445 {offsets = [32, 0], sizes = [8, 64], strides = [1, 1]} : vector<64x64xf32> to vector<8x64xf32>
    %462 = vector.broadcast %47 : vector<1x64xf32> to vector<8x64xf32>
    %463 = arith.mulf %461, %462 : vector<8x64xf32>
    %464 = arith.addf %460, %463 : vector<8x64xf32>
    %465 = vector.extract_strided_slice %445 {offsets = [40, 0], sizes = [8, 64], strides = [1, 1]} : vector<64x64xf32> to vector<8x64xf32>
    %466 = vector.broadcast %54 : vector<1x64xf32> to vector<8x64xf32>
    %467 = arith.mulf %465, %466 : vector<8x64xf32>
    %468 = arith.addf %464, %467 : vector<8x64xf32>
    %469 = vector.extract_strided_slice %445 {offsets = [48, 0], sizes = [8, 64], strides = [1, 1]} : vector<64x64xf32> to vector<8x64xf32>
    %470 = vector.broadcast %61 : vector<1x64xf32> to vector<8x64xf32>
    %471 = arith.mulf %469, %470 : vector<8x64xf32>
    %472 = arith.addf %468, %471 : vector<8x64xf32>
    %473 = vector.extract_strided_slice %445 {offsets = [56, 0], sizes = [8, 64], strides = [1, 1]} : vector<64x64xf32> to vector<8x64xf32>
    %474 = vector.broadcast %68 : vector<1x64xf32> to vector<8x64xf32>
    %475 = arith.mulf %473, %474 : vector<8x64xf32>
    %476 = arith.addf %472, %475 : vector<8x64xf32>
    %c1800 = arith.constant 1800 : index
    %c0_134 = arith.constant 0 : index
    %477 = vector.load %arg7[%c1800, %c0_134] : memref<3000x128xf32, #tpu.memory_space<vmem>>, vector<64x64xf32>
    %cst_135 = arith.constant dense<0.000000e+00> : vector<8x64xf32>
    %478 = tpu.matmul %476, %477, %cst_135 {dimension_numbers = #tpu.dot_dimension_numbers<[1], [0], [0], [1], [0, 0, 1, 1], [], []>} : vector<8x64xf32>, vector<64x64xf32>, vector<8x64xf32> -> vector<8x64xf32>
    %c1864 = arith.constant 1864 : index
    %c0_136 = arith.constant 0 : index
    %479 = vector.load %arg7[%c1864, %c0_136] : memref<3000x128xf32, #tpu.memory_space<vmem>>, vector<1x64xf32>
    %480 = vector.broadcast %479 : vector<1x64xf32> to vector<8x64xf32>
    %481 = arith.addf %478, %480 : vector<8x64xf32>
    %482 = arith.addf %481, %302 : vector<8x64xf32>
    %483 = arith.addf %302, %482 : vector<8x64xf32>
    %484 = arith.addf %483, %403 : vector<8x64xf32>
    %c1888 = arith.constant 1888 : index
    %c0_137 = arith.constant 0 : index
    %485 = vector.load %arg7[%c1888, %c0_137] : memref<3000x128xf32, #tpu.memory_space<vmem>>, vector<64x128xf32>
    %cst_138 = arith.constant dense<0.000000e+00> : vector<8x128xf32>
    %486 = tpu.matmul %484, %485, %cst_138 {dimension_numbers = #tpu.dot_dimension_numbers<[1], [0], [0], [1], [0, 0, 1, 1], [], []>} : vector<8x64xf32>, vector<64x128xf32>, vector<8x128xf32> -> vector<8x128xf32>
    %c1952 = arith.constant 1952 : index
    %c0_139 = arith.constant 0 : index
    %487 = vector.load %arg7[%c1952, %c0_139] : memref<3000x128xf32, #tpu.memory_space<vmem>>, vector<1x128xf32>
    %488 = vector.broadcast %487 : vector<1x128xf32> to vector<8x128xf32>
    %489 = arith.addf %486, %488 : vector<8x128xf32>
    %cst_140 = arith.constant 0.000000e+00 : f32
    %490 = vector.broadcast %cst_140 : f32 to vector<8x128xf32>
    %491 = arith.maximumf %489, %490 : vector<8x128xf32>
    %c1960 = arith.constant 1960 : index
    %c0_141 = arith.constant 0 : index
    %492 = vector.load %arg7[%c1960, %c0_141] : memref<3000x128xf32, #tpu.memory_space<vmem>>, vector<128x64xf32>
    %cst_142 = arith.constant dense<0.000000e+00> : vector<8x64xf32>
    %493 = tpu.matmul %491, %492, %cst_142 {dimension_numbers = #tpu.dot_dimension_numbers<[1], [0], [0], [1], [0, 0, 1, 1], [], []>} : vector<8x128xf32>, vector<128x64xf32>, vector<8x64xf32> -> vector<8x64xf32>
    %c2088 = arith.constant 2088 : index
    %c0_143 = arith.constant 0 : index
    %494 = vector.load %arg7[%c2088, %c0_143] : memref<3000x128xf32, #tpu.memory_space<vmem>>, vector<1x64xf32>
    %495 = vector.broadcast %494 : vector<1x64xf32> to vector<8x64xf32>
    %496 = arith.addf %493, %495 : vector<8x64xf32>
    %497 = arith.addf %496, %484 : vector<8x64xf32>
    %c2096 = arith.constant 2096 : index
    %c0_144 = arith.constant 0 : index
    %498 = vector.load %arg7[%c2096, %c0_144] : memref<3000x128xf32, #tpu.memory_space<vmem>>, vector<1x64xf32>
    %c2104 = arith.constant 2104 : index
    %c0_145 = arith.constant 0 : index
    %499 = vector.load %arg7[%c2104, %c0_145] : memref<3000x128xf32, #tpu.memory_space<vmem>>, vector<1x64xf32>
    %cst_146 = arith.constant dense<0.000000e+00> : vector<8xf32>
    %500 = vector.multi_reduction <add>, %497, %cst_146 [1] : vector<8x64xf32> to vector<8xf32>
    %501 = vector.shape_cast %500 : vector<8xf32> to vector<8x1xf32>
    %cst_147 = arith.constant 6.400000e+01 : f32
    %502 = vector.broadcast %cst_147 : f32 to vector<8x1xf32>
    %503 = arith.divf %501, %502 : vector<8x1xf32>
    %504 = vector.broadcast %503 : vector<8x1xf32> to vector<8x64xf32>
    %505 = arith.subf %497, %504 : vector<8x64xf32>
    %506 = arith.mulf %505, %505 : vector<8x64xf32>
    %cst_148 = arith.constant dense<0.000000e+00> : vector<8xf32>
    %507 = vector.multi_reduction <add>, %506, %cst_148 [1] : vector<8x64xf32> to vector<8xf32>
    %508 = vector.shape_cast %507 : vector<8xf32> to vector<8x1xf32>
    %cst_149 = arith.constant 6.400000e+01 : f32
    %509 = vector.broadcast %cst_149 : f32 to vector<8x1xf32>
    %510 = arith.divf %508, %509 : vector<8x1xf32>
    %511 = vector.broadcast %503 : vector<8x1xf32> to vector<8x64xf32>
    %512 = arith.subf %497, %511 : vector<8x64xf32>
    %cst_150 = arith.constant 9.99999974E-6 : f32
    %513 = vector.broadcast %cst_150 : f32 to vector<8x1xf32>
    %514 = arith.addf %510, %513 : vector<8x1xf32>
    %515 = math.rsqrt %514 : vector<8x1xf32>
    %516 = vector.broadcast %515 : vector<8x1xf32> to vector<8x64xf32>
    %517 = arith.mulf %512, %516 : vector<8x64xf32>
    %518 = vector.broadcast %498 : vector<1x64xf32> to vector<8x64xf32>
    %519 = arith.mulf %517, %518 : vector<8x64xf32>
    %520 = vector.broadcast %499 : vector<1x64xf32> to vector<8x64xf32>
    %521 = arith.addf %519, %520 : vector<8x64xf32>
    %c920_151 = arith.constant 920 : index
    %c0_152 = arith.constant 0 : index
    %522 = vector.load %arg7[%c920_151, %c0_152] : memref<3000x128xf32, #tpu.memory_space<vmem>>, vector<1x64xf32>
    %c928_153 = arith.constant 928 : index
    %c0_154 = arith.constant 0 : index
    %523 = vector.load %arg7[%c928_153, %c0_154] : memref<3000x128xf32, #tpu.memory_space<vmem>>, vector<1x64xf32>
    %cst_155 = arith.constant dense<0.000000e+00> : vector<8xf32>
    %524 = vector.multi_reduction <add>, %521, %cst_155 [1] : vector<8x64xf32> to vector<8xf32>
    %525 = vector.shape_cast %524 : vector<8xf32> to vector<8x1xf32>
    %cst_156 = arith.constant 6.400000e+01 : f32
    %526 = vector.broadcast %cst_156 : f32 to vector<8x1xf32>
    %527 = arith.divf %525, %526 : vector<8x1xf32>
    %528 = vector.broadcast %527 : vector<8x1xf32> to vector<8x64xf32>
    %529 = arith.subf %521, %528 : vector<8x64xf32>
    %530 = arith.mulf %529, %529 : vector<8x64xf32>
    %cst_157 = arith.constant dense<0.000000e+00> : vector<8xf32>
    %531 = vector.multi_reduction <add>, %530, %cst_157 [1] : vector<8x64xf32> to vector<8xf32>
    %532 = vector.shape_cast %531 : vector<8xf32> to vector<8x1xf32>
    %cst_158 = arith.constant 6.400000e+01 : f32
    %533 = vector.broadcast %cst_158 : f32 to vector<8x1xf32>
    %534 = arith.divf %532, %533 : vector<8x1xf32>
    %535 = vector.broadcast %527 : vector<8x1xf32> to vector<8x64xf32>
    %536 = arith.subf %521, %535 : vector<8x64xf32>
    %cst_159 = arith.constant 9.99999974E-6 : f32
    %537 = vector.broadcast %cst_159 : f32 to vector<8x1xf32>
    %538 = arith.addf %534, %537 : vector<8x1xf32>
    %539 = math.rsqrt %538 : vector<8x1xf32>
    %540 = vector.broadcast %539 : vector<8x1xf32> to vector<8x64xf32>
    %541 = arith.mulf %536, %540 : vector<8x64xf32>
    %542 = vector.broadcast %522 : vector<1x64xf32> to vector<8x64xf32>
    %543 = arith.mulf %541, %542 : vector<8x64xf32>
    %544 = vector.broadcast %523 : vector<1x64xf32> to vector<8x64xf32>
    %545 = arith.addf %543, %544 : vector<8x64xf32>
    %c936_160 = arith.constant 936 : index
    %c0_161 = arith.constant 0 : index
    %546 = vector.load %arg7[%c936_160, %c0_161] : memref<3000x128xf32, #tpu.memory_space<vmem>>, vector<64x64xf32>
    %cst_162 = arith.constant dense<0.000000e+00> : vector<8x64xf32>
    %547 = tpu.matmul %545, %546, %cst_162 {dimension_numbers = #tpu.dot_dimension_numbers<[1], [0], [0], [1], [0, 0, 1, 1], [], []>} : vector<8x64xf32>, vector<64x64xf32>, vector<8x64xf32> -> vector<8x64xf32>
    %c1000_163 = arith.constant 1000 : index
    %c0_164 = arith.constant 0 : index
    %548 = vector.load %arg7[%c1000_163, %c0_164] : memref<3000x128xf32, #tpu.memory_space<vmem>>, vector<1x64xf32>
    %549 = vector.broadcast %548 : vector<1x64xf32> to vector<8x64xf32>
    %550 = arith.addf %547, %549 : vector<8x64xf32>
    %cst_165 = arith.constant 0.000000e+00 : f32
    %551 = vector.broadcast %cst_165 : f32 to vector<8x64xf32>
    %552 = arith.maximumf %550, %551 : vector<8x64xf32>
    %c1008_166 = arith.constant 1008 : index
    %c0_167 = arith.constant 0 : index
    %553 = vector.load %arg7[%c1008_166, %c0_167] : memref<3000x128xf32, #tpu.memory_space<vmem>>, vector<64x1xf32>
    %cst_168 = arith.constant dense<0.000000e+00> : vector<8x1xf32>
    %554 = tpu.matmul %552, %553, %cst_168 {dimension_numbers = #tpu.dot_dimension_numbers<[1], [0], [0], [1], [0, 0, 1, 1], [], []>} : vector<8x64xf32>, vector<64x1xf32>, vector<8x1xf32> -> vector<8x1xf32>
    %c1072_169 = arith.constant 1072 : index
    %c0_170 = arith.constant 0 : index
    %555 = vector.load %arg7[%c1072_169, %c0_170] : memref<3000x128xf32, #tpu.memory_space<vmem>>, vector<1x1xf32>
    %556 = vector.broadcast %555 : vector<1x1xf32> to vector<8x1xf32>
    %557 = arith.addf %554, %556 : vector<8x1xf32>
    %cst_171 = arith.constant dense<0.000000e+00> : vector<8x16xf32>
    %558 = tpu.matmul %545, %115, %cst_171 {dimension_numbers = #tpu.dot_dimension_numbers<[1], [1], [0], [0], [0, 0, 1, 0], [], []>} : vector<8x64xf32>, vector<16x64xf32>, vector<8x16xf32> -> vector<8x16xf32>
    %c1080_172 = arith.constant 1080 : index
    %c0_173 = arith.constant 0 : index
    %559 = vector.load %arg7[%c1080_172, %c0_173] : memref<3000x128xf32, #tpu.memory_space<vmem>>, vector<64x64xf32>
    %cst_174 = arith.constant dense<0.000000e+00> : vector<8x64xf32>
    %560 = tpu.matmul %521, %559, %cst_174 {dimension_numbers = #tpu.dot_dimension_numbers<[1], [0], [0], [1], [0, 0, 1, 1], [], []>} : vector<8x64xf32>, vector<64x64xf32>, vector<8x64xf32> -> vector<8x64xf32>
    %c1144_175 = arith.constant 1144 : index
    %c0_176 = arith.constant 0 : index
    %561 = vector.load %arg7[%c1144_175, %c0_176] : memref<3000x128xf32, #tpu.memory_space<vmem>>, vector<1x64xf32>
    %562 = vector.broadcast %561 : vector<1x64xf32> to vector<8x64xf32>
    %563 = arith.addf %560, %562 : vector<8x64xf32>
    %cst_177 = arith.constant 0.000000e+00 : f32
    %564 = vector.broadcast %cst_177 : f32 to vector<8x64xf32>
    %565 = arith.maximumf %563, %564 : vector<8x64xf32>
    %c1152_178 = arith.constant 1152 : index
    %c0_179 = arith.constant 0 : index
    %566 = vector.load %arg7[%c1152_178, %c0_179] : memref<3000x128xf32, #tpu.memory_space<vmem>>, vector<64x2xf32>
    %cst_180 = arith.constant dense<0.000000e+00> : vector<8x2xf32>
    %567 = tpu.matmul %565, %566, %cst_180 {dimension_numbers = #tpu.dot_dimension_numbers<[1], [0], [0], [1], [0, 0, 1, 1], [], []>} : vector<8x64xf32>, vector<64x2xf32>, vector<8x2xf32> -> vector<8x2xf32>
    %c1216_181 = arith.constant 1216 : index
    %c0_182 = arith.constant 0 : index
    %568 = vector.load %arg7[%c1216_181, %c0_182] : memref<3000x128xf32, #tpu.memory_space<vmem>>, vector<1x2xf32>
    %569 = vector.broadcast %568 : vector<1x2xf32> to vector<8x2xf32>
    %570 = arith.addf %567, %569 : vector<8x2xf32>
    %cst_183 = arith.constant 0.000000e+00 : f32
    %571 = vector.broadcast %cst_183 : f32 to vector<8x109xf32>
    %572 = tpu.concatenate %558, %557, %570, %571 in 1 : vector<8x16xf32>, vector<8x1xf32>, vector<8x2xf32>, vector<8x109xf32> -> vector<8x128xf32>
    %c0_184 = arith.constant 0 : index
    %c1 = arith.constant 1 : index
    %c0_185 = arith.constant 0 : index
    %c0_186 = arith.constant 0 : index
    %573 = vector.load %arg8[%c0_184, %c1, %c0_185, %c0_186] : memref<1x3x8x128xf32, #tpu.memory_space<vmem>>, vector<1x1x8x128xf32>
    %574 = vector.shape_cast %573 : vector<1x1x8x128xf32> to vector<8x128xf32>
    %575 = vector.shape_cast %572 : vector<8x128xf32> to vector<1x1x8x128xf32>
    tpu.vector_store %arg8[%c0_184, %c1, %c0_185, %c0_186], %575 {strides = array<i32>} : memref<1x3x8x128xf32, #tpu.memory_space<vmem>>, vector<1x1x8x128xf32>,
    %c2112 = arith.constant 2112 : index
    %c0_187 = arith.constant 0 : index
    %576 = vector.load %arg7[%c2112, %c0_187] : memref<3000x128xf32, #tpu.memory_space<vmem>>, vector<64x64xf32>
    %cst_188 = arith.constant dense<0.000000e+00> : vector<8x64xf32>
    %577 = tpu.matmul %521, %576, %cst_188 {dimension_numbers = #tpu.dot_dimension_numbers<[1], [0], [0], [1], [0, 0, 1, 1], [], []>} : vector<8x64xf32>, vector<64x64xf32>, vector<8x64xf32> -> vector<8x64xf32>
    %c2176 = arith.constant 2176 : index
    %c0_189 = arith.constant 0 : index
    %578 = vector.load %arg7[%c2176, %c0_189] : memref<3000x128xf32, #tpu.memory_space<vmem>>, vector<1x64xf32>
    %579 = vector.broadcast %578 : vector<1x64xf32> to vector<8x64xf32>
    %580 = arith.addf %577, %579 : vector<8x64xf32>
    %c2184 = arith.constant 2184 : index
    %c0_190 = arith.constant 0 : index
    %581 = vector.load %arg7[%c2184, %c0_190] : memref<3000x128xf32, #tpu.memory_space<vmem>>, vector<64x128xf32>
    %cst_191 = arith.constant dense<0.000000e+00> : vector<16x128xf32>
    %582 = tpu.matmul %101, %581, %cst_191 {dimension_numbers = #tpu.dot_dimension_numbers<[1], [0], [0], [1], [0, 0, 1, 1], [], []>} : vector<16x64xf32>, vector<64x128xf32>, vector<16x128xf32> -> vector<16x128xf32>
    %c2248 = arith.constant 2248 : index
    %c0_192 = arith.constant 0 : index
    %583 = vector.load %arg7[%c2248, %c0_192] : memref<3000x128xf32, #tpu.memory_space<vmem>>, vector<1x128xf32>
    %584 = vector.broadcast %583 : vector<1x128xf32> to vector<16x128xf32>
    %585 = arith.addf %582, %584 : vector<16x128xf32>
    %586 = vector.extract_strided_slice %585 {offsets = [0, 0], sizes = [16, 64], strides = [1, 1]} : vector<16x128xf32> to vector<16x64xf32>
    %587 = vector.extract_strided_slice %585 {offsets = [0, 64], sizes = [16, 64], strides = [1, 1]} : vector<16x128xf32> to vector<16x64xf32>
    %588 = vector.broadcast %19 : vector<1x64xf32> to vector<8x64xf32>
    %589 = arith.mulf %580, %588 : vector<8x64xf32>
    %590 = vector.broadcast %26 : vector<1x64xf32> to vector<8x64xf32>
    %591 = arith.mulf %580, %590 : vector<8x64xf32>
    %592 = vector.broadcast %33 : vector<1x64xf32> to vector<8x64xf32>
    %593 = arith.mulf %580, %592 : vector<8x64xf32>
    %594 = vector.broadcast %40 : vector<1x64xf32> to vector<8x64xf32>
    %595 = arith.mulf %580, %594 : vector<8x64xf32>
    %596 = vector.broadcast %47 : vector<1x64xf32> to vector<8x64xf32>
    %597 = arith.mulf %580, %596 : vector<8x64xf32>
    %598 = vector.broadcast %54 : vector<1x64xf32> to vector<8x64xf32>
    %599 = arith.mulf %580, %598 : vector<8x64xf32>
    %600 = vector.broadcast %61 : vector<1x64xf32> to vector<8x64xf32>
    %601 = arith.mulf %580, %600 : vector<8x64xf32>
    %602 = vector.broadcast %68 : vector<1x64xf32> to vector<8x64xf32>
    %603 = arith.mulf %580, %602 : vector<8x64xf32>
    %604 = tpu.concatenate %589, %591, %593, %595, %597, %599, %601, %603 in 0 : vector<8x64xf32>, vector<8x64xf32>, vector<8x64xf32>, vector<8x64xf32>, vector<8x64xf32>, vector<8x64xf32>, vector<8x64xf32>, vector<8x64xf32> -> vector<64x64xf32>
    %cst_193 = arith.constant dense<0.000000e+00> : vector<64x16xf32>
    %605 = tpu.matmul %604, %586, %cst_193 {dimension_numbers = #tpu.dot_dimension_numbers<[1], [1], [0], [0], [0, 0, 1, 0], [], []>} : vector<64x64xf32>, vector<16x64xf32>, vector<64x16xf32> -> vector<64x16xf32>
    %606 = vector.broadcast %9 : vector<1x16xf32> to vector<64x16xf32>
    %607 = arith.addf %605, %606 : vector<64x16xf32>
    %cst_194 = arith.constant dense<0xFF800000> : vector<64xf32>
    %608 = vector.multi_reduction <maximumf>, %607, %cst_194 [1] : vector<64x16xf32> to vector<64xf32>
    %609 = vector.shape_cast %608 : vector<64xf32> to vector<64x1xf32>
    %610 = vector.broadcast %609 : vector<64x1xf32> to vector<64x16xf32>
    %611 = arith.subf %607, %610 : vector<64x16xf32>
    %612 = math.exp %611 : vector<64x16xf32>
    %cst_195 = arith.constant dense<0.000000e+00> : vector<64xf32>
    %613 = vector.multi_reduction <add>, %612, %cst_195 [1] : vector<64x16xf32> to vector<64xf32>
    %614 = vector.shape_cast %613 : vector<64xf32> to vector<64x1xf32>
    %615 = vector.broadcast %614 : vector<64x1xf32> to vector<64x16xf32>
    %616 = arith.divf %612, %615 : vector<64x16xf32>
    %cst_196 = arith.constant dense<0.000000e+00> : vector<64x64xf32>
    %617 = tpu.matmul %616, %587, %cst_196 {dimension_numbers = #tpu.dot_dimension_numbers<[1], [0], [0], [1], [0, 0, 1, 1], [], []>} : vector<64x16xf32>, vector<16x64xf32>, vector<64x64xf32> -> vector<64x64xf32>
    %618 = vector.extract_strided_slice %617 {offsets = [0, 0], sizes = [8, 64], strides = [1, 1]} : vector<64x64xf32> to vector<8x64xf32>
    %619 = vector.broadcast %19 : vector<1x64xf32> to vector<8x64xf32>
    %620 = arith.mulf %618, %619 : vector<8x64xf32>
    %621 = vector.extract_strided_slice %617 {offsets = [8, 0], sizes = [8, 64], strides = [1, 1]} : vector<64x64xf32> to vector<8x64xf32>
    %622 = vector.broadcast %26 : vector<1x64xf32> to vector<8x64xf32>
    %623 = arith.mulf %621, %622 : vector<8x64xf32>
    %624 = arith.addf %620, %623 : vector<8x64xf32>
    %625 = vector.extract_strided_slice %617 {offsets = [16, 0], sizes = [8, 64], strides = [1, 1]} : vector<64x64xf32> to vector<8x64xf32>
    %626 = vector.broadcast %33 : vector<1x64xf32> to vector<8x64xf32>
    %627 = arith.mulf %625, %626 : vector<8x64xf32>
    %628 = arith.addf %624, %627 : vector<8x64xf32>
    %629 = vector.extract_strided_slice %617 {offsets = [24, 0], sizes = [8, 64], strides = [1, 1]} : vector<64x64xf32> to vector<8x64xf32>
    %630 = vector.broadcast %40 : vector<1x64xf32> to vector<8x64xf32>
    %631 = arith.mulf %629, %630 : vector<8x64xf32>
    %632 = arith.addf %628, %631 : vector<8x64xf32>
    %633 = vector.extract_strided_slice %617 {offsets = [32, 0], sizes = [8, 64], strides = [1, 1]} : vector<64x64xf32> to vector<8x64xf32>
    %634 = vector.broadcast %47 : vector<1x64xf32> to vector<8x64xf32>
    %635 = arith.mulf %633, %634 : vector<8x64xf32>
    %636 = arith.addf %632, %635 : vector<8x64xf32>
    %637 = vector.extract_strided_slice %617 {offsets = [40, 0], sizes = [8, 64], strides = [1, 1]} : vector<64x64xf32> to vector<8x64xf32>
    %638 = vector.broadcast %54 : vector<1x64xf32> to vector<8x64xf32>
    %639 = arith.mulf %637, %638 : vector<8x64xf32>
    %640 = arith.addf %636, %639 : vector<8x64xf32>
    %641 = vector.extract_strided_slice %617 {offsets = [48, 0], sizes = [8, 64], strides = [1, 1]} : vector<64x64xf32> to vector<8x64xf32>
    %642 = vector.broadcast %61 : vector<1x64xf32> to vector<8x64xf32>
    %643 = arith.mulf %641, %642 : vector<8x64xf32>
    %644 = arith.addf %640, %643 : vector<8x64xf32>
    %645 = vector.extract_strided_slice %617 {offsets = [56, 0], sizes = [8, 64], strides = [1, 1]} : vector<64x64xf32> to vector<8x64xf32>
    %646 = vector.broadcast %68 : vector<1x64xf32> to vector<8x64xf32>
    %647 = arith.mulf %645, %646 : vector<8x64xf32>
    %648 = arith.addf %644, %647 : vector<8x64xf32>
    %c2256 = arith.constant 2256 : index
    %c0_197 = arith.constant 0 : index
    %649 = vector.load %arg7[%c2256, %c0_197] : memref<3000x128xf32, #tpu.memory_space<vmem>>, vector<64x64xf32>
    %cst_198 = arith.constant dense<0.000000e+00> : vector<8x64xf32>
    %650 = tpu.matmul %648, %649, %cst_198 {dimension_numbers = #tpu.dot_dimension_numbers<[1], [0], [0], [1], [0, 0, 1, 1], [], []>} : vector<8x64xf32>, vector<64x64xf32>, vector<8x64xf32> -> vector<8x64xf32>
    %c2320 = arith.constant 2320 : index
    %c0_199 = arith.constant 0 : index
    %651 = vector.load %arg7[%c2320, %c0_199] : memref<3000x128xf32, #tpu.memory_space<vmem>>, vector<1x64xf32>
    %652 = vector.broadcast %651 : vector<1x64xf32> to vector<8x64xf32>
    %653 = arith.addf %650, %652 : vector<8x64xf32>
    %654 = arith.addf %653, %521 : vector<8x64xf32>
    %c2328 = arith.constant 2328 : index
    %c0_200 = arith.constant 0 : index
    %655 = vector.load %arg7[%c2328, %c0_200] : memref<3000x128xf32, #tpu.memory_space<vmem>>, vector<64x64xf32>
    %cst_201 = arith.constant dense<0.000000e+00> : vector<8x64xf32>
    %656 = tpu.matmul %654, %655, %cst_201 {dimension_numbers = #tpu.dot_dimension_numbers<[1], [0], [0], [1], [0, 0, 1, 1], [], []>} : vector<8x64xf32>, vector<64x64xf32>, vector<8x64xf32> -> vector<8x64xf32>
    %c2392 = arith.constant 2392 : index
    %c0_202 = arith.constant 0 : index
    %657 = vector.load %arg7[%c2392, %c0_202] : memref<3000x128xf32, #tpu.memory_space<vmem>>, vector<1x64xf32>
    %658 = vector.broadcast %657 : vector<1x64xf32> to vector<8x64xf32>
    %659 = arith.addf %656, %658 : vector<8x64xf32>
    %c2400 = arith.constant 2400 : index
    %c0_203 = arith.constant 0 : index
    %660 = vector.load %arg7[%c2400, %c0_203] : memref<3000x128xf32, #tpu.memory_space<vmem>>, vector<64x128xf32>
    %cst_204 = arith.constant dense<0.000000e+00> : vector<8x128xf32>
    %661 = tpu.matmul %654, %660, %cst_204 {dimension_numbers = #tpu.dot_dimension_numbers<[1], [0], [0], [1], [0, 0, 1, 1], [], []>} : vector<8x64xf32>, vector<64x128xf32>, vector<8x128xf32> -> vector<8x128xf32>
    %c2464 = arith.constant 2464 : index
    %c0_205 = arith.constant 0 : index
    %662 = vector.load %arg7[%c2464, %c0_205] : memref<3000x128xf32, #tpu.memory_space<vmem>>, vector<1x128xf32>
    %663 = vector.broadcast %662 : vector<1x128xf32> to vector<8x128xf32>
    %664 = arith.addf %661, %663 : vector<8x128xf32>
    %665 = vector.extract_strided_slice %664 {offsets = [0, 0], sizes = [8, 64], strides = [1, 1]} : vector<8x128xf32> to vector<8x64xf32>
    %666 = vector.extract_strided_slice %664 {offsets = [0, 64], sizes = [8, 64], strides = [1, 1]} : vector<8x128xf32> to vector<8x64xf32>
    %667 = vector.broadcast %19 : vector<1x64xf32> to vector<8x64xf32>
    %668 = arith.mulf %659, %667 : vector<8x64xf32>
    %669 = vector.broadcast %26 : vector<1x64xf32> to vector<8x64xf32>
    %670 = arith.mulf %659, %669 : vector<8x64xf32>
    %671 = vector.broadcast %33 : vector<1x64xf32> to vector<8x64xf32>
    %672 = arith.mulf %659, %671 : vector<8x64xf32>
    %673 = vector.broadcast %40 : vector<1x64xf32> to vector<8x64xf32>
    %674 = arith.mulf %659, %673 : vector<8x64xf32>
    %675 = vector.broadcast %47 : vector<1x64xf32> to vector<8x64xf32>
    %676 = arith.mulf %659, %675 : vector<8x64xf32>
    %677 = vector.broadcast %54 : vector<1x64xf32> to vector<8x64xf32>
    %678 = arith.mulf %659, %677 : vector<8x64xf32>
    %679 = vector.broadcast %61 : vector<1x64xf32> to vector<8x64xf32>
    %680 = arith.mulf %659, %679 : vector<8x64xf32>
    %681 = vector.broadcast %68 : vector<1x64xf32> to vector<8x64xf32>
    %682 = arith.mulf %659, %681 : vector<8x64xf32>
    %683 = tpu.concatenate %668, %670, %672, %674, %676, %678, %680, %682 in 0 : vector<8x64xf32>, vector<8x64xf32>, vector<8x64xf32>, vector<8x64xf32>, vector<8x64xf32>, vector<8x64xf32>, vector<8x64xf32>, vector<8x64xf32> -> vector<64x64xf32>
    %cst_206 = arith.constant dense<0.000000e+00> : vector<64x8xf32>
    %684 = tpu.matmul %683, %665, %cst_206 {dimension_numbers = #tpu.dot_dimension_numbers<[1], [1], [0], [0], [0, 0, 1, 0], [], []>} : vector<64x64xf32>, vector<8x64xf32>, vector<64x8xf32> -> vector<64x8xf32>
    %cst_207 = arith.constant dense<0xFF800000> : vector<64xf32>
    %685 = vector.multi_reduction <maximumf>, %684, %cst_207 [1] : vector<64x8xf32> to vector<64xf32>
    %686 = vector.shape_cast %685 : vector<64xf32> to vector<64x1xf32>
    %687 = vector.broadcast %686 : vector<64x1xf32> to vector<64x8xf32>
    %688 = arith.subf %684, %687 : vector<64x8xf32>
    %689 = math.exp %688 : vector<64x8xf32>
    %cst_208 = arith.constant dense<0.000000e+00> : vector<64xf32>
    %690 = vector.multi_reduction <add>, %689, %cst_208 [1] : vector<64x8xf32> to vector<64xf32>
    %691 = vector.shape_cast %690 : vector<64xf32> to vector<64x1xf32>
    %692 = vector.broadcast %691 : vector<64x1xf32> to vector<64x8xf32>
    %693 = arith.divf %689, %692 : vector<64x8xf32>
    %cst_209 = arith.constant dense<0.000000e+00> : vector<64x64xf32>
    %694 = tpu.matmul %693, %666, %cst_209 {dimension_numbers = #tpu.dot_dimension_numbers<[1], [0], [0], [1], [0, 0, 1, 1], [], []>} : vector<64x8xf32>, vector<8x64xf32>, vector<64x64xf32> -> vector<64x64xf32>
    %695 = vector.extract_strided_slice %694 {offsets = [0, 0], sizes = [8, 64], strides = [1, 1]} : vector<64x64xf32> to vector<8x64xf32>
    %696 = vector.broadcast %19 : vector<1x64xf32> to vector<8x64xf32>
    %697 = arith.mulf %695, %696 : vector<8x64xf32>
    %698 = vector.extract_strided_slice %694 {offsets = [8, 0], sizes = [8, 64], strides = [1, 1]} : vector<64x64xf32> to vector<8x64xf32>
    %699 = vector.broadcast %26 : vector<1x64xf32> to vector<8x64xf32>
    %700 = arith.mulf %698, %699 : vector<8x64xf32>
    %701 = arith.addf %697, %700 : vector<8x64xf32>
    %702 = vector.extract_strided_slice %694 {offsets = [16, 0], sizes = [8, 64], strides = [1, 1]} : vector<64x64xf32> to vector<8x64xf32>
    %703 = vector.broadcast %33 : vector<1x64xf32> to vector<8x64xf32>
    %704 = arith.mulf %702, %703 : vector<8x64xf32>
    %705 = arith.addf %701, %704 : vector<8x64xf32>
    %706 = vector.extract_strided_slice %694 {offsets = [24, 0], sizes = [8, 64], strides = [1, 1]} : vector<64x64xf32> to vector<8x64xf32>
    %707 = vector.broadcast %40 : vector<1x64xf32> to vector<8x64xf32>
    %708 = arith.mulf %706, %707 : vector<8x64xf32>
    %709 = arith.addf %705, %708 : vector<8x64xf32>
    %710 = vector.extract_strided_slice %694 {offsets = [32, 0], sizes = [8, 64], strides = [1, 1]} : vector<64x64xf32> to vector<8x64xf32>
    %711 = vector.broadcast %47 : vector<1x64xf32> to vector<8x64xf32>
    %712 = arith.mulf %710, %711 : vector<8x64xf32>
    %713 = arith.addf %709, %712 : vector<8x64xf32>
    %714 = vector.extract_strided_slice %694 {offsets = [40, 0], sizes = [8, 64], strides = [1, 1]} : vector<64x64xf32> to vector<8x64xf32>
    %715 = vector.broadcast %54 : vector<1x64xf32> to vector<8x64xf32>
    %716 = arith.mulf %714, %715 : vector<8x64xf32>
    %717 = arith.addf %713, %716 : vector<8x64xf32>
    %718 = vector.extract_strided_slice %694 {offsets = [48, 0], sizes = [8, 64], strides = [1, 1]} : vector<64x64xf32> to vector<8x64xf32>
    %719 = vector.broadcast %61 : vector<1x64xf32> to vector<8x64xf32>
    %720 = arith.mulf %718, %719 : vector<8x64xf32>
    %721 = arith.addf %717, %720 : vector<8x64xf32>
    %722 = vector.extract_strided_slice %694 {offsets = [56, 0], sizes = [8, 64], strides = [1, 1]} : vector<64x64xf32> to vector<8x64xf32>
    %723 = vector.broadcast %68 : vector<1x64xf32> to vector<8x64xf32>
    %724 = arith.mulf %722, %723 : vector<8x64xf32>
    %725 = arith.addf %721, %724 : vector<8x64xf32>
    %c2472 = arith.constant 2472 : index
    %c0_210 = arith.constant 0 : index
    %726 = vector.load %arg7[%c2472, %c0_210] : memref<3000x128xf32, #tpu.memory_space<vmem>>, vector<64x64xf32>
    %cst_211 = arith.constant dense<0.000000e+00> : vector<8x64xf32>
    %727 = tpu.matmul %725, %726, %cst_211 {dimension_numbers = #tpu.dot_dimension_numbers<[1], [0], [0], [1], [0, 0, 1, 1], [], []>} : vector<8x64xf32>, vector<64x64xf32>, vector<8x64xf32> -> vector<8x64xf32>
    %c2536 = arith.constant 2536 : index
    %c0_212 = arith.constant 0 : index
    %728 = vector.load %arg7[%c2536, %c0_212] : memref<3000x128xf32, #tpu.memory_space<vmem>>, vector<1x64xf32>
    %729 = vector.broadcast %728 : vector<1x64xf32> to vector<8x64xf32>
    %730 = arith.addf %727, %729 : vector<8x64xf32>
    %731 = arith.addf %730, %654 : vector<8x64xf32>
    %c2760 = arith.constant 2760 : index
    %c0_213 = arith.constant 0 : index
    %732 = vector.load %arg7[%c2760, %c0_213] : memref<3000x128xf32, #tpu.memory_space<vmem>>, vector<1x64xf32>
    %c2768 = arith.constant 2768 : index
    %c0_214 = arith.constant 0 : index
    %733 = vector.load %arg7[%c2768, %c0_214] : memref<3000x128xf32, #tpu.memory_space<vmem>>, vector<1x64xf32>
    %cst_215 = arith.constant dense<0.000000e+00> : vector<8xf32>
    %734 = vector.multi_reduction <add>, %731, %cst_215 [1] : vector<8x64xf32> to vector<8xf32>
    %735 = vector.shape_cast %734 : vector<8xf32> to vector<8x1xf32>
    %cst_216 = arith.constant 6.400000e+01 : f32
    %736 = vector.broadcast %cst_216 : f32 to vector<8x1xf32>
    %737 = arith.divf %735, %736 : vector<8x1xf32>
    %738 = vector.broadcast %737 : vector<8x1xf32> to vector<8x64xf32>
    %739 = arith.subf %731, %738 : vector<8x64xf32>
    %740 = arith.mulf %739, %739 : vector<8x64xf32>
    %cst_217 = arith.constant dense<0.000000e+00> : vector<8xf32>
    %741 = vector.multi_reduction <add>, %740, %cst_217 [1] : vector<8x64xf32> to vector<8xf32>
    %742 = vector.shape_cast %741 : vector<8xf32> to vector<8x1xf32>
    %cst_218 = arith.constant 6.400000e+01 : f32
    %743 = vector.broadcast %cst_218 : f32 to vector<8x1xf32>
    %744 = arith.divf %742, %743 : vector<8x1xf32>
    %745 = vector.broadcast %737 : vector<8x1xf32> to vector<8x64xf32>
    %746 = arith.subf %731, %745 : vector<8x64xf32>
    %cst_219 = arith.constant 9.99999974E-6 : f32
    %747 = vector.broadcast %cst_219 : f32 to vector<8x1xf32>
    %748 = arith.addf %744, %747 : vector<8x1xf32>
    %749 = math.rsqrt %748 : vector<8x1xf32>
    %750 = vector.broadcast %749 : vector<8x1xf32> to vector<8x64xf32>
    %751 = arith.mulf %746, %750 : vector<8x64xf32>
    %752 = vector.broadcast %732 : vector<1x64xf32> to vector<8x64xf32>
    %753 = arith.mulf %751, %752 : vector<8x64xf32>
    %754 = vector.broadcast %733 : vector<1x64xf32> to vector<8x64xf32>
    %755 = arith.addf %753, %754 : vector<8x64xf32>
    %c2544 = arith.constant 2544 : index
    %c0_220 = arith.constant 0 : index
    %756 = vector.load %arg7[%c2544, %c0_220] : memref<3000x128xf32, #tpu.memory_space<vmem>>, vector<64x64xf32>
    %cst_221 = arith.constant dense<0.000000e+00> : vector<8x64xf32>
    %757 = tpu.matmul %654, %756, %cst_221 {dimension_numbers = #tpu.dot_dimension_numbers<[1], [0], [0], [1], [0, 0, 1, 1], [], []>} : vector<8x64xf32>, vector<64x64xf32>, vector<8x64xf32> -> vector<8x64xf32>
    %c2608 = arith.constant 2608 : index
    %c0_222 = arith.constant 0 : index
    %758 = vector.load %arg7[%c2608, %c0_222] : memref<3000x128xf32, #tpu.memory_space<vmem>>, vector<1x64xf32>
    %759 = vector.broadcast %758 : vector<1x64xf32> to vector<8x64xf32>
    %760 = arith.addf %757, %759 : vector<8x64xf32>
    %c2616 = arith.constant 2616 : index
    %c0_223 = arith.constant 0 : index
    %761 = vector.load %arg7[%c2616, %c0_223] : memref<3000x128xf32, #tpu.memory_space<vmem>>, vector<64x128xf32>
    %cst_224 = arith.constant dense<0.000000e+00> : vector<10x128xf32>
    %762 = tpu.matmul %144, %761, %cst_224 {dimension_numbers = #tpu.dot_dimension_numbers<[1], [0], [0], [1], [0, 0, 1, 1], [], []>} : vector<10x64xf32>, vector<64x128xf32>, vector<10x128xf32> -> vector<10x128xf32>
    %c2680 = arith.constant 2680 : index
    %c0_225 = arith.constant 0 : index
    %763 = vector.load %arg7[%c2680, %c0_225] : memref<3000x128xf32, #tpu.memory_space<vmem>>, vector<1x128xf32>
    %764 = vector.broadcast %763 : vector<1x128xf32> to vector<10x128xf32>
    %765 = arith.addf %762, %764 : vector<10x128xf32>
    %766 = vector.extract_strided_slice %765 {offsets = [0, 0], sizes = [10, 64], strides = [1, 1]} : vector<10x128xf32> to vector<10x64xf32>
    %767 = vector.extract_strided_slice %765 {offsets = [0, 64], sizes = [10, 64], strides = [1, 1]} : vector<10x128xf32> to vector<10x64xf32>
    %768 = vector.broadcast %19 : vector<1x64xf32> to vector<8x64xf32>
    %769 = arith.mulf %760, %768 : vector<8x64xf32>
    %770 = vector.broadcast %26 : vector<1x64xf32> to vector<8x64xf32>
    %771 = arith.mulf %760, %770 : vector<8x64xf32>
    %772 = vector.broadcast %33 : vector<1x64xf32> to vector<8x64xf32>
    %773 = arith.mulf %760, %772 : vector<8x64xf32>
    %774 = vector.broadcast %40 : vector<1x64xf32> to vector<8x64xf32>
    %775 = arith.mulf %760, %774 : vector<8x64xf32>
    %776 = vector.broadcast %47 : vector<1x64xf32> to vector<8x64xf32>
    %777 = arith.mulf %760, %776 : vector<8x64xf32>
    %778 = vector.broadcast %54 : vector<1x64xf32> to vector<8x64xf32>
    %779 = arith.mulf %760, %778 : vector<8x64xf32>
    %780 = vector.broadcast %61 : vector<1x64xf32> to vector<8x64xf32>
    %781 = arith.mulf %760, %780 : vector<8x64xf32>
    %782 = vector.broadcast %68 : vector<1x64xf32> to vector<8x64xf32>
    %783 = arith.mulf %760, %782 : vector<8x64xf32>
    %784 = tpu.concatenate %769, %771, %773, %775, %777, %779, %781, %783 in 0 : vector<8x64xf32>, vector<8x64xf32>, vector<8x64xf32>, vector<8x64xf32>, vector<8x64xf32>, vector<8x64xf32>, vector<8x64xf32>, vector<8x64xf32> -> vector<64x64xf32>
    %cst_226 = arith.constant dense<0.000000e+00> : vector<64x10xf32>
    %785 = tpu.matmul %784, %766, %cst_226 {dimension_numbers = #tpu.dot_dimension_numbers<[1], [1], [0], [0], [0, 0, 1, 0], [], []>} : vector<64x64xf32>, vector<10x64xf32>, vector<64x10xf32> -> vector<64x10xf32>
    %786 = vector.broadcast %11 : vector<1x10xf32> to vector<64x10xf32>
    %787 = arith.addf %785, %786 : vector<64x10xf32>
    %cst_227 = arith.constant dense<0xFF800000> : vector<64xf32>
    %788 = vector.multi_reduction <maximumf>, %787, %cst_227 [1] : vector<64x10xf32> to vector<64xf32>
    %789 = vector.shape_cast %788 : vector<64xf32> to vector<64x1xf32>
    %790 = vector.broadcast %789 : vector<64x1xf32> to vector<64x10xf32>
    %791 = arith.subf %787, %790 : vector<64x10xf32>
    %792 = math.exp %791 : vector<64x10xf32>
    %cst_228 = arith.constant dense<0.000000e+00> : vector<64xf32>
    %793 = vector.multi_reduction <add>, %792, %cst_228 [1] : vector<64x10xf32> to vector<64xf32>
    %794 = vector.shape_cast %793 : vector<64xf32> to vector<64x1xf32>
    %795 = vector.broadcast %794 : vector<64x1xf32> to vector<64x10xf32>
    %796 = arith.divf %792, %795 : vector<64x10xf32>
    %cst_229 = arith.constant dense<0.000000e+00> : vector<64x64xf32>
    %797 = tpu.matmul %796, %767, %cst_229 {dimension_numbers = #tpu.dot_dimension_numbers<[1], [0], [0], [1], [0, 0, 1, 1], [], []>} : vector<64x10xf32>, vector<10x64xf32>, vector<64x64xf32> -> vector<64x64xf32>
    %798 = vector.extract_strided_slice %797 {offsets = [0, 0], sizes = [8, 64], strides = [1, 1]} : vector<64x64xf32> to vector<8x64xf32>
    %799 = vector.broadcast %19 : vector<1x64xf32> to vector<8x64xf32>
    %800 = arith.mulf %798, %799 : vector<8x64xf32>
    %801 = vector.extract_strided_slice %797 {offsets = [8, 0], sizes = [8, 64], strides = [1, 1]} : vector<64x64xf32> to vector<8x64xf32>
    %802 = vector.broadcast %26 : vector<1x64xf32> to vector<8x64xf32>
    %803 = arith.mulf %801, %802 : vector<8x64xf32>
    %804 = arith.addf %800, %803 : vector<8x64xf32>
    %805 = vector.extract_strided_slice %797 {offsets = [16, 0], sizes = [8, 64], strides = [1, 1]} : vector<64x64xf32> to vector<8x64xf32>
    %806 = vector.broadcast %33 : vector<1x64xf32> to vector<8x64xf32>
    %807 = arith.mulf %805, %806 : vector<8x64xf32>
    %808 = arith.addf %804, %807 : vector<8x64xf32>
    %809 = vector.extract_strided_slice %797 {offsets = [24, 0], sizes = [8, 64], strides = [1, 1]} : vector<64x64xf32> to vector<8x64xf32>
    %810 = vector.broadcast %40 : vector<1x64xf32> to vector<8x64xf32>
    %811 = arith.mulf %809, %810 : vector<8x64xf32>
    %812 = arith.addf %808, %811 : vector<8x64xf32>
    %813 = vector.extract_strided_slice %797 {offsets = [32, 0], sizes = [8, 64], strides = [1, 1]} : vector<64x64xf32> to vector<8x64xf32>
    %814 = vector.broadcast %47 : vector<1x64xf32> to vector<8x64xf32>
    %815 = arith.mulf %813, %814 : vector<8x64xf32>
    %816 = arith.addf %812, %815 : vector<8x64xf32>
    %817 = vector.extract_strided_slice %797 {offsets = [40, 0], sizes = [8, 64], strides = [1, 1]} : vector<64x64xf32> to vector<8x64xf32>
    %818 = vector.broadcast %54 : vector<1x64xf32> to vector<8x64xf32>
    %819 = arith.mulf %817, %818 : vector<8x64xf32>
    %820 = arith.addf %816, %819 : vector<8x64xf32>
    %821 = vector.extract_strided_slice %797 {offsets = [48, 0], sizes = [8, 64], strides = [1, 1]} : vector<64x64xf32> to vector<8x64xf32>
    %822 = vector.broadcast %61 : vector<1x64xf32> to vector<8x64xf32>
    %823 = arith.mulf %821, %822 : vector<8x64xf32>
    %824 = arith.addf %820, %823 : vector<8x64xf32>
    %825 = vector.extract_strided_slice %797 {offsets = [56, 0], sizes = [8, 64], strides = [1, 1]} : vector<64x64xf32> to vector<8x64xf32>
    %826 = vector.broadcast %68 : vector<1x64xf32> to vector<8x64xf32>
    %827 = arith.mulf %825, %826 : vector<8x64xf32>
    %828 = arith.addf %824, %827 : vector<8x64xf32>
    %c2688 = arith.constant 2688 : index
    %c0_230 = arith.constant 0 : index
    %829 = vector.load %arg7[%c2688, %c0_230] : memref<3000x128xf32, #tpu.memory_space<vmem>>, vector<64x64xf32>
    %cst_231 = arith.constant dense<0.000000e+00> : vector<8x64xf32>
    %830 = tpu.matmul %828, %829, %cst_231 {dimension_numbers = #tpu.dot_dimension_numbers<[1], [0], [0], [1], [0, 0, 1, 1], [], []>} : vector<8x64xf32>, vector<64x64xf32>, vector<8x64xf32> -> vector<8x64xf32>
    %c2752 = arith.constant 2752 : index
    %c0_232 = arith.constant 0 : index
    %831 = vector.load %arg7[%c2752, %c0_232] : memref<3000x128xf32, #tpu.memory_space<vmem>>, vector<1x64xf32>
    %832 = vector.broadcast %831 : vector<1x64xf32> to vector<8x64xf32>
    %833 = arith.addf %830, %832 : vector<8x64xf32>
    %834 = arith.addf %833, %654 : vector<8x64xf32>
    %835 = arith.addf %654, %834 : vector<8x64xf32>
    %836 = arith.addf %835, %755 : vector<8x64xf32>
    %c2776 = arith.constant 2776 : index
    %c0_233 = arith.constant 0 : index
    %837 = vector.load %arg7[%c2776, %c0_233] : memref<3000x128xf32, #tpu.memory_space<vmem>>, vector<64x128xf32>
    %cst_234 = arith.constant dense<0.000000e+00> : vector<8x128xf32>
    %838 = tpu.matmul %836, %837, %cst_234 {dimension_numbers = #tpu.dot_dimension_numbers<[1], [0], [0], [1], [0, 0, 1, 1], [], []>} : vector<8x64xf32>, vector<64x128xf32>, vector<8x128xf32> -> vector<8x128xf32>
    %c2840 = arith.constant 2840 : index
    %c0_235 = arith.constant 0 : index
    %839 = vector.load %arg7[%c2840, %c0_235] : memref<3000x128xf32, #tpu.memory_space<vmem>>, vector<1x128xf32>
    %840 = vector.broadcast %839 : vector<1x128xf32> to vector<8x128xf32>
    %841 = arith.addf %838, %840 : vector<8x128xf32>
    %cst_236 = arith.constant 0.000000e+00 : f32
    %842 = vector.broadcast %cst_236 : f32 to vector<8x128xf32>
    %843 = arith.maximumf %841, %842 : vector<8x128xf32>
    %c2848 = arith.constant 2848 : index
    %c0_237 = arith.constant 0 : index
    %844 = vector.load %arg7[%c2848, %c0_237] : memref<3000x128xf32, #tpu.memory_space<vmem>>, vector<128x64xf32>
    %cst_238 = arith.constant dense<0.000000e+00> : vector<8x64xf32>
    %845 = tpu.matmul %843, %844, %cst_238 {dimension_numbers = #tpu.dot_dimension_numbers<[1], [0], [0], [1], [0, 0, 1, 1], [], []>} : vector<8x128xf32>, vector<128x64xf32>, vector<8x64xf32> -> vector<8x64xf32>
    %c2976 = arith.constant 2976 : index
    %c0_239 = arith.constant 0 : index
    %846 = vector.load %arg7[%c2976, %c0_239] : memref<3000x128xf32, #tpu.memory_space<vmem>>, vector<1x64xf32>
    %847 = vector.broadcast %846 : vector<1x64xf32> to vector<8x64xf32>
    %848 = arith.addf %845, %847 : vector<8x64xf32>
    %849 = arith.addf %848, %836 : vector<8x64xf32>
    %c2984 = arith.constant 2984 : index
    %c0_240 = arith.constant 0 : index
    %850 = vector.load %arg7[%c2984, %c0_240] : memref<3000x128xf32, #tpu.memory_space<vmem>>, vector<1x64xf32>
    %c2992 = arith.constant 2992 : index
    %c0_241 = arith.constant 0 : index
    %851 = vector.load %arg7[%c2992, %c0_241] : memref<3000x128xf32, #tpu.memory_space<vmem>>, vector<1x64xf32>
    %cst_242 = arith.constant dense<0.000000e+00> : vector<8xf32>
    %852 = vector.multi_reduction <add>, %849, %cst_242 [1] : vector<8x64xf32> to vector<8xf32>
    %853 = vector.shape_cast %852 : vector<8xf32> to vector<8x1xf32>
    %cst_243 = arith.constant 6.400000e+01 : f32
    %854 = vector.broadcast %cst_243 : f32 to vector<8x1xf32>
    %855 = arith.divf %853, %854 : vector<8x1xf32>
    %856 = vector.broadcast %855 : vector<8x1xf32> to vector<8x64xf32>
    %857 = arith.subf %849, %856 : vector<8x64xf32>
    %858 = arith.mulf %857, %857 : vector<8x64xf32>
    %cst_244 = arith.constant dense<0.000000e+00> : vector<8xf32>
    %859 = vector.multi_reduction <add>, %858, %cst_244 [1] : vector<8x64xf32> to vector<8xf32>
    %860 = vector.shape_cast %859 : vector<8xf32> to vector<8x1xf32>
    %cst_245 = arith.constant 6.400000e+01 : f32
    %861 = vector.broadcast %cst_245 : f32 to vector<8x1xf32>
    %862 = arith.divf %860, %861 : vector<8x1xf32>
    %863 = vector.broadcast %855 : vector<8x1xf32> to vector<8x64xf32>
    %864 = arith.subf %849, %863 : vector<8x64xf32>
    %cst_246 = arith.constant 9.99999974E-6 : f32
    %865 = vector.broadcast %cst_246 : f32 to vector<8x1xf32>
    %866 = arith.addf %862, %865 : vector<8x1xf32>
    %867 = math.rsqrt %866 : vector<8x1xf32>
    %868 = vector.broadcast %867 : vector<8x1xf32> to vector<8x64xf32>
    %869 = arith.mulf %864, %868 : vector<8x64xf32>
    %870 = vector.broadcast %850 : vector<1x64xf32> to vector<8x64xf32>
    %871 = arith.mulf %869, %870 : vector<8x64xf32>
    %872 = vector.broadcast %851 : vector<1x64xf32> to vector<8x64xf32>
    %873 = arith.addf %871, %872 : vector<8x64xf32>
    %c920_247 = arith.constant 920 : index
    %c0_248 = arith.constant 0 : index
    %874 = vector.load %arg7[%c920_247, %c0_248] : memref<3000x128xf32, #tpu.memory_space<vmem>>, vector<1x64xf32>
    %c928_249 = arith.constant 928 : index
    %c0_250 = arith.constant 0 : index
    %875 = vector.load %arg7[%c928_249, %c0_250] : memref<3000x128xf32, #tpu.memory_space<vmem>>, vector<1x64xf32>
    %cst_251 = arith.constant dense<0.000000e+00> : vector<8xf32>
    %876 = vector.multi_reduction <add>, %873, %cst_251 [1] : vector<8x64xf32> to vector<8xf32>
    %877 = vector.shape_cast %876 : vector<8xf32> to vector<8x1xf32>
    %cst_252 = arith.constant 6.400000e+01 : f32
    %878 = vector.broadcast %cst_252 : f32 to vector<8x1xf32>
    %879 = arith.divf %877, %878 : vector<8x1xf32>
    %880 = vector.broadcast %879 : vector<8x1xf32> to vector<8x64xf32>
    %881 = arith.subf %873, %880 : vector<8x64xf32>
    %882 = arith.mulf %881, %881 : vector<8x64xf32>
    %cst_253 = arith.constant dense<0.000000e+00> : vector<8xf32>
    %883 = vector.multi_reduction <add>, %882, %cst_253 [1] : vector<8x64xf32> to vector<8xf32>
    %884 = vector.shape_cast %883 : vector<8xf32> to vector<8x1xf32>
    %cst_254 = arith.constant 6.400000e+01 : f32
    %885 = vector.broadcast %cst_254 : f32 to vector<8x1xf32>
    %886 = arith.divf %884, %885 : vector<8x1xf32>
    %887 = vector.broadcast %879 : vector<8x1xf32> to vector<8x64xf32>
    %888 = arith.subf %873, %887 : vector<8x64xf32>
    %cst_255 = arith.constant 9.99999974E-6 : f32
    %889 = vector.broadcast %cst_255 : f32 to vector<8x1xf32>
    %890 = arith.addf %886, %889 : vector<8x1xf32>
    %891 = math.rsqrt %890 : vector<8x1xf32>
    %892 = vector.broadcast %891 : vector<8x1xf32> to vector<8x64xf32>
    %893 = arith.mulf %888, %892 : vector<8x64xf32>
    %894 = vector.broadcast %874 : vector<1x64xf32> to vector<8x64xf32>
    %895 = arith.mulf %893, %894 : vector<8x64xf32>
    %896 = vector.broadcast %875 : vector<1x64xf32> to vector<8x64xf32>
    %897 = arith.addf %895, %896 : vector<8x64xf32>
    %c936_256 = arith.constant 936 : index
    %c0_257 = arith.constant 0 : index
    %898 = vector.load %arg7[%c936_256, %c0_257] : memref<3000x128xf32, #tpu.memory_space<vmem>>, vector<64x64xf32>
    %cst_258 = arith.constant dense<0.000000e+00> : vector<8x64xf32>
    %899 = tpu.matmul %897, %898, %cst_258 {dimension_numbers = #tpu.dot_dimension_numbers<[1], [0], [0], [1], [0, 0, 1, 1], [], []>} : vector<8x64xf32>, vector<64x64xf32>, vector<8x64xf32> -> vector<8x64xf32>
    %c1000_259 = arith.constant 1000 : index
    %c0_260 = arith.constant 0 : index
    %900 = vector.load %arg7[%c1000_259, %c0_260] : memref<3000x128xf32, #tpu.memory_space<vmem>>, vector<1x64xf32>
    %901 = vector.broadcast %900 : vector<1x64xf32> to vector<8x64xf32>
    %902 = arith.addf %899, %901 : vector<8x64xf32>
    %cst_261 = arith.constant 0.000000e+00 : f32
    %903 = vector.broadcast %cst_261 : f32 to vector<8x64xf32>
    %904 = arith.maximumf %902, %903 : vector<8x64xf32>
    %c1008_262 = arith.constant 1008 : index
    %c0_263 = arith.constant 0 : index
    %905 = vector.load %arg7[%c1008_262, %c0_263] : memref<3000x128xf32, #tpu.memory_space<vmem>>, vector<64x1xf32>
    %cst_264 = arith.constant dense<0.000000e+00> : vector<8x1xf32>
    %906 = tpu.matmul %904, %905, %cst_264 {dimension_numbers = #tpu.dot_dimension_numbers<[1], [0], [0], [1], [0, 0, 1, 1], [], []>} : vector<8x64xf32>, vector<64x1xf32>, vector<8x1xf32> -> vector<8x1xf32>
    %c1072_265 = arith.constant 1072 : index
    %c0_266 = arith.constant 0 : index
    %907 = vector.load %arg7[%c1072_265, %c0_266] : memref<3000x128xf32, #tpu.memory_space<vmem>>, vector<1x1xf32>
    %908 = vector.broadcast %907 : vector<1x1xf32> to vector<8x1xf32>
    %909 = arith.addf %906, %908 : vector<8x1xf32>
    %cst_267 = arith.constant dense<0.000000e+00> : vector<8x16xf32>
    %910 = tpu.matmul %897, %115, %cst_267 {dimension_numbers = #tpu.dot_dimension_numbers<[1], [1], [0], [0], [0, 0, 1, 0], [], []>} : vector<8x64xf32>, vector<16x64xf32>, vector<8x16xf32> -> vector<8x16xf32>
    %c1080_268 = arith.constant 1080 : index
    %c0_269 = arith.constant 0 : index
    %911 = vector.load %arg7[%c1080_268, %c0_269] : memref<3000x128xf32, #tpu.memory_space<vmem>>, vector<64x64xf32>
    %cst_270 = arith.constant dense<0.000000e+00> : vector<8x64xf32>
    %912 = tpu.matmul %873, %911, %cst_270 {dimension_numbers = #tpu.dot_dimension_numbers<[1], [0], [0], [1], [0, 0, 1, 1], [], []>} : vector<8x64xf32>, vector<64x64xf32>, vector<8x64xf32> -> vector<8x64xf32>
    %c1144_271 = arith.constant 1144 : index
    %c0_272 = arith.constant 0 : index
    %913 = vector.load %arg7[%c1144_271, %c0_272] : memref<3000x128xf32, #tpu.memory_space<vmem>>, vector<1x64xf32>
    %914 = vector.broadcast %913 : vector<1x64xf32> to vector<8x64xf32>
    %915 = arith.addf %912, %914 : vector<8x64xf32>
    %cst_273 = arith.constant 0.000000e+00 : f32
    %916 = vector.broadcast %cst_273 : f32 to vector<8x64xf32>
    %917 = arith.maximumf %915, %916 : vector<8x64xf32>
    %c1152_274 = arith.constant 1152 : index
    %c0_275 = arith.constant 0 : index
    %918 = vector.load %arg7[%c1152_274, %c0_275] : memref<3000x128xf32, #tpu.memory_space<vmem>>, vector<64x2xf32>
    %cst_276 = arith.constant dense<0.000000e+00> : vector<8x2xf32>
    %919 = tpu.matmul %917, %918, %cst_276 {dimension_numbers = #tpu.dot_dimension_numbers<[1], [0], [0], [1], [0, 0, 1, 1], [], []>} : vector<8x64xf32>, vector<64x2xf32>, vector<8x2xf32> -> vector<8x2xf32>
    %c1216_277 = arith.constant 1216 : index
    %c0_278 = arith.constant 0 : index
    %920 = vector.load %arg7[%c1216_277, %c0_278] : memref<3000x128xf32, #tpu.memory_space<vmem>>, vector<1x2xf32>
    %921 = vector.broadcast %920 : vector<1x2xf32> to vector<8x2xf32>
    %922 = arith.addf %919, %921 : vector<8x2xf32>
    %cst_279 = arith.constant 0.000000e+00 : f32
    %923 = vector.broadcast %cst_279 : f32 to vector<8x109xf32>
    %924 = tpu.concatenate %910, %909, %922, %923 in 1 : vector<8x16xf32>, vector<8x1xf32>, vector<8x2xf32>, vector<8x109xf32> -> vector<8x128xf32>
    %c0_280 = arith.constant 0 : index
    %c2 = arith.constant 2 : index
    %c0_281 = arith.constant 0 : index
    %c0_282 = arith.constant 0 : index
    %925 = vector.load %arg8[%c0_280, %c2, %c0_281, %c0_282] : memref<1x3x8x128xf32, #tpu.memory_space<vmem>>, vector<1x1x8x128xf32>
    %926 = vector.shape_cast %925 : vector<1x1x8x128xf32> to vector<8x128xf32>
    %927 = vector.shape_cast %924 : vector<8x128xf32> to vector<1x1x8x128xf32>
    tpu.vector_store %arg8[%c0_280, %c2, %c0_281, %c0_282], %927 {strides = array<i32>} : memref<1x3x8x128xf32, #tpu.memory_space<vmem>>, vector<1x1x8x128xf32>,
    return
  }
  func.func @transform_0(%arg0: i32) -> (i32, i32, i32) {
    %c0_i32 = arith.constant 0 : i32
    %c0_i32_0 = arith.constant 0 : i32
    %c0_i32_1 = arith.constant 0 : i32
    return %arg0, %c0_i32, %c0_i32_0 : i32, i32, i32
  }
  func.func @transform_1(%arg0: i32) -> (i32, i32, i32) {
    %c0_i32 = arith.constant 0 : i32
    %c0_i32_0 = arith.constant 0 : i32
    %c0_i32_1 = arith.constant 0 : i32
    return %arg0, %c0_i32, %c0_i32_0 : i32, i32, i32
  }
  func.func @transform_2(%arg0: i32) -> (i32, i32, i32) {
    %c0_i32 = arith.constant 0 : i32
    %c0_i32_0 = arith.constant 0 : i32
    %c0_i32_1 = arith.constant 0 : i32
    return %arg0, %c0_i32, %c0_i32_0 : i32, i32, i32
  }
  func.func @transform_3(%arg0: i32) -> (i32, i32, i32) {
    %c0_i32 = arith.constant 0 : i32
    %c0_i32_0 = arith.constant 0 : i32
    %c0_i32_1 = arith.constant 0 : i32
    return %arg0, %c0_i32, %c0_i32_0 : i32, i32, i32
  }
  func.func @transform_4(%arg0: i32) -> (i32, i32, i32) {
    %c0_i32 = arith.constant 0 : i32
    %c0_i32_0 = arith.constant 0 : i32
    %c0_i32_1 = arith.constant 0 : i32
    return %arg0, %c0_i32, %c0_i32_0 : i32, i32, i32
  }
  func.func @transform_5(%arg0: i32) -> (i32, i32, i32) {
    %c0_i32 = arith.constant 0 : i32
    %c0_i32_0 = arith.constant 0 : i32
    %c0_i32_1 = arith.constant 0 : i32
    return %arg0, %c0_i32, %c0_i32_0 : i32, i32, i32
  }
  func.func @transform_6(%arg0: i32) -> (i32, i32) {
    %c0_i32 = arith.constant 0 : i32
    %c0_i32_0 = arith.constant 0 : i32
    %c0_i32_1 = arith.constant 0 : i32
    return %c0_i32, %c0_i32_0 : i32, i32
  }
  func.func @transform_7(%arg0: i32) -> (i32, i32, i32, i32) {
    %c0_i32 = arith.constant 0 : i32
    %c0_i32_0 = arith.constant 0 : i32
    %c0_i32_1 = arith.constant 0 : i32
    %c0_i32_2 = arith.constant 0 : i32
    return %arg0, %c0_i32, %c0_i32_0, %c0_i32_1 : i32, i32, i32, i32
  }
}

</mosaic_0001>

<llo_original>
// kernel: tpu_custom_call.1
$region0: #{tpu_custom_call.1}
  #allocation0 [shape = 'u32[]', space=smem, size = 0x4, offset = 0x4, fixed_abs, tag = 'smem constant byte address 0x4 - core index']
  #allocation1 [shape = 'u32[144,128]{1,0:T(1,128)}', space=vmem, size = 0x12000, scoped, tag = 'internal scratch']
  %s0 = inlined_call_operand.hbm [shape: f32[2,16,32], index: 0, kind: input, shape index: {}]
  %s1 = inlined_call_operand.vmem [shape: f32[2,16,1], index: 1, kind: input, shape index: {}]
  %s2 = inlined_call_operand.vmem [shape: f32[2,10,512], index: 2, kind: input, shape index: {}]
  %s3 = inlined_call_operand.vmem [shape: s32[2,8,1], index: 3, kind: input, shape index: {}]
  %s4 = inlined_call_operand.hbm [shape: f32[2,1,16], index: 4, kind: input, shape index: {}]
  %s5 = inlined_call_operand.hbm [shape: f32[2,1,10], index: 5, kind: input, shape index: {}]
  %s6 = inlined_call_operand.hbm [shape: f32[3000,128], index: 6, kind: input, shape index: {}]
  %s7 = inlined_call_operand.hbm [shape: f32[2,3,8,128], index: 7, kind: output, shape index: {}]
  %s8 = sld [smem:[#allocation0]]
  $region77: #{tpu_custom_call.1} parent=0
    _
  %s10 = ssub.s32 1, %s8
  %s11 = scalar_select 0, %s10, %s8
  $region1: #{tpu_custom_call.1} parent=0
    #allocation2 [shape = 'u8[16384]{0}', space=vmem, size = 0x4000, scoped, tag = 'input window, operand 0']
    #allocation3 [shape = 's32[2]{0}', space=sflag, size = 0x8, scoped, tag = 'scoped memory for tpu_custom_call.1']
    #allocation4 [shape = 's32[2]{0}', space=sflag, size = 0x8, scoped, tag = 'scoped memory for tpu_custom_call.1']
    #allocation5 [shape = 'u8[1024]{0}', space=vmem, size = 0x400, scoped, tag = 'input window, operand 4']
    #allocation6 [shape = 's32[2]{0}', space=sflag, size = 0x8, scoped, tag = 'scoped memory for tpu_custom_call.1']
    #allocation7 [shape = 'u8[1024]{0}', space=vmem, size = 0x400, scoped, tag = 'input window, operand 5']
    #allocation8 [shape = 'u8[1536000]{0}', space=vmem, size = 0x177000, scoped, tag = 'input window, operand 6, single buffered']
    #allocation9 [shape = 's32[1]{0}', space=sflag, size = 0x4, scoped, tag = 'scoped memory for tpu_custom_call.1']
    #allocation10 [shape = 'u8[24576]{0}', space=vmem, size = 0x6000, scoped, tag = 'output window, operand 0']
    %12 = vsyncpa [#allocation3], 0
    %s13 = scalar_lea.sflag [#allocation3], 1
    %14 = vsyncpa %s13, 0
    %15 = vsyncpa [#allocation6], 0
    %s16 = scalar_lea.sflag [#allocation6], 1
    %17 = vsyncpa %s16, 0
    %18 = vsyncpa [#allocation9], 0
    %19 = vsyncpa [#allocation4], 0
    %s20 = scalar_lea.sflag [#allocation4], 1
    %21 = vsyncpa %s20, 0
    loop: start=0, step=1, limit=4
    $region2: #{tpu_custom_call.1} parent=1 // loop_pre_header
      _
    $region3: #{tpu_custom_call.1} parent=1 // loop_header
      %s23 = sphi 0, %s27
      %p24 = scmp.ge.s32.totalorder %s23, 4
      %s33 = sphi 0, %s35
      %s36 = sphi 0, %s33
      %s37 = sphi 0, %s36
      %s53 = sphi 0, %s37
      %s59 = sphi 0, %s61
      %s62 = sphi 0, %s59
      %s63 = sphi 0, %s62
      %s79 = sphi 0, %s63
      %s85 = sphi 0, %s87
      %s88 = sphi 0, %s85
      %s89 = sphi 0, %s88
      %s105 = sphi 0, %s89
      %s111 = sphi 0, %s113
      %s114 = sphi 0, %s111
      %s115 = sphi 0, %s114
      %s131 = sphi 0, %s115
      %s137 = sphi 0, %s139
      %s140 = sphi 0, %s137
      %s141 = sphi 0, %s140
      %s157 = sphi 0, %s141
      %s163 = sphi 0, %s165
      %s166 = sphi 0, %s163
      %s167 = sphi 0, %s166
      %s183 = sphi 0, %s167
      %s187 = sphi 0, %s187
      %s189 = sphi 0, %s187
      %s190 = sphi 0, %s189
      %s204 = sphi 0, %s190
      %s210 = sphi 0, %s212
      %s213 = sphi 0, %s210
      %s214 = sphi 0, %s213
      %s230 = sphi 0, %s214
    $region4: #{tpu_custom_call.1} parent=1 // loop_header_branch
      %26 = sbr.rel (%p24) target = $region8
    $region5: #{tpu_custom_call.1} parent=1 // loop_body
      %s28 = ssub.s32 %s23, 1
      %s29 = ssub.s32 %s23, 2
      %s30 = sadd.s32 %s23, 1
      %s31 = ssub.s32 %s23, %s30
      %p32 = scmp.eq.s32.totalorder %s31, 0
      %s34 = sadd.s32 %s33, 1
      %s35 = scalar_select %p32, %s33, %s34
      %p38 = pneg %p32
      %p39 = scmp.eq.s32.totalorder %s23, 1
      %p40 = por %p38, %p39
      %p41 = scmp.ne.s32.totalorder %s33, %s36
      %p42 = scmp.eq.s32.totalorder %s23, 0
      %p43 = por %p41, %p42
      %p44 = scmp.ne.s32.totalorder %s33, %s36
      %p45 = scmp.eq.s32.totalorder %s28, 1
      %p46 = por %p44, %p45
      %p47 = scmp.ne.s32.totalorder %s36, %s37
      %p48 = scmp.eq.s32.totalorder %s28, 0
      %p49 = por %p47, %p48
      %p50 = scmp.ne.s32.totalorder %s36, %s37
      %p51 = scmp.eq.s32.totalorder %s29, 1
      %p52 = por %p50, %p51
      %p54 = scmp.ne.s32.totalorder %s37, %s53
      %p55 = scmp.eq.s32.totalorder %s29, 0
      %p56 = por %p54, %p55
      %s57 = ssub.s32 %s23, %s30
      %p58 = scmp.eq.s32.totalorder %s57, 0
      %s60 = sadd.s32 %s59, 1
      %s61 = scalar_select %p58, %s59, %s60
      %p64 = pneg %p58
      %p65 = scmp.eq.s32.totalorder %s23, 1
      %p66 = por %p64, %p65
      %p67 = scmp.ne.s32.totalorder %s59, %s62
      %p68 = scmp.eq.s32.totalorder %s23, 0
      %p69 = por %p67, %p68
      %p70 = scmp.ne.s32.totalorder %s59, %s62
      %p71 = scmp.eq.s32.totalorder %s28, 1
      %p72 = por %p70, %p71
      %p73 = scmp.ne.s32.totalorder %s62, %s63
      %p74 = scmp.eq.s32.totalorder %s28, 0
      %p75 = por %p73, %p74
      %p76 = scmp.ne.s32.totalorder %s62, %s63
      %p77 = scmp.eq.s32.totalorder %s29, 1
      %p78 = por %p76, %p77
      %p80 = scmp.ne.s32.totalorder %s63, %s79
      %p81 = scmp.eq.s32.totalorder %s29, 0
      %p82 = por %p80, %p81
      %s83 = ssub.s32 %s23, %s30
      %p84 = scmp.eq.s32.totalorder %s83, 0
      %s86 = sadd.s32 %s85, 1
      %s87 = scalar_select %p84, %s85, %s86
      %p90 = pneg %p84
      %p91 = scmp.eq.s32.totalorder %s23, 1
      %p92 = por %p90, %p91
      %p93 = scmp.ne.s32.totalorder %s85, %s88
      %p94 = scmp.eq.s32.totalorder %s23, 0
      %p95 = por %p93, %p94
      %p96 = scmp.ne.s32.totalorder %s85, %s88
      %p97 = scmp.eq.s32.totalorder %s28, 1
      %p98 = por %p96, %p97
      %p99 = scmp.ne.s32.totalorder %s88, %s89
      %p100 = scmp.eq.s32.totalorder %s28, 0
      %p101 = por %p99, %p100
      %p102 = scmp.ne.s32.totalorder %s88, %s89
      %p103 = scmp.eq.s32.totalorder %s29, 1
      %p104 = por %p102, %p103
      %p106 = scmp.ne.s32.totalorder %s89, %s105
      %p107 = scmp.eq.s32.totalorder %s29, 0
      %p108 = por %p106, %p107
      %s109 = ssub.s32 %s23, %s30
      %p110 = scmp.eq.s32.totalorder %s109, 0
      %s112 = sadd.s32 %s111, 1
      %s113 = scalar_select %p110, %s111, %s112
      %p116 = pneg %p110
      %p117 = scmp.eq.s32.totalorder %s23, 1
      %p118 = por %p116, %p117
      %p119 = scmp.ne.s32.totalorder %s111, %s114
      %p120 = scmp.eq.s32.totalorder %s23, 0
      %p121 = por %p119, %p120
      %p122 = scmp.ne.s32.totalorder %s111, %s114
      %p123 = scmp.eq.s32.totalorder %s28, 1
      %p124 = por %p122, %p123
      %p125 = scmp.ne.s32.totalorder %s114, %s115
      %p126 = scmp.eq.s32.totalorder %s28, 0
      %p127 = por %p125, %p126
      %p128 = scmp.ne.s32.totalorder %s114, %s115
      %p129 = scmp.eq.s32.totalorder %s29, 1
      %p130 = por %p128, %p129
      %p132 = scmp.ne.s32.totalorder %s115, %s131
      %p133 = scmp.eq.s32.totalorder %s29, 0
      %p134 = por %p132, %p133
      %s135 = ssub.s32 %s23, %s30
      %p136 = scmp.eq.s32.totalorder %s135, 0
      %s138 = sadd.s32 %s137, 1
      %s139 = scalar_select %p136, %s137, %s138
      %p142 = pneg %p136
      %p143 = scmp.eq.s32.totalorder %s23, 1
      %p144 = por %p142, %p143
      %p145 = scmp.ne.s32.totalorder %s137, %s140
      %p146 = scmp.eq.s32.totalorder %s23, 0
      %p147 = por %p145, %p146
      %p148 = scmp.ne.s32.totalorder %s137, %s140
      %p149 = scmp.eq.s32.totalorder %s28, 1
      %p150 = por %p148, %p149
      %p151 = scmp.ne.s32.totalorder %s140, %s141
      %p152 = scmp.eq.s32.totalorder %s28, 0
      %p153 = por %p151, %p152
      %p154 = scmp.ne.s32.totalorder %s140, %s141
      %p155 = scmp.eq.s32.totalorder %s29, 1
      %p156 = por %p154, %p155
      %p158 = scmp.ne.s32.totalorder %s141, %s157
      %p159 = scmp.eq.s32.totalorder %s29, 0
      %p160 = por %p158, %p159
      %s161 = ssub.s32 %s23, %s30
      %p162 = scmp.eq.s32.totalorder %s161, 0
      %s164 = sadd.s32 %s163, 1
      %s165 = scalar_select %p162, %s163, %s164
      %p168 = pneg %p162
      %p169 = scmp.eq.s32.totalorder %s23, 1
      %p170 = por %p168, %p169
      %p171 = scmp.ne.s32.totalorder %s163, %s166
      %p172 = scmp.eq.s32.totalorder %s23, 0
      %p173 = por %p171, %p172
      %p174 = scmp.ne.s32.totalorder %s163, %s166
      %p175 = scmp.eq.s32.totalorder %s28, 1
      %p176 = por %p174, %p175
      %p177 = scmp.ne.s32.totalorder %s166, %s167
      %p178 = scmp.eq.s32.totalorder %s28, 0
      %p179 = por %p177, %p178
      %p180 = scmp.ne.s32.totalorder %s166, %s167
      %p181 = scmp.eq.s32.totalorder %s29, 1
      %p182 = por %p180, %p181
      %p184 = scmp.ne.s32.totalorder %s167, %s183
      %p185 = scmp.eq.s32.totalorder %s29, 0
      %p186 = por %p184, %p185
      %s188 = sadd.s32 %s187, 1
      %p191 = scmp.eq.s32.totalorder %s23, 1
      %p192 = scmp.ne.s32.totalorder %s187, %s189
      %p193 = scmp.eq.s32.totalorder %s23, 0
      %p194 = por %p192, %p193
      %p195 = scmp.ne.s32.totalorder %s187, %s189
      %p196 = scmp.eq.s32.totalorder %s28, 1
      %p197 = por %p195, %p196
      %p198 = scmp.ne.s32.totalorder %s189, %s190
      %p199 = scmp.eq.s32.totalorder %s28, 0
      %p200 = por %p198, %p199
      %p201 = scmp.ne.s32.totalorder %s189, %s190
      %p202 = scmp.eq.s32.totalorder %s29, 1
      %p203 = por %p201, %p202
      %p205 = scmp.ne.s32.totalorder %s190, %s204
      %p206 = scmp.eq.s32.totalorder %s29, 0
      %p207 = por %p205, %p206
      %s208 = ssub.s32 %s23, %s30
      %p209 = scmp.eq.s32.totalorder %s208, 0
      %s211 = sadd.s32 %s210, 1
      %s212 = scalar_select %p209, %s210, %s211
      %p215 = pneg %p209
      %p216 = scmp.eq.s32.totalorder %s23, 1
      %p217 = por %p215, %p216
      %p218 = scmp.ne.s32.totalorder %s210, %s213
      %p219 = scmp.eq.s32.totalorder %s23, 0
      %p220 = por %p218, %p219
      %p221 = scmp.ne.s32.totalorder %s210, %s213
      %p222 = scmp.eq.s32.totalorder %s28, 1
      %p223 = por %p221, %p222
      %p224 = scmp.ne.s32.totalorder %s213, %s214
      %p225 = scmp.eq.s32.totalorder %s28, 0
      %p226 = por %p224, %p225
      %p227 = scmp.ne.s32.totalorder %s213, %s214
      %p228 = scmp.eq.s32.totalorder %s29, 1
      %p229 = por %p227, %p228
      %p231 = scmp.ne.s32.totalorder %s214, %s230
      %p232 = scmp.eq.s32.totalorder %s29, 0
      %p233 = por %p231, %p232
      %p234 = scmp.le.s32.totalorder 1, %s23
      %p235 = scmp.lt.s32.totalorder %s23, 3
      %p236 = pnand %p234, %p235
      %p237 = pneg %p236
      // Predicated region
      $region9: #{tpu_custom_call.1} parent=5 // pred_check
        _
      $region10: #{tpu_custom_call.1} parent=5 // pred_check_branch
        %239 = sbr.rel (%p236) target = $region12
      $region11: #{tpu_custom_call.1} parent=5 // pred_region
        %s240 = ssub.s32 %s23, 1
        // Predicated region
        $region13: #{tpu_custom_call.1} parent=11 // pred_check
          %p241 = pneg %p200
        $region14: #{tpu_custom_call.1} parent=11 // pred_check_branch
          %243 = sbr.rel (%p241) target = $region16
        $region15: #{tpu_custom_call.1} parent=11 // pred_region
          %s245 = ssub.s32 48000, 48000
          %246 = vsyncadd [#allocation9], %s245
          %s247 = sshll.u32 [#allocation8], 4
          %s248 = int_to_ptr.vmem [resolvable:$true] %s247
          %253 = dma.hbm_to_vmem [thread:$0]  %s6, 48000, %s248, [#allocation9], 128, 128, 8
        $region16: #{tpu_custom_call.1} parent=11 // pred_fallthru
          _
      $region12: #{tpu_custom_call.1} parent=5 // pred_fallthru
        _
      %p254 = scmp.lt.s32.totalorder %s23, 2
      // Predicated region
      $region17: #{tpu_custom_call.1} parent=5 // pred_check
        %p255 = pneg %p254
      $region18: #{tpu_custom_call.1} parent=5 // pred_check_branch
        %257 = sbr.rel (%p255) target = $region20
      $region19: #{tpu_custom_call.1} parent=5 // pred_region
        // Predicated region
        $region21: #{tpu_custom_call.1} parent=19 // pred_check
          %p258 = pneg %p43
        $region22: #{tpu_custom_call.1} parent=19 // pred_check_branch
          %260 = sbr.rel (%p258) target = $region24
        $region23: #{tpu_custom_call.1} parent=19 // pred_region
          %s261 = sand.u32 %s33, 1
          %s262 = scalar_lea.sflag [#allocation3], %s261
          %s263 = sand.u32 %s33, 1
          %s264 = smul.addr %s263, 16
          %s265 = scalar_lea.vmem [#allocation2], %s264
          %s267 = ssub.s32 256, 256
          %268 = vsyncadd %s262, %s267
          %s269 = smul.addr %s23, 2
          %s270 = smul.addr %s269, 128
          %s271 = scalar_lea.hbm %s0, %s270
          %s272 = sshll.u32 %s265, 4
          %s273 = int_to_ptr.vmem [resolvable:$true] %s272
          %278 = dma.hbm_to_vmem [thread:$0]  %s271, 256, %s273, %s262, 128, 128, 8
        $region24: #{tpu_custom_call.1} parent=19 // pred_fallthru
          _
        // Predicated region
        $region25: #{tpu_custom_call.1} parent=19 // pred_check
          %p279 = pneg %p69
        $region26: #{tpu_custom_call.1} parent=19 // pred_check_branch
          %281 = sbr.rel (%p279) target = $region28
        $region27: #{tpu_custom_call.1} parent=19 // pred_region
          %p282 = scmp.lt.s32.totalorder %s23, 1
          %s283 = scalar_select %p282, %s23, 1
          %s284 = smul.addr %s283, 2
          %s285 = smul.addr %s284, 8
          %s286 = scalar_lea.vmem %s1, %s285
        $region28: #{tpu_custom_call.1} parent=19 // pred_fallthru
          _
        // Predicated region
        $region29: #{tpu_custom_call.1} parent=19 // pred_check
          %p287 = pneg %p95
        $region30: #{tpu_custom_call.1} parent=19 // pred_check_branch
          %289 = sbr.rel (%p287) target = $region32
        $region31: #{tpu_custom_call.1} parent=19 // pred_region
          %p290 = scmp.lt.s32.totalorder %s23, 1
          %s291 = scalar_select %p290, %s23, 1
          %s292 = smul.addr %s291, 8
          %s293 = smul.addr %s292, 8
          %s294 = scalar_lea.vmem %s2, %s293
        $region32: #{tpu_custom_call.1} parent=19 // pred_fallthru
          _
        // Predicated region
        $region33: #{tpu_custom_call.1} parent=19 // pred_check
          %p295 = pneg %p121
        $region34: #{tpu_custom_call.1} parent=19 // pred_check_branch
          %297 = sbr.rel (%p295) target = $region36
        $region35: #{tpu_custom_call.1} parent=19 // pred_region
          %p298 = scmp.lt.s32.totalorder %s23, 1
          %s299 = scalar_select %p298, %s23, 1
          %s300 = smul.addr %s299, 8
          %s301 = scalar_lea.vmem %s3, %s300
        $region36: #{tpu_custom_call.1} parent=19 // pred_fallthru
          _
        // Predicated region
        $region37: #{tpu_custom_call.1} parent=19 // pred_check
          %p302 = pneg %p147
        $region38: #{tpu_custom_call.1} parent=19 // pred_check_branch
          %304 = sbr.rel (%p302) target = $region40
        $region39: #{tpu_custom_call.1} parent=19 // pred_region
          %s305 = sand.u32 %s23, 1
          %s306 = scalar_lea.sflag [#allocation6], %s305
          %s307 = sand.u32 %s137, 1
          %s308 = scalar_lea.vmem [#allocation5], %s307
          %s310 = ssub.s32 16, 16
          %311 = vsyncadd %s306, %s310
          %s312 = smul.addr %s23, 16
          %s313 = scalar_lea.hbm %s4, %s312
          %s315 = sshll.u32 %s308, 4
          %s316 = int_to_ptr.vmem [resolvable:$true] %s315
          %318 = dma.hbm_to_vmem [thread:$0]  %s313, 16, %s316, %s306
        $region40: #{tpu_custom_call.1} parent=19 // pred_fallthru
          _
        // Predicated region
        $region41: #{tpu_custom_call.1} parent=19 // pred_check
          %p319 = pneg %p173
        $region42: #{tpu_custom_call.1} parent=19 // pred_check_branch
          %321 = sbr.rel (%p319) target = $region44
        $region43: #{tpu_custom_call.1} parent=19 // pred_region
          %s322 = sand.u32 %s23, 1
          %s323 = scalar_lea.sflag [#allocation6], %s322
          %s324 = sand.u32 %s163, 1
          %s325 = scalar_lea.vmem [#allocation7], %s324
          %s327 = ssub.s32 16, 16
          %328 = vsyncadd %s323, %s327
          %s329 = smul.addr %s23, 16
          %s330 = scalar_lea.hbm %s5, %s329
          %s332 = sshll.u32 %s325, 4
          %s333 = int_to_ptr.vmem [resolvable:$true] %s332
          %335 = dma.hbm_to_vmem [thread:$0]  %s330, 16, %s333, %s323
        $region44: #{tpu_custom_call.1} parent=19 // pred_fallthru
          _
      $region20: #{tpu_custom_call.1} parent=5 // pred_fallthru
        _
      %p336 = scmp.le.s32.totalorder 1, %s23
      %p337 = scmp.lt.s32.totalorder %s23, 3
      %p338 = pnand %p336, %p337
      %p339 = pneg %p338
      // Predicated region
      $region45: #{tpu_custom_call.1} parent=5 // pred_check
        _
      $region46: #{tpu_custom_call.1} parent=5 // pred_check_branch
        %341 = sbr.rel (%p338) target = $region48
      $region47: #{tpu_custom_call.1} parent=5 // pred_region
        %s342 = ssub.s32 %s23, 1
        %s343 = sand.u32 %s36, 1
        %s344 = scalar_lea.sflag [#allocation3], %s343
        %s345 = sand.u32 %s36, 1
        %s346 = smul.addr %s345, 16
        %s347 = scalar_lea.vmem [#allocation2], %s346
        // Predicated region
        $region49: #{tpu_custom_call.1} parent=47 // pred_check
          %p348 = pneg %p49
        $region50: #{tpu_custom_call.1} parent=47 // pred_check_branch
          %350 = sbr.rel (%p348) target = $region52
        $region51: #{tpu_custom_call.1} parent=47 // pred_region
          %351 = dma.done %s344, 256
        $region52: #{tpu_custom_call.1} parent=47 // pred_fallthru
          _
        %s352 = sand.u32 %s28, 1
        %s353 = scalar_lea.sflag [#allocation6], %s352
        %s354 = sand.u32 %s140, 1
        %s355 = scalar_lea.vmem [#allocation5], %s354
        // Predicated region
        $region53: #{tpu_custom_call.1} parent=47 // pred_check
          %p356 = pneg %p153
        $region54: #{tpu_custom_call.1} parent=47 // pred_check_branch
          %358 = sbr.rel (%p356) target = $region56
        $region55: #{tpu_custom_call.1} parent=47 // pred_region
          %359 = dma.done %s353, 16
        $region56: #{tpu_custom_call.1} parent=47 // pred_fallthru
          _
        %s360 = sand.u32 %s28, 1
        %s361 = scalar_lea.sflag [#allocation6], %s360
        %s362 = sand.u32 %s166, 1
        %s363 = scalar_lea.vmem [#allocation7], %s362
        // Predicated region
        $region57: #{tpu_custom_call.1} parent=47 // pred_check
          %p364 = pneg %p179
        $region58: #{tpu_custom_call.1} parent=47 // pred_check_branch
          %366 = sbr.rel (%p364) target = $region60
        $region59: #{tpu_custom_call.1} parent=47 // pred_region
          %367 = dma.done %s361, 16
        $region60: #{tpu_custom_call.1} parent=47 // pred_fallthru
          _
        // Predicated region
        $region61: #{tpu_custom_call.1} parent=47 // pred_check
          %p368 = pneg %p200
        $region62: #{tpu_custom_call.1} parent=47 // pred_check_branch
          %370 = sbr.rel (%p368) target = $region64
        $region63: #{tpu_custom_call.1} parent=47 // pred_region
          %371 = dma.done [#allocation9], 48000
        $region64: #{tpu_custom_call.1} parent=47 // pred_fallthru
          _
        %s372 = sand.u32 %s36, 1
        %s373 = scalar_lea.sflag [#allocation3], %s372
        %s374 = sand.u32 %s36, 1
        %s375 = smul.addr %s374, 16
        %s376 = scalar_lea.vmem [#allocation2], %s375
        %p377 = pneg %p49
        %p378 = pneg %p46
        %p379 = scmp.lt.s32.totalorder %s28, 1
        %s380 = scalar_select %p379, %s28, 1
        %s381 = smul.addr %s380, 2
        %s382 = smul.addr %s381, 8
        %s383 = scalar_lea.vmem %s1, %s382
        %p384 = pneg %p75
        %p385 = pneg %p72
        %p386 = scmp.lt.s32.totalorder %s28, 1
        %s387 = scalar_select %p386, %s28, 1
        %s388 = smul.addr %s387, 8
        %s389 = smul.addr %s388, 8
        %s390 = scalar_lea.vmem %s2, %s389
        %p391 = pneg %p101
        %p392 = pneg %p98
        %p393 = scmp.lt.s32.totalorder %s28, 1
        %s394 = scalar_select %p393, %s28, 1
        %s395 = smul.addr %s394, 8
        %s396 = scalar_lea.vmem %s3, %s395
        %p397 = pneg %p127
        %p398 = pneg %p124
        %s399 = sand.u32 %s28, 1
        %s400 = scalar_lea.sflag [#allocation6], %s399
        %s401 = sand.u32 %s140, 1
        %s402 = scalar_lea.vmem [#allocation5], %s401
        %p403 = pneg %p153
        %p404 = pneg %p150
        %s405 = sand.u32 %s28, 1
        %s406 = scalar_lea.sflag [#allocation6], %s405
        %s407 = sand.u32 %s166, 1
        %s408 = scalar_lea.vmem [#allocation7], %s407
        %p409 = pneg %p179
        %p410 = pneg %p176
        %p411 = pneg %p200
        %p412 = pneg %p197
        %p413 = pneg %p226
        %p414 = pneg %p223
        %s415 = sand.u32 %s213, 1
        %s416 = scalar_lea.sflag [#allocation4], %s415
        %s417 = sand.u32 %s213, 1
        %s418 = smul.addr %s417, 24
        %s419 = scalar_lea.vmem [#allocation10], %s418
        %p420 = scmp.lt.s32.totalorder %s28, 1
        %s421 = scalar_select %p420, %s28, 1
        %s422 = smul.addr %s421, 2
        %s423 = smul.addr %s422, 8
        %s424 = scalar_lea.vmem %s1, %s423
        %p425 = scmp.lt.s32.totalorder %s28, 1
        %s426 = scalar_select %p425, %s28, 1
        %s427 = smul.addr %s426, 8
        %s428 = smul.addr %s427, 8
        %s429 = scalar_lea.vmem %s2, %s428
        %p430 = scmp.lt.s32.totalorder %s28, 1
        %s431 = scalar_select %p430, %s28, 1
        %s432 = smul.addr %s431, 8
        %s433 = scalar_lea.vmem %s3, %s432
        %v434 = vld [vmem:[%s347] sm:$0xff]
        %v435 = vld [vmem:[%s347 + $0x8] sm:$0xff]
        %v436 = vld [vmem:[%s424] sm:$0xff]
        %v437 = vld [vmem:[%s424 + $0x8] sm:$0xff]
        %v438 = vld [vmem:[%s429] sm:$0xff]
        %v439 = vld [vmem:[%s429 + $0x8] sm:$0xff]
        %v440 = vld [vmem:[%s429 + $0x10] sm:$0xff]
        %v441 = vld [vmem:[%s429 + $0x18] sm:$0xff]
        %v442 = vld [vmem:[%s429 + $0x20] sm:$0x3]
        %v443 = vld [vmem:[%s429 + $0x28] sm:$0x3]
        %v444 = vld [vmem:[%s429 + $0x30] sm:$0x3]
        %v445 = vld [vmem:[%s429 + $0x38] sm:$0x3]
        %v446 = vld [vmem:[%s433] sm:$0xff]
        %v447 = vld [vmem:[%s355] sm:$0x1]
        %v448 = vld [vmem:[%s363] sm:$0x1]
        %v449 = vlaneseq
        %v450 = vand.u32 %v449, 127
        %vm451 = vcmp.ge.s32.totalorder %v450, 0
        %vm452 = vcmp.lt.s32.totalorder %v450, 8
        %vm453 = vmand %vm451, %vm452
        %v454 = vsel %vm453, 1, 0
        %v455 = vcvt.s32.f32 %v454
        %vm456 = vcmp.ge.s32.totalorder %v450, 8
        %vm457 = vcmp.lt.s32.totalorder %v450, 16
        %vm458 = vmand %vm456, %vm457
        %v459 = vsel %vm458, 1, 0
        %v460 = vcvt.s32.f32 %v459
        %vm461 = vcmp.ge.s32.totalorder %v450, 16
        %vm462 = vcmp.lt.s32.totalorder %v450, 24
        %vm463 = vmand %vm461, %vm462
        %v464 = vsel %vm463, 1, 0
        %v465 = vcvt.s32.f32 %v464
        %vm466 = vcmp.ge.s32.totalorder %v450, 24
        %vm467 = vcmp.lt.s32.totalorder %v450, 32
        %vm468 = vmand %vm466, %vm467
        %v469 = vsel %vm468, 1, 0
        %v470 = vcvt.s32.f32 %v469
        %vm471 = vcmp.ge.s32.totalorder %v450, 32
        %vm472 = vcmp.lt.s32.totalorder %v450, 40
        %vm473 = vmand %vm471, %vm472
        %v474 = vsel %vm473, 1, 0
        %v475 = vcvt.s32.f32 %v474
        %vm476 = vcmp.ge.s32.totalorder %v450, 40
        %vm477 = vcmp.lt.s32.totalorder %v450, 48
        %vm478 = vmand %vm476, %vm477
        %v479 = vsel %vm478, 1, 0
        %v480 = vcvt.s32.f32 %v479
        %vm481 = vcmp.ge.s32.totalorder %v450, 48
        %vm482 = vcmp.lt.s32.totalorder %v450, 56
        %vm483 = vmand %vm481, %vm482
        %v484 = vsel %vm483, 1, 0
        %v485 = vcvt.s32.f32 %v484
        %vm486 = vcmp.ge.s32.totalorder %v450, 56
        %vm487 = vcmp.lt.s32.totalorder %v450, 64
        %vm488 = vmand %vm486, %vm487
        %v489 = vsel %vm488, 1, 0
        %v490 = vcvt.s32.f32 %v489
        %v491 = vld [vmem:[#allocation8] sm:$0xff]
        %v492 = vld [vmem:[#allocation8 + $0x8] sm:$0xff]
        %v493 = vld [vmem:[#allocation8 + $0x10] sm:$0xff]
        %v494 = vld [vmem:[#allocation8 + $0x18] sm:$0xff]
        %v495 = vld [vmem:[#allocation8 + $0x20] sm:$0x1]
        %v496 = vlaneseq
        %v497 = vshrl.u32 %v496, 7
        %v498 = vsub.s32 0, %v497
        %v499 = vrot.slane %v495, %v498
        %vm500 = vcmask 261120
        %v502 = vsel %vm500, %v434, 0
        %v505 = vsel %vm500, %v435, 0
        %507 = vmatprep.subr.mxu0 0.0
        %508 = vmatpush1.msra.mxu0 %v491
        %509 = vmatprep.subr.mxu0 0.0
        %510 = vmatpush1.msra.mxu0 %v492
        %511 = vmatprep.subr.mxu0 0.0
        %512 = vmatpush1.msra.mxu0 %v493
        %513 = vmatprep.subr.mxu0 0.0
        %514 = vmatpush1.msra.mxu0 %v494
        %515 = vmatprep.subr.mxu0 0.0
        %516 = vmatpush1.msra.mxu0 0.0
        %517 = vmatprep.subr.mxu0 0.0
        %518 = vmatpush1.msra.mxu0 0.0
        %519 = vmatprep.subr.mxu0 0.0
        %520 = vmatpush1.msra.mxu0 0.0
        %521 = vmatprep.subr.mxu0 0.0
        %522 = vmatpush1.msra.mxu0 0.0
        %523 = vmatprep.subr.mxu0 0.0
        %524 = vmatpush1.msra.mxu0 0.0
        %525 = vmatprep.subr.mxu0 0.0
        %526 = vmatpush1.msra.mxu0 0.0
        %527 = vmatprep.subr.mxu0 0.0
        %528 = vmatpush1.msra.mxu0 0.0
        %529 = vmatprep.subr.mxu0 0.0
        %530 = vmatpush1.msra.mxu0 0.0
        %531 = vmatprep.subr.mxu0 0.0
        %532 = vmatpush1.msra.mxu0 0.0
        %533 = vmatprep.subr.mxu0 0.0
        %534 = vmatpush1.msra.mxu0 0.0
        %535 = vmatprep.subr.mxu0 0.0
        %536 = vmatpush1.msra.mxu0 0.0
        %537 = vmatprep.subr.mxu0 0.0
        %538 = vmatpush1.msra.mxu0 0.0
        %539 = vmatprep.subr.mxu0 0.0
        %540 = vmatpush1.msra.mxu0 0.0
        %541 = vmatprep.subr.mxu0 0.0
        %542 = vmatpush1.msra.mxu0 0.0
        %543 = vmatprep.subr.mxu0 0.0
        %544 = vmatpush1.msra.mxu0 0.0
        %545 = vmatprep.subr.mxu0 0.0
        %546 = vmatpush1.msra.mxu0 0.0
        %547 = vmatprep.subr.mxu0 0.0
        %548 = vmatpush1.msra.mxu0 0.0
        %549 = vmatprep.subr.mxu0 0.0
        %550 = vmatpush1.msra.mxu0 0.0
        %551 = vmatprep.subr.mxu0 0.0
        %552 = vmatpush1.msra.mxu0 0.0
        %553 = vmatprep.subr.mxu0 0.0
        %554 = vmatpush1.msra.mxu0 0.0
        %555 = vmatprep.subr.mxu0 0.0
        %556 = vmatpush1.msra.mxu0 0.0
        %557 = vmatprep.subr.mxu0 0.0
        %558 = vmatpush1.msra.mxu0 0.0
        %559 = vmatprep.subr.mxu0 0.0
        %560 = vmatpush1.msra.mxu0 0.0
        %561 = vmatprep.subr.mxu0 0.0
        %562 = vmatpush1.msra.mxu0 0.0
        %563 = vmatprep.subr.mxu0 0.0
        %564 = vmatpush1.msra.mxu0 0.0
        %565 = vmatprep.subr.mxu0 0.0
        %566 = vmatpush1.msra.mxu0 0.0
        %567 = vmatprep.subr.mxu0 0.0
        %568 = vmatpush1.msra.mxu0 0.0
        %569 = vmatprep.subr.mxu0 0.0
        %570 = vmatpush1.msra.mxu0 0.0
        %571 = vmatprep.mubr.f32.mxu0 0.0
        %572 = vmatmul.mubr.f32.gmra.mrb[0].mxu0 %v502
        %v573 = vpop.f32.mrb[0].mxu0
        %v574 = vadd.f32 %v499, %v573
        %v575 = vpop.f32.mrb[0].mxu0
        %576 = vmatprep.mubr.f32.mxu0 0.0
        %577 = vmatmul.mubr.f32.gmra.mrb[0].mxu0 %v505
        %v578 = vpop.f32.mrb[0].mxu0
        %v579 = vadd.f32 %v499, %v578
        %v580 = vpop.f32.mrb[0].mxu0
        %581 = vdwg.mxu0
        %v582 = vld [vmem:[#allocation8 + $0x28] sm:$0x1]
        %v583 = vld [vmem:[#allocation8 + $0x30] sm:$0x1]
        %vm584 = vcmask 523264
        %v585 = vsel %vm584, %v574, 0.0
        %586 = vadd.xlane.f32.xlu0 %v585
        %v587 = vpop.xlane.xlu0 %586
        %v588 = vsel %vm584, %v579, 0.0
        %589 = vadd.xlane.f32.xlu0 %v588
        %v590 = vpop.xlane.xlu0 %589
        %v591 = vrcp.pop 64.0
        %v592 = vmul.f32 %v587, %v591
        %v593 = vmul.f32 %v590, %v591
        %v594 = vsub.f32 %v574, %v592
        %v595 = vsub.f32 %v579, %v593
        %v596 = vmul.f32 %v594, %v594
        %v597 = vmul.f32 %v595, %v595
        %v598 = vsel %vm584, %v596, 0.0
        %599 = vadd.xlane.f32.xlu0 %v598
        %v600 = vpop.xlane.xlu0 %599
        %v601 = vsel %vm584, %v597, 0.0
        %602 = vadd.xlane.f32.xlu0 %v601
        %v603 = vpop.xlane.xlu0 %602
        %v604 = vmul.f32 %v600, %v591
        %v605 = vmul.f32 %v603, %v591
        %v606 = vadd.f32 %v604, 1e-05
        %v607 = vadd.f32 %v605, 1e-05
        %v608 = vrsqrt.pop %v606
        %v609 = vrsqrt.pop %v607
        %v610 = vmul.f32 %v594, %v608
        %v611 = vmul.f32 %v595, %v609
        %v612 = vlaneseq
        %v613 = vshrl.u32 %v612, 7
        %v614 = vsub.s32 0, %v613
        %v615 = vrot.slane %v582, %v614
        %v616 = vmul.f32 %v610, %v615
        %v617 = vmul.f32 %v611, %v615
        %v618 = vlaneseq
        %v619 = vshrl.u32 %v618, 7
        %v620 = vsub.s32 0, %v619
        %v621 = vrot.slane %v583, %v620
        %v622 = vadd.f32 %v616, %v621
        %v623 = vadd.f32 %v617, %v621
        %v624 = vmax.f32 %v622, 0.0
        %v625 = vmax.f32 %v623, 0.0
        %627 = vset.pattern.permute.xlu0 0
        %628 = vperm.xlu0 %627, %v436
        %v629 = vpop.permute.xlu0 %628
        %632 = vset.pattern.permute.xlu0 0
        %633 = vperm.xlu0 %632, %v437
        %v634 = vpop.permute.xlu0 %633
        %v636 = vmul.f32 %v624, %v629
        %v637 = vmul.f32 %v625, %v634
        %v638 = vld [vmem:[#allocation8 + $0x38] sm:$0xff]
        %v639 = vld [vmem:[#allocation8 + $0x40] sm:$0xff]
        %v640 = vld [vmem:[#allocation8 + $0x48] sm:$0xff]
        %v641 = vld [vmem:[#allocation8 + $0x50] sm:$0xff]
        %v642 = vld [vmem:[#allocation8 + $0x58] sm:$0x1]
        %v643 = vlaneseq
        %v644 = vshrl.u32 %v643, 7
        %v645 = vsub.s32 0, %v644
        %v646 = vrot.slane %v642, %v645
        %647 = vmatprep.subr.mxu0 0.0
        %648 = vmatpush1.msra.mxu0 %v638
        %649 = vmatprep.subr.mxu0 0.0
        %650 = vmatpush1.msra.mxu0 %v639
        %651 = vmatprep.subr.mxu0 0.0
        %652 = vmatpush1.msra.mxu0 %v640
        %653 = vmatprep.subr.mxu0 0.0
        %654 = vmatpush1.msra.mxu0 %v641
        %655 = vmatprep.subr.mxu0 0.0
        %656 = vmatpush1.msra.mxu0 0.0
        %657 = vmatprep.subr.mxu0 0.0
        %658 = vmatpush1.msra.mxu0 0.0
        %659 = vmatprep.subr.mxu0 0.0
        %660 = vmatpush1.msra.mxu0 0.0
        %661 = vmatprep.subr.mxu0 0.0
        %662 = vmatpush1.msra.mxu0 0.0
        %663 = vmatprep.subr.mxu0 0.0
        %664 = vmatpush1.msra.mxu0 0.0
        %665 = vmatprep.subr.mxu0 0.0
        %666 = vmatpush1.msra.mxu0 0.0
        %667 = vmatprep.subr.mxu0 0.0
        %668 = vmatpush1.msra.mxu0 0.0
        %669 = vmatprep.subr.mxu0 0.0
        %670 = vmatpush1.msra.mxu0 0.0
        %671 = vmatprep.subr.mxu0 0.0
        %672 = vmatpush1.msra.mxu0 0.0
        %673 = vmatprep.subr.mxu0 0.0
        %674 = vmatpush1.msra.mxu0 0.0
        %675 = vmatprep.subr.mxu0 0.0
        %676 = vmatpush1.msra.mxu0 0.0
        %677 = vmatprep.subr.mxu0 0.0
        %678 = vmatpush1.msra.mxu0 0.0
        %679 = vmatprep.subr.mxu0 0.0
        %680 = vmatpush1.msra.mxu0 0.0
        %681 = vmatprep.subr.mxu0 0.0
        %682 = vmatpush1.msra.mxu0 0.0
        %683 = vmatprep.subr.mxu0 0.0
        %684 = vmatpush1.msra.mxu0 0.0
        %685 = vmatprep.subr.mxu0 0.0
        %686 = vmatpush1.msra.mxu0 0.0
        %687 = vmatprep.subr.mxu0 0.0
        %688 = vmatpush1.msra.mxu0 0.0
        %689 = vmatprep.subr.mxu0 0.0
        %690 = vmatpush1.msra.mxu0 0.0
        %691 = vmatprep.subr.mxu0 0.0
        %692 = vmatpush1.msra.mxu0 0.0
        %693 = vmatprep.subr.mxu0 0.0
        %694 = vmatpush1.msra.mxu0 0.0
        %695 = vmatprep.subr.mxu0 0.0
        %696 = vmatpush1.msra.mxu0 0.0
        %697 = vmatprep.subr.mxu0 0.0
        %698 = vmatpush1.msra.mxu0 0.0
        %699 = vmatprep.subr.mxu0 0.0
        %700 = vmatpush1.msra.mxu0 0.0
        %701 = vmatprep.subr.mxu0 0.0
        %702 = vmatpush1.msra.mxu0 0.0
        %703 = vmatprep.subr.mxu0 0.0
        %704 = vmatpush1.msra.mxu0 0.0
        %705 = vmatprep.subr.mxu0 0.0
        %706 = vmatpush1.msra.mxu0 0.0
        %707 = vmatprep.subr.mxu0 0.0
        %708 = vmatpush1.msra.mxu0 0.0
        %709 = vmatprep.subr.mxu0 0.0
        %710 = vmatpush1.msra.mxu0 0.0
        %711 = vmatprep.mubr.f32.mxu0 0.0
        %712 = vmatmul.mubr.f32.gmra.mrb[0].mxu0 %v502
        %v713 = vpop.f32.mrb[0].mxu0
        %v714 = vadd.f32 %v646, %v713
        %v715 = vpop.f32.mrb[0].mxu0
        %716 = vmatprep.mubr.f32.mxu0 0.0
        %717 = vmatmul.mubr.f32.gmra.mrb[0].mxu0 %v505
        %v718 = vpop.f32.mrb[0].mxu0
        %v719 = vadd.f32 %v646, %v718
        %v720 = vpop.f32.mrb[0].mxu0
        %721 = vdwg.mxu0
        %v722 = vmax.f32 %v714, 0.0
        %v723 = vmax.f32 %v719, 0.0
        %v724 = vld [vmem:[#allocation8 + $0x60] sm:$0xff]
        %v725 = vld [vmem:[#allocation8 + $0x68] sm:$0xff]
        %v726 = vld [vmem:[#allocation8 + $0x70] sm:$0xff]
        %v727 = vld [vmem:[#allocation8 + $0x78] sm:$0xff]
        %v728 = vld [vmem:[#allocation8 + $0x80] sm:$0xff]
        %v729 = vld [vmem:[#allocation8 + $0x88] sm:$0xff]
        %v730 = vld [vmem:[#allocation8 + $0x90] sm:$0xff]
        %v731 = vld [vmem:[#allocation8 + $0x98] sm:$0xff]
        %v732 = vld [vmem:[#allocation8 + $0xa0] sm:$0x1]
        %v733 = vlaneseq
        %v734 = vshrl.u32 %v733, 7
        %v735 = vsub.s32 0, %v734
        %v736 = vrot.slane %v732, %v735
        %v738 = vsel %vm584, %v722, 0
        %v741 = vsel %vm584, %v723, 0
        %743 = vmatprep.subr.mxu0 0.0
        %744 = vmatpush1.msra.mxu0 %v724
        %745 = vmatprep.subr.mxu0 0.0
        %746 = vmatpush1.msra.mxu0 %v725
        %747 = vmatprep.subr.mxu0 0.0
        %748 = vmatpush1.msra.mxu0 %v726
        %749 = vmatprep.subr.mxu0 0.0
        %750 = vmatpush1.msra.mxu0 %v727
        %751 = vmatprep.subr.mxu0 0.0
        %752 = vmatpush1.msra.mxu0 %v728
        %753 = vmatprep.subr.mxu0 0.0
        %754 = vmatpush1.msra.mxu0 %v729
        %755 = vmatprep.subr.mxu0 0.0
        %756 = vmatpush1.msra.mxu0 %v730
        %757 = vmatprep.subr.mxu0 0.0
        %758 = vmatpush1.msra.mxu0 %v731
        %759 = vmatprep.subr.mxu0 0.0
        %760 = vmatpush1.msra.mxu0 0.0
        %761 = vmatprep.subr.mxu0 0.0
        %762 = vmatpush1.msra.mxu0 0.0
        %763 = vmatprep.subr.mxu0 0.0
        %764 = vmatpush1.msra.mxu0 0.0
        %765 = vmatprep.subr.mxu0 0.0
        %766 = vmatpush1.msra.mxu0 0.0
        %767 = vmatprep.subr.mxu0 0.0
        %768 = vmatpush1.msra.mxu0 0.0
        %769 = vmatprep.subr.mxu0 0.0
        %770 = vmatpush1.msra.mxu0 0.0
        %771 = vmatprep.subr.mxu0 0.0
        %772 = vmatpush1.msra.mxu0 0.0
        %773 = vmatprep.subr.mxu0 0.0
        %774 = vmatpush1.msra.mxu0 0.0
        %775 = vmatprep.subr.mxu0 0.0
        %776 = vmatpush1.msra.mxu0 0.0
        %777 = vmatprep.subr.mxu0 0.0
        %778 = vmatpush1.msra.mxu0 0.0
        %779 = vmatprep.subr.mxu0 0.0
        %780 = vmatpush1.msra.mxu0 0.0
        %781 = vmatprep.subr.mxu0 0.0
        %782 = vmatpush1.msra.mxu0 0.0
        %783 = vmatprep.subr.mxu0 0.0
        %784 = vmatpush1.msra.mxu0 0.0
        %785 = vmatprep.subr.mxu0 0.0
        %786 = vmatpush1.msra.mxu0 0.0
        %787 = vmatprep.subr.mxu0 0.0
        %788 = vmatpush1.msra.mxu0 0.0
        %789 = vmatprep.subr.mxu0 0.0
        %790 = vmatpush1.msra.mxu0 0.0
        %791 = vmatprep.subr.mxu0 0.0
        %792 = vmatpush1.msra.mxu0 0.0
        %793 = vmatprep.subr.mxu0 0.0
        %794 = vmatpush1.msra.mxu0 0.0
        %795 = vmatprep.subr.mxu0 0.0
        %796 = vmatpush1.msra.mxu0 0.0
        %797 = vmatprep.subr.mxu0 0.0
        %798 = vmatpush1.msra.mxu0 0.0
        %799 = vmatprep.subr.mxu0 0.0
        %800 = vmatpush1.msra.mxu0 0.0
        %801 = vmatprep.subr.mxu0 0.0
        %802 = vmatpush1.msra.mxu0 0.0
        %803 = vmatprep.subr.mxu0 0.0
        %804 = vmatpush1.msra.mxu0 0.0
        %805 = vmatprep.subr.mxu0 0.0
        %806 = vmatpush1.msra.mxu0 0.0
        %807 = vmatprep.mubr.f32.mxu0 0.0
        %808 = vmatmul.mubr.f32.gmra.mrb[0].mxu0 %v738
        %v809 = vpop.f32.mrb[0].mxu0
        %v810 = vadd.f32 %v736, %v809
        %v811 = vpop.f32.mrb[0].mxu0
        %812 = vmatprep.mubr.f32.mxu0 0.0
        %813 = vmatmul.mubr.f32.gmra.mrb[0].mxu0 %v741
        %v814 = vpop.f32.mrb[0].mxu0
        %v815 = vadd.f32 %v736, %v814
        %v816 = vpop.f32.mrb[0].mxu0
        %817 = vdwg.mxu0
        %v818 = vmul.f32 %v810, %v629
        %v819 = vmul.f32 %v815, %v634
        %v820 = vld [vmem:[#allocation8 + $0xa8] sm:$0xff]
        %v821 = vld [vmem:[#allocation8 + $0xb0] sm:$0xff]
        %v822 = vld [vmem:[#allocation8 + $0xb8] sm:$0xff]
        %v823 = vld [vmem:[#allocation8 + $0xc0] sm:$0xff]
        %v824 = vld [vmem:[#allocation8 + $0xc8] sm:$0xff]
        %v825 = vld [vmem:[#allocation8 + $0xd0] sm:$0xff]
        %v826 = vld [vmem:[#allocation8 + $0xd8] sm:$0xff]
        %v827 = vld [vmem:[#allocation8 + $0xe0] sm:$0xff]
        %v828 = vld [vmem:[#allocation8 + $0xe8] sm:$0xff]
        %v829 = vld [vmem:[#allocation8 + $0xf0] sm:$0xff]
        %v830 = vld [vmem:[#allocation8 + $0xf8] sm:$0xff]
        %v831 = vld [vmem:[#allocation8 + $0x100] sm:$0xff]
        %v832 = vld [vmem:[#allocation8 + $0x108] sm:$0xff]
        %v833 = vld [vmem:[#allocation8 + $0x110] sm:$0xff]
        %v834 = vld [vmem:[#allocation8 + $0x118] sm:$0xff]
        %v835 = vld [vmem:[#allocation8 + $0x120] sm:$0xff]
        %v836 = vld [vmem:[#allocation8 + $0x128] sm:$0xff]
        %v837 = vld [vmem:[#allocation8 + $0x130] sm:$0xff]
        %v838 = vld [vmem:[#allocation8 + $0x138] sm:$0xff]
        %v839 = vld [vmem:[#allocation8 + $0x140] sm:$0xff]
        %v840 = vld [vmem:[#allocation8 + $0x148] sm:$0xff]
        %v841 = vld [vmem:[#allocation8 + $0x150] sm:$0xff]
        %v842 = vld [vmem:[#allocation8 + $0x158] sm:$0xff]
        %v843 = vld [vmem:[#allocation8 + $0x160] sm:$0xff]
        %v844 = vld [vmem:[#allocation8 + $0x168] sm:$0xff]
        %v845 = vld [vmem:[#allocation8 + $0x170] sm:$0xff]
        %v846 = vld [vmem:[#allocation8 + $0x178] sm:$0xff]
        %v847 = vld [vmem:[#allocation8 + $0x180] sm:$0xff]
        %v848 = vld [vmem:[#allocation8 + $0x188] sm:$0xff]
        %v849 = vld [vmem:[#allocation8 + $0x190] sm:$0xff]
        %v850 = vld [vmem:[#allocation8 + $0x198] sm:$0xff]
        %v851 = vld [vmem:[#allocation8 + $0x1a0] sm:$0xff]
        %v852 = vld [vmem:[#allocation8 + $0x1a8] sm:$0xff]
        %v853 = vld [vmem:[#allocation8 + $0x1b0] sm:$0xff]
        %v854 = vld [vmem:[#allocation8 + $0x1b8] sm:$0xff]
        %v855 = vld [vmem:[#allocation8 + $0x1c0] sm:$0xff]
        %v856 = vld [vmem:[#allocation8 + $0x1c8] sm:$0xff]
        %v857 = vld [vmem:[#allocation8 + $0x1d0] sm:$0xff]
        %v858 = vld [vmem:[#allocation8 + $0x1d8] sm:$0xff]
        %v859 = vld [vmem:[#allocation8 + $0x1e0] sm:$0xff]
        %v860 = vld [vmem:[#allocation8 + $0x1e8] sm:$0xff]
        %v861 = vld [vmem:[#allocation8 + $0x1f0] sm:$0xff]
        %v862 = vld [vmem:[#allocation8 + $0x1f8] sm:$0xff]
        %v863 = vld [vmem:[#allocation8 + $0x200] sm:$0xff]
        %v864 = vld [vmem:[#allocation8 + $0x208] sm:$0xff]
        %v865 = vld [vmem:[#allocation8 + $0x210] sm:$0xff]
        %v866 = vld [vmem:[#allocation8 + $0x218] sm:$0xff]
        %v867 = vld [vmem:[#allocation8 + $0x220] sm:$0xff]
        %v868 = vld [vmem:[#allocation8 + $0x228] sm:$0xff]
        %v869 = vld [vmem:[#allocation8 + $0x230] sm:$0xff]
        %v870 = vld [vmem:[#allocation8 + $0x238] sm:$0xff]
        %v871 = vld [vmem:[#allocation8 + $0x240] sm:$0xff]
        %v872 = vld [vmem:[#allocation8 + $0x248] sm:$0xff]
        %v873 = vld [vmem:[#allocation8 + $0x250] sm:$0xff]
        %v874 = vld [vmem:[#allocation8 + $0x258] sm:$0xff]
        %v875 = vld [vmem:[#allocation8 + $0x260] sm:$0xff]
        %v876 = vld [vmem:[#allocation8 + $0x268] sm:$0xff]
        %v877 = vld [vmem:[#allocation8 + $0x270] sm:$0xff]
        %v878 = vld [vmem:[#allocation8 + $0x278] sm:$0xff]
        %v879 = vld [vmem:[#allocation8 + $0x280] sm:$0xff]
        %v880 = vld [vmem:[#allocation8 + $0x288] sm:$0xff]
        %v881 = vld [vmem:[#allocation8 + $0x290] sm:$0xff]
        %v882 = vld [vmem:[#allocation8 + $0x298] sm:$0xff]
        %v883 = vld [vmem:[#allocation8 + $0x2a0] sm:$0xff]
        %v884 = vld [vmem:[#allocation8 + $0x2a8] sm:$0x1]
        %v885 = vlaneseq
        %v886 = vshrl.u32 %v885, 7
        %v887 = vsub.s32 0, %v886
        %v888 = vrot.slane %v884, %v887
        %889 = vmatprep.subr.mxu0 0.0
        %890 = vmatpush1.msra.mxu0 %v820
        %891 = vmatprep.subr.mxu0 0.0
        %892 = vmatpush1.msra.mxu0 %v821
        %893 = vmatprep.subr.mxu0 0.0
        %894 = vmatpush1.msra.mxu0 %v822
        %895 = vmatprep.subr.mxu0 0.0
        %896 = vmatpush1.msra.mxu0 %v823
        %897 = vmatprep.subr.mxu0 0.0
        %898 = vmatpush1.msra.mxu0 %v824
        %899 = vmatprep.subr.mxu0 0.0
        %900 = vmatpush1.msra.mxu0 %v825
        %901 = vmatprep.subr.mxu0 0.0
        %902 = vmatpush1.msra.mxu0 %v826
        %903 = vmatprep.subr.mxu0 0.0
        %904 = vmatpush1.msra.mxu0 %v827
        %905 = vmatprep.subr.mxu0 0.0
        %906 = vmatpush1.msra.mxu0 %v828
        %907 = vmatprep.subr.mxu0 0.0
        %908 = vmatpush1.msra.mxu0 %v829
        %909 = vmatprep.subr.mxu0 0.0
        %910 = vmatpush1.msra.mxu0 %v830
        %911 = vmatprep.subr.mxu0 0.0
        %912 = vmatpush1.msra.mxu0 %v831
        %913 = vmatprep.subr.mxu0 0.0
        %914 = vmatpush1.msra.mxu0 %v832
        %915 = vmatprep.subr.mxu0 0.0
        %916 = vmatpush1.msra.mxu0 %v833
        %917 = vmatprep.subr.mxu0 0.0
        %918 = vmatpush1.msra.mxu0 %v834
        %919 = vmatprep.subr.mxu0 0.0
        %920 = vmatpush1.msra.mxu0 %v835
        %921 = vmatprep.subr.mxu0 0.0
        %922 = vmatpush1.msra.mxu0 %v836
        %923 = vmatprep.subr.mxu0 0.0
        %924 = vmatpush1.msra.mxu0 %v837
        %925 = vmatprep.subr.mxu0 0.0
        %926 = vmatpush1.msra.mxu0 %v838
        %927 = vmatprep.subr.mxu0 0.0
        %928 = vmatpush1.msra.mxu0 %v839
        %929 = vmatprep.subr.mxu0 0.0
        %930 = vmatpush1.msra.mxu0 %v840
        %931 = vmatprep.subr.mxu0 0.0
        %932 = vmatpush1.msra.mxu0 %v841
        %933 = vmatprep.subr.mxu0 0.0
        %934 = vmatpush1.msra.mxu0 %v842
        %935 = vmatprep.subr.mxu0 0.0
        %936 = vmatpush1.msra.mxu0 %v843
        %937 = vmatprep.subr.mxu0 0.0
        %938 = vmatpush1.msra.mxu0 %v844
        %939 = vmatprep.subr.mxu0 0.0
        %940 = vmatpush1.msra.mxu0 %v845
        %941 = vmatprep.subr.mxu0 0.0
        %942 = vmatpush1.msra.mxu0 %v846
        %943 = vmatprep.subr.mxu0 0.0
        %944 = vmatpush1.msra.mxu0 %v847
        %945 = vmatprep.subr.mxu0 0.0
        %946 = vmatpush1.msra.mxu0 %v848
        %947 = vmatprep.subr.mxu0 0.0
        %948 = vmatpush1.msra.mxu0 %v849
        %949 = vmatprep.subr.mxu0 0.0
        %950 = vmatpush1.msra.mxu0 %v850
        %951 = vmatprep.subr.mxu0 0.0
        %952 = vmatpush1.msra.mxu0 %v851
        %953 = vmatprep.mubr.f32.mxu0 %v439
        %954 = vmatmul.mubr.f32.gmra.mrb[0].mxu0 %v438
        %v955 = vpop.f32.mrb[0].mxu0
        %v956 = vadd.f32 %v888, %v955
        %v957 = vpop.f32.mrb[0].mxu0
        %958 = vmatprep.mubr.f32.mxu0 %v443
        %959 = vmatmul.mubr.f32.gmra.mrb[0].mxu0 %v442
        %v960 = vpop.f32.mrb[0].mxu0
        %v961 = vadd.f32 %v888, %v960
        %v962 = vpop.f32.mrb[0].mxu0
        %963 = vdwg.mxu0
        %964 = vmatprep.subr.mxu0 0.0
        %965 = vmatpush1.msra.mxu0 %v852
        %966 = vmatprep.subr.mxu0 0.0
        %967 = vmatpush1.msra.mxu0 %v853
        %968 = vmatprep.subr.mxu0 0.0
        %969 = vmatpush1.msra.mxu0 %v854
        %970 = vmatprep.subr.mxu0 0.0
        %971 = vmatpush1.msra.mxu0 %v855
        %972 = vmatprep.subr.mxu0 0.0
        %973 = vmatpush1.msra.mxu0 %v856
        %974 = vmatprep.subr.mxu0 0.0
        %975 = vmatpush1.msra.mxu0 %v857
        %976 = vmatprep.subr.mxu0 0.0
        %977 = vmatpush1.msra.mxu0 %v858
        %978 = vmatprep.subr.mxu0 0.0
        %979 = vmatpush1.msra.mxu0 %v859
        %980 = vmatprep.subr.mxu0 0.0
        %981 = vmatpush1.msra.mxu0 %v860
        %982 = vmatprep.subr.mxu0 0.0
        %983 = vmatpush1.msra.mxu0 %v861
        %984 = vmatprep.subr.mxu0 0.0
        %985 = vmatpush1.msra.mxu0 %v862
        %986 = vmatprep.subr.mxu0 0.0
        %987 = vmatpush1.msra.mxu0 %v863
        %988 = vmatprep.subr.mxu0 0.0
        %989 = vmatpush1.msra.mxu0 %v864
        %990 = vmatprep.subr.mxu0 0.0
        %991 = vmatpush1.msra.mxu0 %v865
        %992 = vmatprep.subr.mxu0 0.0
        %993 = vmatpush1.msra.mxu0 %v866
        %994 = vmatprep.subr.mxu0 0.0
        %995 = vmatpush1.msra.mxu0 %v867
        %996 = vmatprep.subr.mxu0 0.0
        %997 = vmatpush1.msra.mxu0 %v868
        %998 = vmatprep.subr.mxu0 0.0
        %999 = vmatpush1.msra.mxu0 %v869
        %1000 = vmatprep.subr.mxu0 0.0
        %1001 = vmatpush1.msra.mxu0 %v870
        %1002 = vmatprep.subr.mxu0 0.0
        %1003 = vmatpush1.msra.mxu0 %v871
        %1004 = vmatprep.subr.mxu0 0.0
        %1005 = vmatpush1.msra.mxu0 %v872
        %1006 = vmatprep.subr.mxu0 0.0
        %1007 = vmatpush1.msra.mxu0 %v873
        %1008 = vmatprep.subr.mxu0 0.0
        %1009 = vmatpush1.msra.mxu0 %v874
        %1010 = vmatprep.subr.mxu0 0.0
        %1011 = vmatpush1.msra.mxu0 %v875
        %1012 = vmatprep.subr.mxu0 0.0
        %1013 = vmatpush1.msra.mxu0 %v876
        %1014 = vmatprep.subr.mxu0 0.0
        %1015 = vmatpush1.msra.mxu0 %v877
        %1016 = vmatprep.subr.mxu0 0.0
        %1017 = vmatpush1.msra.mxu0 %v878
        %1018 = vmatprep.subr.mxu0 0.0
        %1019 = vmatpush1.msra.mxu0 %v879
        %1020 = vmatprep.subr.mxu0 0.0
        %1021 = vmatpush1.msra.mxu0 %v880
        %1022 = vmatprep.subr.mxu0 0.0
        %1023 = vmatpush1.msra.mxu0 %v881
        %1024 = vmatprep.subr.mxu0 0.0
        %1025 = vmatpush1.msra.mxu0 %v882
        %1026 = vmatprep.subr.mxu0 0.0
        %1027 = vmatpush1.msra.mxu0 %v883
        %1028 = vmatprep.mubr.f32.mxu0 %v441
        %1029 = vmatmul.mubr.f32.gmra.mrb[0].mxu0 %v440
        %v1030 = vpop.f32.mrb[0].mxu0
        %v1031 = vadd.f32 %v956, %v1030
        %v1032 = vpop.f32.mrb[0].mxu0
        %1033 = vmatprep.mubr.f32.mxu0 %v445
        %1034 = vmatmul.mubr.f32.gmra.mrb[0].mxu0 %v444
        %v1035 = vpop.f32.mrb[0].mxu0
        %v1036 = vadd.f32 %v961, %v1035
        %v1037 = vpop.f32.mrb[0].mxu0
        %1038 = vdwg.mxu0
        %v1039 = vld [vmem:[#allocation8 + $0x2b0] sm:$0x1]
        %v1040 = vld [vmem:[#allocation8 + $0x2b8] sm:$0x1]
        %v1041 = vsel %vm584, %v1031, 0.0
        %1042 = vadd.xlane.f32.xlu0 %v1041
        %v1043 = vpop.xlane.xlu0 %1042
        %vm1044 = vcmask 517120
        %v1045 = vsel %vm1044, %v1036, 0.0
        %1046 = vadd.xlane.f32.xlu0 %v1045
        %v1047 = vpop.xlane.xlu0 %1046
        %v1048 = vmul.f32 %v1043, %v591
        %v1049 = vmul.f32 %v1047, %v591
        %v1050 = vsub.f32 %v1031, %v1048
        %v1051 = vsub.f32 %v1036, %v1049
        %v1052 = vmul.f32 %v1050, %v1050
        %v1053 = vmul.f32 %v1051, %v1051
        %v1054 = vsel %vm584, %v1052, 0.0
        %1055 = vadd.xlane.f32.xlu0 %v1054
        %v1056 = vpop.xlane.xlu0 %1055
        %v1057 = vsel %vm1044, %v1053, 0.0
        %1058 = vadd.xlane.f32.xlu0 %v1057
        %v1059 = vpop.xlane.xlu0 %1058
        %v1060 = vmul.f32 %v1056, %v591
        %v1061 = vmul.f32 %v1059, %v591
        %v1062 = vadd.f32 %v1060, 1e-05
        %v1063 = vadd.f32 %v1061, 1e-05
        %v1064 = vrsqrt.pop %v1062
        %v1065 = vrsqrt.pop %v1063
        %v1066 = vmul.f32 %v1050, %v1064
        %v1067 = vmul.f32 %v1051, %v1065
        %v1068 = vlaneseq
        %v1069 = vshrl.u32 %v1068, 7
        %v1070 = vsub.s32 0, %v1069
        %v1071 = vrot.slane %v1039, %v1070
        %v1072 = vmul.f32 %v1066, %v1071
        %v1073 = vmul.f32 %v1067, %v1071
        %v1074 = vlaneseq
        %v1075 = vshrl.u32 %v1074, 7
        %v1076 = vsub.s32 0, %v1075
        %v1077 = vrot.slane %v1040, %v1076
        %v1078 = vadd.f32 %v1072, %v1077
        %v1079 = vadd.f32 %v1073, %v1077
        %1080 = vset.pattern.permute.xlu0 0
        %1081 = vperm.xlu0 %1080, %v446
        %v1082 = vpop.permute.xlu0 %1081
        %vm1083 = vcmp.eq.s32.totalorder %v1082, %v450
        %v1084 = vsel %vm1083, 1, 0
        %v1085 = vcvt.s32.f32 %v1084
        %vm1086 = vcmask 130048
        %v1088 = vsel %vm1086, %v1085, 0
        %1090 = vmatprep.subr.mxu0 0.0
        %1091 = vmatpush1.msra.mxu0 %v636
        %1092 = vmatprep.subr.mxu0 0.0
        %1093 = vmatpush1.msra.mxu0 %v637
        %1094 = vmatprep.subr.mxu0 0.0
        %1095 = vmatpush1.msra.mxu0 0.0
        %1096 = vmatprep.subr.mxu0 0.0
        %1097 = vmatpush1.msra.mxu0 0.0
        %1098 = vmatprep.subr.mxu0 0.0
        %1099 = vmatpush1.msra.mxu0 0.0
        %1100 = vmatprep.subr.mxu0 0.0
        %1101 = vmatpush1.msra.mxu0 0.0
        %1102 = vmatprep.subr.mxu0 0.0
        %1103 = vmatpush1.msra.mxu0 0.0
        %1104 = vmatprep.subr.mxu0 0.0
        %1105 = vmatpush1.msra.mxu0 0.0
        %1106 = vmatprep.subr.mxu0 0.0
        %1107 = vmatpush1.msra.mxu0 0.0
        %1108 = vmatprep.subr.mxu0 0.0
        %1109 = vmatpush1.msra.mxu0 0.0
        %1110 = vmatprep.subr.mxu0 0.0
        %1111 = vmatpush1.msra.mxu0 0.0
        %1112 = vmatprep.subr.mxu0 0.0
        %1113 = vmatpush1.msra.mxu0 0.0
        %1114 = vmatprep.subr.mxu0 0.0
        %1115 = vmatpush1.msra.mxu0 0.0
        %1116 = vmatprep.subr.mxu0 0.0
        %1117 = vmatpush1.msra.mxu0 0.0
        %1118 = vmatprep.subr.mxu0 0.0
        %1119 = vmatpush1.msra.mxu0 0.0
        %1120 = vmatprep.subr.mxu0 0.0
        %1121 = vmatpush1.msra.mxu0 0.0
        %1122 = vmatprep.subr.mxu0 0.0
        %1123 = vmatpush1.msra.mxu0 0.0
        %1124 = vmatprep.subr.mxu0 0.0
        %1125 = vmatpush1.msra.mxu0 0.0
        %1126 = vmatprep.subr.mxu0 0.0
        %1127 = vmatpush1.msra.mxu0 0.0
        %1128 = vmatprep.subr.mxu0 0.0
        %1129 = vmatpush1.msra.mxu0 0.0
        %1130 = vmatprep.subr.mxu0 0.0
        %1131 = vmatpush1.msra.mxu0 0.0
        %1132 = vmatprep.subr.mxu0 0.0
        %1133 = vmatpush1.msra.mxu0 0.0
        %1134 = vmatprep.subr.mxu0 0.0
        %1135 = vmatpush1.msra.mxu0 0.0
        %1136 = vmatprep.subr.mxu0 0.0
        %1137 = vmatpush1.msra.mxu0 0.0
        %1138 = vmatprep.subr.mxu0 0.0
        %1139 = vmatpush1.msra.mxu0 0.0
        %1140 = vmatprep.subr.mxu0 0.0
        %1141 = vmatpush1.msra.mxu0 0.0
        %1142 = vmatprep.subr.mxu0 0.0
        %1143 = vmatpush1.msra.mxu0 0.0
        %1144 = vmatprep.subr.mxu0 0.0
        %1145 = vmatpush1.msra.mxu0 0.0
        %1146 = vmatprep.subr.mxu0 0.0
        %1147 = vmatpush1.msra.mxu0 0.0
        %1148 = vmatprep.subr.mxu0 0.0
        %1149 = vmatpush1.msra.mxu0 0.0
        %1150 = vmatprep.subr.mxu0 0.0
        %1151 = vmatpush1.msra.mxu0 0.0
        %1152 = vmatprep.subr.mxu0 0.0
        %1153 = vmatpush1.msra.mxu0 0.0
        %1154 = vmatprep.mubr.f32.mxu0 0.0
        %1155 = vmatmul.mubr.f32.gmra.mrb[0].mxu0 %v1088
        %v1156 = vpop.f32.mrb[0].mxu0
        %v1157 = vadd.f32 0.0, %v1156
        %v1158 = vpop.f32.mrb[0].mxu0
        %1159 = vdwg.mxu0
        %v1160 = vld [vmem:[#allocation8 + $0x2c0] sm:$0xff]
        %v1161 = vld [vmem:[#allocation8 + $0x2c8] sm:$0xff]
        %v1162 = vld [vmem:[#allocation8 + $0x2d0] sm:$0xff]
        %v1163 = vld [vmem:[#allocation8 + $0x2d8] sm:$0xff]
        %v1164 = vld [vmem:[#allocation8 + $0x2e0] sm:$0xff]
        %v1165 = vld [vmem:[#allocation8 + $0x2e8] sm:$0xff]
        %v1166 = vld [vmem:[#allocation8 + $0x2f0] sm:$0xff]
        %v1167 = vld [vmem:[#allocation8 + $0x2f8] sm:$0xff]
        %v1168 = vld [vmem:[#allocation8 + $0x300] sm:$0x1]
        %v1169 = vlaneseq
        %v1170 = vshrl.u32 %v1169, 7
        %v1171 = vsub.s32 0, %v1170
        %v1172 = vrot.slane %v1168, %v1171
        %v1174 = vsel %vm584, %v1157, 0
        %1176 = vmatprep.subr.mxu0 0.0
        %1177 = vmatpush1.msra.mxu0 %v1160
        %1178 = vmatprep.subr.mxu0 0.0
        %1179 = vmatpush1.msra.mxu0 %v1161
        %1180 = vmatprep.subr.mxu0 0.0
        %1181 = vmatpush1.msra.mxu0 %v1162
        %1182 = vmatprep.subr.mxu0 0.0
        %1183 = vmatpush1.msra.mxu0 %v1163
        %1184 = vmatprep.subr.mxu0 0.0
        %1185 = vmatpush1.msra.mxu0 %v1164
        %1186 = vmatprep.subr.mxu0 0.0
        %1187 = vmatpush1.msra.mxu0 %v1165
        %1188 = vmatprep.subr.mxu0 0.0
        %1189 = vmatpush1.msra.mxu0 %v1166
        %1190 = vmatprep.subr.mxu0 0.0
        %1191 = vmatpush1.msra.mxu0 %v1167
        %1192 = vmatprep.subr.mxu0 0.0
        %1193 = vmatpush1.msra.mxu0 0.0
        %1194 = vmatprep.subr.mxu0 0.0
        %1195 = vmatpush1.msra.mxu0 0.0
        %1196 = vmatprep.subr.mxu0 0.0
        %1197 = vmatpush1.msra.mxu0 0.0
        %1198 = vmatprep.subr.mxu0 0.0
        %1199 = vmatpush1.msra.mxu0 0.0
        %1200 = vmatprep.subr.mxu0 0.0
        %1201 = vmatpush1.msra.mxu0 0.0
        %1202 = vmatprep.subr.mxu0 0.0
        %1203 = vmatpush1.msra.mxu0 0.0
        %1204 = vmatprep.subr.mxu0 0.0
        %1205 = vmatpush1.msra.mxu0 0.0
        %1206 = vmatprep.subr.mxu0 0.0
        %1207 = vmatpush1.msra.mxu0 0.0
        %1208 = vmatprep.subr.mxu0 0.0
        %1209 = vmatpush1.msra.mxu0 0.0
        %1210 = vmatprep.subr.mxu0 0.0
        %1211 = vmatpush1.msra.mxu0 0.0
        %1212 = vmatprep.subr.mxu0 0.0
        %1213 = vmatpush1.msra.mxu0 0.0
        %1214 = vmatprep.subr.mxu0 0.0
        %1215 = vmatpush1.msra.mxu0 0.0
        %1216 = vmatprep.subr.mxu0 0.0
        %1217 = vmatpush1.msra.mxu0 0.0
        %1218 = vmatprep.subr.mxu0 0.0
        %1219 = vmatpush1.msra.mxu0 0.0
        %1220 = vmatprep.subr.mxu0 0.0
        %1221 = vmatpush1.msra.mxu0 0.0
        %1222 = vmatprep.subr.mxu0 0.0
        %1223 = vmatpush1.msra.mxu0 0.0
        %1224 = vmatprep.subr.mxu0 0.0
        %1225 = vmatpush1.msra.mxu0 0.0
        %1226 = vmatprep.subr.mxu0 0.0
        %1227 = vmatpush1.msra.mxu0 0.0
        %1228 = vmatprep.subr.mxu0 0.0
        %1229 = vmatpush1.msra.mxu0 0.0
        %1230 = vmatprep.subr.mxu0 0.0
        %1231 = vmatpush1.msra.mxu0 0.0
        %1232 = vmatprep.subr.mxu0 0.0
        %1233 = vmatpush1.msra.mxu0 0.0
        %1234 = vmatprep.subr.mxu0 0.0
        %1235 = vmatpush1.msra.mxu0 0.0
        %1236 = vmatprep.subr.mxu0 0.0
        %1237 = vmatpush1.msra.mxu0 0.0
        %1238 = vmatprep.subr.mxu0 0.0
        %1239 = vmatpush1.msra.mxu0 0.0
        %1240 = vmatprep.mubr.f32.mxu0 0.0
        %1241 = vmatmul.mubr.f32.gmra.mrb[0].mxu0 %v1174
        %v1242 = vpop.f32.mrb[0].mxu0
        %v1243 = vadd.f32 %v1172, %v1242
        %v1244 = vpop.f32.mrb[0].mxu0
        %1245 = vdwg.mxu0
        %v1246 = vmax.f32 %v1243, 0.0
        %v1247 = vld [vmem:[#allocation8 + $0x308] sm:$0xff]
        %v1248 = vld [vmem:[#allocation8 + $0x310] sm:$0xff]
        %v1249 = vld [vmem:[#allocation8 + $0x318] sm:$0xff]
        %v1250 = vld [vmem:[#allocation8 + $0x320] sm:$0xff]
        %v1251 = vld [vmem:[#allocation8 + $0x328] sm:$0xff]
        %v1252 = vld [vmem:[#allocation8 + $0x330] sm:$0xff]
        %v1253 = vld [vmem:[#allocation8 + $0x338] sm:$0xff]
        %v1254 = vld [vmem:[#allocation8 + $0x340] sm:$0xff]
        %v1255 = vld [vmem:[#allocation8 + $0x348] sm:$0x1]
        %v1256 = vlaneseq
        %v1257 = vshrl.u32 %v1256, 7
        %v1258 = vsub.s32 0, %v1257
        %v1259 = vrot.slane %v1255, %v1258
        %v1261 = vsel %vm584, %v1246, 0
        %1263 = vmatprep.subr.mxu0 0.0
        %1264 = vmatpush1.msra.mxu0 %v1247
        %1265 = vmatprep.subr.mxu0 0.0
        %1266 = vmatpush1.msra.mxu0 %v1248
        %1267 = vmatprep.subr.mxu0 0.0
        %1268 = vmatpush1.msra.mxu0 %v1249
        %1269 = vmatprep.subr.mxu0 0.0
        %1270 = vmatpush1.msra.mxu0 %v1250
        %1271 = vmatprep.subr.mxu0 0.0
        %1272 = vmatpush1.msra.mxu0 %v1251
        %1273 = vmatprep.subr.mxu0 0.0
        %1274 = vmatpush1.msra.mxu0 %v1252
        %1275 = vmatprep.subr.mxu0 0.0
        %1276 = vmatpush1.msra.mxu0 %v1253
        %1277 = vmatprep.subr.mxu0 0.0
        %1278 = vmatpush1.msra.mxu0 %v1254
        %1279 = vmatprep.subr.mxu0 0.0
        %1280 = vmatpush1.msra.mxu0 0.0
        %1281 = vmatprep.subr.mxu0 0.0
        %1282 = vmatpush1.msra.mxu0 0.0
        %1283 = vmatprep.subr.mxu0 0.0
        %1284 = vmatpush1.msra.mxu0 0.0
        %1285 = vmatprep.subr.mxu0 0.0
        %1286 = vmatpush1.msra.mxu0 0.0
        %1287 = vmatprep.subr.mxu0 0.0
        %1288 = vmatpush1.msra.mxu0 0.0
        %1289 = vmatprep.subr.mxu0 0.0
        %1290 = vmatpush1.msra.mxu0 0.0
        %1291 = vmatprep.subr.mxu0 0.0
        %1292 = vmatpush1.msra.mxu0 0.0
        %1293 = vmatprep.subr.mxu0 0.0
        %1294 = vmatpush1.msra.mxu0 0.0
        %1295 = vmatprep.subr.mxu0 0.0
        %1296 = vmatpush1.msra.mxu0 0.0
        %1297 = vmatprep.subr.mxu0 0.0
        %1298 = vmatpush1.msra.mxu0 0.0
        %1299 = vmatprep.subr.mxu0 0.0
        %1300 = vmatpush1.msra.mxu0 0.0
        %1301 = vmatprep.subr.mxu0 0.0
        %1302 = vmatpush1.msra.mxu0 0.0
        %1303 = vmatprep.subr.mxu0 0.0
        %1304 = vmatpush1.msra.mxu0 0.0
        %1305 = vmatprep.subr.mxu0 0.0
        %1306 = vmatpush1.msra.mxu0 0.0
        %1307 = vmatprep.subr.mxu0 0.0
        %1308 = vmatpush1.msra.mxu0 0.0
        %1309 = vmatprep.subr.mxu0 0.0
        %1310 = vmatpush1.msra.mxu0 0.0
        %1311 = vmatprep.subr.mxu0 0.0
        %1312 = vmatpush1.msra.mxu0 0.0
        %1313 = vmatprep.subr.mxu0 0.0
        %1314 = vmatpush1.msra.mxu0 0.0
        %1315 = vmatprep.subr.mxu0 0.0
        %1316 = vmatpush1.msra.mxu0 0.0
        %1317 = vmatprep.subr.mxu0 0.0
        %1318 = vmatpush1.msra.mxu0 0.0
        %1319 = vmatprep.subr.mxu0 0.0
        %1320 = vmatpush1.msra.mxu0 0.0
        %1321 = vmatprep.subr.mxu0 0.0
        %1322 = vmatpush1.msra.mxu0 0.0
        %1323 = vmatprep.subr.mxu0 0.0
        %1324 = vmatpush1.msra.mxu0 0.0
        %1325 = vmatprep.subr.mxu0 0.0
        %1326 = vmatpush1.msra.mxu0 0.0
        %1327 = vmatprep.mubr.f32.mxu0 0.0
        %1328 = vmatmul.mubr.f32.gmra.mrb[0].mxu0 %v1261
        %v1329 = vpop.f32.mrb[0].mxu0
        %v1330 = vadd.f32 %v1259, %v1329
        %v1331 = vpop.f32.mrb[0].mxu0
        %1332 = vdwg.mxu0
        %v1333 = vmax.f32 %v1330, 0.0
        %v1334 = vld [vmem:[#allocation8 + $0x350] sm:$0xff]
        %v1335 = vld [vmem:[#allocation8 + $0x358] sm:$0xff]
        %v1336 = vld [vmem:[#allocation8 + $0x360] sm:$0xff]
        %v1337 = vld [vmem:[#allocation8 + $0x368] sm:$0xff]
        %v1338 = vld [vmem:[#allocation8 + $0x370] sm:$0xff]
        %v1339 = vld [vmem:[#allocation8 + $0x378] sm:$0xff]
        %v1340 = vld [vmem:[#allocation8 + $0x380] sm:$0xff]
        %v1341 = vld [vmem:[#allocation8 + $0x388] sm:$0xff]
        %v1342 = vld [vmem:[#allocation8 + $0x390] sm:$0x1]
        %v1343 = vlaneseq
        %v1344 = vshrl.u32 %v1343, 7
        %v1345 = vsub.s32 0, %v1344
        %v1346 = vrot.slane %v1342, %v1345
        %v1348 = vsel %vm584, %v1333, 0
        %1350 = vmatprep.subr.mxu0 0.0
        %1351 = vmatpush1.msra.mxu0 %v1334
        %1352 = vmatprep.subr.mxu0 0.0
        %1353 = vmatpush1.msra.mxu0 %v1335
        %1354 = vmatprep.subr.mxu0 0.0
        %1355 = vmatpush1.msra.mxu0 %v1336
        %1356 = vmatprep.subr.mxu0 0.0
        %1357 = vmatpush1.msra.mxu0 %v1337
        %1358 = vmatprep.subr.mxu0 0.0
        %1359 = vmatpush1.msra.mxu0 %v1338
        %1360 = vmatprep.subr.mxu0 0.0
        %1361 = vmatpush1.msra.mxu0 %v1339
        %1362 = vmatprep.subr.mxu0 0.0
        %1363 = vmatpush1.msra.mxu0 %v1340
        %1364 = vmatprep.subr.mxu0 0.0
        %1365 = vmatpush1.msra.mxu0 %v1341
        %1366 = vmatprep.subr.mxu0 0.0
        %1367 = vmatpush1.msra.mxu0 0.0
        %1368 = vmatprep.subr.mxu0 0.0
        %1369 = vmatpush1.msra.mxu0 0.0
        %1370 = vmatprep.subr.mxu0 0.0
        %1371 = vmatpush1.msra.mxu0 0.0
        %1372 = vmatprep.subr.mxu0 0.0
        %1373 = vmatpush1.msra.mxu0 0.0
        %1374 = vmatprep.subr.mxu0 0.0
        %1375 = vmatpush1.msra.mxu0 0.0
        %1376 = vmatprep.subr.mxu0 0.0
        %1377 = vmatpush1.msra.mxu0 0.0
        %1378 = vmatprep.subr.mxu0 0.0
        %1379 = vmatpush1.msra.mxu0 0.0
        %1380 = vmatprep.subr.mxu0 0.0
        %1381 = vmatpush1.msra.mxu0 0.0
        %1382 = vmatprep.subr.mxu0 0.0
        %1383 = vmatpush1.msra.mxu0 0.0
        %1384 = vmatprep.subr.mxu0 0.0
        %1385 = vmatpush1.msra.mxu0 0.0
        %1386 = vmatprep.subr.mxu0 0.0
        %1387 = vmatpush1.msra.mxu0 0.0
        %1388 = vmatprep.subr.mxu0 0.0
        %1389 = vmatpush1.msra.mxu0 0.0
        %1390 = vmatprep.subr.mxu0 0.0
        %1391 = vmatpush1.msra.mxu0 0.0
        %1392 = vmatprep.subr.mxu0 0.0
        %1393 = vmatpush1.msra.mxu0 0.0
        %1394 = vmatprep.subr.mxu0 0.0
        %1395 = vmatpush1.msra.mxu0 0.0
        %1396 = vmatprep.subr.mxu0 0.0
        %1397 = vmatpush1.msra.mxu0 0.0
        %1398 = vmatprep.subr.mxu0 0.0
        %1399 = vmatpush1.msra.mxu0 0.0
        %1400 = vmatprep.subr.mxu0 0.0
        %1401 = vmatpush1.msra.mxu0 0.0
        %1402 = vmatprep.subr.mxu0 0.0
        %1403 = vmatpush1.msra.mxu0 0.0
        %1404 = vmatprep.subr.mxu0 0.0
        %1405 = vmatpush1.msra.mxu0 0.0
        %1406 = vmatprep.subr.mxu0 0.0
        %1407 = vmatpush1.msra.mxu0 0.0
        %1408 = vmatprep.subr.mxu0 0.0
        %1409 = vmatpush1.msra.mxu0 0.0
        %1410 = vmatprep.subr.mxu0 0.0
        %1411 = vmatpush1.msra.mxu0 0.0
        %1412 = vmatprep.subr.mxu0 0.0
        %1413 = vmatpush1.msra.mxu0 0.0
        %1414 = vmatprep.mubr.f32.mxu0 0.0
        %1415 = vmatmul.mubr.f32.gmra.mrb[0].mxu0 %v1348
        %v1416 = vpop.f32.mrb[0].mxu0
        %v1417 = vadd.f32 %v1346, %v1416
        %v1418 = vpop.f32.mrb[0].mxu0
        %1419 = vdwg.mxu0
        %v1420 = vld [vmem:[#allocation8 + $0x398] sm:$0x1]
        %v1421 = vld [vmem:[#allocation8 + $0x3a0] sm:$0x1]
        %v1422 = vsel %vm584, %v1417, 0.0
        %1423 = vadd.xlane.f32.xlu0 %v1422
        %v1424 = vpop.xlane.xlu0 %1423
        %v1425 = vmul.f32 %v1424, %v591
        %v1426 = vsub.f32 %v1417, %v1425
        %v1427 = vmul.f32 %v1426, %v1426
        %v1428 = vsel %vm584, %v1427, 0.0
        %1429 = vadd.xlane.f32.xlu0 %v1428
        %v1430 = vpop.xlane.xlu0 %1429
        %v1431 = vmul.f32 %v1430, %v591
        %v1432 = vadd.f32 %v1431, 1e-05
        %v1433 = vrsqrt.pop %v1432
        %v1434 = vmul.f32 %v1426, %v1433
        %v1435 = vlaneseq
        %v1436 = vshrl.u32 %v1435, 7
        %v1437 = vsub.s32 0, %v1436
        %v1438 = vrot.slane %v1420, %v1437
        %v1439 = vmul.f32 %v1434, %v1438
        %v1440 = vlaneseq
        %v1441 = vshrl.u32 %v1440, 7
        %v1442 = vsub.s32 0, %v1441
        %v1443 = vrot.slane %v1421, %v1442
        %v1444 = vadd.f32 %v1439, %v1443
        %v1445 = vld [vmem:[#allocation8 + $0x3a8] sm:$0xff]
        %v1446 = vld [vmem:[#allocation8 + $0x3b0] sm:$0xff]
        %v1447 = vld [vmem:[#allocation8 + $0x3b8] sm:$0xff]
        %v1448 = vld [vmem:[#allocation8 + $0x3c0] sm:$0xff]
        %v1449 = vld [vmem:[#allocation8 + $0x3c8] sm:$0xff]
        %v1450 = vld [vmem:[#allocation8 + $0x3d0] sm:$0xff]
        %v1451 = vld [vmem:[#allocation8 + $0x3d8] sm:$0xff]
        %v1452 = vld [vmem:[#allocation8 + $0x3e0] sm:$0xff]
        %v1453 = vld [vmem:[#allocation8 + $0x3e8] sm:$0x1]
        %v1454 = vlaneseq
        %v1455 = vshrl.u32 %v1454, 7
        %v1456 = vsub.s32 0, %v1455
        %v1457 = vrot.slane %v1453, %v1456
        %v1459 = vsel %vm584, %v1444, 0
        %1461 = vmatprep.subr.mxu0 0.0
        %1462 = vmatpush1.msra.mxu0 %v1445
        %1463 = vmatprep.subr.mxu0 0.0
        %1464 = vmatpush1.msra.mxu0 %v1446
        %1465 = vmatprep.subr.mxu0 0.0
        %1466 = vmatpush1.msra.mxu0 %v1447
        %1467 = vmatprep.subr.mxu0 0.0
        %1468 = vmatpush1.msra.mxu0 %v1448
        %1469 = vmatprep.subr.mxu0 0.0
        %1470 = vmatpush1.msra.mxu0 %v1449
        %1471 = vmatprep.subr.mxu0 0.0
        %1472 = vmatpush1.msra.mxu0 %v1450
        %1473 = vmatprep.subr.mxu0 0.0
        %1474 = vmatpush1.msra.mxu0 %v1451
        %1475 = vmatprep.subr.mxu0 0.0
        %1476 = vmatpush1.msra.mxu0 %v1452
        %1477 = vmatprep.subr.mxu0 0.0
        %1478 = vmatpush1.msra.mxu0 0.0
        %1479 = vmatprep.subr.mxu0 0.0
        %1480 = vmatpush1.msra.mxu0 0.0
        %1481 = vmatprep.subr.mxu0 0.0
        %1482 = vmatpush1.msra.mxu0 0.0
        %1483 = vmatprep.subr.mxu0 0.0
        %1484 = vmatpush1.msra.mxu0 0.0
        %1485 = vmatprep.subr.mxu0 0.0
        %1486 = vmatpush1.msra.mxu0 0.0
        %1487 = vmatprep.subr.mxu0 0.0
        %1488 = vmatpush1.msra.mxu0 0.0
        %1489 = vmatprep.subr.mxu0 0.0
        %1490 = vmatpush1.msra.mxu0 0.0
        %1491 = vmatprep.subr.mxu0 0.0
        %1492 = vmatpush1.msra.mxu0 0.0
        %1493 = vmatprep.subr.mxu0 0.0
        %1494 = vmatpush1.msra.mxu0 0.0
        %1495 = vmatprep.subr.mxu0 0.0
        %1496 = vmatpush1.msra.mxu0 0.0
        %1497 = vmatprep.subr.mxu0 0.0
        %1498 = vmatpush1.msra.mxu0 0.0
        %1499 = vmatprep.subr.mxu0 0.0
        %1500 = vmatpush1.msra.mxu0 0.0
        %1501 = vmatprep.subr.mxu0 0.0
        %1502 = vmatpush1.msra.mxu0 0.0
        %1503 = vmatprep.subr.mxu0 0.0
        %1504 = vmatpush1.msra.mxu0 0.0
        %1505 = vmatprep.subr.mxu0 0.0
        %1506 = vmatpush1.msra.mxu0 0.0
        %1507 = vmatprep.subr.mxu0 0.0
        %1508 = vmatpush1.msra.mxu0 0.0
        %1509 = vmatprep.subr.mxu0 0.0
        %1510 = vmatpush1.msra.mxu0 0.0
        %1511 = vmatprep.subr.mxu0 0.0
        %1512 = vmatpush1.msra.mxu0 0.0
        %1513 = vmatprep.subr.mxu0 0.0
        %1514 = vmatpush1.msra.mxu0 0.0
        %1515 = vmatprep.subr.mxu0 0.0
        %1516 = vmatpush1.msra.mxu0 0.0
        %1517 = vmatprep.subr.mxu0 0.0
        %1518 = vmatpush1.msra.mxu0 0.0
        %1519 = vmatprep.subr.mxu0 0.0
        %1520 = vmatpush1.msra.mxu0 0.0
        %1521 = vmatprep.subr.mxu0 0.0
        %1522 = vmatpush1.msra.mxu0 0.0
        %1523 = vmatprep.subr.mxu0 0.0
        %1524 = vmatpush1.msra.mxu0 0.0
        %1525 = vmatprep.mubr.f32.mxu0 0.0
        %1526 = vmatmul.mubr.f32.gmra.mrb[0].mxu0 %v1459
        %v1527 = vpop.f32.mrb[0].mxu0
        %v1528 = vadd.f32 %v1457, %v1527
        %v1529 = vpop.f32.mrb[0].mxu0
        %1530 = vdwg.mxu0
        %v1531 = vmax.f32 %v1528, 0.0
        %v1532 = vld [vmem:[#allocation8 + $0x3f0] sm:$0xff]
        %v1533 = vld [vmem:[#allocation8 + $0x3f8] sm:$0xff]
        %v1534 = vld [vmem:[#allocation8 + $0x400] sm:$0xff]
        %v1535 = vld [vmem:[#allocation8 + $0x408] sm:$0xff]
        %v1536 = vld [vmem:[#allocation8 + $0x410] sm:$0xff]
        %v1537 = vld [vmem:[#allocation8 + $0x418] sm:$0xff]
        %v1538 = vld [vmem:[#allocation8 + $0x420] sm:$0xff]
        %v1539 = vld [vmem:[#allocation8 + $0x428] sm:$0xff]
        %v1540 = vld [vmem:[#allocation8 + $0x430] sm:$0x1]
        %v1541 = vlaneseq
        %v1542 = vshrl.u32 %v1541, 7
        %v1543 = vsub.s32 0, %v1542
        %v1544 = vrot.slane %v1540, %v1543
        %v1546 = vsel %vm584, %v1531, 0
        %1548 = vmatprep.subr.mxu0 0.0
        %1549 = vmatpush1.msra.mxu0 %v1532
        %1550 = vmatprep.subr.mxu0 0.0
        %1551 = vmatpush1.msra.mxu0 %v1533
        %1552 = vmatprep.subr.mxu0 0.0
        %1553 = vmatpush1.msra.mxu0 %v1534
        %1554 = vmatprep.subr.mxu0 0.0
        %1555 = vmatpush1.msra.mxu0 %v1535
        %1556 = vmatprep.subr.mxu0 0.0
        %1557 = vmatpush1.msra.mxu0 %v1536
        %1558 = vmatprep.subr.mxu0 0.0
        %1559 = vmatpush1.msra.mxu0 %v1537
        %1560 = vmatprep.subr.mxu0 0.0
        %1561 = vmatpush1.msra.mxu0 %v1538
        %1562 = vmatprep.subr.mxu0 0.0
        %1563 = vmatpush1.msra.mxu0 %v1539
        %1564 = vmatprep.subr.mxu0 0.0
        %1565 = vmatpush1.msra.mxu0 0.0
        %1566 = vmatprep.subr.mxu0 0.0
        %1567 = vmatpush1.msra.mxu0 0.0
        %1568 = vmatprep.subr.mxu0 0.0
        %1569 = vmatpush1.msra.mxu0 0.0
        %1570 = vmatprep.subr.mxu0 0.0
        %1571 = vmatpush1.msra.mxu0 0.0
        %1572 = vmatprep.subr.mxu0 0.0
        %1573 = vmatpush1.msra.mxu0 0.0
        %1574 = vmatprep.subr.mxu0 0.0
        %1575 = vmatpush1.msra.mxu0 0.0
        %1576 = vmatprep.subr.mxu0 0.0
        %1577 = vmatpush1.msra.mxu0 0.0
        %1578 = vmatprep.subr.mxu0 0.0
        %1579 = vmatpush1.msra.mxu0 0.0
        %1580 = vmatprep.subr.mxu0 0.0
        %1581 = vmatpush1.msra.mxu0 0.0
        %1582 = vmatprep.subr.mxu0 0.0
        %1583 = vmatpush1.msra.mxu0 0.0
        %1584 = vmatprep.subr.mxu0 0.0
        %1585 = vmatpush1.msra.mxu0 0.0
        %1586 = vmatprep.subr.mxu0 0.0
        %1587 = vmatpush1.msra.mxu0 0.0
        %1588 = vmatprep.subr.mxu0 0.0
        %1589 = vmatpush1.msra.mxu0 0.0
        %1590 = vmatprep.subr.mxu0 0.0
        %1591 = vmatpush1.msra.mxu0 0.0
        %1592 = vmatprep.subr.mxu0 0.0
        %1593 = vmatpush1.msra.mxu0 0.0
        %1594 = vmatprep.subr.mxu0 0.0
        %1595 = vmatpush1.msra.mxu0 0.0
        %1596 = vmatprep.subr.mxu0 0.0
        %1597 = vmatpush1.msra.mxu0 0.0
        %1598 = vmatprep.subr.mxu0 0.0
        %1599 = vmatpush1.msra.mxu0 0.0
        %1600 = vmatprep.subr.mxu0 0.0
        %1601 = vmatpush1.msra.mxu0 0.0
        %1602 = vmatprep.subr.mxu0 0.0
        %1603 = vmatpush1.msra.mxu0 0.0
        %1604 = vmatprep.subr.mxu0 0.0
        %1605 = vmatpush1.msra.mxu0 0.0
        %1606 = vmatprep.subr.mxu0 0.0
        %1607 = vmatpush1.msra.mxu0 0.0
        %1608 = vmatprep.subr.mxu0 0.0
        %1609 = vmatpush1.msra.mxu0 0.0
        %1610 = vmatprep.subr.mxu0 0.0
        %1611 = vmatpush1.msra.mxu0 0.0
        %1612 = vmatprep.mubr.f32.mxu0 0.0
        %1613 = vmatmul.mubr.f32.gmra.mrb[0].mxu0 %v1546
        %v1614 = vpop.f32.mrb[0].mxu0
        %v1615 = vadd.f32 %v1544, %v1614
        %v1616 = vpop.f32.mrb[0].mxu0
        %1617 = vdwg.mxu0
        %v1619 = vsel %vm584, %v818, 0
        %v1622 = vsel %vm584, %v819, 0
        %1624 = vmatprep.subr.mxu0 0.0
        %1625 = vmatpush1.xpose.msra.mxu0 %v1619
        %1626 = vmatprep.subr.mxu0 0.0
        %1627 = vmatpush1.xpose.msra.mxu0 %v1622
        %1628 = vmatprep.subr.mxu0 0.0
        %1629 = vmatpush1.xpose.msra.mxu0 0.0
        %1630 = vmatprep.subr.mxu0 0.0
        %1631 = vmatpush1.xpose.msra.mxu0 0.0
        %1632 = vmatprep.subr.mxu0 0.0
        %1633 = vmatpush1.xpose.msra.mxu0 0.0
        %1634 = vmatprep.subr.mxu0 0.0
        %1635 = vmatpush1.xpose.msra.mxu0 0.0
        %1636 = vmatprep.subr.mxu0 0.0
        %1637 = vmatpush1.xpose.msra.mxu0 0.0
        %1638 = vmatprep.subr.mxu0 0.0
        %1639 = vmatpush1.xpose.msra.mxu0 0.0
        %1640 = vmatprep.subr.mxu0 0.0
        %1641 = vmatpush1.xpose.msra.mxu0 0.0
        %1642 = vmatprep.subr.mxu0 0.0
        %1643 = vmatpush1.xpose.msra.mxu0 0.0
        %1644 = vmatprep.subr.mxu0 0.0
        %1645 = vmatpush1.xpose.msra.mxu0 0.0
        %1646 = vmatprep.subr.mxu0 0.0
        %1647 = vmatpush1.xpose.msra.mxu0 0.0
        %1648 = vmatprep.subr.mxu0 0.0
        %1649 = vmatpush1.xpose.msra.mxu0 0.0
        %1650 = vmatprep.subr.mxu0 0.0
        %1651 = vmatpush1.xpose.msra.mxu0 0.0
        %1652 = vmatprep.subr.mxu0 0.0
        %1653 = vmatpush1.xpose.msra.mxu0 0.0
        %1654 = vmatprep.subr.mxu0 0.0
        %1655 = vmatpush1.xpose.msra.mxu0 0.0
        %1656 = vmatprep.subr.mxu0 0.0
        %1657 = vmatpush1.xpose.msra.mxu0 0.0
        %1658 = vmatprep.subr.mxu0 0.0
        %1659 = vmatpush1.xpose.msra.mxu0 0.0
        %1660 = vmatprep.subr.mxu0 0.0
        %1661 = vmatpush1.xpose.msra.mxu0 0.0
        %1662 = vmatprep.subr.mxu0 0.0
        %1663 = vmatpush1.xpose.msra.mxu0 0.0
        %1664 = vmatprep.subr.mxu0 0.0
        %1665 = vmatpush1.xpose.msra.mxu0 0.0
        %1666 = vmatprep.subr.mxu0 0.0
        %1667 = vmatpush1.xpose.msra.mxu0 0.0
        %1668 = vmatprep.subr.mxu0 0.0
        %1669 = vmatpush1.xpose.msra.mxu0 0.0
        %1670 = vmatprep.subr.mxu0 0.0
        %1671 = vmatpush1.xpose.msra.mxu0 0.0
        %1672 = vmatprep.subr.mxu0 0.0
        %1673 = vmatpush1.xpose.msra.mxu0 0.0
        %1674 = vmatprep.subr.mxu0 0.0
        %1675 = vmatpush1.xpose.msra.mxu0 0.0
        %1676 = vmatprep.subr.mxu0 0.0
        %1677 = vmatpush1.xpose.msra.mxu0 0.0
        %1678 = vmatprep.subr.mxu0 0.0
        %1679 = vmatpush1.xpose.msra.mxu0 0.0
        %1680 = vmatprep.subr.mxu0 0.0
        %1681 = vmatpush1.xpose.msra.mxu0 0.0
        %1682 = vmatprep.subr.mxu0 0.0
        %1683 = vmatpush1.xpose.msra.mxu0 0.0
        %1684 = vmatprep.subr.mxu0 0.0
        %1685 = vmatpush1.xpose.msra.mxu0 0.0
        %1686 = vmatprep.subr.mxu0 0.0
        %1687 = vmatpush1.xpose.msra.mxu0 0.0
        %1688 = vmatprep.mubr.f32.mxu0 0.0
        %1689 = vmatmul.mubr.f32.gmra.mrb[0].mxu0 %v1459
        %v1690 = vpop.f32.mrb[0].mxu0
        %v1691 = vadd.f32 0.0, %v1690
        %v1692 = vpop.f32.mrb[0].mxu0
        %1693 = vdwg.mxu0
        %v1694 = vld [vmem:[#allocation8 + $0x438] sm:$0xff]
        %v1695 = vld [vmem:[#allocation8 + $0x440] sm:$0xff]
        %v1696 = vld [vmem:[#allocation8 + $0x448] sm:$0xff]
        %v1697 = vld [vmem:[#allocation8 + $0x450] sm:$0xff]
        %v1698 = vld [vmem:[#allocation8 + $0x458] sm:$0xff]
        %v1699 = vld [vmem:[#allocation8 + $0x460] sm:$0xff]
        %v1700 = vld [vmem:[#allocation8 + $0x468] sm:$0xff]
        %v1701 = vld [vmem:[#allocation8 + $0x470] sm:$0xff]
        %v1702 = vld [vmem:[#allocation8 + $0x478] sm:$0x1]
        %v1703 = vlaneseq
        %v1704 = vshrl.u32 %v1703, 7
        %v1705 = vsub.s32 0, %v1704
        %v1706 = vrot.slane %v1702, %v1705
        %v1708 = vsel %vm584, %v1417, 0
        %1710 = vmatprep.subr.mxu0 0.0
        %1711 = vmatpush1.msra.mxu0 %v1694
        %1712 = vmatprep.subr.mxu0 0.0
        %1713 = vmatpush1.msra.mxu0 %v1695
        %1714 = vmatprep.subr.mxu0 0.0
        %1715 = vmatpush1.msra.mxu0 %v1696
        %1716 = vmatprep.subr.mxu0 0.0
        %1717 = vmatpush1.msra.mxu0 %v1697
        %1718 = vmatprep.subr.mxu0 0.0
        %1719 = vmatpush1.msra.mxu0 %v1698
        %1720 = vmatprep.subr.mxu0 0.0
        %1721 = vmatpush1.msra.mxu0 %v1699
        %1722 = vmatprep.subr.mxu0 0.0
        %1723 = vmatpush1.msra.mxu0 %v1700
        %1724 = vmatprep.subr.mxu0 0.0
        %1725 = vmatpush1.msra.mxu0 %v1701
        %1726 = vmatprep.subr.mxu0 0.0
        %1727 = vmatpush1.msra.mxu0 0.0
        %1728 = vmatprep.subr.mxu0 0.0
        %1729 = vmatpush1.msra.mxu0 0.0
        %1730 = vmatprep.subr.mxu0 0.0
        %1731 = vmatpush1.msra.mxu0 0.0
        %1732 = vmatprep.subr.mxu0 0.0
        %1733 = vmatpush1.msra.mxu0 0.0
        %1734 = vmatprep.subr.mxu0 0.0
        %1735 = vmatpush1.msra.mxu0 0.0
        %1736 = vmatprep.subr.mxu0 0.0
        %1737 = vmatpush1.msra.mxu0 0.0
        %1738 = vmatprep.subr.mxu0 0.0
        %1739 = vmatpush1.msra.mxu0 0.0
        %1740 = vmatprep.subr.mxu0 0.0
        %1741 = vmatpush1.msra.mxu0 0.0
        %1742 = vmatprep.subr.mxu0 0.0
        %1743 = vmatpush1.msra.mxu0 0.0
        %1744 = vmatprep.subr.mxu0 0.0
        %1745 = vmatpush1.msra.mxu0 0.0
        %1746 = vmatprep.subr.mxu0 0.0
        %1747 = vmatpush1.msra.mxu0 0.0
        %1748 = vmatprep.subr.mxu0 0.0
        %1749 = vmatpush1.msra.mxu0 0.0
        %1750 = vmatprep.subr.mxu0 0.0
        %1751 = vmatpush1.msra.mxu0 0.0
        %1752 = vmatprep.subr.mxu0 0.0
        %1753 = vmatpush1.msra.mxu0 0.0
        %1754 = vmatprep.subr.mxu0 0.0
        %1755 = vmatpush1.msra.mxu0 0.0
        %1756 = vmatprep.subr.mxu0 0.0
        %1757 = vmatpush1.msra.mxu0 0.0
        %1758 = vmatprep.subr.mxu0 0.0
        %1759 = vmatpush1.msra.mxu0 0.0
        %1760 = vmatprep.subr.mxu0 0.0
        %1761 = vmatpush1.msra.mxu0 0.0
        %1762 = vmatprep.subr.mxu0 0.0
        %1763 = vmatpush1.msra.mxu0 0.0
        %1764 = vmatprep.subr.mxu0 0.0
        %1765 = vmatpush1.msra.mxu0 0.0
        %1766 = vmatprep.subr.mxu0 0.0
        %1767 = vmatpush1.msra.mxu0 0.0
        %1768 = vmatprep.subr.mxu0 0.0
        %1769 = vmatpush1.msra.mxu0 0.0
        %1770 = vmatprep.subr.mxu0 0.0
        %1771 = vmatpush1.msra.mxu0 0.0
        %1772 = vmatprep.subr.mxu0 0.0
        %1773 = vmatpush1.msra.mxu0 0.0
        %1774 = vmatprep.mubr.f32.mxu0 0.0
        %1775 = vmatmul.mubr.f32.gmra.mrb[0].mxu0 %v1708
        %v1776 = vpop.f32.mrb[0].mxu0
        %v1777 = vadd.f32 %v1706, %v1776
        %v1778 = vpop.f32.mrb[0].mxu0
        %1779 = vdwg.mxu0
        %v1780 = vmax.f32 %v1777, 0.0
        %v1781 = vld [vmem:[#allocation8 + $0x480] sm:$0xff]
        %v1782 = vld [vmem:[#allocation8 + $0x488] sm:$0xff]
        %v1783 = vld [vmem:[#allocation8 + $0x490] sm:$0xff]
        %v1784 = vld [vmem:[#allocation8 + $0x498] sm:$0xff]
        %v1785 = vld [vmem:[#allocation8 + $0x4a0] sm:$0xff]
        %v1786 = vld [vmem:[#allocation8 + $0x4a8] sm:$0xff]
        %v1787 = vld [vmem:[#allocation8 + $0x4b0] sm:$0xff]
        %v1788 = vld [vmem:[#allocation8 + $0x4b8] sm:$0xff]
        %v1789 = vld [vmem:[#allocation8 + $0x4c0] sm:$0x1]
        %v1790 = vlaneseq
        %v1791 = vshrl.u32 %v1790, 7
        %v1792 = vsub.s32 0, %v1791
        %v1793 = vrot.slane %v1789, %v1792
        %v1795 = vsel %vm584, %v1780, 0
        %1797 = vmatprep.subr.mxu0 0.0
        %1798 = vmatpush1.msra.mxu0 %v1781
        %1799 = vmatprep.subr.mxu0 0.0
        %1800 = vmatpush1.msra.mxu0 %v1782
        %1801 = vmatprep.subr.mxu0 0.0
        %1802 = vmatpush1.msra.mxu0 %v1783
        %1803 = vmatprep.subr.mxu0 0.0
        %1804 = vmatpush1.msra.mxu0 %v1784
        %1805 = vmatprep.subr.mxu0 0.0
        %1806 = vmatpush1.msra.mxu0 %v1785
        %1807 = vmatprep.subr.mxu0 0.0
        %1808 = vmatpush1.msra.mxu0 %v1786
        %1809 = vmatprep.subr.mxu0 0.0
        %1810 = vmatpush1.msra.mxu0 %v1787
        %1811 = vmatprep.subr.mxu0 0.0
        %1812 = vmatpush1.msra.mxu0 %v1788
        %1813 = vmatprep.subr.mxu0 0.0
        %1814 = vmatpush1.msra.mxu0 0.0
        %1815 = vmatprep.subr.mxu0 0.0
        %1816 = vmatpush1.msra.mxu0 0.0
        %1817 = vmatprep.subr.mxu0 0.0
        %1818 = vmatpush1.msra.mxu0 0.0
        %1819 = vmatprep.subr.mxu0 0.0
        %1820 = vmatpush1.msra.mxu0 0.0
        %1821 = vmatprep.subr.mxu0 0.0
        %1822 = vmatpush1.msra.mxu0 0.0
        %1823 = vmatprep.subr.mxu0 0.0
        %1824 = vmatpush1.msra.mxu0 0.0
        %1825 = vmatprep.subr.mxu0 0.0
        %1826 = vmatpush1.msra.mxu0 0.0
        %1827 = vmatprep.subr.mxu0 0.0
        %1828 = vmatpush1.msra.mxu0 0.0
        %1829 = vmatprep.subr.mxu0 0.0
        %1830 = vmatpush1.msra.mxu0 0.0
        %1831 = vmatprep.subr.mxu0 0.0
        %1832 = vmatpush1.msra.mxu0 0.0
        %1833 = vmatprep.subr.mxu0 0.0
        %1834 = vmatpush1.msra.mxu0 0.0
        %1835 = vmatprep.subr.mxu0 0.0
        %1836 = vmatpush1.msra.mxu0 0.0
        %1837 = vmatprep.subr.mxu0 0.0
        %1838 = vmatpush1.msra.mxu0 0.0
        %1839 = vmatprep.subr.mxu0 0.0
        %1840 = vmatpush1.msra.mxu0 0.0
        %1841 = vmatprep.subr.mxu0 0.0
        %1842 = vmatpush1.msra.mxu0 0.0
        %1843 = vmatprep.subr.mxu0 0.0
        %1844 = vmatpush1.msra.mxu0 0.0
        %1845 = vmatprep.subr.mxu0 0.0
        %1846 = vmatpush1.msra.mxu0 0.0
        %1847 = vmatprep.subr.mxu0 0.0
        %1848 = vmatpush1.msra.mxu0 0.0
        %1849 = vmatprep.subr.mxu0 0.0
        %1850 = vmatpush1.msra.mxu0 0.0
        %1851 = vmatprep.subr.mxu0 0.0
        %1852 = vmatpush1.msra.mxu0 0.0
        %1853 = vmatprep.subr.mxu0 0.0
        %1854 = vmatpush1.msra.mxu0 0.0
        %1855 = vmatprep.subr.mxu0 0.0
        %1856 = vmatpush1.msra.mxu0 0.0
        %1857 = vmatprep.subr.mxu0 0.0
        %1858 = vmatpush1.msra.mxu0 0.0
        %1859 = vmatprep.subr.mxu0 0.0
        %1860 = vmatpush1.msra.mxu0 0.0
        %1861 = vmatprep.mubr.f32.mxu0 0.0
        %1862 = vmatmul.mubr.f32.gmra.mrb[0].mxu0 %v1795
        %v1863 = vpop.f32.mrb[0].mxu0
        %v1864 = vadd.f32 %v1793, %v1863
        %v1865 = vpop.f32.mrb[0].mxu0
        %1866 = vdwg.mxu0
        %1868 = vrot.lane.b32.xlu0 %v1615, 16
        %v1869 = vpop.permute.xlu0 %1868
        %1872 = vrot.lane.b32.xlu0 %v1864, 17
        %v1873 = vpop.permute.xlu0 %1872
        %v1875 = vsel %vm1086, %v1691, %v1869
        %vm1876 = vcmask 138240
        %v1877 = vsel %vm1876, %v1875, %v1873
        %vm1878 = vcmask 154624
        %v1879 = vsel %vm1878, %v1877, 0.0
        %1880 = vst [vmem:[%s419] sm:$0xff] %v1879
        %v1881 = vld [vmem:[#allocation8 + $0x4c8] sm:$0xff]
        %v1882 = vld [vmem:[#allocation8 + $0x4d0] sm:$0xff]
        %v1883 = vld [vmem:[#allocation8 + $0x4d8] sm:$0xff]
        %v1884 = vld [vmem:[#allocation8 + $0x4e0] sm:$0xff]
        %v1885 = vld [vmem:[#allocation8 + $0x4e8] sm:$0xff]
        %v1886 = vld [vmem:[#allocation8 + $0x4f0] sm:$0xff]
        %v1887 = vld [vmem:[#allocation8 + $0x4f8] sm:$0xff]
        %v1888 = vld [vmem:[#allocation8 + $0x500] sm:$0xff]
        %v1889 = vld [vmem:[#allocation8 + $0x508] sm:$0x1]
        %v1890 = vlaneseq
        %v1891 = vshrl.u32 %v1890, 7
        %v1892 = vsub.s32 0, %v1891
        %v1893 = vrot.slane %v1889, %v1892
        %1894 = vmatprep.subr.mxu0 0.0
        %1895 = vmatpush1.msra.mxu0 %v1881
        %1896 = vmatprep.subr.mxu0 0.0
        %1897 = vmatpush1.msra.mxu0 %v1882
        %1898 = vmatprep.subr.mxu0 0.0
        %1899 = vmatpush1.msra.mxu0 %v1883
        %1900 = vmatprep.subr.mxu0 0.0
        %1901 = vmatpush1.msra.mxu0 %v1884
        %1902 = vmatprep.subr.mxu0 0.0
        %1903 = vmatpush1.msra.mxu0 %v1885
        %1904 = vmatprep.subr.mxu0 0.0
        %1905 = vmatpush1.msra.mxu0 %v1886
        %1906 = vmatprep.subr.mxu0 0.0
        %1907 = vmatpush1.msra.mxu0 %v1887
        %1908 = vmatprep.subr.mxu0 0.0
        %1909 = vmatpush1.msra.mxu0 %v1888
        %1910 = vmatprep.subr.mxu0 0.0
        %1911 = vmatpush1.msra.mxu0 0.0
        %1912 = vmatprep.subr.mxu0 0.0
        %1913 = vmatpush1.msra.mxu0 0.0
        %1914 = vmatprep.subr.mxu0 0.0
        %1915 = vmatpush1.msra.mxu0 0.0
        %1916 = vmatprep.subr.mxu0 0.0
        %1917 = vmatpush1.msra.mxu0 0.0
        %1918 = vmatprep.subr.mxu0 0.0
        %1919 = vmatpush1.msra.mxu0 0.0
        %1920 = vmatprep.subr.mxu0 0.0
        %1921 = vmatpush1.msra.mxu0 0.0
        %1922 = vmatprep.subr.mxu0 0.0
        %1923 = vmatpush1.msra.mxu0 0.0
        %1924 = vmatprep.subr.mxu0 0.0
        %1925 = vmatpush1.msra.mxu0 0.0
        %1926 = vmatprep.subr.mxu0 0.0
        %1927 = vmatpush1.msra.mxu0 0.0
        %1928 = vmatprep.subr.mxu0 0.0
        %1929 = vmatpush1.msra.mxu0 0.0
        %1930 = vmatprep.subr.mxu0 0.0
        %1931 = vmatpush1.msra.mxu0 0.0
        %1932 = vmatprep.subr.mxu0 0.0
        %1933 = vmatpush1.msra.mxu0 0.0
        %1934 = vmatprep.subr.mxu0 0.0
        %1935 = vmatpush1.msra.mxu0 0.0
        %1936 = vmatprep.subr.mxu0 0.0
        %1937 = vmatpush1.msra.mxu0 0.0
        %1938 = vmatprep.subr.mxu0 0.0
        %1939 = vmatpush1.msra.mxu0 0.0
        %1940 = vmatprep.subr.mxu0 0.0
        %1941 = vmatpush1.msra.mxu0 0.0
        %1942 = vmatprep.subr.mxu0 0.0
        %1943 = vmatpush1.msra.mxu0 0.0
        %1944 = vmatprep.subr.mxu0 0.0
        %1945 = vmatpush1.msra.mxu0 0.0
        %1946 = vmatprep.subr.mxu0 0.0
        %1947 = vmatpush1.msra.mxu0 0.0
        %1948 = vmatprep.subr.mxu0 0.0
        %1949 = vmatpush1.msra.mxu0 0.0
        %1950 = vmatprep.subr.mxu0 0.0
        %1951 = vmatpush1.msra.mxu0 0.0
        %1952 = vmatprep.subr.mxu0 0.0
        %1953 = vmatpush1.msra.mxu0 0.0
        %1954 = vmatprep.subr.mxu0 0.0
        %1955 = vmatpush1.msra.mxu0 0.0
        %1956 = vmatprep.subr.mxu0 0.0
        %1957 = vmatpush1.msra.mxu0 0.0
        %1958 = vmatprep.mubr.f32.mxu0 0.0
        %1959 = vmatmul.mubr.f32.gmra.mrb[0].mxu0 %v1708
        %v1960 = vpop.f32.mrb[0].mxu0
        %v1961 = vadd.f32 %v1893, %v1960
        %v1962 = vpop.f32.mrb[0].mxu0
        %1963 = vdwg.mxu0
        %v1964 = vld [vmem:[#allocation8 + $0x510] sm:$0xff]
        %v1965 = vld [vmem:[#allocation8 + $0x518] sm:$0xff]
        %v1966 = vld [vmem:[#allocation8 + $0x520] sm:$0xff]
        %v1967 = vld [vmem:[#allocation8 + $0x528] sm:$0xff]
        %v1968 = vld [vmem:[#allocation8 + $0x530] sm:$0xff]
        %v1969 = vld [vmem:[#allocation8 + $0x538] sm:$0xff]
        %v1970 = vld [vmem:[#allocation8 + $0x540] sm:$0xff]
        %v1971 = vld [vmem:[#allocation8 + $0x548] sm:$0xff]
        %v1972 = vld [vmem:[#allocation8 + $0x550] sm:$0x1]
        %v1973 = vlaneseq
        %v1974 = vshrl.u32 %v1973, 7
        %v1975 = vsub.s32 0, %v1974
        %v1976 = vrot.slane %v1972, %v1975
        %v1978 = vsel %vm584, %v636, 0
        %v1981 = vsel %vm584, %v637, 0
        %1983 = vmatprep.subr.mxu0 0.0
        %1984 = vmatpush1.msra.mxu0 %v1964
        %1985 = vmatprep.subr.mxu0 0.0
        %1986 = vmatpush1.msra.mxu0 %v1965
        %1987 = vmatprep.subr.mxu0 0.0
        %1988 = vmatpush1.msra.mxu0 %v1966
        %1989 = vmatprep.subr.mxu0 0.0
        %1990 = vmatpush1.msra.mxu0 %v1967
        %1991 = vmatprep.subr.mxu0 0.0
        %1992 = vmatpush1.msra.mxu0 %v1968
        %1993 = vmatprep.subr.mxu0 0.0
        %1994 = vmatpush1.msra.mxu0 %v1969
        %1995 = vmatprep.subr.mxu0 0.0
        %1996 = vmatpush1.msra.mxu0 %v1970
        %1997 = vmatprep.subr.mxu0 0.0
        %1998 = vmatpush1.msra.mxu0 %v1971
        %1999 = vmatprep.subr.mxu0 0.0
        %2000 = vmatpush1.msra.mxu0 0.0
        %2001 = vmatprep.subr.mxu0 0.0
        %2002 = vmatpush1.msra.mxu0 0.0
        %2003 = vmatprep.subr.mxu0 0.0
        %2004 = vmatpush1.msra.mxu0 0.0
        %2005 = vmatprep.subr.mxu0 0.0
        %2006 = vmatpush1.msra.mxu0 0.0
        %2007 = vmatprep.subr.mxu0 0.0
        %2008 = vmatpush1.msra.mxu0 0.0
        %2009 = vmatprep.subr.mxu0 0.0
        %2010 = vmatpush1.msra.mxu0 0.0
        %2011 = vmatprep.subr.mxu0 0.0
        %2012 = vmatpush1.msra.mxu0 0.0
        %2013 = vmatprep.subr.mxu0 0.0
        %2014 = vmatpush1.msra.mxu0 0.0
        %2015 = vmatprep.subr.mxu0 0.0
        %2016 = vmatpush1.msra.mxu0 0.0
        %2017 = vmatprep.subr.mxu0 0.0
        %2018 = vmatpush1.msra.mxu0 0.0
        %2019 = vmatprep.subr.mxu0 0.0
        %2020 = vmatpush1.msra.mxu0 0.0
        %2021 = vmatprep.subr.mxu0 0.0
        %2022 = vmatpush1.msra.mxu0 0.0
        %2023 = vmatprep.subr.mxu0 0.0
        %2024 = vmatpush1.msra.mxu0 0.0
        %2025 = vmatprep.subr.mxu0 0.0
        %2026 = vmatpush1.msra.mxu0 0.0
        %2027 = vmatprep.subr.mxu0 0.0
        %2028 = vmatpush1.msra.mxu0 0.0
        %2029 = vmatprep.subr.mxu0 0.0
        %2030 = vmatpush1.msra.mxu0 0.0
        %2031 = vmatprep.subr.mxu0 0.0
        %2032 = vmatpush1.msra.mxu0 0.0
        %2033 = vmatprep.subr.mxu0 0.0
        %2034 = vmatpush1.msra.mxu0 0.0
        %2035 = vmatprep.subr.mxu0 0.0
        %2036 = vmatpush1.msra.mxu0 0.0
        %2037 = vmatprep.subr.mxu0 0.0
        %2038 = vmatpush1.msra.mxu0 0.0
        %2039 = vmatprep.subr.mxu0 0.0
        %2040 = vmatpush1.msra.mxu0 0.0
        %2041 = vmatprep.subr.mxu0 0.0
        %2042 = vmatpush1.msra.mxu0 0.0
        %2043 = vmatprep.subr.mxu0 0.0
        %2044 = vmatpush1.msra.mxu0 0.0
        %2045 = vmatprep.subr.mxu0 0.0
        %2046 = vmatpush1.msra.mxu0 0.0
        %2047 = vmatprep.mubr.f32.mxu0 0.0
        %2048 = vmatmul.mubr.f32.gmra.mrb[0].mxu0 %v1978
        %v2049 = vpop.f32.mrb[0].mxu0
        %v2050 = vadd.f32 %v1976, %v2049
        %v2051 = vpop.f32.mrb[0].mxu0
        %2052 = vmatprep.mubr.f32.mxu0 0.0
        %2053 = vmatmul.mubr.f32.gmra.mrb[0].mxu0 %v1981
        %v2054 = vpop.f32.mrb[0].mxu0
        %v2055 = vadd.f32 %v1976, %v2054
        %v2056 = vpop.f32.mrb[0].mxu0
        %2057 = vdwg.mxu0
        %v2058 = vmul.f32 %v1961, %v455
        %v2059 = vmul.f32 %v1961, %v460
        %v2060 = vmul.f32 %v1961, %v465
        %v2061 = vmul.f32 %v1961, %v470
        %v2062 = vmul.f32 %v1961, %v475
        %v2063 = vmul.f32 %v1961, %v480
        %v2064 = vmul.f32 %v1961, %v485
        %v2065 = vmul.f32 %v1961, %v490
        %v2067 = vlaneseq
        %v2068 = vshrl.u32 %v2067, 7
        %v2069 = vsub.s32 0, %v2068
        %v2070 = vrot.slane %v447, %v2069
        %v2073 = vsel %vm584, %v2058, 0
        %v2076 = vsel %vm584, %v2059, 0
        %v2079 = vsel %vm584, %v2060, 0
        %v2082 = vsel %vm584, %v2061, 0
        %v2085 = vsel %vm584, %v2062, 0
        %v2088 = vsel %vm584, %v2063, 0
        %v2091 = vsel %vm584, %v2064, 0
        %v2094 = vsel %vm584, %v2065, 0
        %v2097 = vsel %vm584, %v2050, 0
        %v2100 = vsel %vm584, %v2055, 0
        %2102 = vmatprep.subr.mxu0 0.0
        %2103 = vmatpush1.xpose.msra.mxu0 %v2097
        %2104 = vmatprep.subr.mxu0 0.0
        %2105 = vmatpush1.xpose.msra.mxu0 %v2100
        %2106 = vmatprep.subr.mxu0 0.0
        %2107 = vmatpush1.xpose.msra.mxu0 0.0
        %2108 = vmatprep.subr.mxu0 0.0
        %2109 = vmatpush1.xpose.msra.mxu0 0.0
        %2110 = vmatprep.subr.mxu0 0.0
        %2111 = vmatpush1.xpose.msra.mxu0 0.0
        %2112 = vmatprep.subr.mxu0 0.0
        %2113 = vmatpush1.xpose.msra.mxu0 0.0
        %2114 = vmatprep.subr.mxu0 0.0
        %2115 = vmatpush1.xpose.msra.mxu0 0.0
        %2116 = vmatprep.subr.mxu0 0.0
        %2117 = vmatpush1.xpose.msra.mxu0 0.0
        %2118 = vmatprep.subr.mxu0 0.0
        %2119 = vmatpush1.xpose.msra.mxu0 0.0
        %2120 = vmatprep.subr.mxu0 0.0
        %2121 = vmatpush1.xpose.msra.mxu0 0.0
        %2122 = vmatprep.subr.mxu0 0.0
        %2123 = vmatpush1.xpose.msra.mxu0 0.0
        %2124 = vmatprep.subr.mxu0 0.0
        %2125 = vmatpush1.xpose.msra.mxu0 0.0
        %2126 = vmatprep.subr.mxu0 0.0
        %2127 = vmatpush1.xpose.msra.mxu0 0.0
        %2128 = vmatprep.subr.mxu0 0.0
        %2129 = vmatpush1.xpose.msra.mxu0 0.0
        %2130 = vmatprep.subr.mxu0 0.0
        %2131 = vmatpush1.xpose.msra.mxu0 0.0
        %2132 = vmatprep.subr.mxu0 0.0
        %2133 = vmatpush1.xpose.msra.mxu0 0.0
        %2134 = vmatprep.subr.mxu0 0.0
        %2135 = vmatpush1.xpose.msra.mxu0 0.0
        %2136 = vmatprep.subr.mxu0 0.0
        %2137 = vmatpush1.xpose.msra.mxu0 0.0
        %2138 = vmatprep.subr.mxu0 0.0
        %2139 = vmatpush1.xpose.msra.mxu0 0.0
        %2140 = vmatprep.subr.mxu0 0.0
        %2141 = vmatpush1.xpose.msra.mxu0 0.0
        %2142 = vmatprep.subr.mxu0 0.0
        %2143 = vmatpush1.xpose.msra.mxu0 0.0
        %2144 = vmatprep.subr.mxu0 0.0
        %2145 = vmatpush1.xpose.msra.mxu0 0.0
        %2146 = vmatprep.subr.mxu0 0.0
        %2147 = vmatpush1.xpose.msra.mxu0 0.0
        %2148 = vmatprep.subr.mxu0 0.0
        %2149 = vmatpush1.xpose.msra.mxu0 0.0
        %2150 = vmatprep.subr.mxu0 0.0
        %2151 = vmatpush1.xpose.msra.mxu0 0.0
        %2152 = vmatprep.subr.mxu0 0.0
        %2153 = vmatpush1.xpose.msra.mxu0 0.0
        %2154 = vmatprep.subr.mxu0 0.0
        %2155 = vmatpush1.xpose.msra.mxu0 0.0
        %2156 = vmatprep.subr.mxu0 0.0
        %2157 = vmatpush1.xpose.msra.mxu0 0.0
        %2158 = vmatprep.subr.mxu0 0.0
        %2159 = vmatpush1.xpose.msra.mxu0 0.0
        %2160 = vmatprep.subr.mxu0 0.0
        %2161 = vmatpush1.xpose.msra.mxu0 0.0
        %2162 = vmatprep.subr.mxu0 0.0
        %2163 = vmatpush1.xpose.msra.mxu0 0.0
        %2164 = vmatprep.subr.mxu0 0.0
        %2165 = vmatpush1.xpose.msra.mxu0 0.0
        %2166 = vmatprep.mubr.f32.mxu0 0.0
        %2167 = vmatmul.mubr.f32.gmra.mrb[0].mxu0 %v2073
        %v2168 = vpop.f32.mrb[0].mxu0
        %v2169 = vadd.f32 %v2070, %v2168
        %v2170 = vpop.f32.mrb[0].mxu0
        %2171 = vmatprep.mubr.f32.mxu0 0.0
        %2172 = vmatmul.mubr.f32.gmra.mrb[0].mxu0 %v2076
        %v2173 = vpop.f32.mrb[0].mxu0
        %v2174 = vadd.f32 %v2070, %v2173
        %v2175 = vpop.f32.mrb[0].mxu0
        %2176 = vmatprep.mubr.f32.mxu0 0.0
        %2177 = vmatmul.mubr.f32.gmra.mrb[0].mxu0 %v2079
        %v2178 = vpop.f32.mrb[0].mxu0
        %v2179 = vadd.f32 %v2070, %v2178
        %v2180 = vpop.f32.mrb[0].mxu0
        %2181 = vmatprep.mubr.f32.mxu0 0.0
        %2182 = vmatmul.mubr.f32.gmra.mrb[0].mxu0 %v2082
        %v2183 = vpop.f32.mrb[0].mxu0
        %v2184 = vadd.f32 %v2070, %v2183
        %v2185 = vpop.f32.mrb[0].mxu0
        %2186 = vmatprep.mubr.f32.mxu0 0.0
        %2187 = vmatmul.mubr.f32.gmra.mrb[0].mxu0 %v2085
        %v2188 = vpop.f32.mrb[0].mxu0
        %v2189 = vadd.f32 %v2070, %v2188
        %v2190 = vpop.f32.mrb[0].mxu0
        %2191 = vmatprep.mubr.f32.mxu0 0.0
        %2192 = vmatmul.mubr.f32.gmra.mrb[0].mxu0 %v2088
        %v2193 = vpop.f32.mrb[0].mxu0
        %v2194 = vadd.f32 %v2070, %v2193
        %v2195 = vpop.f32.mrb[0].mxu0
        %2196 = vmatprep.mubr.f32.mxu0 0.0
        %2197 = vmatmul.mubr.f32.gmra.mrb[0].mxu0 %v2091
        %v2198 = vpop.f32.mrb[0].mxu0
        %v2199 = vadd.f32 %v2070, %v2198
        %v2200 = vpop.f32.mrb[0].mxu0
        %2201 = vmatprep.mubr.f32.mxu0 0.0
        %2202 = vmatmul.mubr.f32.gmra.mrb[0].mxu0 %v2094
        %v2203 = vpop.f32.mrb[0].mxu0
        %v2204 = vadd.f32 %v2070, %v2203
        %v2205 = vpop.f32.mrb[0].mxu0
        %2206 = vdwg.mxu0
        %v2207 = vsel %vm1086, %v2169, -inf
        %2208 = vmax.xlane.f32.xlu0 %v2207
        %v2209 = vpop.xlane.xlu0 %2208
        %v2210 = vsel %vm1086, %v2174, -inf
        %2211 = vmax.xlane.f32.xlu0 %v2210
        %v2212 = vpop.xlane.xlu0 %2211
        %v2213 = vsel %vm1086, %v2179, -inf
        %2214 = vmax.xlane.f32.xlu0 %v2213
        %v2215 = vpop.xlane.xlu0 %2214
        %v2216 = vsel %vm1086, %v2184, -inf
        %2217 = vmax.xlane.f32.xlu0 %v2216
        %v2218 = vpop.xlane.xlu0 %2217
        %v2219 = vsel %vm1086, %v2189, -inf
        %2220 = vmax.xlane.f32.xlu0 %v2219
        %v2221 = vpop.xlane.xlu0 %2220
        %v2222 = vsel %vm1086, %v2194, -inf
        %2223 = vmax.xlane.f32.xlu0 %v2222
        %v2224 = vpop.xlane.xlu0 %2223
        %v2225 = vsel %vm1086, %v2199, -inf
        %2226 = vmax.xlane.f32.xlu0 %v2225
        %v2227 = vpop.xlane.xlu0 %2226
        %v2228 = vsel %vm1086, %v2204, -inf
        %2229 = vmax.xlane.f32.xlu0 %v2228
        %v2230 = vpop.xlane.xlu0 %2229
        %v2231 = vsub.f32 %v2169, %v2209
        %v2232 = vsub.f32 %v2174, %v2212
        %v2233 = vsub.f32 %v2179, %v2215
        %v2234 = vsub.f32 %v2184, %v2218
        %v2235 = vsub.f32 %v2189, %v2221
        %v2236 = vsub.f32 %v2194, %v2224
        %v2237 = vsub.f32 %v2199, %v2227
        %v2238 = vsub.f32 %v2204, %v2230
        %v2239 = vmul.f32 %v2231, 1.442695
        %v2240 = vpow.pop %v2239
        %v2241 = vmul.f32 %v2232, 1.442695
        %v2242 = vpow.pop %v2241
        %v2243 = vmul.f32 %v2233, 1.442695
        %v2244 = vpow.pop %v2243
        %v2245 = vmul.f32 %v2234, 1.442695
        %v2246 = vpow.pop %v2245
        %v2247 = vmul.f32 %v2235, 1.442695
        %v2248 = vpow.pop %v2247
        %v2249 = vmul.f32 %v2236, 1.442695
        %v2250 = vpow.pop %v2249
        %v2251 = vmul.f32 %v2237, 1.442695
        %v2252 = vpow.pop %v2251
        %v2253 = vmul.f32 %v2238, 1.442695
        %v2254 = vpow.pop %v2253
        %v2255 = vsel %vm1086, %v2240, 0.0
        %2256 = vadd.xlane.f32.xlu0 %v2255
        %v2257 = vpop.xlane.xlu0 %2256
        %v2258 = vsel %vm1086, %v2242, 0.0
        %2259 = vadd.xlane.f32.xlu0 %v2258
        %v2260 = vpop.xlane.xlu0 %2259
        %v2261 = vsel %vm1086, %v2244, 0.0
        %2262 = vadd.xlane.f32.xlu0 %v2261
        %v2263 = vpop.xlane.xlu0 %2262
        %v2264 = vsel %vm1086, %v2246, 0.0
        %2265 = vadd.xlane.f32.xlu0 %v2264
        %v2266 = vpop.xlane.xlu0 %2265
        %v2267 = vsel %vm1086, %v2248, 0.0
        %2268 = vadd.xlane.f32.xlu0 %v2267
        %v2269 = vpop.xlane.xlu0 %2268
        %v2270 = vsel %vm1086, %v2250, 0.0
        %2271 = vadd.xlane.f32.xlu0 %v2270
        %v2272 = vpop.xlane.xlu0 %2271
        %v2273 = vsel %vm1086, %v2252, 0.0
        %2274 = vadd.xlane.f32.xlu0 %v2273
        %v2275 = vpop.xlane.xlu0 %2274
        %v2276 = vsel %vm1086, %v2254, 0.0
        %2277 = vadd.xlane.f32.xlu0 %v2276
        %v2278 = vpop.xlane.xlu0 %2277
        %v2279 = vrcp.pop %v2257
        %v2280 = vmul.f32 %v2240, %v2279
        %v2281 = vrcp.pop %v2260
        %v2282 = vmul.f32 %v2242, %v2281
        %v2283 = vrcp.pop %v2263
        %v2284 = vmul.f32 %v2244, %v2283
        %v2285 = vrcp.pop %v2266
        %v2286 = vmul.f32 %v2246, %v2285
        %v2287 = vrcp.pop %v2269
        %v2288 = vmul.f32 %v2248, %v2287
        %v2289 = vrcp.pop %v2272
        %v2290 = vmul.f32 %v2250, %v2289
        %v2291 = vrcp.pop %v2275
        %v2292 = vmul.f32 %v2252, %v2291
        %v2293 = vrcp.pop %v2278
        %v2294 = vmul.f32 %v2254, %v2293
        %2295 = vrot.lane.b32.xlu0 %v2050, 64
        %v2296 = vpop.permute.xlu0 %2295
        %2297 = vrot.lane.b32.xlu0 %v2055, 64
        %v2298 = vpop.permute.xlu0 %2297
        %v2302 = vsel %vm1086, %v2280, 0
        %v2305 = vsel %vm1086, %v2282, 0
        %v2308 = vsel %vm1086, %v2284, 0
        %v2311 = vsel %vm1086, %v2286, 0
        %v2314 = vsel %vm1086, %v2288, 0
        %v2317 = vsel %vm1086, %v2290, 0
        %v2320 = vsel %vm1086, %v2292, 0
        %v2323 = vsel %vm1086, %v2294, 0
        %2325 = vmatprep.subr.mxu0 0.0
        %2326 = vmatpush1.msra.mxu0 %v2296
        %2327 = vmatprep.subr.mxu0 0.0
        %2328 = vmatpush1.msra.mxu0 %v2298
        %2329 = vmatprep.subr.mxu0 0.0
        %2330 = vmatpush1.msra.mxu0 0.0
        %2331 = vmatprep.subr.mxu0 0.0
        %2332 = vmatpush1.msra.mxu0 0.0
        %2333 = vmatprep.subr.mxu0 0.0
        %2334 = vmatpush1.msra.mxu0 0.0
        %2335 = vmatprep.subr.mxu0 0.0
        %2336 = vmatpush1.msra.mxu0 0.0
        %2337 = vmatprep.subr.mxu0 0.0
        %2338 = vmatpush1.msra.mxu0 0.0
        %2339 = vmatprep.subr.mxu0 0.0
        %2340 = vmatpush1.msra.mxu0 0.0
        %2341 = vmatprep.subr.mxu0 0.0
        %2342 = vmatpush1.msra.mxu0 0.0
        %2343 = vmatprep.subr.mxu0 0.0
        %2344 = vmatpush1.msra.mxu0 0.0
        %2345 = vmatprep.subr.mxu0 0.0
        %2346 = vmatpush1.msra.mxu0 0.0
        %2347 = vmatprep.subr.mxu0 0.0
        %2348 = vmatpush1.msra.mxu0 0.0
        %2349 = vmatprep.subr.mxu0 0.0
        %2350 = vmatpush1.msra.mxu0 0.0
        %2351 = vmatprep.subr.mxu0 0.0
        %2352 = vmatpush1.msra.mxu0 0.0
        %2353 = vmatprep.subr.mxu0 0.0
        %2354 = vmatpush1.msra.mxu0 0.0
        %2355 = vmatprep.subr.mxu0 0.0
        %2356 = vmatpush1.msra.mxu0 0.0
        %2357 = vmatprep.subr.mxu0 0.0
        %2358 = vmatpush1.msra.mxu0 0.0
        %2359 = vmatprep.subr.mxu0 0.0
        %2360 = vmatpush1.msra.mxu0 0.0
        %2361 = vmatprep.subr.mxu0 0.0
        %2362 = vmatpush1.msra.mxu0 0.0
        %2363 = vmatprep.subr.mxu0 0.0
        %2364 = vmatpush1.msra.mxu0 0.0
        %2365 = vmatprep.subr.mxu0 0.0
        %2366 = vmatpush1.msra.mxu0 0.0
        %2367 = vmatprep.subr.mxu0 0.0
        %2368 = vmatpush1.msra.mxu0 0.0
        %2369 = vmatprep.subr.mxu0 0.0
        %2370 = vmatpush1.msra.mxu0 0.0
        %2371 = vmatprep.subr.mxu0 0.0
        %2372 = vmatpush1.msra.mxu0 0.0
        %2373 = vmatprep.subr.mxu0 0.0
        %2374 = vmatpush1.msra.mxu0 0.0
        %2375 = vmatprep.subr.mxu0 0.0
        %2376 = vmatpush1.msra.mxu0 0.0
        %2377 = vmatprep.subr.mxu0 0.0
        %2378 = vmatpush1.msra.mxu0 0.0
        %2379 = vmatprep.subr.mxu0 0.0
        %2380 = vmatpush1.msra.mxu0 0.0
        %2381 = vmatprep.subr.mxu0 0.0
        %2382 = vmatpush1.msra.mxu0 0.0
        %2383 = vmatprep.subr.mxu0 0.0
        %2384 = vmatpush1.msra.mxu0 0.0
        %2385 = vmatprep.subr.mxu0 0.0
        %2386 = vmatpush1.msra.mxu0 0.0
        %2387 = vmatprep.subr.mxu0 0.0
        %2388 = vmatpush1.msra.mxu0 0.0
        %2389 = vmatprep.mubr.f32.mxu0 0.0
        %2390 = vmatmul.mubr.f32.gmra.mrb[0].mxu0 %v2302
        %v2391 = vpop.f32.mrb[0].mxu0
        %v2392 = vadd.f32 0.0, %v2391
        %v2393 = vpop.f32.mrb[0].mxu0
        %2394 = vmatprep.mubr.f32.mxu0 0.0
        %2395 = vmatmul.mubr.f32.gmra.mrb[0].mxu0 %v2305
        %v2396 = vpop.f32.mrb[0].mxu0
        %v2397 = vadd.f32 0.0, %v2396
        %v2398 = vpop.f32.mrb[0].mxu0
        %2399 = vmatprep.mubr.f32.mxu0 0.0
        %2400 = vmatmul.mubr.f32.gmra.mrb[0].mxu0 %v2308
        %v2401 = vpop.f32.mrb[0].mxu0
        %v2402 = vadd.f32 0.0, %v2401
        %v2403 = vpop.f32.mrb[0].mxu0
        %2404 = vmatprep.mubr.f32.mxu0 0.0
        %2405 = vmatmul.mubr.f32.gmra.mrb[0].mxu0 %v2311
        %v2406 = vpop.f32.mrb[0].mxu0
        %v2407 = vadd.f32 0.0, %v2406
        %v2408 = vpop.f32.mrb[0].mxu0
        %2409 = vmatprep.mubr.f32.mxu0 0.0
        %2410 = vmatmul.mubr.f32.gmra.mrb[0].mxu0 %v2314
        %v2411 = vpop.f32.mrb[0].mxu0
        %v2412 = vadd.f32 0.0, %v2411
        %v2413 = vpop.f32.mrb[0].mxu0
        %2414 = vmatprep.mubr.f32.mxu0 0.0
        %2415 = vmatmul.mubr.f32.gmra.mrb[0].mxu0 %v2317
        %v2416 = vpop.f32.mrb[0].mxu0
        %v2417 = vadd.f32 0.0, %v2416
        %v2418 = vpop.f32.mrb[0].mxu0
        %2419 = vmatprep.mubr.f32.mxu0 0.0
        %2420 = vmatmul.mubr.f32.gmra.mrb[0].mxu0 %v2320
        %v2421 = vpop.f32.mrb[0].mxu0
        %v2422 = vadd.f32 0.0, %v2421
        %v2423 = vpop.f32.mrb[0].mxu0
        %2424 = vmatprep.mubr.f32.mxu0 0.0
        %2425 = vmatmul.mubr.f32.gmra.mrb[0].mxu0 %v2323
        %v2426 = vpop.f32.mrb[0].mxu0
        %v2427 = vadd.f32 0.0, %v2426
        %v2428 = vpop.f32.mrb[0].mxu0
        %2429 = vdwg.mxu0
        %v2430 = vmul.f32 %v2392, %v455
        %v2431 = vmul.f32 %v2397, %v460
        %v2432 = vadd.f32 %v2430, %v2431
        %v2433 = vmul.f32 %v2402, %v465
        %v2434 = vadd.f32 %v2432, %v2433
        %v2435 = vmul.f32 %v2407, %v470
        %v2436 = vadd.f32 %v2434, %v2435
        %v2437 = vmul.f32 %v2412, %v475
        %v2438 = vadd.f32 %v2436, %v2437
        %v2439 = vmul.f32 %v2417, %v480
        %v2440 = vadd.f32 %v2438, %v2439
        %v2441 = vmul.f32 %v2422, %v485
        %v2442 = vadd.f32 %v2440, %v2441
        %v2443 = vmul.f32 %v2427, %v490
        %v2444 = vadd.f32 %v2442, %v2443
        %v2445 = vld [vmem:[#allocation8 + $0x558] sm:$0xff]
        %v2446 = vld [vmem:[#allocation8 + $0x560] sm:$0xff]
        %v2447 = vld [vmem:[#allocation8 + $0x568] sm:$0xff]
        %v2448 = vld [vmem:[#allocation8 + $0x570] sm:$0xff]
        %v2449 = vld [vmem:[#allocation8 + $0x578] sm:$0xff]
        %v2450 = vld [vmem:[#allocation8 + $0x580] sm:$0xff]
        %v2451 = vld [vmem:[#allocation8 + $0x588] sm:$0xff]
        %v2452 = vld [vmem:[#allocation8 + $0x590] sm:$0xff]
        %v2453 = vld [vmem:[#allocation8 + $0x598] sm:$0x1]
        %v2454 = vlaneseq
        %v2455 = vshrl.u32 %v2454, 7
        %v2456 = vsub.s32 0, %v2455
        %v2457 = vrot.slane %v2453, %v2456
        %v2459 = vsel %vm584, %v2444, 0
        %2461 = vmatprep.subr.mxu0 0.0
        %2462 = vmatpush1.msra.mxu0 %v2445
        %2463 = vmatprep.subr.mxu0 0.0
        %2464 = vmatpush1.msra.mxu0 %v2446
        %2465 = vmatprep.subr.mxu0 0.0
        %2466 = vmatpush1.msra.mxu0 %v2447
        %2467 = vmatprep.subr.mxu0 0.0
        %2468 = vmatpush1.msra.mxu0 %v2448
        %2469 = vmatprep.subr.mxu0 0.0
        %2470 = vmatpush1.msra.mxu0 %v2449
        %2471 = vmatprep.subr.mxu0 0.0
        %2472 = vmatpush1.msra.mxu0 %v2450
        %2473 = vmatprep.subr.mxu0 0.0
        %2474 = vmatpush1.msra.mxu0 %v2451
        %2475 = vmatprep.subr.mxu0 0.0
        %2476 = vmatpush1.msra.mxu0 %v2452
        %2477 = vmatprep.subr.mxu0 0.0
        %2478 = vmatpush1.msra.mxu0 0.0
        %2479 = vmatprep.subr.mxu0 0.0
        %2480 = vmatpush1.msra.mxu0 0.0
        %2481 = vmatprep.subr.mxu0 0.0
        %2482 = vmatpush1.msra.mxu0 0.0
        %2483 = vmatprep.subr.mxu0 0.0
        %2484 = vmatpush1.msra.mxu0 0.0
        %2485 = vmatprep.subr.mxu0 0.0
        %2486 = vmatpush1.msra.mxu0 0.0
        %2487 = vmatprep.subr.mxu0 0.0
        %2488 = vmatpush1.msra.mxu0 0.0
        %2489 = vmatprep.subr.mxu0 0.0
        %2490 = vmatpush1.msra.mxu0 0.0
        %2491 = vmatprep.subr.mxu0 0.0
        %2492 = vmatpush1.msra.mxu0 0.0
        %2493 = vmatprep.subr.mxu0 0.0
        %2494 = vmatpush1.msra.mxu0 0.0
        %2495 = vmatprep.subr.mxu0 0.0
        %2496 = vmatpush1.msra.mxu0 0.0
        %2497 = vmatprep.subr.mxu0 0.0
        %2498 = vmatpush1.msra.mxu0 0.0
        %2499 = vmatprep.subr.mxu0 0.0
        %2500 = vmatpush1.msra.mxu0 0.0
        %2501 = vmatprep.subr.mxu0 0.0
        %2502 = vmatpush1.msra.mxu0 0.0
        %2503 = vmatprep.subr.mxu0 0.0
        %2504 = vmatpush1.msra.mxu0 0.0
        %2505 = vmatprep.subr.mxu0 0.0
        %2506 = vmatpush1.msra.mxu0 0.0
        %2507 = vmatprep.subr.mxu0 0.0
        %2508 = vmatpush1.msra.mxu0 0.0
        %2509 = vmatprep.subr.mxu0 0.0
        %2510 = vmatpush1.msra.mxu0 0.0
        %2511 = vmatprep.subr.mxu0 0.0
        %2512 = vmatpush1.msra.mxu0 0.0
        %2513 = vmatprep.subr.mxu0 0.0
        %2514 = vmatpush1.msra.mxu0 0.0
        %2515 = vmatprep.subr.mxu0 0.0
        %2516 = vmatpush1.msra.mxu0 0.0
        %2517 = vmatprep.subr.mxu0 0.0
        %2518 = vmatpush1.msra.mxu0 0.0
        %2519 = vmatprep.subr.mxu0 0.0
        %2520 = vmatpush1.msra.mxu0 0.0
        %2521 = vmatprep.subr.mxu0 0.0
        %2522 = vmatpush1.msra.mxu0 0.0
        %2523 = vmatprep.subr.mxu0 0.0
        %2524 = vmatpush1.msra.mxu0 0.0
        %2525 = vmatprep.mubr.f32.mxu0 0.0
        %2526 = vmatmul.mubr.f32.gmra.mrb[0].mxu0 %v2459
        %v2527 = vpop.f32.mrb[0].mxu0
        %v2528 = vadd.f32 %v2457, %v2527
        %v2529 = vpop.f32.mrb[0].mxu0
        %2530 = vdwg.mxu0
        %v2531 = vadd.f32 %v2528, %v1417
        %v2532 = vld [vmem:[#allocation8 + $0x5a0] sm:$0xff]
        %v2533 = vld [vmem:[#allocation8 + $0x5a8] sm:$0xff]
        %v2534 = vld [vmem:[#allocation8 + $0x5b0] sm:$0xff]
        %v2535 = vld [vmem:[#allocation8 + $0x5b8] sm:$0xff]
        %v2536 = vld [vmem:[#allocation8 + $0x5c0] sm:$0xff]
        %v2537 = vld [vmem:[#allocation8 + $0x5c8] sm:$0xff]
        %v2538 = vld [vmem:[#allocation8 + $0x5d0] sm:$0xff]
        %v2539 = vld [vmem:[#allocation8 + $0x5d8] sm:$0xff]
        %v2540 = vld [vmem:[#allocation8 + $0x5e0] sm:$0x1]
        %v2541 = vlaneseq
        %v2542 = vshrl.u32 %v2541, 7
        %v2543 = vsub.s32 0, %v2542
        %v2544 = vrot.slane %v2540, %v2543
        %v2546 = vsel %vm584, %v2531, 0
        %2548 = vmatprep.subr.mxu0 0.0
        %2549 = vmatpush1.msra.mxu0 %v2532
        %2550 = vmatprep.subr.mxu0 0.0
        %2551 = vmatpush1.msra.mxu0 %v2533
        %2552 = vmatprep.subr.mxu0 0.0
        %2553 = vmatpush1.msra.mxu0 %v2534
        %2554 = vmatprep.subr.mxu0 0.0
        %2555 = vmatpush1.msra.mxu0 %v2535
        %2556 = vmatprep.subr.mxu0 0.0
        %2557 = vmatpush1.msra.mxu0 %v2536
        %2558 = vmatprep.subr.mxu0 0.0
        %2559 = vmatpush1.msra.mxu0 %v2537
        %2560 = vmatprep.subr.mxu0 0.0
        %2561 = vmatpush1.msra.mxu0 %v2538
        %2562 = vmatprep.subr.mxu0 0.0
        %2563 = vmatpush1.msra.mxu0 %v2539
        %2564 = vmatprep.subr.mxu0 0.0
        %2565 = vmatpush1.msra.mxu0 0.0
        %2566 = vmatprep.subr.mxu0 0.0
        %2567 = vmatpush1.msra.mxu0 0.0
        %2568 = vmatprep.subr.mxu0 0.0
        %2569 = vmatpush1.msra.mxu0 0.0
        %2570 = vmatprep.subr.mxu0 0.0
        %2571 = vmatpush1.msra.mxu0 0.0
        %2572 = vmatprep.subr.mxu0 0.0
        %2573 = vmatpush1.msra.mxu0 0.0
        %2574 = vmatprep.subr.mxu0 0.0
        %2575 = vmatpush1.msra.mxu0 0.0
        %2576 = vmatprep.subr.mxu0 0.0
        %2577 = vmatpush1.msra.mxu0 0.0
        %2578 = vmatprep.subr.mxu0 0.0
        %2579 = vmatpush1.msra.mxu0 0.0
        %2580 = vmatprep.subr.mxu0 0.0
        %2581 = vmatpush1.msra.mxu0 0.0
        %2582 = vmatprep.subr.mxu0 0.0
        %2583 = vmatpush1.msra.mxu0 0.0
        %2584 = vmatprep.subr.mxu0 0.0
        %2585 = vmatpush1.msra.mxu0 0.0
        %2586 = vmatprep.subr.mxu0 0.0
        %2587 = vmatpush1.msra.mxu0 0.0
        %2588 = vmatprep.subr.mxu0 0.0
        %2589 = vmatpush1.msra.mxu0 0.0
        %2590 = vmatprep.subr.mxu0 0.0
        %2591 = vmatpush1.msra.mxu0 0.0
        %2592 = vmatprep.subr.mxu0 0.0
        %2593 = vmatpush1.msra.mxu0 0.0
        %2594 = vmatprep.subr.mxu0 0.0
        %2595 = vmatpush1.msra.mxu0 0.0
        %2596 = vmatprep.subr.mxu0 0.0
        %2597 = vmatpush1.msra.mxu0 0.0
        %2598 = vmatprep.subr.mxu0 0.0
        %2599 = vmatpush1.msra.mxu0 0.0
        %2600 = vmatprep.subr.mxu0 0.0
        %2601 = vmatpush1.msra.mxu0 0.0
        %2602 = vmatprep.subr.mxu0 0.0
        %2603 = vmatpush1.msra.mxu0 0.0
        %2604 = vmatprep.subr.mxu0 0.0
        %2605 = vmatpush1.msra.mxu0 0.0
        %2606 = vmatprep.subr.mxu0 0.0
        %2607 = vmatpush1.msra.mxu0 0.0
        %2608 = vmatprep.subr.mxu0 0.0
        %2609 = vmatpush1.msra.mxu0 0.0
        %2610 = vmatprep.subr.mxu0 0.0
        %2611 = vmatpush1.msra.mxu0 0.0
        %2612 = vmatprep.mubr.f32.mxu0 0.0
        %2613 = vmatmul.mubr.f32.gmra.mrb[0].mxu0 %v2546
        %v2614 = vpop.f32.mrb[0].mxu0
        %v2615 = vadd.f32 %v2544, %v2614
        %v2616 = vpop.f32.mrb[0].mxu0
        %2617 = vdwg.mxu0
        %v2618 = vld [vmem:[#allocation8 + $0x5e8] sm:$0xff]
        %v2619 = vld [vmem:[#allocation8 + $0x5f0] sm:$0xff]
        %v2620 = vld [vmem:[#allocation8 + $0x5f8] sm:$0xff]
        %v2621 = vld [vmem:[#allocation8 + $0x600] sm:$0xff]
        %v2622 = vld [vmem:[#allocation8 + $0x608] sm:$0xff]
        %v2623 = vld [vmem:[#allocation8 + $0x610] sm:$0xff]
        %v2624 = vld [vmem:[#allocation8 + $0x618] sm:$0xff]
        %v2625 = vld [vmem:[#allocation8 + $0x620] sm:$0xff]
        %v2626 = vld [vmem:[#allocation8 + $0x628] sm:$0x1]
        %v2627 = vlaneseq
        %v2628 = vshrl.u32 %v2627, 7
        %v2629 = vsub.s32 0, %v2628
        %v2630 = vrot.slane %v2626, %v2629
        %2631 = vmatprep.subr.mxu0 0.0
        %2632 = vmatpush1.msra.mxu0 %v2618
        %2633 = vmatprep.subr.mxu0 0.0
        %2634 = vmatpush1.msra.mxu0 %v2619
        %2635 = vmatprep.subr.mxu0 0.0
        %2636 = vmatpush1.msra.mxu0 %v2620
        %2637 = vmatprep.subr.mxu0 0.0
        %2638 = vmatpush1.msra.mxu0 %v2621
        %2639 = vmatprep.subr.mxu0 0.0
        %2640 = vmatpush1.msra.mxu0 %v2622
        %2641 = vmatprep.subr.mxu0 0.0
        %2642 = vmatpush1.msra.mxu0 %v2623
        %2643 = vmatprep.subr.mxu0 0.0
        %2644 = vmatpush1.msra.mxu0 %v2624
        %2645 = vmatprep.subr.mxu0 0.0
        %2646 = vmatpush1.msra.mxu0 %v2625
        %2647 = vmatprep.subr.mxu0 0.0
        %2648 = vmatpush1.msra.mxu0 0.0
        %2649 = vmatprep.subr.mxu0 0.0
        %2650 = vmatpush1.msra.mxu0 0.0
        %2651 = vmatprep.subr.mxu0 0.0
        %2652 = vmatpush1.msra.mxu0 0.0
        %2653 = vmatprep.subr.mxu0 0.0
        %2654 = vmatpush1.msra.mxu0 0.0
        %2655 = vmatprep.subr.mxu0 0.0
        %2656 = vmatpush1.msra.mxu0 0.0
        %2657 = vmatprep.subr.mxu0 0.0
        %2658 = vmatpush1.msra.mxu0 0.0
        %2659 = vmatprep.subr.mxu0 0.0
        %2660 = vmatpush1.msra.mxu0 0.0
        %2661 = vmatprep.subr.mxu0 0.0
        %2662 = vmatpush1.msra.mxu0 0.0
        %2663 = vmatprep.subr.mxu0 0.0
        %2664 = vmatpush1.msra.mxu0 0.0
        %2665 = vmatprep.subr.mxu0 0.0
        %2666 = vmatpush1.msra.mxu0 0.0
        %2667 = vmatprep.subr.mxu0 0.0
        %2668 = vmatpush1.msra.mxu0 0.0
        %2669 = vmatprep.subr.mxu0 0.0
        %2670 = vmatpush1.msra.mxu0 0.0
        %2671 = vmatprep.subr.mxu0 0.0
        %2672 = vmatpush1.msra.mxu0 0.0
        %2673 = vmatprep.subr.mxu0 0.0
        %2674 = vmatpush1.msra.mxu0 0.0
        %2675 = vmatprep.subr.mxu0 0.0
        %2676 = vmatpush1.msra.mxu0 0.0
        %2677 = vmatprep.subr.mxu0 0.0
        %2678 = vmatpush1.msra.mxu0 0.0
        %2679 = vmatprep.subr.mxu0 0.0
        %2680 = vmatpush1.msra.mxu0 0.0
        %2681 = vmatprep.subr.mxu0 0.0
        %2682 = vmatpush1.msra.mxu0 0.0
        %2683 = vmatprep.subr.mxu0 0.0
        %2684 = vmatpush1.msra.mxu0 0.0
        %2685 = vmatprep.subr.mxu0 0.0
        %2686 = vmatpush1.msra.mxu0 0.0
        %2687 = vmatprep.subr.mxu0 0.0
        %2688 = vmatpush1.msra.mxu0 0.0
        %2689 = vmatprep.subr.mxu0 0.0
        %2690 = vmatpush1.msra.mxu0 0.0
        %2691 = vmatprep.subr.mxu0 0.0
        %2692 = vmatpush1.msra.mxu0 0.0
        %2693 = vmatprep.subr.mxu0 0.0
        %2694 = vmatpush1.msra.mxu0 0.0
        %2695 = vmatprep.mubr.f32.mxu0 0.0
        %2696 = vmatmul.mubr.f32.gmra.mrb[0].mxu0 %v2546
        %v2697 = vpop.f32.mrb[0].mxu0
        %v2698 = vadd.f32 %v2630, %v2697
        %v2699 = vpop.f32.mrb[0].mxu0
        %2700 = vdwg.mxu0
        %v2701 = vmul.f32 %v2615, %v455
        %v2702 = vmul.f32 %v2615, %v460
        %v2703 = vmul.f32 %v2615, %v465
        %v2704 = vmul.f32 %v2615, %v470
        %v2705 = vmul.f32 %v2615, %v475
        %v2706 = vmul.f32 %v2615, %v480
        %v2707 = vmul.f32 %v2615, %v485
        %v2708 = vmul.f32 %v2615, %v490
        %v2710 = vsel %vm584, %v2701, 0
        %v2713 = vsel %vm584, %v2702, 0
        %v2716 = vsel %vm584, %v2703, 0
        %v2719 = vsel %vm584, %v2704, 0
        %v2722 = vsel %vm584, %v2705, 0
        %v2725 = vsel %vm584, %v2706, 0
        %v2728 = vsel %vm584, %v2707, 0
        %v2731 = vsel %vm584, %v2708, 0
        %v2734 = vsel %vm584, %v2698, 0
        %2736 = vmatprep.subr.mxu0 0.0
        %2737 = vmatpush1.xpose.msra.mxu0 %v2734
        %2738 = vmatprep.subr.mxu0 0.0
        %2739 = vmatpush1.xpose.msra.mxu0 0.0
        %2740 = vmatprep.subr.mxu0 0.0
        %2741 = vmatpush1.xpose.msra.mxu0 0.0
        %2742 = vmatprep.subr.mxu0 0.0
        %2743 = vmatpush1.xpose.msra.mxu0 0.0
        %2744 = vmatprep.subr.mxu0 0.0
        %2745 = vmatpush1.xpose.msra.mxu0 0.0
        %2746 = vmatprep.subr.mxu0 0.0
        %2747 = vmatpush1.xpose.msra.mxu0 0.0
        %2748 = vmatprep.subr.mxu0 0.0
        %2749 = vmatpush1.xpose.msra.mxu0 0.0
        %2750 = vmatprep.subr.mxu0 0.0
        %2751 = vmatpush1.xpose.msra.mxu0 0.0
        %2752 = vmatprep.subr.mxu0 0.0
        %2753 = vmatpush1.xpose.msra.mxu0 0.0
        %2754 = vmatprep.subr.mxu0 0.0
        %2755 = vmatpush1.xpose.msra.mxu0 0.0
        %2756 = vmatprep.subr.mxu0 0.0
        %2757 = vmatpush1.xpose.msra.mxu0 0.0
        %2758 = vmatprep.subr.mxu0 0.0
        %2759 = vmatpush1.xpose.msra.mxu0 0.0
        %2760 = vmatprep.subr.mxu0 0.0
        %2761 = vmatpush1.xpose.msra.mxu0 0.0
        %2762 = vmatprep.subr.mxu0 0.0
        %2763 = vmatpush1.xpose.msra.mxu0 0.0
        %2764 = vmatprep.subr.mxu0 0.0
        %2765 = vmatpush1.xpose.msra.mxu0 0.0
        %2766 = vmatprep.subr.mxu0 0.0
        %2767 = vmatpush1.xpose.msra.mxu0 0.0
        %2768 = vmatprep.subr.mxu0 0.0
        %2769 = vmatpush1.xpose.msra.mxu0 0.0
        %2770 = vmatprep.subr.mxu0 0.0
        %2771 = vmatpush1.xpose.msra.mxu0 0.0
        %2772 = vmatprep.subr.mxu0 0.0
        %2773 = vmatpush1.xpose.msra.mxu0 0.0
        %2774 = vmatprep.subr.mxu0 0.0
        %2775 = vmatpush1.xpose.msra.mxu0 0.0
        %2776 = vmatprep.subr.mxu0 0.0
        %2777 = vmatpush1.xpose.msra.mxu0 0.0
        %2778 = vmatprep.subr.mxu0 0.0
        %2779 = vmatpush1.xpose.msra.mxu0 0.0
        %2780 = vmatprep.subr.mxu0 0.0
        %2781 = vmatpush1.xpose.msra.mxu0 0.0
        %2782 = vmatprep.subr.mxu0 0.0
        %2783 = vmatpush1.xpose.msra.mxu0 0.0
        %2784 = vmatprep.subr.mxu0 0.0
        %2785 = vmatpush1.xpose.msra.mxu0 0.0
        %2786 = vmatprep.subr.mxu0 0.0
        %2787 = vmatpush1.xpose.msra.mxu0 0.0
        %2788 = vmatprep.subr.mxu0 0.0
        %2789 = vmatpush1.xpose.msra.mxu0 0.0
        %2790 = vmatprep.subr.mxu0 0.0
        %2791 = vmatpush1.xpose.msra.mxu0 0.0
        %2792 = vmatprep.subr.mxu0 0.0
        %2793 = vmatpush1.xpose.msra.mxu0 0.0
        %2794 = vmatprep.subr.mxu0 0.0
        %2795 = vmatpush1.xpose.msra.mxu0 0.0
        %2796 = vmatprep.subr.mxu0 0.0
        %2797 = vmatpush1.xpose.msra.mxu0 0.0
        %2798 = vmatprep.subr.mxu0 0.0
        %2799 = vmatpush1.xpose.msra.mxu0 0.0
        %2800 = vmatprep.mubr.f32.mxu0 0.0
        %2801 = vmatmul.mubr.f32.gmra.mrb[0].mxu0 %v2710
        %v2802 = vpop.f32.mrb[0].mxu0
        %v2803 = vadd.f32 0.0, %v2802
        %v2804 = vpop.f32.mrb[0].mxu0
        %2805 = vmatprep.mubr.f32.mxu0 0.0
        %2806 = vmatmul.mubr.f32.gmra.mrb[0].mxu0 %v2713
        %v2807 = vpop.f32.mrb[0].mxu0
        %v2808 = vadd.f32 0.0, %v2807
        %v2809 = vpop.f32.mrb[0].mxu0
        %2810 = vmatprep.mubr.f32.mxu0 0.0
        %2811 = vmatmul.mubr.f32.gmra.mrb[0].mxu0 %v2716
        %v2812 = vpop.f32.mrb[0].mxu0
        %v2813 = vadd.f32 0.0, %v2812
        %v2814 = vpop.f32.mrb[0].mxu0
        %2815 = vmatprep.mubr.f32.mxu0 0.0
        %2816 = vmatmul.mubr.f32.gmra.mrb[0].mxu0 %v2719
        %v2817 = vpop.f32.mrb[0].mxu0
        %v2818 = vadd.f32 0.0, %v2817
        %v2819 = vpop.f32.mrb[0].mxu0
        %2820 = vmatprep.mubr.f32.mxu0 0.0
        %2821 = vmatmul.mubr.f32.gmra.mrb[0].mxu0 %v2722
        %v2822 = vpop.f32.mrb[0].mxu0
        %v2823 = vadd.f32 0.0, %v2822
        %v2824 = vpop.f32.mrb[0].mxu0
        %2825 = vmatprep.mubr.f32.mxu0 0.0
        %2826 = vmatmul.mubr.f32.gmra.mrb[0].mxu0 %v2725
        %v2827 = vpop.f32.mrb[0].mxu0
        %v2828 = vadd.f32 0.0, %v2827
        %v2829 = vpop.f32.mrb[0].mxu0
        %2830 = vmatprep.mubr.f32.mxu0 0.0
        %2831 = vmatmul.mubr.f32.gmra.mrb[0].mxu0 %v2728
        %v2832 = vpop.f32.mrb[0].mxu0
        %v2833 = vadd.f32 0.0, %v2832
        %v2834 = vpop.f32.mrb[0].mxu0
        %2835 = vmatprep.mubr.f32.mxu0 0.0
        %2836 = vmatmul.mubr.f32.gmra.mrb[0].mxu0 %v2731
        %v2837 = vpop.f32.mrb[0].mxu0
        %v2838 = vadd.f32 0.0, %v2837
        %v2839 = vpop.f32.mrb[0].mxu0
        %2840 = vdwg.mxu0
        %vm2841 = vcmask 64512
        %v2842 = vsel %vm2841, %v2803, -inf
        %2843 = vmax.xlane.f32.xlu0 %v2842
        %v2844 = vpop.xlane.xlu0 %2843
        %v2845 = vsel %vm2841, %v2808, -inf
        %2846 = vmax.xlane.f32.xlu0 %v2845
        %v2847 = vpop.xlane.xlu0 %2846
        %v2848 = vsel %vm2841, %v2813, -inf
        %2849 = vmax.xlane.f32.xlu0 %v2848
        %v2850 = vpop.xlane.xlu0 %2849
        %v2851 = vsel %vm2841, %v2818, -inf
        %2852 = vmax.xlane.f32.xlu0 %v2851
        %v2853 = vpop.xlane.xlu0 %2852
        %v2854 = vsel %vm2841, %v2823, -inf
        %2855 = vmax.xlane.f32.xlu0 %v2854
        %v2856 = vpop.xlane.xlu0 %2855
        %v2857 = vsel %vm2841, %v2828, -inf
        %2858 = vmax.xlane.f32.xlu0 %v2857
        %v2859 = vpop.xlane.xlu0 %2858
        %v2860 = vsel %vm2841, %v2833, -inf
        %2861 = vmax.xlane.f32.xlu0 %v2860
        %v2862 = vpop.xlane.xlu0 %2861
        %v2863 = vsel %vm2841, %v2838, -inf
        %2864 = vmax.xlane.f32.xlu0 %v2863
        %v2865 = vpop.xlane.xlu0 %2864
        %v2866 = vsub.f32 %v2803, %v2844
        %v2867 = vsub.f32 %v2808, %v2847
        %v2868 = vsub.f32 %v2813, %v2850
        %v2869 = vsub.f32 %v2818, %v2853
        %v2870 = vsub.f32 %v2823, %v2856
        %v2871 = vsub.f32 %v2828, %v2859
        %v2872 = vsub.f32 %v2833, %v2862
        %v2873 = vsub.f32 %v2838, %v2865
        %v2874 = vmul.f32 %v2866, 1.442695
        %v2875 = vpow.pop %v2874
        %v2876 = vmul.f32 %v2867, 1.442695
        %v2877 = vpow.pop %v2876
        %v2878 = vmul.f32 %v2868, 1.442695
        %v2879 = vpow.pop %v2878
        %v2880 = vmul.f32 %v2869, 1.442695
        %v2881 = vpow.pop %v2880
        %v2882 = vmul.f32 %v2870, 1.442695
        %v2883 = vpow.pop %v2882
        %v2884 = vmul.f32 %v2871, 1.442695
        %v2885 = vpow.pop %v2884
        %v2886 = vmul.f32 %v2872, 1.442695
        %v2887 = vpow.pop %v2886
        %v2888 = vmul.f32 %v2873, 1.442695
        %v2889 = vpow.pop %v2888
        %v2890 = vsel %vm2841, %v2875, 0.0
        %2891 = vadd.xlane.f32.xlu0 %v2890
        %v2892 = vpop.xlane.xlu0 %2891
        %v2893 = vsel %vm2841, %v2877, 0.0
        %2894 = vadd.xlane.f32.xlu0 %v2893
        %v2895 = vpop.xlane.xlu0 %2894
        %v2896 = vsel %vm2841, %v2879, 0.0
        %2897 = vadd.xlane.f32.xlu0 %v2896
        %v2898 = vpop.xlane.xlu0 %2897
        %v2899 = vsel %vm2841, %v2881, 0.0
        %2900 = vadd.xlane.f32.xlu0 %v2899
        %v2901 = vpop.xlane.xlu0 %2900
        %v2902 = vsel %vm2841, %v2883, 0.0
        %2903 = vadd.xlane.f32.xlu0 %v2902
        %v2904 = vpop.xlane.xlu0 %2903
        %v2905 = vsel %vm2841, %v2885, 0.0
        %2906 = vadd.xlane.f32.xlu0 %v2905
        %v2907 = vpop.xlane.xlu0 %2906
        %v2908 = vsel %vm2841, %v2887, 0.0
        %2909 = vadd.xlane.f32.xlu0 %v2908
        %v2910 = vpop.xlane.xlu0 %2909
        %v2911 = vsel %vm2841, %v2889, 0.0
        %2912 = vadd.xlane.f32.xlu0 %v2911
        %v2913 = vpop.xlane.xlu0 %2912
        %v2914 = vrcp.pop %v2892
        %v2915 = vmul.f32 %v2875, %v2914
        %v2916 = vrcp.pop %v2895
        %v2917 = vmul.f32 %v2877, %v2916
        %v2918 = vrcp.pop %v2898
        %v2919 = vmul.f32 %v2879, %v2918
        %v2920 = vrcp.pop %v2901
        %v2921 = vmul.f32 %v2881, %v2920
        %v2922 = vrcp.pop %v2904
        %v2923 = vmul.f32 %v2883, %v2922
        %v2924 = vrcp.pop %v2907
        %v2925 = vmul.f32 %v2885, %v2924
        %v2926 = vrcp.pop %v2910
        %v2927 = vmul.f32 %v2887, %v2926
        %v2928 = vrcp.pop %v2913
        %v2929 = vmul.f32 %v2889, %v2928
        %2930 = vrot.lane.b32.xlu0 %v2698, 64
        %v2931 = vpop.permute.xlu0 %2930
        %v2934 = vsel %vm2841, %v2915, 0
        %v2937 = vsel %vm2841, %v2917, 0
        %v2940 = vsel %vm2841, %v2919, 0
        %v2943 = vsel %vm2841, %v2921, 0
        %v2946 = vsel %vm2841, %v2923, 0
        %v2949 = vsel %vm2841, %v2925, 0
        %v2952 = vsel %vm2841, %v2927, 0
        %v2955 = vsel %vm2841, %v2929, 0
        %2957 = vmatprep.subr.mxu0 0.0
        %2958 = vmatpush1.msra.mxu0 %v2931
        %2959 = vmatprep.subr.mxu0 0.0
        %2960 = vmatpush1.msra.mxu0 0.0
        %2961 = vmatprep.subr.mxu0 0.0
        %2962 = vmatpush1.msra.mxu0 0.0
        %2963 = vmatprep.subr.mxu0 0.0
        %2964 = vmatpush1.msra.mxu0 0.0
        %2965 = vmatprep.subr.mxu0 0.0
        %2966 = vmatpush1.msra.mxu0 0.0
        %2967 = vmatprep.subr.mxu0 0.0
        %2968 = vmatpush1.msra.mxu0 0.0
        %2969 = vmatprep.subr.mxu0 0.0
        %2970 = vmatpush1.msra.mxu0 0.0
        %2971 = vmatprep.subr.mxu0 0.0
        %2972 = vmatpush1.msra.mxu0 0.0
        %2973 = vmatprep.subr.mxu0 0.0
        %2974 = vmatpush1.msra.mxu0 0.0
        %2975 = vmatprep.subr.mxu0 0.0
        %2976 = vmatpush1.msra.mxu0 0.0
        %2977 = vmatprep.subr.mxu0 0.0
        %2978 = vmatpush1.msra.mxu0 0.0
        %2979 = vmatprep.subr.mxu0 0.0
        %2980 = vmatpush1.msra.mxu0 0.0
        %2981 = vmatprep.subr.mxu0 0.0
        %2982 = vmatpush1.msra.mxu0 0.0
        %2983 = vmatprep.subr.mxu0 0.0
        %2984 = vmatpush1.msra.mxu0 0.0
        %2985 = vmatprep.subr.mxu0 0.0
        %2986 = vmatpush1.msra.mxu0 0.0
        %2987 = vmatprep.subr.mxu0 0.0
        %2988 = vmatpush1.msra.mxu0 0.0
        %2989 = vmatprep.subr.mxu0 0.0
        %2990 = vmatpush1.msra.mxu0 0.0
        %2991 = vmatprep.subr.mxu0 0.0
        %2992 = vmatpush1.msra.mxu0 0.0
        %2993 = vmatprep.subr.mxu0 0.0
        %2994 = vmatpush1.msra.mxu0 0.0
        %2995 = vmatprep.subr.mxu0 0.0
        %2996 = vmatpush1.msra.mxu0 0.0
        %2997 = vmatprep.subr.mxu0 0.0
        %2998 = vmatpush1.msra.mxu0 0.0
        %2999 = vmatprep.subr.mxu0 0.0
        %3000 = vmatpush1.msra.mxu0 0.0
        %3001 = vmatprep.subr.mxu0 0.0
        %3002 = vmatpush1.msra.mxu0 0.0
        %3003 = vmatprep.subr.mxu0 0.0
        %3004 = vmatpush1.msra.mxu0 0.0
        %3005 = vmatprep.subr.mxu0 0.0
        %3006 = vmatpush1.msra.mxu0 0.0
        %3007 = vmatprep.subr.mxu0 0.0
        %3008 = vmatpush1.msra.mxu0 0.0
        %3009 = vmatprep.subr.mxu0 0.0
        %3010 = vmatpush1.msra.mxu0 0.0
        %3011 = vmatprep.subr.mxu0 0.0
        %3012 = vmatpush1.msra.mxu0 0.0
        %3013 = vmatprep.subr.mxu0 0.0
        %3014 = vmatpush1.msra.mxu0 0.0
        %3015 = vmatprep.subr.mxu0 0.0
        %3016 = vmatpush1.msra.mxu0 0.0
        %3017 = vmatprep.subr.mxu0 0.0
        %3018 = vmatpush1.msra.mxu0 0.0
        %3019 = vmatprep.subr.mxu0 0.0
        %3020 = vmatpush1.msra.mxu0 0.0
        %3021 = vmatprep.mubr.f32.mxu0 0.0
        %3022 = vmatmul.mubr.f32.gmra.mrb[0].mxu0 %v2934
        %v3023 = vpop.f32.mrb[0].mxu0
        %v3024 = vadd.f32 0.0, %v3023
        %v3025 = vpop.f32.mrb[0].mxu0
        %3026 = vmatprep.mubr.f32.mxu0 0.0
        %3027 = vmatmul.mubr.f32.gmra.mrb[0].mxu0 %v2937
        %v3028 = vpop.f32.mrb[0].mxu0
        %v3029 = vadd.f32 0.0, %v3028
        %v3030 = vpop.f32.mrb[0].mxu0
        %3031 = vmatprep.mubr.f32.mxu0 0.0
        %3032 = vmatmul.mubr.f32.gmra.mrb[0].mxu0 %v2940
        %v3033 = vpop.f32.mrb[0].mxu0
        %v3034 = vadd.f32 0.0, %v3033
        %v3035 = vpop.f32.mrb[0].mxu0
        %3036 = vmatprep.mubr.f32.mxu0 0.0
        %3037 = vmatmul.mubr.f32.gmra.mrb[0].mxu0 %v2943
        %v3038 = vpop.f32.mrb[0].mxu0
        %v3039 = vadd.f32 0.0, %v3038
        %v3040 = vpop.f32.mrb[0].mxu0
        %3041 = vmatprep.mubr.f32.mxu0 0.0
        %3042 = vmatmul.mubr.f32.gmra.mrb[0].mxu0 %v2946
        %v3043 = vpop.f32.mrb[0].mxu0
        %v3044 = vadd.f32 0.0, %v3043
        %v3045 = vpop.f32.mrb[0].mxu0
        %3046 = vmatprep.mubr.f32.mxu0 0.0
        %3047 = vmatmul.mubr.f32.gmra.mrb[0].mxu0 %v2949
        %v3048 = vpop.f32.mrb[0].mxu0
        %v3049 = vadd.f32 0.0, %v3048
        %v3050 = vpop.f32.mrb[0].mxu0
        %3051 = vmatprep.mubr.f32.mxu0 0.0
        %3052 = vmatmul.mubr.f32.gmra.mrb[0].mxu0 %v2952
        %v3053 = vpop.f32.mrb[0].mxu0
        %v3054 = vadd.f32 0.0, %v3053
        %v3055 = vpop.f32.mrb[0].mxu0
        %3056 = vmatprep.mubr.f32.mxu0 0.0
        %3057 = vmatmul.mubr.f32.gmra.mrb[0].mxu0 %v2955
        %v3058 = vpop.f32.mrb[0].mxu0
        %v3059 = vadd.f32 0.0, %v3058
        %v3060 = vpop.f32.mrb[0].mxu0
        %3061 = vdwg.mxu0
        %v3062 = vmul.f32 %v3024, %v455
        %v3063 = vmul.f32 %v3029, %v460
        %v3064 = vadd.f32 %v3062, %v3063
        %v3065 = vmul.f32 %v3034, %v465
        %v3066 = vadd.f32 %v3064, %v3065
        %v3067 = vmul.f32 %v3039, %v470
        %v3068 = vadd.f32 %v3066, %v3067
        %v3069 = vmul.f32 %v3044, %v475
        %v3070 = vadd.f32 %v3068, %v3069
        %v3071 = vmul.f32 %v3049, %v480
        %v3072 = vadd.f32 %v3070, %v3071
        %v3073 = vmul.f32 %v3054, %v485
        %v3074 = vadd.f32 %v3072, %v3073
        %v3075 = vmul.f32 %v3059, %v490
        %v3076 = vadd.f32 %v3074, %v3075
        %v3077 = vld [vmem:[#allocation8 + $0x630] sm:$0xff]
        %v3078 = vld [vmem:[#allocation8 + $0x638] sm:$0xff]
        %v3079 = vld [vmem:[#allocation8 + $0x640] sm:$0xff]
        %v3080 = vld [vmem:[#allocation8 + $0x648] sm:$0xff]
        %v3081 = vld [vmem:[#allocation8 + $0x650] sm:$0xff]
        %v3082 = vld [vmem:[#allocation8 + $0x658] sm:$0xff]
        %v3083 = vld [vmem:[#allocation8 + $0x660] sm:$0xff]
        %v3084 = vld [vmem:[#allocation8 + $0x668] sm:$0xff]
        %v3085 = vld [vmem:[#allocation8 + $0x670] sm:$0x1]
        %v3086 = vlaneseq
        %v3087 = vshrl.u32 %v3086, 7
        %v3088 = vsub.s32 0, %v3087
        %v3089 = vrot.slane %v3085, %v3088
        %v3091 = vsel %vm584, %v3076, 0
        %3093 = vmatprep.subr.mxu0 0.0
        %3094 = vmatpush1.msra.mxu0 %v3077
        %3095 = vmatprep.subr.mxu0 0.0
        %3096 = vmatpush1.msra.mxu0 %v3078
        %3097 = vmatprep.subr.mxu0 0.0
        %3098 = vmatpush1.msra.mxu0 %v3079
        %3099 = vmatprep.subr.mxu0 0.0
        %3100 = vmatpush1.msra.mxu0 %v3080
        %3101 = vmatprep.subr.mxu0 0.0
        %3102 = vmatpush1.msra.mxu0 %v3081
        %3103 = vmatprep.subr.mxu0 0.0
        %3104 = vmatpush1.msra.mxu0 %v3082
        %3105 = vmatprep.subr.mxu0 0.0
        %3106 = vmatpush1.msra.mxu0 %v3083
        %3107 = vmatprep.subr.mxu0 0.0
        %3108 = vmatpush1.msra.mxu0 %v3084
        %3109 = vmatprep.subr.mxu0 0.0
        %3110 = vmatpush1.msra.mxu0 0.0
        %3111 = vmatprep.subr.mxu0 0.0
        %3112 = vmatpush1.msra.mxu0 0.0
        %3113 = vmatprep.subr.mxu0 0.0
        %3114 = vmatpush1.msra.mxu0 0.0
        %3115 = vmatprep.subr.mxu0 0.0
        %3116 = vmatpush1.msra.mxu0 0.0
        %3117 = vmatprep.subr.mxu0 0.0
        %3118 = vmatpush1.msra.mxu0 0.0
        %3119 = vmatprep.subr.mxu0 0.0
        %3120 = vmatpush1.msra.mxu0 0.0
        %3121 = vmatprep.subr.mxu0 0.0
        %3122 = vmatpush1.msra.mxu0 0.0
        %3123 = vmatprep.subr.mxu0 0.0
        %3124 = vmatpush1.msra.mxu0 0.0
        %3125 = vmatprep.subr.mxu0 0.0
        %3126 = vmatpush1.msra.mxu0 0.0
        %3127 = vmatprep.subr.mxu0 0.0
        %3128 = vmatpush1.msra.mxu0 0.0
        %3129 = vmatprep.subr.mxu0 0.0
        %3130 = vmatpush1.msra.mxu0 0.0
        %3131 = vmatprep.subr.mxu0 0.0
        %3132 = vmatpush1.msra.mxu0 0.0
        %3133 = vmatprep.subr.mxu0 0.0
        %3134 = vmatpush1.msra.mxu0 0.0
        %3135 = vmatprep.subr.mxu0 0.0
        %3136 = vmatpush1.msra.mxu0 0.0
        %3137 = vmatprep.subr.mxu0 0.0
        %3138 = vmatpush1.msra.mxu0 0.0
        %3139 = vmatprep.subr.mxu0 0.0
        %3140 = vmatpush1.msra.mxu0 0.0
        %3141 = vmatprep.subr.mxu0 0.0
        %3142 = vmatpush1.msra.mxu0 0.0
        %3143 = vmatprep.subr.mxu0 0.0
        %3144 = vmatpush1.msra.mxu0 0.0
        %3145 = vmatprep.subr.mxu0 0.0
        %3146 = vmatpush1.msra.mxu0 0.0
        %3147 = vmatprep.subr.mxu0 0.0
        %3148 = vmatpush1.msra.mxu0 0.0
        %3149 = vmatprep.subr.mxu0 0.0
        %3150 = vmatpush1.msra.mxu0 0.0
        %3151 = vmatprep.subr.mxu0 0.0
        %3152 = vmatpush1.msra.mxu0 0.0
        %3153 = vmatprep.subr.mxu0 0.0
        %3154 = vmatpush1.msra.mxu0 0.0
        %3155 = vmatprep.subr.mxu0 0.0
        %3156 = vmatpush1.msra.mxu0 0.0
        %3157 = vmatprep.mubr.f32.mxu0 0.0
        %3158 = vmatmul.mubr.f32.gmra.mrb[0].mxu0 %v3091
        %v3159 = vpop.f32.mrb[0].mxu0
        %v3160 = vadd.f32 %v3089, %v3159
        %v3161 = vpop.f32.mrb[0].mxu0
        %3162 = vdwg.mxu0
        %v3163 = vadd.f32 %v3160, %v2531
        %v3164 = vld [vmem:[#allocation8 + $0x750] sm:$0x1]
        %v3165 = vld [vmem:[#allocation8 + $0x758] sm:$0x1]
        %v3166 = vsel %vm584, %v3163, 0.0
        %3167 = vadd.xlane.f32.xlu0 %v3166
        %v3168 = vpop.xlane.xlu0 %3167
        %v3169 = vmul.f32 %v3168, %v591
        %v3170 = vsub.f32 %v3163, %v3169
        %v3171 = vmul.f32 %v3170, %v3170
        %v3172 = vsel %vm584, %v3171, 0.0
        %3173 = vadd.xlane.f32.xlu0 %v3172
        %v3174 = vpop.xlane.xlu0 %3173
        %v3175 = vmul.f32 %v3174, %v591
        %v3176 = vadd.f32 %v3175, 1e-05
        %v3177 = vrsqrt.pop %v3176
        %v3178 = vmul.f32 %v3170, %v3177
        %v3179 = vlaneseq
        %v3180 = vshrl.u32 %v3179, 7
        %v3181 = vsub.s32 0, %v3180
        %v3182 = vrot.slane %v3164, %v3181
        %v3183 = vmul.f32 %v3178, %v3182
        %v3184 = vlaneseq
        %v3185 = vshrl.u32 %v3184, 7
        %v3186 = vsub.s32 0, %v3185
        %v3187 = vrot.slane %v3165, %v3186
        %v3188 = vadd.f32 %v3183, %v3187
        %v3189 = vld [vmem:[#allocation8 + $0x678] sm:$0xff]
        %v3190 = vld [vmem:[#allocation8 + $0x680] sm:$0xff]
        %v3191 = vld [vmem:[#allocation8 + $0x688] sm:$0xff]
        %v3192 = vld [vmem:[#allocation8 + $0x690] sm:$0xff]
        %v3193 = vld [vmem:[#allocation8 + $0x698] sm:$0xff]
        %v3194 = vld [vmem:[#allocation8 + $0x6a0] sm:$0xff]
        %v3195 = vld [vmem:[#allocation8 + $0x6a8] sm:$0xff]
        %v3196 = vld [vmem:[#allocation8 + $0x6b0] sm:$0xff]
        %v3197 = vld [vmem:[#allocation8 + $0x6b8] sm:$0x1]
        %v3198 = vlaneseq
        %v3199 = vshrl.u32 %v3198, 7
        %v3200 = vsub.s32 0, %v3199
        %v3201 = vrot.slane %v3197, %v3200
        %3202 = vmatprep.subr.mxu0 0.0
        %3203 = vmatpush1.msra.mxu0 %v3189
        %3204 = vmatprep.subr.mxu0 0.0
        %3205 = vmatpush1.msra.mxu0 %v3190
        %3206 = vmatprep.subr.mxu0 0.0
        %3207 = vmatpush1.msra.mxu0 %v3191
        %3208 = vmatprep.subr.mxu0 0.0
        %3209 = vmatpush1.msra.mxu0 %v3192
        %3210 = vmatprep.subr.mxu0 0.0
        %3211 = vmatpush1.msra.mxu0 %v3193
        %3212 = vmatprep.subr.mxu0 0.0
        %3213 = vmatpush1.msra.mxu0 %v3194
        %3214 = vmatprep.subr.mxu0 0.0
        %3215 = vmatpush1.msra.mxu0 %v3195
        %3216 = vmatprep.subr.mxu0 0.0
        %3217 = vmatpush1.msra.mxu0 %v3196
        %3218 = vmatprep.subr.mxu0 0.0
        %3219 = vmatpush1.msra.mxu0 0.0
        %3220 = vmatprep.subr.mxu0 0.0
        %3221 = vmatpush1.msra.mxu0 0.0
        %3222 = vmatprep.subr.mxu0 0.0
        %3223 = vmatpush1.msra.mxu0 0.0
        %3224 = vmatprep.subr.mxu0 0.0
        %3225 = vmatpush1.msra.mxu0 0.0
        %3226 = vmatprep.subr.mxu0 0.0
        %3227 = vmatpush1.msra.mxu0 0.0
        %3228 = vmatprep.subr.mxu0 0.0
        %3229 = vmatpush1.msra.mxu0 0.0
        %3230 = vmatprep.subr.mxu0 0.0
        %3231 = vmatpush1.msra.mxu0 0.0
        %3232 = vmatprep.subr.mxu0 0.0
        %3233 = vmatpush1.msra.mxu0 0.0
        %3234 = vmatprep.subr.mxu0 0.0
        %3235 = vmatpush1.msra.mxu0 0.0
        %3236 = vmatprep.subr.mxu0 0.0
        %3237 = vmatpush1.msra.mxu0 0.0
        %3238 = vmatprep.subr.mxu0 0.0
        %3239 = vmatpush1.msra.mxu0 0.0
        %3240 = vmatprep.subr.mxu0 0.0
        %3241 = vmatpush1.msra.mxu0 0.0
        %3242 = vmatprep.subr.mxu0 0.0
        %3243 = vmatpush1.msra.mxu0 0.0
        %3244 = vmatprep.subr.mxu0 0.0
        %3245 = vmatpush1.msra.mxu0 0.0
        %3246 = vmatprep.subr.mxu0 0.0
        %3247 = vmatpush1.msra.mxu0 0.0
        %3248 = vmatprep.subr.mxu0 0.0
        %3249 = vmatpush1.msra.mxu0 0.0
        %3250 = vmatprep.subr.mxu0 0.0
        %3251 = vmatpush1.msra.mxu0 0.0
        %3252 = vmatprep.subr.mxu0 0.0
        %3253 = vmatpush1.msra.mxu0 0.0
        %3254 = vmatprep.subr.mxu0 0.0
        %3255 = vmatpush1.msra.mxu0 0.0
        %3256 = vmatprep.subr.mxu0 0.0
        %3257 = vmatpush1.msra.mxu0 0.0
        %3258 = vmatprep.subr.mxu0 0.0
        %3259 = vmatpush1.msra.mxu0 0.0
        %3260 = vmatprep.subr.mxu0 0.0
        %3261 = vmatpush1.msra.mxu0 0.0
        %3262 = vmatprep.subr.mxu0 0.0
        %3263 = vmatpush1.msra.mxu0 0.0
        %3264 = vmatprep.subr.mxu0 0.0
        %3265 = vmatpush1.msra.mxu0 0.0
        %3266 = vmatprep.mubr.f32.mxu0 0.0
        %3267 = vmatmul.mubr.f32.gmra.mrb[0].mxu0 %v2546
        %v3268 = vpop.f32.mrb[0].mxu0
        %v3269 = vadd.f32 %v3201, %v3268
        %v3270 = vpop.f32.mrb[0].mxu0
        %3271 = vdwg.mxu0
        %v3272 = vld [vmem:[#allocation8 + $0x6c0] sm:$0xff]
        %v3273 = vld [vmem:[#allocation8 + $0x6c8] sm:$0xff]
        %v3274 = vld [vmem:[#allocation8 + $0x6d0] sm:$0xff]
        %v3275 = vld [vmem:[#allocation8 + $0x6d8] sm:$0xff]
        %v3276 = vld [vmem:[#allocation8 + $0x6e0] sm:$0xff]
        %v3277 = vld [vmem:[#allocation8 + $0x6e8] sm:$0xff]
        %v3278 = vld [vmem:[#allocation8 + $0x6f0] sm:$0xff]
        %v3279 = vld [vmem:[#allocation8 + $0x6f8] sm:$0xff]
        %v3280 = vld [vmem:[#allocation8 + $0x700] sm:$0x1]
        %v3281 = vlaneseq
        %v3282 = vshrl.u32 %v3281, 7
        %v3283 = vsub.s32 0, %v3282
        %v3284 = vrot.slane %v3280, %v3283
        %v3286 = vsel %vm584, %v1078, 0
        %v3289 = vsel %vm584, %v1079, 0
        %3291 = vmatprep.subr.mxu0 0.0
        %3292 = vmatpush1.msra.mxu0 %v3272
        %3293 = vmatprep.subr.mxu0 0.0
        %3294 = vmatpush1.msra.mxu0 %v3273
        %3295 = vmatprep.subr.mxu0 0.0
        %3296 = vmatpush1.msra.mxu0 %v3274
        %3297 = vmatprep.subr.mxu0 0.0
        %3298 = vmatpush1.msra.mxu0 %v3275
        %3299 = vmatprep.subr.mxu0 0.0
        %3300 = vmatpush1.msra.mxu0 %v3276
        %3301 = vmatprep.subr.mxu0 0.0
        %3302 = vmatpush1.msra.mxu0 %v3277
        %3303 = vmatprep.subr.mxu0 0.0
        %3304 = vmatpush1.msra.mxu0 %v3278
        %3305 = vmatprep.subr.mxu0 0.0
        %3306 = vmatpush1.msra.mxu0 %v3279
        %3307 = vmatprep.subr.mxu0 0.0
        %3308 = vmatpush1.msra.mxu0 0.0
        %3309 = vmatprep.subr.mxu0 0.0
        %3310 = vmatpush1.msra.mxu0 0.0
        %3311 = vmatprep.subr.mxu0 0.0
        %3312 = vmatpush1.msra.mxu0 0.0
        %3313 = vmatprep.subr.mxu0 0.0
        %3314 = vmatpush1.msra.mxu0 0.0
        %3315 = vmatprep.subr.mxu0 0.0
        %3316 = vmatpush1.msra.mxu0 0.0
        %3317 = vmatprep.subr.mxu0 0.0
        %3318 = vmatpush1.msra.mxu0 0.0
        %3319 = vmatprep.subr.mxu0 0.0
        %3320 = vmatpush1.msra.mxu0 0.0
        %3321 = vmatprep.subr.mxu0 0.0
        %3322 = vmatpush1.msra.mxu0 0.0
        %3323 = vmatprep.subr.mxu0 0.0
        %3324 = vmatpush1.msra.mxu0 0.0
        %3325 = vmatprep.subr.mxu0 0.0
        %3326 = vmatpush1.msra.mxu0 0.0
        %3327 = vmatprep.subr.mxu0 0.0
        %3328 = vmatpush1.msra.mxu0 0.0
        %3329 = vmatprep.subr.mxu0 0.0
        %3330 = vmatpush1.msra.mxu0 0.0
        %3331 = vmatprep.subr.mxu0 0.0
        %3332 = vmatpush1.msra.mxu0 0.0
        %3333 = vmatprep.subr.mxu0 0.0
        %3334 = vmatpush1.msra.mxu0 0.0
        %3335 = vmatprep.subr.mxu0 0.0
        %3336 = vmatpush1.msra.mxu0 0.0
        %3337 = vmatprep.subr.mxu0 0.0
        %3338 = vmatpush1.msra.mxu0 0.0
        %3339 = vmatprep.subr.mxu0 0.0
        %3340 = vmatpush1.msra.mxu0 0.0
        %3341 = vmatprep.subr.mxu0 0.0
        %3342 = vmatpush1.msra.mxu0 0.0
        %3343 = vmatprep.subr.mxu0 0.0
        %3344 = vmatpush1.msra.mxu0 0.0
        %3345 = vmatprep.subr.mxu0 0.0
        %3346 = vmatpush1.msra.mxu0 0.0
        %3347 = vmatprep.subr.mxu0 0.0
        %3348 = vmatpush1.msra.mxu0 0.0
        %3349 = vmatprep.subr.mxu0 0.0
        %3350 = vmatpush1.msra.mxu0 0.0
        %3351 = vmatprep.subr.mxu0 0.0
        %3352 = vmatpush1.msra.mxu0 0.0
        %3353 = vmatprep.subr.mxu0 0.0
        %3354 = vmatpush1.msra.mxu0 0.0
        %3355 = vmatprep.mubr.f32.mxu0 0.0
        %3356 = vmatmul.mubr.f32.gmra.mrb[0].mxu0 %v3286
        %v3357 = vpop.f32.mrb[0].mxu0
        %v3358 = vadd.f32 %v3284, %v3357
        %v3359 = vpop.f32.mrb[0].mxu0
        %3360 = vmatprep.mubr.f32.mxu0 0.0
        %3361 = vmatmul.mubr.f32.gmra.mrb[0].mxu0 %v3289
        %v3362 = vpop.f32.mrb[0].mxu0
        %v3363 = vadd.f32 %v3284, %v3362
        %v3364 = vpop.f32.mrb[0].mxu0
        %3365 = vdwg.mxu0
        %v3366 = vmul.f32 %v3269, %v455
        %v3367 = vmul.f32 %v3269, %v460
        %v3368 = vmul.f32 %v3269, %v465
        %v3369 = vmul.f32 %v3269, %v470
        %v3370 = vmul.f32 %v3269, %v475
        %v3371 = vmul.f32 %v3269, %v480
        %v3372 = vmul.f32 %v3269, %v485
        %v3373 = vmul.f32 %v3269, %v490
        %v3375 = vlaneseq
        %v3376 = vshrl.u32 %v3375, 7
        %v3377 = vsub.s32 0, %v3376
        %v3378 = vrot.slane %v448, %v3377
        %v3381 = vsel %vm584, %v3366, 0
        %v3384 = vsel %vm584, %v3367, 0
        %v3387 = vsel %vm584, %v3368, 0
        %v3390 = vsel %vm584, %v3369, 0
        %v3393 = vsel %vm584, %v3370, 0
        %v3396 = vsel %vm584, %v3371, 0
        %v3399 = vsel %vm584, %v3372, 0
        %v3402 = vsel %vm584, %v3373, 0
        %v3405 = vsel %vm584, %v3358, 0
        %v3408 = vsel %vm584, %v3363, 0
        %3410 = vmatprep.subr.mxu0 0.0
        %3411 = vmatpush1.xpose.msra.mxu0 %v3405
        %3412 = vmatprep.subr.mxu0 0.0
        %3413 = vmatpush1.xpose.msra.mxu0 %v3408
        %3414 = vmatprep.subr.mxu0 0.0
        %3415 = vmatpush1.xpose.msra.mxu0 0.0
        %3416 = vmatprep.subr.mxu0 0.0
        %3417 = vmatpush1.xpose.msra.mxu0 0.0
        %3418 = vmatprep.subr.mxu0 0.0
        %3419 = vmatpush1.xpose.msra.mxu0 0.0
        %3420 = vmatprep.subr.mxu0 0.0
        %3421 = vmatpush1.xpose.msra.mxu0 0.0
        %3422 = vmatprep.subr.mxu0 0.0
        %3423 = vmatpush1.xpose.msra.mxu0 0.0
        %3424 = vmatprep.subr.mxu0 0.0
        %3425 = vmatpush1.xpose.msra.mxu0 0.0
        %3426 = vmatprep.subr.mxu0 0.0
        %3427 = vmatpush1.xpose.msra.mxu0 0.0
        %3428 = vmatprep.subr.mxu0 0.0
        %3429 = vmatpush1.xpose.msra.mxu0 0.0
        %3430 = vmatprep.subr.mxu0 0.0
        %3431 = vmatpush1.xpose.msra.mxu0 0.0
        %3432 = vmatprep.subr.mxu0 0.0
        %3433 = vmatpush1.xpose.msra.mxu0 0.0
        %3434 = vmatprep.subr.mxu0 0.0
        %3435 = vmatpush1.xpose.msra.mxu0 0.0
        %3436 = vmatprep.subr.mxu0 0.0
        %3437 = vmatpush1.xpose.msra.mxu0 0.0
        %3438 = vmatprep.subr.mxu0 0.0
        %3439 = vmatpush1.xpose.msra.mxu0 0.0
        %3440 = vmatprep.subr.mxu0 0.0
        %3441 = vmatpush1.xpose.msra.mxu0 0.0
        %3442 = vmatprep.subr.mxu0 0.0
        %3443 = vmatpush1.xpose.msra.mxu0 0.0
        %3444 = vmatprep.subr.mxu0 0.0
        %3445 = vmatpush1.xpose.msra.mxu0 0.0
        %3446 = vmatprep.subr.mxu0 0.0
        %3447 = vmatpush1.xpose.msra.mxu0 0.0
        %3448 = vmatprep.subr.mxu0 0.0
        %3449 = vmatpush1.xpose.msra.mxu0 0.0
        %3450 = vmatprep.subr.mxu0 0.0
        %3451 = vmatpush1.xpose.msra.mxu0 0.0
        %3452 = vmatprep.subr.mxu0 0.0
        %3453 = vmatpush1.xpose.msra.mxu0 0.0
        %3454 = vmatprep.subr.mxu0 0.0
        %3455 = vmatpush1.xpose.msra.mxu0 0.0
        %3456 = vmatprep.subr.mxu0 0.0
        %3457 = vmatpush1.xpose.msra.mxu0 0.0
        %3458 = vmatprep.subr.mxu0 0.0
        %3459 = vmatpush1.xpose.msra.mxu0 0.0
        %3460 = vmatprep.subr.mxu0 0.0
        %3461 = vmatpush1.xpose.msra.mxu0 0.0
        %3462 = vmatprep.subr.mxu0 0.0
        %3463 = vmatpush1.xpose.msra.mxu0 0.0
        %3464 = vmatprep.subr.mxu0 0.0
        %3465 = vmatpush1.xpose.msra.mxu0 0.0
        %3466 = vmatprep.subr.mxu0 0.0
        %3467 = vmatpush1.xpose.msra.mxu0 0.0
        %3468 = vmatprep.subr.mxu0 0.0
        %3469 = vmatpush1.xpose.msra.mxu0 0.0
        %3470 = vmatprep.subr.mxu0 0.0
        %3471 = vmatpush1.xpose.msra.mxu0 0.0
        %3472 = vmatprep.subr.mxu0 0.0
        %3473 = vmatpush1.xpose.msra.mxu0 0.0
        %3474 = vmatprep.mubr.f32.mxu0 0.0
        %3475 = vmatmul.mubr.f32.gmra.mrb[0].mxu0 %v3381
        %v3476 = vpop.f32.mrb[0].mxu0
        %v3477 = vadd.f32 %v3378, %v3476
        %v3478 = vpop.f32.mrb[0].mxu0
        %3479 = vmatprep.mubr.f32.mxu0 0.0
        %3480 = vmatmul.mubr.f32.gmra.mrb[0].mxu0 %v3384
        %v3481 = vpop.f32.mrb[0].mxu0
        %v3482 = vadd.f32 %v3378, %v3481
        %v3483 = vpop.f32.mrb[0].mxu0
        %3484 = vmatprep.mubr.f32.mxu0 0.0
        %3485 = vmatmul.mubr.f32.gmra.mrb[0].mxu0 %v3387
        %v3486 = vpop.f32.mrb[0].mxu0
        %v3487 = vadd.f32 %v3378, %v3486
        %v3488 = vpop.f32.mrb[0].mxu0
        %3489 = vmatprep.mubr.f32.mxu0 0.0
        %3490 = vmatmul.mubr.f32.gmra.mrb[0].mxu0 %v3390
        %v3491 = vpop.f32.mrb[0].mxu0
        %v3492 = vadd.f32 %v3378, %v3491
        %v3493 = vpop.f32.mrb[0].mxu0
        %3494 = vmatprep.mubr.f32.mxu0 0.0
        %3495 = vmatmul.mubr.f32.gmra.mrb[0].mxu0 %v3393
        %v3496 = vpop.f32.mrb[0].mxu0
        %v3497 = vadd.f32 %v3378, %v3496
        %v3498 = vpop.f32.mrb[0].mxu0
        %3499 = vmatprep.mubr.f32.mxu0 0.0
        %3500 = vmatmul.mubr.f32.gmra.mrb[0].mxu0 %v3396
        %v3501 = vpop.f32.mrb[0].mxu0
        %v3502 = vadd.f32 %v3378, %v3501
        %v3503 = vpop.f32.mrb[0].mxu0
        %3504 = vmatprep.mubr.f32.mxu0 0.0
        %3505 = vmatmul.mubr.f32.gmra.mrb[0].mxu0 %v3399
        %v3506 = vpop.f32.mrb[0].mxu0
        %v3507 = vadd.f32 %v3378, %v3506
        %v3508 = vpop.f32.mrb[0].mxu0
        %3509 = vmatprep.mubr.f32.mxu0 0.0
        %3510 = vmatmul.mubr.f32.gmra.mrb[0].mxu0 %v3402
        %v3511 = vpop.f32.mrb[0].mxu0
        %v3512 = vadd.f32 %v3378, %v3511
        %v3513 = vpop.f32.mrb[0].mxu0
        %3514 = vdwg.mxu0
        %vm3515 = vcmask 80896
        %v3516 = vsel %vm3515, %v3477, -inf
        %3517 = vmax.xlane.f32.xlu0 %v3516
        %v3518 = vpop.xlane.xlu0 %3517
        %v3519 = vsel %vm3515, %v3482, -inf
        %3520 = vmax.xlane.f32.xlu0 %v3519
        %v3521 = vpop.xlane.xlu0 %3520
        %v3522 = vsel %vm3515, %v3487, -inf
        %3523 = vmax.xlane.f32.xlu0 %v3522
        %v3524 = vpop.xlane.xlu0 %3523
        %v3525 = vsel %vm3515, %v3492, -inf
        %3526 = vmax.xlane.f32.xlu0 %v3525
        %v3527 = vpop.xlane.xlu0 %3526
        %v3528 = vsel %vm3515, %v3497, -inf
        %3529 = vmax.xlane.f32.xlu0 %v3528
        %v3530 = vpop.xlane.xlu0 %3529
        %v3531 = vsel %vm3515, %v3502, -inf
        %3532 = vmax.xlane.f32.xlu0 %v3531
        %v3533 = vpop.xlane.xlu0 %3532
        %v3534 = vsel %vm3515, %v3507, -inf
        %3535 = vmax.xlane.f32.xlu0 %v3534
        %v3536 = vpop.xlane.xlu0 %3535
        %v3537 = vsel %vm3515, %v3512, -inf
        %3538 = vmax.xlane.f32.xlu0 %v3537
        %v3539 = vpop.xlane.xlu0 %3538
        %v3540 = vsub.f32 %v3477, %v3518
        %v3541 = vsub.f32 %v3482, %v3521
        %v3542 = vsub.f32 %v3487, %v3524
        %v3543 = vsub.f32 %v3492, %v3527
        %v3544 = vsub.f32 %v3497, %v3530
        %v3545 = vsub.f32 %v3502, %v3533
        %v3546 = vsub.f32 %v3507, %v3536
        %v3547 = vsub.f32 %v3512, %v3539
        %v3548 = vmul.f32 %v3540, 1.442695
        %v3549 = vpow.pop %v3548
        %v3550 = vmul.f32 %v3541, 1.442695
        %v3551 = vpow.pop %v3550
        %v3552 = vmul.f32 %v3542, 1.442695
        %v3553 = vpow.pop %v3552
        %v3554 = vmul.f32 %v3543, 1.442695
        %v3555 = vpow.pop %v3554
        %v3556 = vmul.f32 %v3544, 1.442695
        %v3557 = vpow.pop %v3556
        %v3558 = vmul.f32 %v3545, 1.442695
        %v3559 = vpow.pop %v3558
        %v3560 = vmul.f32 %v3546, 1.442695
        %v3561 = vpow.pop %v3560
        %v3562 = vmul.f32 %v3547, 1.442695
        %v3563 = vpow.pop %v3562
        %v3564 = vsel %vm3515, %v3549, 0.0
        %3565 = vadd.xlane.f32.xlu0 %v3564
        %v3566 = vpop.xlane.xlu0 %3565
        %v3567 = vsel %vm3515, %v3551, 0.0
        %3568 = vadd.xlane.f32.xlu0 %v3567
        %v3569 = vpop.xlane.xlu0 %3568
        %v3570 = vsel %vm3515, %v3553, 0.0
        %3571 = vadd.xlane.f32.xlu0 %v3570
        %v3572 = vpop.xlane.xlu0 %3571
        %v3573 = vsel %vm3515, %v3555, 0.0
        %3574 = vadd.xlane.f32.xlu0 %v3573
        %v3575 = vpop.xlane.xlu0 %3574
        %v3576 = vsel %vm3515, %v3557, 0.0
        %3577 = vadd.xlane.f32.xlu0 %v3576
        %v3578 = vpop.xlane.xlu0 %3577
        %v3579 = vsel %vm3515, %v3559, 0.0
        %3580 = vadd.xlane.f32.xlu0 %v3579
        %v3581 = vpop.xlane.xlu0 %3580
        %v3582 = vsel %vm3515, %v3561, 0.0
        %3583 = vadd.xlane.f32.xlu0 %v3582
        %v3584 = vpop.xlane.xlu0 %3583
        %v3585 = vsel %vm3515, %v3563, 0.0
        %3586 = vadd.xlane.f32.xlu0 %v3585
        %v3587 = vpop.xlane.xlu0 %3586
        %v3588 = vrcp.pop %v3566
        %v3589 = vmul.f32 %v3549, %v3588
        %v3590 = vrcp.pop %v3569
        %v3591 = vmul.f32 %v3551, %v3590
        %v3592 = vrcp.pop %v3572
        %v3593 = vmul.f32 %v3553, %v3592
        %v3594 = vrcp.pop %v3575
        %v3595 = vmul.f32 %v3555, %v3594
        %v3596 = vrcp.pop %v3578
        %v3597 = vmul.f32 %v3557, %v3596
        %v3598 = vrcp.pop %v3581
        %v3599 = vmul.f32 %v3559, %v3598
        %v3600 = vrcp.pop %v3584
        %v3601 = vmul.f32 %v3561, %v3600
        %v3602 = vrcp.pop %v3587
        %v3603 = vmul.f32 %v3563, %v3602
        %3604 = vrot.lane.b32.xlu0 %v3358, 64
        %v3605 = vpop.permute.xlu0 %3604
        %3606 = vrot.lane.b32.xlu0 %v3363, 64
        %v3607 = vpop.permute.xlu0 %3606
        %v3610 = vsel %vm3515, %v3589, 0
        %v3613 = vsel %vm3515, %v3591, 0
        %v3616 = vsel %vm3515, %v3593, 0
        %v3619 = vsel %vm3515, %v3595, 0
        %v3622 = vsel %vm3515, %v3597, 0
        %v3625 = vsel %vm3515, %v3599, 0
        %v3628 = vsel %vm3515, %v3601, 0
        %v3631 = vsel %vm3515, %v3603, 0
        %vm3633 = vcmask 1041408
        %v3634 = vsel %vm3633, %v3607, 0
        %3636 = vmatprep.subr.mxu0 0.0
        %3637 = vmatpush1.msra.mxu0 %v3605
        %3638 = vmatprep.subr.mxu0 0.0
        %3639 = vmatpush1.msra.mxu0 %v3634
        %3640 = vmatprep.subr.mxu0 0.0
        %3641 = vmatpush1.msra.mxu0 0.0
        %3642 = vmatprep.subr.mxu0 0.0
        %3643 = vmatpush1.msra.mxu0 0.0
        %3644 = vmatprep.subr.mxu0 0.0
        %3645 = vmatpush1.msra.mxu0 0.0
        %3646 = vmatprep.subr.mxu0 0.0
        %3647 = vmatpush1.msra.mxu0 0.0
        %3648 = vmatprep.subr.mxu0 0.0
        %3649 = vmatpush1.msra.mxu0 0.0
        %3650 = vmatprep.subr.mxu0 0.0
        %3651 = vmatpush1.msra.mxu0 0.0
        %3652 = vmatprep.subr.mxu0 0.0
        %3653 = vmatpush1.msra.mxu0 0.0
        %3654 = vmatprep.subr.mxu0 0.0
        %3655 = vmatpush1.msra.mxu0 0.0
        %3656 = vmatprep.subr.mxu0 0.0
        %3657 = vmatpush1.msra.mxu0 0.0
        %3658 = vmatprep.subr.mxu0 0.0
        %3659 = vmatpush1.msra.mxu0 0.0
        %3660 = vmatprep.subr.mxu0 0.0
        %3661 = vmatpush1.msra.mxu0 0.0
        %3662 = vmatprep.subr.mxu0 0.0
        %3663 = vmatpush1.msra.mxu0 0.0
        %3664 = vmatprep.subr.mxu0 0.0
        %3665 = vmatpush1.msra.mxu0 0.0
        %3666 = vmatprep.subr.mxu0 0.0
        %3667 = vmatpush1.msra.mxu0 0.0
        %3668 = vmatprep.subr.mxu0 0.0
        %3669 = vmatpush1.msra.mxu0 0.0
        %3670 = vmatprep.subr.mxu0 0.0
        %3671 = vmatpush1.msra.mxu0 0.0
        %3672 = vmatprep.subr.mxu0 0.0
        %3673 = vmatpush1.msra.mxu0 0.0
        %3674 = vmatprep.subr.mxu0 0.0
        %3675 = vmatpush1.msra.mxu0 0.0
        %3676 = vmatprep.subr.mxu0 0.0
        %3677 = vmatpush1.msra.mxu0 0.0
        %3678 = vmatprep.subr.mxu0 0.0
        %3679 = vmatpush1.msra.mxu0 0.0
        %3680 = vmatprep.subr.mxu0 0.0
        %3681 = vmatpush1.msra.mxu0 0.0
        %3682 = vmatprep.subr.mxu0 0.0
        %3683 = vmatpush1.msra.mxu0 0.0
        %3684 = vmatprep.subr.mxu0 0.0
        %3685 = vmatpush1.msra.mxu0 0.0
        %3686 = vmatprep.subr.mxu0 0.0
        %3687 = vmatpush1.msra.mxu0 0.0
        %3688 = vmatprep.subr.mxu0 0.0
        %3689 = vmatpush1.msra.mxu0 0.0
        %3690 = vmatprep.subr.mxu0 0.0
        %3691 = vmatpush1.msra.mxu0 0.0
        %3692 = vmatprep.subr.mxu0 0.0
        %3693 = vmatpush1.msra.mxu0 0.0
        %3694 = vmatprep.subr.mxu0 0.0
        %3695 = vmatpush1.msra.mxu0 0.0
        %3696 = vmatprep.subr.mxu0 0.0
        %3697 = vmatpush1.msra.mxu0 0.0
        %3698 = vmatprep.subr.mxu0 0.0
        %3699 = vmatpush1.msra.mxu0 0.0
        %3700 = vmatprep.mubr.f32.mxu0 0.0
        %3701 = vmatmul.mubr.f32.gmra.mrb[0].mxu0 %v3610
        %v3702 = vpop.f32.mrb[0].mxu0
        %v3703 = vadd.f32 0.0, %v3702
        %v3704 = vpop.f32.mrb[0].mxu0
        %3705 = vmatprep.mubr.f32.mxu0 0.0
        %3706 = vmatmul.mubr.f32.gmra.mrb[0].mxu0 %v3613
        %v3707 = vpop.f32.mrb[0].mxu0
        %v3708 = vadd.f32 0.0, %v3707
        %v3709 = vpop.f32.mrb[0].mxu0
        %3710 = vmatprep.mubr.f32.mxu0 0.0
        %3711 = vmatmul.mubr.f32.gmra.mrb[0].mxu0 %v3616
        %v3712 = vpop.f32.mrb[0].mxu0
        %v3713 = vadd.f32 0.0, %v3712
        %v3714 = vpop.f32.mrb[0].mxu0
        %3715 = vmatprep.mubr.f32.mxu0 0.0
        %3716 = vmatmul.mubr.f32.gmra.mrb[0].mxu0 %v3619
        %v3717 = vpop.f32.mrb[0].mxu0
        %v3718 = vadd.f32 0.0, %v3717
        %v3719 = vpop.f32.mrb[0].mxu0
        %3720 = vmatprep.mubr.f32.mxu0 0.0
        %3721 = vmatmul.mubr.f32.gmra.mrb[0].mxu0 %v3622
        %v3722 = vpop.f32.mrb[0].mxu0
        %v3723 = vadd.f32 0.0, %v3722
        %v3724 = vpop.f32.mrb[0].mxu0
        %3725 = vmatprep.mubr.f32.mxu0 0.0
        %3726 = vmatmul.mubr.f32.gmra.mrb[0].mxu0 %v3625
        %v3727 = vpop.f32.mrb[0].mxu0
        %v3728 = vadd.f32 0.0, %v3727
        %v3729 = vpop.f32.mrb[0].mxu0
        %3730 = vmatprep.mubr.f32.mxu0 0.0
        %3731 = vmatmul.mubr.f32.gmra.mrb[0].mxu0 %v3628
        %v3732 = vpop.f32.mrb[0].mxu0
        %v3733 = vadd.f32 0.0, %v3732
        %v3734 = vpop.f32.mrb[0].mxu0
        %3735 = vmatprep.mubr.f32.mxu0 0.0
        %3736 = vmatmul.mubr.f32.gmra.mrb[0].mxu0 %v3631
        %v3737 = vpop.f32.mrb[0].mxu0
        %v3738 = vadd.f32 0.0, %v3737
        %v3739 = vpop.f32.mrb[0].mxu0
        %3740 = vdwg.mxu0
        %v3741 = vmul.f32 %v3703, %v455
        %v3742 = vmul.f32 %v3708, %v460
        %v3743 = vadd.f32 %v3741, %v3742
        %v3744 = vmul.f32 %v3713, %v465
        %v3745 = vadd.f32 %v3743, %v3744
        %v3746 = vmul.f32 %v3718, %v470
        %v3747 = vadd.f32 %v3745, %v3746
        %v3748 = vmul.f32 %v3723, %v475
        %v3749 = vadd.f32 %v3747, %v3748
        %v3750 = vmul.f32 %v3728, %v480
        %v3751 = vadd.f32 %v3749, %v3750
        %v3752 = vmul.f32 %v3733, %v485
        %v3753 = vadd.f32 %v3751, %v3752
        %v3754 = vmul.f32 %v3738, %v490
        %v3755 = vadd.f32 %v3753, %v3754
        %v3756 = vld [vmem:[#allocation8 + $0x708] sm:$0xff]
        %v3757 = vld [vmem:[#allocation8 + $0x710] sm:$0xff]
        %v3758 = vld [vmem:[#allocation8 + $0x718] sm:$0xff]
        %v3759 = vld [vmem:[#allocation8 + $0x720] sm:$0xff]
        %v3760 = vld [vmem:[#allocation8 + $0x728] sm:$0xff]
        %v3761 = vld [vmem:[#allocation8 + $0x730] sm:$0xff]
        %v3762 = vld [vmem:[#allocation8 + $0x738] sm:$0xff]
        %v3763 = vld [vmem:[#allocation8 + $0x740] sm:$0xff]
        %v3764 = vld [vmem:[#allocation8 + $0x748] sm:$0x1]
        %v3765 = vlaneseq
        %v3766 = vshrl.u32 %v3765, 7
        %v3767 = vsub.s32 0, %v3766
        %v3768 = vrot.slane %v3764, %v3767
        %v3770 = vsel %vm584, %v3755, 0
        %3772 = vmatprep.subr.mxu0 0.0
        %3773 = vmatpush1.msra.mxu0 %v3756
        %3774 = vmatprep.subr.mxu0 0.0
        %3775 = vmatpush1.msra.mxu0 %v3757
        %3776 = vmatprep.subr.mxu0 0.0
        %3777 = vmatpush1.msra.mxu0 %v3758
        %3778 = vmatprep.subr.mxu0 0.0
        %3779 = vmatpush1.msra.mxu0 %v3759
        %3780 = vmatprep.subr.mxu0 0.0
        %3781 = vmatpush1.msra.mxu0 %v3760
        %3782 = vmatprep.subr.mxu0 0.0
        %3783 = vmatpush1.msra.mxu0 %v3761
        %3784 = vmatprep.subr.mxu0 0.0
        %3785 = vmatpush1.msra.mxu0 %v3762
        %3786 = vmatprep.subr.mxu0 0.0
        %3787 = vmatpush1.msra.mxu0 %v3763
        %3788 = vmatprep.subr.mxu0 0.0
        %3789 = vmatpush1.msra.mxu0 0.0
        %3790 = vmatprep.subr.mxu0 0.0
        %3791 = vmatpush1.msra.mxu0 0.0
        %3792 = vmatprep.subr.mxu0 0.0
        %3793 = vmatpush1.msra.mxu0 0.0
        %3794 = vmatprep.subr.mxu0 0.0
        %3795 = vmatpush1.msra.mxu0 0.0
        %3796 = vmatprep.subr.mxu0 0.0
        %3797 = vmatpush1.msra.mxu0 0.0
        %3798 = vmatprep.subr.mxu0 0.0
        %3799 = vmatpush1.msra.mxu0 0.0
        %3800 = vmatprep.subr.mxu0 0.0
        %3801 = vmatpush1.msra.mxu0 0.0
        %3802 = vmatprep.subr.mxu0 0.0
        %3803 = vmatpush1.msra.mxu0 0.0
        %3804 = vmatprep.subr.mxu0 0.0
        %3805 = vmatpush1.msra.mxu0 0.0
        %3806 = vmatprep.subr.mxu0 0.0
        %3807 = vmatpush1.msra.mxu0 0.0
        %3808 = vmatprep.subr.mxu0 0.0
        %3809 = vmatpush1.msra.mxu0 0.0
        %3810 = vmatprep.subr.mxu0 0.0
        %3811 = vmatpush1.msra.mxu0 0.0
        %3812 = vmatprep.subr.mxu0 0.0
        %3813 = vmatpush1.msra.mxu0 0.0
        %3814 = vmatprep.subr.mxu0 0.0
        %3815 = vmatpush1.msra.mxu0 0.0
        %3816 = vmatprep.subr.mxu0 0.0
        %3817 = vmatpush1.msra.mxu0 0.0
        %3818 = vmatprep.subr.mxu0 0.0
        %3819 = vmatpush1.msra.mxu0 0.0
        %3820 = vmatprep.subr.mxu0 0.0
        %3821 = vmatpush1.msra.mxu0 0.0
        %3822 = vmatprep.subr.mxu0 0.0
        %3823 = vmatpush1.msra.mxu0 0.0
        %3824 = vmatprep.subr.mxu0 0.0
        %3825 = vmatpush1.msra.mxu0 0.0
        %3826 = vmatprep.subr.mxu0 0.0
        %3827 = vmatpush1.msra.mxu0 0.0
        %3828 = vmatprep.subr.mxu0 0.0
        %3829 = vmatpush1.msra.mxu0 0.0
        %3830 = vmatprep.subr.mxu0 0.0
        %3831 = vmatpush1.msra.mxu0 0.0
        %3832 = vmatprep.subr.mxu0 0.0
        %3833 = vmatpush1.msra.mxu0 0.0
        %3834 = vmatprep.subr.mxu0 0.0
        %3835 = vmatpush1.msra.mxu0 0.0
        %3836 = vmatprep.mubr.f32.mxu0 0.0
        %3837 = vmatmul.mubr.f32.gmra.mrb[0].mxu0 %v3770
        %v3838 = vpop.f32.mrb[0].mxu0
        %v3839 = vadd.f32 %v3768, %v3838
        %v3840 = vpop.f32.mrb[0].mxu0
        %3841 = vdwg.mxu0
        %v3842 = vadd.f32 %v3839, %v2531
        %v3843 = vadd.f32 %v2531, %v3842
        %v3844 = vadd.f32 %v3843, %v3188
        %v3845 = vld [vmem:[#allocation8 + $0x760] sm:$0xff]
        %v3846 = vld [vmem:[#allocation8 + $0x768] sm:$0xff]
        %v3847 = vld [vmem:[#allocation8 + $0x770] sm:$0xff]
        %v3848 = vld [vmem:[#allocation8 + $0x778] sm:$0xff]
        %v3849 = vld [vmem:[#allocation8 + $0x780] sm:$0xff]
        %v3850 = vld [vmem:[#allocation8 + $0x788] sm:$0xff]
        %v3851 = vld [vmem:[#allocation8 + $0x790] sm:$0xff]
        %v3852 = vld [vmem:[#allocation8 + $0x798] sm:$0xff]
        %v3853 = vld [vmem:[#allocation8 + $0x7a0] sm:$0x1]
        %v3854 = vlaneseq
        %v3855 = vshrl.u32 %v3854, 7
        %v3856 = vsub.s32 0, %v3855
        %v3857 = vrot.slane %v3853, %v3856
        %v3859 = vsel %vm584, %v3844, 0
        %3861 = vmatprep.subr.mxu0 0.0
        %3862 = vmatpush1.msra.mxu0 %v3845
        %3863 = vmatprep.subr.mxu0 0.0
        %3864 = vmatpush1.msra.mxu0 %v3846
        %3865 = vmatprep.subr.mxu0 0.0
        %3866 = vmatpush1.msra.mxu0 %v3847
        %3867 = vmatprep.subr.mxu0 0.0
        %3868 = vmatpush1.msra.mxu0 %v3848
        %3869 = vmatprep.subr.mxu0 0.0
        %3870 = vmatpush1.msra.mxu0 %v3849
        %3871 = vmatprep.subr.mxu0 0.0
        %3872 = vmatpush1.msra.mxu0 %v3850
        %3873 = vmatprep.subr.mxu0 0.0
        %3874 = vmatpush1.msra.mxu0 %v3851
        %3875 = vmatprep.subr.mxu0 0.0
        %3876 = vmatpush1.msra.mxu0 %v3852
        %3877 = vmatprep.subr.mxu0 0.0
        %3878 = vmatpush1.msra.mxu0 0.0
        %3879 = vmatprep.subr.mxu0 0.0
        %3880 = vmatpush1.msra.mxu0 0.0
        %3881 = vmatprep.subr.mxu0 0.0
        %3882 = vmatpush1.msra.mxu0 0.0
        %3883 = vmatprep.subr.mxu0 0.0
        %3884 = vmatpush1.msra.mxu0 0.0
        %3885 = vmatprep.subr.mxu0 0.0
        %3886 = vmatpush1.msra.mxu0 0.0
        %3887 = vmatprep.subr.mxu0 0.0
        %3888 = vmatpush1.msra.mxu0 0.0
        %3889 = vmatprep.subr.mxu0 0.0
        %3890 = vmatpush1.msra.mxu0 0.0
        %3891 = vmatprep.subr.mxu0 0.0
        %3892 = vmatpush1.msra.mxu0 0.0
        %3893 = vmatprep.subr.mxu0 0.0
        %3894 = vmatpush1.msra.mxu0 0.0
        %3895 = vmatprep.subr.mxu0 0.0
        %3896 = vmatpush1.msra.mxu0 0.0
        %3897 = vmatprep.subr.mxu0 0.0
        %3898 = vmatpush1.msra.mxu0 0.0
        %3899 = vmatprep.subr.mxu0 0.0
        %3900 = vmatpush1.msra.mxu0 0.0
        %3901 = vmatprep.subr.mxu0 0.0
        %3902 = vmatpush1.msra.mxu0 0.0
        %3903 = vmatprep.subr.mxu0 0.0
        %3904 = vmatpush1.msra.mxu0 0.0
        %3905 = vmatprep.subr.mxu0 0.0
        %3906 = vmatpush1.msra.mxu0 0.0
        %3907 = vmatprep.subr.mxu0 0.0
        %3908 = vmatpush1.msra.mxu0 0.0
        %3909 = vmatprep.subr.mxu0 0.0
        %3910 = vmatpush1.msra.mxu0 0.0
        %3911 = vmatprep.subr.mxu0 0.0
        %3912 = vmatpush1.msra.mxu0 0.0
        %3913 = vmatprep.subr.mxu0 0.0
        %3914 = vmatpush1.msra.mxu0 0.0
        %3915 = vmatprep.subr.mxu0 0.0
        %3916 = vmatpush1.msra.mxu0 0.0
        %3917 = vmatprep.subr.mxu0 0.0
        %3918 = vmatpush1.msra.mxu0 0.0
        %3919 = vmatprep.subr.mxu0 0.0
        %3920 = vmatpush1.msra.mxu0 0.0
        %3921 = vmatprep.subr.mxu0 0.0
        %3922 = vmatpush1.msra.mxu0 0.0
        %3923 = vmatprep.subr.mxu0 0.0
        %3924 = vmatpush1.msra.mxu0 0.0
        %3925 = vmatprep.mubr.f32.mxu0 0.0
        %3926 = vmatmul.mubr.f32.gmra.mrb[0].mxu0 %v3859
        %v3927 = vpop.f32.mrb[0].mxu0
        %v3928 = vadd.f32 %v3857, %v3927
        %v3929 = vpop.f32.mrb[0].mxu0
        %3930 = vdwg.mxu0
        %v3931 = vmax.f32 %v3928, 0.0
        %v3932 = vld [vmem:[#allocation8 + $0x7a8] sm:$0xff]
        %v3933 = vld [vmem:[#allocation8 + $0x7b0] sm:$0xff]
        %v3934 = vld [vmem:[#allocation8 + $0x7b8] sm:$0xff]
        %v3935 = vld [vmem:[#allocation8 + $0x7c0] sm:$0xff]
        %v3936 = vld [vmem:[#allocation8 + $0x7c8] sm:$0xff]
        %v3937 = vld [vmem:[#allocation8 + $0x7d0] sm:$0xff]
        %v3938 = vld [vmem:[#allocation8 + $0x7d8] sm:$0xff]
        %v3939 = vld [vmem:[#allocation8 + $0x7e0] sm:$0xff]
        %v3940 = vld [vmem:[#allocation8 + $0x7e8] sm:$0xff]
        %v3941 = vld [vmem:[#allocation8 + $0x7f0] sm:$0xff]
        %v3942 = vld [vmem:[#allocation8 + $0x7f8] sm:$0xff]
        %v3943 = vld [vmem:[#allocation8 + $0x800] sm:$0xff]
        %v3944 = vld [vmem:[#allocation8 + $0x808] sm:$0xff]
        %v3945 = vld [vmem:[#allocation8 + $0x810] sm:$0xff]
        %v3946 = vld [vmem:[#allocation8 + $0x818] sm:$0xff]
        %v3947 = vld [vmem:[#allocation8 + $0x820] sm:$0xff]
        %v3948 = vld [vmem:[#allocation8 + $0x828] sm:$0x1]
        %v3949 = vlaneseq
        %v3950 = vshrl.u32 %v3949, 7
        %v3951 = vsub.s32 0, %v3950
        %v3952 = vrot.slane %v3948, %v3951
        %3953 = vmatprep.subr.mxu0 0.0
        %3954 = vmatpush1.msra.mxu0 %v3932
        %3955 = vmatprep.subr.mxu0 0.0
        %3956 = vmatpush1.msra.mxu0 %v3933
        %3957 = vmatprep.subr.mxu0 0.0
        %3958 = vmatpush1.msra.mxu0 %v3934
        %3959 = vmatprep.subr.mxu0 0.0
        %3960 = vmatpush1.msra.mxu0 %v3935
        %3961 = vmatprep.subr.mxu0 0.0
        %3962 = vmatpush1.msra.mxu0 %v3936
        %3963 = vmatprep.subr.mxu0 0.0
        %3964 = vmatpush1.msra.mxu0 %v3937
        %3965 = vmatprep.subr.mxu0 0.0
        %3966 = vmatpush1.msra.mxu0 %v3938
        %3967 = vmatprep.subr.mxu0 0.0
        %3968 = vmatpush1.msra.mxu0 %v3939
        %3969 = vmatprep.subr.mxu0 0.0
        %3970 = vmatpush1.msra.mxu0 %v3940
        %3971 = vmatprep.subr.mxu0 0.0
        %3972 = vmatpush1.msra.mxu0 %v3941
        %3973 = vmatprep.subr.mxu0 0.0
        %3974 = vmatpush1.msra.mxu0 %v3942
        %3975 = vmatprep.subr.mxu0 0.0
        %3976 = vmatpush1.msra.mxu0 %v3943
        %3977 = vmatprep.subr.mxu0 0.0
        %3978 = vmatpush1.msra.mxu0 %v3944
        %3979 = vmatprep.subr.mxu0 0.0
        %3980 = vmatpush1.msra.mxu0 %v3945
        %3981 = vmatprep.subr.mxu0 0.0
        %3982 = vmatpush1.msra.mxu0 %v3946
        %3983 = vmatprep.subr.mxu0 0.0
        %3984 = vmatpush1.msra.mxu0 %v3947
        %3985 = vmatprep.subr.mxu0 0.0
        %3986 = vmatpush1.msra.mxu0 0.0
        %3987 = vmatprep.subr.mxu0 0.0
        %3988 = vmatpush1.msra.mxu0 0.0
        %3989 = vmatprep.subr.mxu0 0.0
        %3990 = vmatpush1.msra.mxu0 0.0
        %3991 = vmatprep.subr.mxu0 0.0
        %3992 = vmatpush1.msra.mxu0 0.0
        %3993 = vmatprep.subr.mxu0 0.0
        %3994 = vmatpush1.msra.mxu0 0.0
        %3995 = vmatprep.subr.mxu0 0.0
        %3996 = vmatpush1.msra.mxu0 0.0
        %3997 = vmatprep.subr.mxu0 0.0
        %3998 = vmatpush1.msra.mxu0 0.0
        %3999 = vmatprep.subr.mxu0 0.0
        %4000 = vmatpush1.msra.mxu0 0.0
        %4001 = vmatprep.subr.mxu0 0.0
        %4002 = vmatpush1.msra.mxu0 0.0
        %4003 = vmatprep.subr.mxu0 0.0
        %4004 = vmatpush1.msra.mxu0 0.0
        %4005 = vmatprep.subr.mxu0 0.0
        %4006 = vmatpush1.msra.mxu0 0.0
        %4007 = vmatprep.subr.mxu0 0.0
        %4008 = vmatpush1.msra.mxu0 0.0
        %4009 = vmatprep.subr.mxu0 0.0
        %4010 = vmatpush1.msra.mxu0 0.0
        %4011 = vmatprep.subr.mxu0 0.0
        %4012 = vmatpush1.msra.mxu0 0.0
        %4013 = vmatprep.subr.mxu0 0.0
        %4014 = vmatpush1.msra.mxu0 0.0
        %4015 = vmatprep.subr.mxu0 0.0
        %4016 = vmatpush1.msra.mxu0 0.0
        %4017 = vmatprep.mubr.f32.mxu0 0.0
        %4018 = vmatmul.mubr.f32.gmra.mrb[0].mxu0 %v3931
        %v4019 = vpop.f32.mrb[0].mxu0
        %v4020 = vadd.f32 %v3952, %v4019
        %v4021 = vpop.f32.mrb[0].mxu0
        %4022 = vdwg.mxu0
        %v4023 = vadd.f32 %v4020, %v3844
        %v4024 = vld [vmem:[#allocation8 + $0x830] sm:$0x1]
        %v4025 = vld [vmem:[#allocation8 + $0x838] sm:$0x1]
        %v4026 = vsel %vm584, %v4023, 0.0
        %4027 = vadd.xlane.f32.xlu0 %v4026
        %v4028 = vpop.xlane.xlu0 %4027
        %v4029 = vmul.f32 %v4028, %v591
        %v4030 = vsub.f32 %v4023, %v4029
        %v4031 = vmul.f32 %v4030, %v4030
        %v4032 = vsel %vm584, %v4031, 0.0
        %4033 = vadd.xlane.f32.xlu0 %v4032
        %v4034 = vpop.xlane.xlu0 %4033
        %v4035 = vmul.f32 %v4034, %v591
        %v4036 = vadd.f32 %v4035, 1e-05
        %v4037 = vrsqrt.pop %v4036
        %v4038 = vmul.f32 %v4030, %v4037
        %v4039 = vlaneseq
        %v4040 = vshrl.u32 %v4039, 7
        %v4041 = vsub.s32 0, %v4040
        %v4042 = vrot.slane %v4024, %v4041
        %v4043 = vmul.f32 %v4038, %v4042
        %v4044 = vlaneseq
        %v4045 = vshrl.u32 %v4044, 7
        %v4046 = vsub.s32 0, %v4045
        %v4047 = vrot.slane %v4025, %v4046
        %v4048 = vadd.f32 %v4043, %v4047
        %v4049 = vld [vmem:[#allocation8 + $0x398] sm:$0x1]
        %v4050 = vld [vmem:[#allocation8 + $0x3a0] sm:$0x1]
        %v4051 = vsel %vm584, %v4048, 0.0
        %4052 = vadd.xlane.f32.xlu0 %v4051
        %v4053 = vpop.xlane.xlu0 %4052
        %v4054 = vmul.f32 %v4053, %v591
        %v4055 = vsub.f32 %v4048, %v4054
        %v4056 = vmul.f32 %v4055, %v4055
        %v4057 = vsel %vm584, %v4056, 0.0
        %4058 = vadd.xlane.f32.xlu0 %v4057
        %v4059 = vpop.xlane.xlu0 %4058
        %v4060 = vmul.f32 %v4059, %v591
        %v4061 = vadd.f32 %v4060, 1e-05
        %v4062 = vrsqrt.pop %v4061
        %v4063 = vmul.f32 %v4055, %v4062
        %v4064 = vlaneseq
        %v4065 = vshrl.u32 %v4064, 7
        %v4066 = vsub.s32 0, %v4065
        %v4067 = vrot.slane %v4049, %v4066
        %v4068 = vmul.f32 %v4063, %v4067
        %v4069 = vlaneseq
        %v4070 = vshrl.u32 %v4069, 7
        %v4071 = vsub.s32 0, %v4070
        %v4072 = vrot.slane %v4050, %v4071
        %v4073 = vadd.f32 %v4068, %v4072
        %v4074 = vld [vmem:[#allocation8 + $0x3a8] sm:$0xff]
        %v4075 = vld [vmem:[#allocation8 + $0x3b0] sm:$0xff]
        %v4076 = vld [vmem:[#allocation8 + $0x3b8] sm:$0xff]
        %v4077 = vld [vmem:[#allocation8 + $0x3c0] sm:$0xff]
        %v4078 = vld [vmem:[#allocation8 + $0x3c8] sm:$0xff]
        %v4079 = vld [vmem:[#allocation8 + $0x3d0] sm:$0xff]
        %v4080 = vld [vmem:[#allocation8 + $0x3d8] sm:$0xff]
        %v4081 = vld [vmem:[#allocation8 + $0x3e0] sm:$0xff]
        %v4082 = vld [vmem:[#allocation8 + $0x3e8] sm:$0x1]
        %v4083 = vlaneseq
        %v4084 = vshrl.u32 %v4083, 7
        %v4085 = vsub.s32 0, %v4084
        %v4086 = vrot.slane %v4082, %v4085
        %v4088 = vsel %vm584, %v4073, 0
        %4090 = vmatprep.subr.mxu0 0.0
        %4091 = vmatpush1.msra.mxu0 %v4074
        %4092 = vmatprep.subr.mxu0 0.0
        %4093 = vmatpush1.msra.mxu0 %v4075
        %4094 = vmatprep.subr.mxu0 0.0
        %4095 = vmatpush1.msra.mxu0 %v4076
        %4096 = vmatprep.subr.mxu0 0.0
        %4097 = vmatpush1.msra.mxu0 %v4077
        %4098 = vmatprep.subr.mxu0 0.0
        %4099 = vmatpush1.msra.mxu0 %v4078
        %4100 = vmatprep.subr.mxu0 0.0
        %4101 = vmatpush1.msra.mxu0 %v4079
        %4102 = vmatprep.subr.mxu0 0.0
        %4103 = vmatpush1.msra.mxu0 %v4080
        %4104 = vmatprep.subr.mxu0 0.0
        %4105 = vmatpush1.msra.mxu0 %v4081
        %4106 = vmatprep.subr.mxu0 0.0
        %4107 = vmatpush1.msra.mxu0 0.0
        %4108 = vmatprep.subr.mxu0 0.0
        %4109 = vmatpush1.msra.mxu0 0.0
        %4110 = vmatprep.subr.mxu0 0.0
        %4111 = vmatpush1.msra.mxu0 0.0
        %4112 = vmatprep.subr.mxu0 0.0
        %4113 = vmatpush1.msra.mxu0 0.0
        %4114 = vmatprep.subr.mxu0 0.0
        %4115 = vmatpush1.msra.mxu0 0.0
        %4116 = vmatprep.subr.mxu0 0.0
        %4117 = vmatpush1.msra.mxu0 0.0
        %4118 = vmatprep.subr.mxu0 0.0
        %4119 = vmatpush1.msra.mxu0 0.0
        %4120 = vmatprep.subr.mxu0 0.0
        %4121 = vmatpush1.msra.mxu0 0.0
        %4122 = vmatprep.subr.mxu0 0.0
        %4123 = vmatpush1.msra.mxu0 0.0
        %4124 = vmatprep.subr.mxu0 0.0
        %4125 = vmatpush1.msra.mxu0 0.0
        %4126 = vmatprep.subr.mxu0 0.0
        %4127 = vmatpush1.msra.mxu0 0.0
        %4128 = vmatprep.subr.mxu0 0.0
        %4129 = vmatpush1.msra.mxu0 0.0
        %4130 = vmatprep.subr.mxu0 0.0
        %4131 = vmatpush1.msra.mxu0 0.0
        %4132 = vmatprep.subr.mxu0 0.0
        %4133 = vmatpush1.msra.mxu0 0.0
        %4134 = vmatprep.subr.mxu0 0.0
        %4135 = vmatpush1.msra.mxu0 0.0
        %4136 = vmatprep.subr.mxu0 0.0
        %4137 = vmatpush1.msra.mxu0 0.0
        %4138 = vmatprep.subr.mxu0 0.0
        %4139 = vmatpush1.msra.mxu0 0.0
        %4140 = vmatprep.subr.mxu0 0.0
        %4141 = vmatpush1.msra.mxu0 0.0
        %4142 = vmatprep.subr.mxu0 0.0
        %4143 = vmatpush1.msra.mxu0 0.0
        %4144 = vmatprep.subr.mxu0 0.0
        %4145 = vmatpush1.msra.mxu0 0.0
        %4146 = vmatprep.subr.mxu0 0.0
        %4147 = vmatpush1.msra.mxu0 0.0
        %4148 = vmatprep.subr.mxu0 0.0
        %4149 = vmatpush1.msra.mxu0 0.0
        %4150 = vmatprep.subr.mxu0 0.0
        %4151 = vmatpush1.msra.mxu0 0.0
        %4152 = vmatprep.subr.mxu0 0.0
        %4153 = vmatpush1.msra.mxu0 0.0
        %4154 = vmatprep.mubr.f32.mxu0 0.0
        %4155 = vmatmul.mubr.f32.gmra.mrb[0].mxu0 %v4088
        %v4156 = vpop.f32.mrb[0].mxu0
        %v4157 = vadd.f32 %v4086, %v4156
        %v4158 = vpop.f32.mrb[0].mxu0
        %4159 = vdwg.mxu0
        %v4160 = vmax.f32 %v4157, 0.0
        %v4161 = vld [vmem:[#allocation8 + $0x3f0] sm:$0xff]
        %v4162 = vld [vmem:[#allocation8 + $0x3f8] sm:$0xff]
        %v4163 = vld [vmem:[#allocation8 + $0x400] sm:$0xff]
        %v4164 = vld [vmem:[#allocation8 + $0x408] sm:$0xff]
        %v4165 = vld [vmem:[#allocation8 + $0x410] sm:$0xff]
        %v4166 = vld [vmem:[#allocation8 + $0x418] sm:$0xff]
        %v4167 = vld [vmem:[#allocation8 + $0x420] sm:$0xff]
        %v4168 = vld [vmem:[#allocation8 + $0x428] sm:$0xff]
        %v4169 = vld [vmem:[#allocation8 + $0x430] sm:$0x1]
        %v4170 = vlaneseq
        %v4171 = vshrl.u32 %v4170, 7
        %v4172 = vsub.s32 0, %v4171
        %v4173 = vrot.slane %v4169, %v4172
        %v4175 = vsel %vm584, %v4160, 0
        %4177 = vmatprep.subr.mxu0 0.0
        %4178 = vmatpush1.msra.mxu0 %v4161
        %4179 = vmatprep.subr.mxu0 0.0
        %4180 = vmatpush1.msra.mxu0 %v4162
        %4181 = vmatprep.subr.mxu0 0.0
        %4182 = vmatpush1.msra.mxu0 %v4163
        %4183 = vmatprep.subr.mxu0 0.0
        %4184 = vmatpush1.msra.mxu0 %v4164
        %4185 = vmatprep.subr.mxu0 0.0
        %4186 = vmatpush1.msra.mxu0 %v4165
        %4187 = vmatprep.subr.mxu0 0.0
        %4188 = vmatpush1.msra.mxu0 %v4166
        %4189 = vmatprep.subr.mxu0 0.0
        %4190 = vmatpush1.msra.mxu0 %v4167
        %4191 = vmatprep.subr.mxu0 0.0
        %4192 = vmatpush1.msra.mxu0 %v4168
        %4193 = vmatprep.subr.mxu0 0.0
        %4194 = vmatpush1.msra.mxu0 0.0
        %4195 = vmatprep.subr.mxu0 0.0
        %4196 = vmatpush1.msra.mxu0 0.0
        %4197 = vmatprep.subr.mxu0 0.0
        %4198 = vmatpush1.msra.mxu0 0.0
        %4199 = vmatprep.subr.mxu0 0.0
        %4200 = vmatpush1.msra.mxu0 0.0
        %4201 = vmatprep.subr.mxu0 0.0
        %4202 = vmatpush1.msra.mxu0 0.0
        %4203 = vmatprep.subr.mxu0 0.0
        %4204 = vmatpush1.msra.mxu0 0.0
        %4205 = vmatprep.subr.mxu0 0.0
        %4206 = vmatpush1.msra.mxu0 0.0
        %4207 = vmatprep.subr.mxu0 0.0
        %4208 = vmatpush1.msra.mxu0 0.0
        %4209 = vmatprep.subr.mxu0 0.0
        %4210 = vmatpush1.msra.mxu0 0.0
        %4211 = vmatprep.subr.mxu0 0.0
        %4212 = vmatpush1.msra.mxu0 0.0
        %4213 = vmatprep.subr.mxu0 0.0
        %4214 = vmatpush1.msra.mxu0 0.0
        %4215 = vmatprep.subr.mxu0 0.0
        %4216 = vmatpush1.msra.mxu0 0.0
        %4217 = vmatprep.subr.mxu0 0.0
        %4218 = vmatpush1.msra.mxu0 0.0
        %4219 = vmatprep.subr.mxu0 0.0
        %4220 = vmatpush1.msra.mxu0 0.0
        %4221 = vmatprep.subr.mxu0 0.0
        %4222 = vmatpush1.msra.mxu0 0.0
        %4223 = vmatprep.subr.mxu0 0.0
        %4224 = vmatpush1.msra.mxu0 0.0
        %4225 = vmatprep.subr.mxu0 0.0
        %4226 = vmatpush1.msra.mxu0 0.0
        %4227 = vmatprep.subr.mxu0 0.0
        %4228 = vmatpush1.msra.mxu0 0.0
        %4229 = vmatprep.subr.mxu0 0.0
        %4230 = vmatpush1.msra.mxu0 0.0
        %4231 = vmatprep.subr.mxu0 0.0
        %4232 = vmatpush1.msra.mxu0 0.0
        %4233 = vmatprep.subr.mxu0 0.0
        %4234 = vmatpush1.msra.mxu0 0.0
        %4235 = vmatprep.subr.mxu0 0.0
        %4236 = vmatpush1.msra.mxu0 0.0
        %4237 = vmatprep.subr.mxu0 0.0
        %4238 = vmatpush1.msra.mxu0 0.0
        %4239 = vmatprep.subr.mxu0 0.0
        %4240 = vmatpush1.msra.mxu0 0.0
        %4241 = vmatprep.mubr.f32.mxu0 0.0
        %4242 = vmatmul.mubr.f32.gmra.mrb[0].mxu0 %v4175
        %v4243 = vpop.f32.mrb[0].mxu0
        %v4244 = vadd.f32 %v4173, %v4243
        %v4245 = vpop.f32.mrb[0].mxu0
        %4246 = vdwg.mxu0
        %4247 = vmatprep.subr.mxu0 0.0
        %4248 = vmatpush1.xpose.msra.mxu0 %v1619
        %4249 = vmatprep.subr.mxu0 0.0
        %4250 = vmatpush1.xpose.msra.mxu0 %v1622
        %4251 = vmatprep.subr.mxu0 0.0
        %4252 = vmatpush1.xpose.msra.mxu0 0.0
        %4253 = vmatprep.subr.mxu0 0.0
        %4254 = vmatpush1.xpose.msra.mxu0 0.0
        %4255 = vmatprep.subr.mxu0 0.0
        %4256 = vmatpush1.xpose.msra.mxu0 0.0
        %4257 = vmatprep.subr.mxu0 0.0
        %4258 = vmatpush1.xpose.msra.mxu0 0.0
        %4259 = vmatprep.subr.mxu0 0.0
        %4260 = vmatpush1.xpose.msra.mxu0 0.0
        %4261 = vmatprep.subr.mxu0 0.0
        %4262 = vmatpush1.xpose.msra.mxu0 0.0
        %4263 = vmatprep.subr.mxu0 0.0
        %4264 = vmatpush1.xpose.msra.mxu0 0.0
        %4265 = vmatprep.subr.mxu0 0.0
        %4266 = vmatpush1.xpose.msra.mxu0 0.0
        %4267 = vmatprep.subr.mxu0 0.0
        %4268 = vmatpush1.xpose.msra.mxu0 0.0
        %4269 = vmatprep.subr.mxu0 0.0
        %4270 = vmatpush1.xpose.msra.mxu0 0.0
        %4271 = vmatprep.subr.mxu0 0.0
        %4272 = vmatpush1.xpose.msra.mxu0 0.0
        %4273 = vmatprep.subr.mxu0 0.0
        %4274 = vmatpush1.xpose.msra.mxu0 0.0
        %4275 = vmatprep.subr.mxu0 0.0
        %4276 = vmatpush1.xpose.msra.mxu0 0.0
        %4277 = vmatprep.subr.mxu0 0.0
        %4278 = vmatpush1.xpose.msra.mxu0 0.0
        %4279 = vmatprep.subr.mxu0 0.0
        %4280 = vmatpush1.xpose.msra.mxu0 0.0
        %4281 = vmatprep.subr.mxu0 0.0
        %4282 = vmatpush1.xpose.msra.mxu0 0.0
        %4283 = vmatprep.subr.mxu0 0.0
        %4284 = vmatpush1.xpose.msra.mxu0 0.0
        %4285 = vmatprep.subr.mxu0 0.0
        %4286 = vmatpush1.xpose.msra.mxu0 0.0
        %4287 = vmatprep.subr.mxu0 0.0
        %4288 = vmatpush1.xpose.msra.mxu0 0.0
        %4289 = vmatprep.subr.mxu0 0.0
        %4290 = vmatpush1.xpose.msra.mxu0 0.0
        %4291 = vmatprep.subr.mxu0 0.0
        %4292 = vmatpush1.xpose.msra.mxu0 0.0
        %4293 = vmatprep.subr.mxu0 0.0
        %4294 = vmatpush1.xpose.msra.mxu0 0.0
        %4295 = vmatprep.subr.mxu0 0.0
        %4296 = vmatpush1.xpose.msra.mxu0 0.0
        %4297 = vmatprep.subr.mxu0 0.0
        %4298 = vmatpush1.xpose.msra.mxu0 0.0
        %4299 = vmatprep.subr.mxu0 0.0
        %4300 = vmatpush1.xpose.msra.mxu0 0.0
        %4301 = vmatprep.subr.mxu0 0.0
        %4302 = vmatpush1.xpose.msra.mxu0 0.0
        %4303 = vmatprep.subr.mxu0 0.0
        %4304 = vmatpush1.xpose.msra.mxu0 0.0
        %4305 = vmatprep.subr.mxu0 0.0
        %4306 = vmatpush1.xpose.msra.mxu0 0.0
        %4307 = vmatprep.subr.mxu0 0.0
        %4308 = vmatpush1.xpose.msra.mxu0 0.0
        %4309 = vmatprep.subr.mxu0 0.0
        %4310 = vmatpush1.xpose.msra.mxu0 0.0
        %4311 = vmatprep.mubr.f32.mxu0 0.0
        %4312 = vmatmul.mubr.f32.gmra.mrb[0].mxu0 %v4088
        %v4313 = vpop.f32.mrb[0].mxu0
        %v4314 = vadd.f32 0.0, %v4313
        %v4315 = vpop.f32.mrb[0].mxu0
        %4316 = vdwg.mxu0
        %v4317 = vld [vmem:[#allocation8 + $0x438] sm:$0xff]
        %v4318 = vld [vmem:[#allocation8 + $0x440] sm:$0xff]
        %v4319 = vld [vmem:[#allocation8 + $0x448] sm:$0xff]
        %v4320 = vld [vmem:[#allocation8 + $0x450] sm:$0xff]
        %v4321 = vld [vmem:[#allocation8 + $0x458] sm:$0xff]
        %v4322 = vld [vmem:[#allocation8 + $0x460] sm:$0xff]
        %v4323 = vld [vmem:[#allocation8 + $0x468] sm:$0xff]
        %v4324 = vld [vmem:[#allocation8 + $0x470] sm:$0xff]
        %v4325 = vld [vmem:[#allocation8 + $0x478] sm:$0x1]
        %v4326 = vlaneseq
        %v4327 = vshrl.u32 %v4326, 7
        %v4328 = vsub.s32 0, %v4327
        %v4329 = vrot.slane %v4325, %v4328
        %v4331 = vsel %vm584, %v4048, 0
        %4333 = vmatprep.subr.mxu0 0.0
        %4334 = vmatpush1.msra.mxu0 %v4317
        %4335 = vmatprep.subr.mxu0 0.0
        %4336 = vmatpush1.msra.mxu0 %v4318
        %4337 = vmatprep.subr.mxu0 0.0
        %4338 = vmatpush1.msra.mxu0 %v4319
        %4339 = vmatprep.subr.mxu0 0.0
        %4340 = vmatpush1.msra.mxu0 %v4320
        %4341 = vmatprep.subr.mxu0 0.0
        %4342 = vmatpush1.msra.mxu0 %v4321
        %4343 = vmatprep.subr.mxu0 0.0
        %4344 = vmatpush1.msra.mxu0 %v4322
        %4345 = vmatprep.subr.mxu0 0.0
        %4346 = vmatpush1.msra.mxu0 %v4323
        %4347 = vmatprep.subr.mxu0 0.0
        %4348 = vmatpush1.msra.mxu0 %v4324
        %4349 = vmatprep.subr.mxu0 0.0
        %4350 = vmatpush1.msra.mxu0 0.0
        %4351 = vmatprep.subr.mxu0 0.0
        %4352 = vmatpush1.msra.mxu0 0.0
        %4353 = vmatprep.subr.mxu0 0.0
        %4354 = vmatpush1.msra.mxu0 0.0
        %4355 = vmatprep.subr.mxu0 0.0
        %4356 = vmatpush1.msra.mxu0 0.0
        %4357 = vmatprep.subr.mxu0 0.0
        %4358 = vmatpush1.msra.mxu0 0.0
        %4359 = vmatprep.subr.mxu0 0.0
        %4360 = vmatpush1.msra.mxu0 0.0
        %4361 = vmatprep.subr.mxu0 0.0
        %4362 = vmatpush1.msra.mxu0 0.0
        %4363 = vmatprep.subr.mxu0 0.0
        %4364 = vmatpush1.msra.mxu0 0.0
        %4365 = vmatprep.subr.mxu0 0.0
        %4366 = vmatpush1.msra.mxu0 0.0
        %4367 = vmatprep.subr.mxu0 0.0
        %4368 = vmatpush1.msra.mxu0 0.0
        %4369 = vmatprep.subr.mxu0 0.0
        %4370 = vmatpush1.msra.mxu0 0.0
        %4371 = vmatprep.subr.mxu0 0.0
        %4372 = vmatpush1.msra.mxu0 0.0
        %4373 = vmatprep.subr.mxu0 0.0
        %4374 = vmatpush1.msra.mxu0 0.0
        %4375 = vmatprep.subr.mxu0 0.0
        %4376 = vmatpush1.msra.mxu0 0.0
        %4377 = vmatprep.subr.mxu0 0.0
        %4378 = vmatpush1.msra.mxu0 0.0
        %4379 = vmatprep.subr.mxu0 0.0
        %4380 = vmatpush1.msra.mxu0 0.0
        %4381 = vmatprep.subr.mxu0 0.0
        %4382 = vmatpush1.msra.mxu0 0.0
        %4383 = vmatprep.subr.mxu0 0.0
        %4384 = vmatpush1.msra.mxu0 0.0
        %4385 = vmatprep.subr.mxu0 0.0
        %4386 = vmatpush1.msra.mxu0 0.0
        %4387 = vmatprep.subr.mxu0 0.0
        %4388 = vmatpush1.msra.mxu0 0.0
        %4389 = vmatprep.subr.mxu0 0.0
        %4390 = vmatpush1.msra.mxu0 0.0
        %4391 = vmatprep.subr.mxu0 0.0
        %4392 = vmatpush1.msra.mxu0 0.0
        %4393 = vmatprep.subr.mxu0 0.0
        %4394 = vmatpush1.msra.mxu0 0.0
        %4395 = vmatprep.subr.mxu0 0.0
        %4396 = vmatpush1.msra.mxu0 0.0
        %4397 = vmatprep.mubr.f32.mxu0 0.0
        %4398 = vmatmul.mubr.f32.gmra.mrb[0].mxu0 %v4331
        %v4399 = vpop.f32.mrb[0].mxu0
        %v4400 = vadd.f32 %v4329, %v4399
        %v4401 = vpop.f32.mrb[0].mxu0
        %4402 = vdwg.mxu0
        %v4403 = vmax.f32 %v4400, 0.0
        %v4404 = vld [vmem:[#allocation8 + $0x480] sm:$0xff]
        %v4405 = vld [vmem:[#allocation8 + $0x488] sm:$0xff]
        %v4406 = vld [vmem:[#allocation8 + $0x490] sm:$0xff]
        %v4407 = vld [vmem:[#allocation8 + $0x498] sm:$0xff]
        %v4408 = vld [vmem:[#allocation8 + $0x4a0] sm:$0xff]
        %v4409 = vld [vmem:[#allocation8 + $0x4a8] sm:$0xff]
        %v4410 = vld [vmem:[#allocation8 + $0x4b0] sm:$0xff]
        %v4411 = vld [vmem:[#allocation8 + $0x4b8] sm:$0xff]
        %v4412 = vld [vmem:[#allocation8 + $0x4c0] sm:$0x1]
        %v4413 = vlaneseq
        %v4414 = vshrl.u32 %v4413, 7
        %v4415 = vsub.s32 0, %v4414
        %v4416 = vrot.slane %v4412, %v4415
        %v4418 = vsel %vm584, %v4403, 0
        %4420 = vmatprep.subr.mxu0 0.0
        %4421 = vmatpush1.msra.mxu0 %v4404
        %4422 = vmatprep.subr.mxu0 0.0
        %4423 = vmatpush1.msra.mxu0 %v4405
        %4424 = vmatprep.subr.mxu0 0.0
        %4425 = vmatpush1.msra.mxu0 %v4406
        %4426 = vmatprep.subr.mxu0 0.0
        %4427 = vmatpush1.msra.mxu0 %v4407
        %4428 = vmatprep.subr.mxu0 0.0
        %4429 = vmatpush1.msra.mxu0 %v4408
        %4430 = vmatprep.subr.mxu0 0.0
        %4431 = vmatpush1.msra.mxu0 %v4409
        %4432 = vmatprep.subr.mxu0 0.0
        %4433 = vmatpush1.msra.mxu0 %v4410
        %4434 = vmatprep.subr.mxu0 0.0
        %4435 = vmatpush1.msra.mxu0 %v4411
        %4436 = vmatprep.subr.mxu0 0.0
        %4437 = vmatpush1.msra.mxu0 0.0
        %4438 = vmatprep.subr.mxu0 0.0
        %4439 = vmatpush1.msra.mxu0 0.0
        %4440 = vmatprep.subr.mxu0 0.0
        %4441 = vmatpush1.msra.mxu0 0.0
        %4442 = vmatprep.subr.mxu0 0.0
        %4443 = vmatpush1.msra.mxu0 0.0
        %4444 = vmatprep.subr.mxu0 0.0
        %4445 = vmatpush1.msra.mxu0 0.0
        %4446 = vmatprep.subr.mxu0 0.0
        %4447 = vmatpush1.msra.mxu0 0.0
        %4448 = vmatprep.subr.mxu0 0.0
        %4449 = vmatpush1.msra.mxu0 0.0
        %4450 = vmatprep.subr.mxu0 0.0
        %4451 = vmatpush1.msra.mxu0 0.0
        %4452 = vmatprep.subr.mxu0 0.0
        %4453 = vmatpush1.msra.mxu0 0.0
        %4454 = vmatprep.subr.mxu0 0.0
        %4455 = vmatpush1.msra.mxu0 0.0
        %4456 = vmatprep.subr.mxu0 0.0
        %4457 = vmatpush1.msra.mxu0 0.0
        %4458 = vmatprep.subr.mxu0 0.0
        %4459 = vmatpush1.msra.mxu0 0.0
        %4460 = vmatprep.subr.mxu0 0.0
        %4461 = vmatpush1.msra.mxu0 0.0
        %4462 = vmatprep.subr.mxu0 0.0
        %4463 = vmatpush1.msra.mxu0 0.0
        %4464 = vmatprep.subr.mxu0 0.0
        %4465 = vmatpush1.msra.mxu0 0.0
        %4466 = vmatprep.subr.mxu0 0.0
        %4467 = vmatpush1.msra.mxu0 0.0
        %4468 = vmatprep.subr.mxu0 0.0
        %4469 = vmatpush1.msra.mxu0 0.0
        %4470 = vmatprep.subr.mxu0 0.0
        %4471 = vmatpush1.msra.mxu0 0.0
        %4472 = vmatprep.subr.mxu0 0.0
        %4473 = vmatpush1.msra.mxu0 0.0
        %4474 = vmatprep.subr.mxu0 0.0
        %4475 = vmatpush1.msra.mxu0 0.0
        %4476 = vmatprep.subr.mxu0 0.0
        %4477 = vmatpush1.msra.mxu0 0.0
        %4478 = vmatprep.subr.mxu0 0.0
        %4479 = vmatpush1.msra.mxu0 0.0
        %4480 = vmatprep.subr.mxu0 0.0
        %4481 = vmatpush1.msra.mxu0 0.0
        %4482 = vmatprep.subr.mxu0 0.0
        %4483 = vmatpush1.msra.mxu0 0.0
        %4484 = vmatprep.mubr.f32.mxu0 0.0
        %4485 = vmatmul.mubr.f32.gmra.mrb[0].mxu0 %v4418
        %v4486 = vpop.f32.mrb[0].mxu0
        %v4487 = vadd.f32 %v4416, %v4486
        %v4488 = vpop.f32.mrb[0].mxu0
        %4489 = vdwg.mxu0
        %4491 = vrot.lane.b32.xlu0 %v4244, 16
        %v4492 = vpop.permute.xlu0 %4491
        %4495 = vrot.lane.b32.xlu0 %v4487, 17
        %v4496 = vpop.permute.xlu0 %4495
        %v4498 = vsel %vm1086, %v4314, %v4492
        %v4499 = vsel %vm1876, %v4498, %v4496
        %v4500 = vsel %vm1878, %v4499, 0.0
        %s4501 = scalar_lea.vmem %s419, 8 [#allocation10]
        %4502 = vst [vmem:[%s4501] sm:$0xff] %v4500
        %v4503 = vld [vmem:[#allocation8 + $0x840] sm:$0xff]
        %v4504 = vld [vmem:[#allocation8 + $0x848] sm:$0xff]
        %v4505 = vld [vmem:[#allocation8 + $0x850] sm:$0xff]
        %v4506 = vld [vmem:[#allocation8 + $0x858] sm:$0xff]
        %v4507 = vld [vmem:[#allocation8 + $0x860] sm:$0xff]
        %v4508 = vld [vmem:[#allocation8 + $0x868] sm:$0xff]
        %v4509 = vld [vmem:[#allocation8 + $0x870] sm:$0xff]
        %v4510 = vld [vmem:[#allocation8 + $0x878] sm:$0xff]
        %v4511 = vld [vmem:[#allocation8 + $0x880] sm:$0x1]
        %v4512 = vlaneseq
        %v4513 = vshrl.u32 %v4512, 7
        %v4514 = vsub.s32 0, %v4513
        %v4515 = vrot.slane %v4511, %v4514
        %4516 = vmatprep.subr.mxu0 0.0
        %4517 = vmatpush1.msra.mxu0 %v4503
        %4518 = vmatprep.subr.mxu0 0.0
        %4519 = vmatpush1.msra.mxu0 %v4504
        %4520 = vmatprep.subr.mxu0 0.0
        %4521 = vmatpush1.msra.mxu0 %v4505
        %4522 = vmatprep.subr.mxu0 0.0
        %4523 = vmatpush1.msra.mxu0 %v4506
        %4524 = vmatprep.subr.mxu0 0.0
        %4525 = vmatpush1.msra.mxu0 %v4507
        %4526 = vmatprep.subr.mxu0 0.0
        %4527 = vmatpush1.msra.mxu0 %v4508
        %4528 = vmatprep.subr.mxu0 0.0
        %4529 = vmatpush1.msra.mxu0 %v4509
        %4530 = vmatprep.subr.mxu0 0.0
        %4531 = vmatpush1.msra.mxu0 %v4510
        %4532 = vmatprep.subr.mxu0 0.0
        %4533 = vmatpush1.msra.mxu0 0.0
        %4534 = vmatprep.subr.mxu0 0.0
        %4535 = vmatpush1.msra.mxu0 0.0
        %4536 = vmatprep.subr.mxu0 0.0
        %4537 = vmatpush1.msra.mxu0 0.0
        %4538 = vmatprep.subr.mxu0 0.0
        %4539 = vmatpush1.msra.mxu0 0.0
        %4540 = vmatprep.subr.mxu0 0.0
        %4541 = vmatpush1.msra.mxu0 0.0
        %4542 = vmatprep.subr.mxu0 0.0
        %4543 = vmatpush1.msra.mxu0 0.0
        %4544 = vmatprep.subr.mxu0 0.0
        %4545 = vmatpush1.msra.mxu0 0.0
        %4546 = vmatprep.subr.mxu0 0.0
        %4547 = vmatpush1.msra.mxu0 0.0
        %4548 = vmatprep.subr.mxu0 0.0
        %4549 = vmatpush1.msra.mxu0 0.0
        %4550 = vmatprep.subr.mxu0 0.0
        %4551 = vmatpush1.msra.mxu0 0.0
        %4552 = vmatprep.subr.mxu0 0.0
        %4553 = vmatpush1.msra.mxu0 0.0
        %4554 = vmatprep.subr.mxu0 0.0
        %4555 = vmatpush1.msra.mxu0 0.0
        %4556 = vmatprep.subr.mxu0 0.0
        %4557 = vmatpush1.msra.mxu0 0.0
        %4558 = vmatprep.subr.mxu0 0.0
        %4559 = vmatpush1.msra.mxu0 0.0
        %4560 = vmatprep.subr.mxu0 0.0
        %4561 = vmatpush1.msra.mxu0 0.0
        %4562 = vmatprep.subr.mxu0 0.0
        %4563 = vmatpush1.msra.mxu0 0.0
        %4564 = vmatprep.subr.mxu0 0.0
        %4565 = vmatpush1.msra.mxu0 0.0
        %4566 = vmatprep.subr.mxu0 0.0
        %4567 = vmatpush1.msra.mxu0 0.0
        %4568 = vmatprep.subr.mxu0 0.0
        %4569 = vmatpush1.msra.mxu0 0.0
        %4570 = vmatprep.subr.mxu0 0.0
        %4571 = vmatpush1.msra.mxu0 0.0
        %4572 = vmatprep.subr.mxu0 0.0
        %4573 = vmatpush1.msra.mxu0 0.0
        %4574 = vmatprep.subr.mxu0 0.0
        %4575 = vmatpush1.msra.mxu0 0.0
        %4576 = vmatprep.subr.mxu0 0.0
        %4577 = vmatpush1.msra.mxu0 0.0
        %4578 = vmatprep.subr.mxu0 0.0
        %4579 = vmatpush1.msra.mxu0 0.0
        %4580 = vmatprep.mubr.f32.mxu0 0.0
        %4581 = vmatmul.mubr.f32.gmra.mrb[0].mxu0 %v4331
        %v4582 = vpop.f32.mrb[0].mxu0
        %v4583 = vadd.f32 %v4515, %v4582
        %v4584 = vpop.f32.mrb[0].mxu0
        %4585 = vdwg.mxu0
        %v4586 = vld [vmem:[#allocation8 + $0x888] sm:$0xff]
        %v4587 = vld [vmem:[#allocation8 + $0x890] sm:$0xff]
        %v4588 = vld [vmem:[#allocation8 + $0x898] sm:$0xff]
        %v4589 = vld [vmem:[#allocation8 + $0x8a0] sm:$0xff]
        %v4590 = vld [vmem:[#allocation8 + $0x8a8] sm:$0xff]
        %v4591 = vld [vmem:[#allocation8 + $0x8b0] sm:$0xff]
        %v4592 = vld [vmem:[#allocation8 + $0x8b8] sm:$0xff]
        %v4593 = vld [vmem:[#allocation8 + $0x8c0] sm:$0xff]
        %v4594 = vld [vmem:[#allocation8 + $0x8c8] sm:$0x1]
        %v4595 = vlaneseq
        %v4596 = vshrl.u32 %v4595, 7
        %v4597 = vsub.s32 0, %v4596
        %v4598 = vrot.slane %v4594, %v4597
        %4599 = vmatprep.subr.mxu0 0.0
        %4600 = vmatpush1.msra.mxu0 %v4586
        %4601 = vmatprep.subr.mxu0 0.0
        %4602 = vmatpush1.msra.mxu0 %v4587
        %4603 = vmatprep.subr.mxu0 0.0
        %4604 = vmatpush1.msra.mxu0 %v4588
        %4605 = vmatprep.subr.mxu0 0.0
        %4606 = vmatpush1.msra.mxu0 %v4589
        %4607 = vmatprep.subr.mxu0 0.0
        %4608 = vmatpush1.msra.mxu0 %v4590
        %4609 = vmatprep.subr.mxu0 0.0
        %4610 = vmatpush1.msra.mxu0 %v4591
        %4611 = vmatprep.subr.mxu0 0.0
        %4612 = vmatpush1.msra.mxu0 %v4592
        %4613 = vmatprep.subr.mxu0 0.0
        %4614 = vmatpush1.msra.mxu0 %v4593
        %4615 = vmatprep.subr.mxu0 0.0
        %4616 = vmatpush1.msra.mxu0 0.0
        %4617 = vmatprep.subr.mxu0 0.0
        %4618 = vmatpush1.msra.mxu0 0.0
        %4619 = vmatprep.subr.mxu0 0.0
        %4620 = vmatpush1.msra.mxu0 0.0
        %4621 = vmatprep.subr.mxu0 0.0
        %4622 = vmatpush1.msra.mxu0 0.0
        %4623 = vmatprep.subr.mxu0 0.0
        %4624 = vmatpush1.msra.mxu0 0.0
        %4625 = vmatprep.subr.mxu0 0.0
        %4626 = vmatpush1.msra.mxu0 0.0
        %4627 = vmatprep.subr.mxu0 0.0
        %4628 = vmatpush1.msra.mxu0 0.0
        %4629 = vmatprep.subr.mxu0 0.0
        %4630 = vmatpush1.msra.mxu0 0.0
        %4631 = vmatprep.subr.mxu0 0.0
        %4632 = vmatpush1.msra.mxu0 0.0
        %4633 = vmatprep.subr.mxu0 0.0
        %4634 = vmatpush1.msra.mxu0 0.0
        %4635 = vmatprep.subr.mxu0 0.0
        %4636 = vmatpush1.msra.mxu0 0.0
        %4637 = vmatprep.subr.mxu0 0.0
        %4638 = vmatpush1.msra.mxu0 0.0
        %4639 = vmatprep.subr.mxu0 0.0
        %4640 = vmatpush1.msra.mxu0 0.0
        %4641 = vmatprep.subr.mxu0 0.0
        %4642 = vmatpush1.msra.mxu0 0.0
        %4643 = vmatprep.subr.mxu0 0.0
        %4644 = vmatpush1.msra.mxu0 0.0
        %4645 = vmatprep.subr.mxu0 0.0
        %4646 = vmatpush1.msra.mxu0 0.0
        %4647 = vmatprep.subr.mxu0 0.0
        %4648 = vmatpush1.msra.mxu0 0.0
        %4649 = vmatprep.subr.mxu0 0.0
        %4650 = vmatpush1.msra.mxu0 0.0
        %4651 = vmatprep.subr.mxu0 0.0
        %4652 = vmatpush1.msra.mxu0 0.0
        %4653 = vmatprep.subr.mxu0 0.0
        %4654 = vmatpush1.msra.mxu0 0.0
        %4655 = vmatprep.subr.mxu0 0.0
        %4656 = vmatpush1.msra.mxu0 0.0
        %4657 = vmatprep.subr.mxu0 0.0
        %4658 = vmatpush1.msra.mxu0 0.0
        %4659 = vmatprep.subr.mxu0 0.0
        %4660 = vmatpush1.msra.mxu0 0.0
        %4661 = vmatprep.subr.mxu0 0.0
        %4662 = vmatpush1.msra.mxu0 0.0
        %4663 = vmatprep.mubr.f32.mxu0 0.0
        %4664 = vmatmul.mubr.f32.gmra.mrb[0].mxu0 %v1978
        %v4665 = vpop.f32.mrb[0].mxu0
        %v4666 = vadd.f32 %v4598, %v4665
        %v4667 = vpop.f32.mrb[0].mxu0
        %4668 = vmatprep.mubr.f32.mxu0 0.0
        %4669 = vmatmul.mubr.f32.gmra.mrb[0].mxu0 %v1981
        %v4670 = vpop.f32.mrb[0].mxu0
        %v4671 = vadd.f32 %v4598, %v4670
        %v4672 = vpop.f32.mrb[0].mxu0
        %4673 = vdwg.mxu0
        %v4674 = vmul.f32 %v4583, %v455
        %v4675 = vmul.f32 %v4583, %v460
        %v4676 = vmul.f32 %v4583, %v465
        %v4677 = vmul.f32 %v4583, %v470
        %v4678 = vmul.f32 %v4583, %v475
        %v4679 = vmul.f32 %v4583, %v480
        %v4680 = vmul.f32 %v4583, %v485
        %v4681 = vmul.f32 %v4583, %v490
        %v4683 = vsel %vm584, %v4674, 0
        %v4686 = vsel %vm584, %v4675, 0
        %v4689 = vsel %vm584, %v4676, 0
        %v4692 = vsel %vm584, %v4677, 0
        %v4695 = vsel %vm584, %v4678, 0
        %v4698 = vsel %vm584, %v4679, 0
        %v4701 = vsel %vm584, %v4680, 0
        %v4704 = vsel %vm584, %v4681, 0
        %v4707 = vsel %vm584, %v4666, 0
        %v4710 = vsel %vm584, %v4671, 0
        %4712 = vmatprep.subr.mxu0 0.0
        %4713 = vmatpush1.xpose.msra.mxu0 %v4707
        %4714 = vmatprep.subr.mxu0 0.0
        %4715 = vmatpush1.xpose.msra.mxu0 %v4710
        %4716 = vmatprep.subr.mxu0 0.0
        %4717 = vmatpush1.xpose.msra.mxu0 0.0
        %4718 = vmatprep.subr.mxu0 0.0
        %4719 = vmatpush1.xpose.msra.mxu0 0.0
        %4720 = vmatprep.subr.mxu0 0.0
        %4721 = vmatpush1.xpose.msra.mxu0 0.0
        %4722 = vmatprep.subr.mxu0 0.0
        %4723 = vmatpush1.xpose.msra.mxu0 0.0
        %4724 = vmatprep.subr.mxu0 0.0
        %4725 = vmatpush1.xpose.msra.mxu0 0.0
        %4726 = vmatprep.subr.mxu0 0.0
        %4727 = vmatpush1.xpose.msra.mxu0 0.0
        %4728 = vmatprep.subr.mxu0 0.0
        %4729 = vmatpush1.xpose.msra.mxu0 0.0
        %4730 = vmatprep.subr.mxu0 0.0
        %4731 = vmatpush1.xpose.msra.mxu0 0.0
        %4732 = vmatprep.subr.mxu0 0.0
        %4733 = vmatpush1.xpose.msra.mxu0 0.0
        %4734 = vmatprep.subr.mxu0 0.0
        %4735 = vmatpush1.xpose.msra.mxu0 0.0
        %4736 = vmatprep.subr.mxu0 0.0
        %4737 = vmatpush1.xpose.msra.mxu0 0.0
        %4738 = vmatprep.subr.mxu0 0.0
        %4739 = vmatpush1.xpose.msra.mxu0 0.0
        %4740 = vmatprep.subr.mxu0 0.0
        %4741 = vmatpush1.xpose.msra.mxu0 0.0
        %4742 = vmatprep.subr.mxu0 0.0
        %4743 = vmatpush1.xpose.msra.mxu0 0.0
        %4744 = vmatprep.subr.mxu0 0.0
        %4745 = vmatpush1.xpose.msra.mxu0 0.0
        %4746 = vmatprep.subr.mxu0 0.0
        %4747 = vmatpush1.xpose.msra.mxu0 0.0
        %4748 = vmatprep.subr.mxu0 0.0
        %4749 = vmatpush1.xpose.msra.mxu0 0.0
        %4750 = vmatprep.subr.mxu0 0.0
        %4751 = vmatpush1.xpose.msra.mxu0 0.0
        %4752 = vmatprep.subr.mxu0 0.0
        %4753 = vmatpush1.xpose.msra.mxu0 0.0
        %4754 = vmatprep.subr.mxu0 0.0
        %4755 = vmatpush1.xpose.msra.mxu0 0.0
        %4756 = vmatprep.subr.mxu0 0.0
        %4757 = vmatpush1.xpose.msra.mxu0 0.0
        %4758 = vmatprep.subr.mxu0 0.0
        %4759 = vmatpush1.xpose.msra.mxu0 0.0
        %4760 = vmatprep.subr.mxu0 0.0
        %4761 = vmatpush1.xpose.msra.mxu0 0.0
        %4762 = vmatprep.subr.mxu0 0.0
        %4763 = vmatpush1.xpose.msra.mxu0 0.0
        %4764 = vmatprep.subr.mxu0 0.0
        %4765 = vmatpush1.xpose.msra.mxu0 0.0
        %4766 = vmatprep.subr.mxu0 0.0
        %4767 = vmatpush1.xpose.msra.mxu0 0.0
        %4768 = vmatprep.subr.mxu0 0.0
        %4769 = vmatpush1.xpose.msra.mxu0 0.0
        %4770 = vmatprep.subr.mxu0 0.0
        %4771 = vmatpush1.xpose.msra.mxu0 0.0
        %4772 = vmatprep.subr.mxu0 0.0
        %4773 = vmatpush1.xpose.msra.mxu0 0.0
        %4774 = vmatprep.subr.mxu0 0.0
        %4775 = vmatpush1.xpose.msra.mxu0 0.0
        %4776 = vmatprep.mubr.f32.mxu0 0.0
        %4777 = vmatmul.mubr.f32.gmra.mrb[0].mxu0 %v4683
        %v4778 = vpop.f32.mrb[0].mxu0
        %v4779 = vadd.f32 %v2070, %v4778
        %v4780 = vpop.f32.mrb[0].mxu0
        %4781 = vmatprep.mubr.f32.mxu0 0.0
        %4782 = vmatmul.mubr.f32.gmra.mrb[0].mxu0 %v4686
        %v4783 = vpop.f32.mrb[0].mxu0
        %v4784 = vadd.f32 %v2070, %v4783
        %v4785 = vpop.f32.mrb[0].mxu0
        %4786 = vmatprep.mubr.f32.mxu0 0.0
        %4787 = vmatmul.mubr.f32.gmra.mrb[0].mxu0 %v4689
        %v4788 = vpop.f32.mrb[0].mxu0
        %v4789 = vadd.f32 %v2070, %v4788
        %v4790 = vpop.f32.mrb[0].mxu0
        %4791 = vmatprep.mubr.f32.mxu0 0.0
        %4792 = vmatmul.mubr.f32.gmra.mrb[0].mxu0 %v4692
        %v4793 = vpop.f32.mrb[0].mxu0
        %v4794 = vadd.f32 %v2070, %v4793
        %v4795 = vpop.f32.mrb[0].mxu0
        %4796 = vmatprep.mubr.f32.mxu0 0.0
        %4797 = vmatmul.mubr.f32.gmra.mrb[0].mxu0 %v4695
        %v4798 = vpop.f32.mrb[0].mxu0
        %v4799 = vadd.f32 %v2070, %v4798
        %v4800 = vpop.f32.mrb[0].mxu0
        %4801 = vmatprep.mubr.f32.mxu0 0.0
        %4802 = vmatmul.mubr.f32.gmra.mrb[0].mxu0 %v4698
        %v4803 = vpop.f32.mrb[0].mxu0
        %v4804 = vadd.f32 %v2070, %v4803
        %v4805 = vpop.f32.mrb[0].mxu0
        %4806 = vmatprep.mubr.f32.mxu0 0.0
        %4807 = vmatmul.mubr.f32.gmra.mrb[0].mxu0 %v4701
        %v4808 = vpop.f32.mrb[0].mxu0
        %v4809 = vadd.f32 %v2070, %v4808
        %v4810 = vpop.f32.mrb[0].mxu0
        %4811 = vmatprep.mubr.f32.mxu0 0.0
        %4812 = vmatmul.mubr.f32.gmra.mrb[0].mxu0 %v4704
        %v4813 = vpop.f32.mrb[0].mxu0
        %v4814 = vadd.f32 %v2070, %v4813
        %v4815 = vpop.f32.mrb[0].mxu0
        %4816 = vdwg.mxu0
        %v4817 = vsel %vm1086, %v4779, -inf
        %4818 = vmax.xlane.f32.xlu0 %v4817
        %v4819 = vpop.xlane.xlu0 %4818
        %v4820 = vsel %vm1086, %v4784, -inf
        %4821 = vmax.xlane.f32.xlu0 %v4820
        %v4822 = vpop.xlane.xlu0 %4821
        %v4823 = vsel %vm1086, %v4789, -inf
        %4824 = vmax.xlane.f32.xlu0 %v4823
        %v4825 = vpop.xlane.xlu0 %4824
        %v4826 = vsel %vm1086, %v4794, -inf
        %4827 = vmax.xlane.f32.xlu0 %v4826
        %v4828 = vpop.xlane.xlu0 %4827
        %v4829 = vsel %vm1086, %v4799, -inf
        %4830 = vmax.xlane.f32.xlu0 %v4829
        %v4831 = vpop.xlane.xlu0 %4830
        %v4832 = vsel %vm1086, %v4804, -inf
        %4833 = vmax.xlane.f32.xlu0 %v4832
        %v4834 = vpop.xlane.xlu0 %4833
        %v4835 = vsel %vm1086, %v4809, -inf
        %4836 = vmax.xlane.f32.xlu0 %v4835
        %v4837 = vpop.xlane.xlu0 %4836
        %v4838 = vsel %vm1086, %v4814, -inf
        %4839 = vmax.xlane.f32.xlu0 %v4838
        %v4840 = vpop.xlane.xlu0 %4839
        %v4841 = vsub.f32 %v4779, %v4819
        %v4842 = vsub.f32 %v4784, %v4822
        %v4843 = vsub.f32 %v4789, %v4825
        %v4844 = vsub.f32 %v4794, %v4828
        %v4845 = vsub.f32 %v4799, %v4831
        %v4846 = vsub.f32 %v4804, %v4834
        %v4847 = vsub.f32 %v4809, %v4837
        %v4848 = vsub.f32 %v4814, %v4840
        %v4849 = vmul.f32 %v4841, 1.442695
        %v4850 = vpow.pop %v4849
        %v4851 = vmul.f32 %v4842, 1.442695
        %v4852 = vpow.pop %v4851
        %v4853 = vmul.f32 %v4843, 1.442695
        %v4854 = vpow.pop %v4853
        %v4855 = vmul.f32 %v4844, 1.442695
        %v4856 = vpow.pop %v4855
        %v4857 = vmul.f32 %v4845, 1.442695
        %v4858 = vpow.pop %v4857
        %v4859 = vmul.f32 %v4846, 1.442695
        %v4860 = vpow.pop %v4859
        %v4861 = vmul.f32 %v4847, 1.442695
        %v4862 = vpow.pop %v4861
        %v4863 = vmul.f32 %v4848, 1.442695
        %v4864 = vpow.pop %v4863
        %v4865 = vsel %vm1086, %v4850, 0.0
        %4866 = vadd.xlane.f32.xlu0 %v4865
        %v4867 = vpop.xlane.xlu0 %4866
        %v4868 = vsel %vm1086, %v4852, 0.0
        %4869 = vadd.xlane.f32.xlu0 %v4868
        %v4870 = vpop.xlane.xlu0 %4869
        %v4871 = vsel %vm1086, %v4854, 0.0
        %4872 = vadd.xlane.f32.xlu0 %v4871
        %v4873 = vpop.xlane.xlu0 %4872
        %v4874 = vsel %vm1086, %v4856, 0.0
        %4875 = vadd.xlane.f32.xlu0 %v4874
        %v4876 = vpop.xlane.xlu0 %4875
        %v4877 = vsel %vm1086, %v4858, 0.0
        %4878 = vadd.xlane.f32.xlu0 %v4877
        %v4879 = vpop.xlane.xlu0 %4878
        %v4880 = vsel %vm1086, %v4860, 0.0
        %4881 = vadd.xlane.f32.xlu0 %v4880
        %v4882 = vpop.xlane.xlu0 %4881
        %v4883 = vsel %vm1086, %v4862, 0.0
        %4884 = vadd.xlane.f32.xlu0 %v4883
        %v4885 = vpop.xlane.xlu0 %4884
        %v4886 = vsel %vm1086, %v4864, 0.0
        %4887 = vadd.xlane.f32.xlu0 %v4886
        %v4888 = vpop.xlane.xlu0 %4887
        %v4889 = vrcp.pop %v4867
        %v4890 = vmul.f32 %v4850, %v4889
        %v4891 = vrcp.pop %v4870
        %v4892 = vmul.f32 %v4852, %v4891
        %v4893 = vrcp.pop %v4873
        %v4894 = vmul.f32 %v4854, %v4893
        %v4895 = vrcp.pop %v4876
        %v4896 = vmul.f32 %v4856, %v4895
        %v4897 = vrcp.pop %v4879
        %v4898 = vmul.f32 %v4858, %v4897
        %v4899 = vrcp.pop %v4882
        %v4900 = vmul.f32 %v4860, %v4899
        %v4901 = vrcp.pop %v4885
        %v4902 = vmul.f32 %v4862, %v4901
        %v4903 = vrcp.pop %v4888
        %v4904 = vmul.f32 %v4864, %v4903
        %4905 = vrot.lane.b32.xlu0 %v4666, 64
        %v4906 = vpop.permute.xlu0 %4905
        %4907 = vrot.lane.b32.xlu0 %v4671, 64
        %v4908 = vpop.permute.xlu0 %4907
        %v4912 = vsel %vm1086, %v4890, 0
        %v4915 = vsel %vm1086, %v4892, 0
        %v4918 = vsel %vm1086, %v4894, 0
        %v4921 = vsel %vm1086, %v4896, 0
        %v4924 = vsel %vm1086, %v4898, 0
        %v4927 = vsel %vm1086, %v4900, 0
        %v4930 = vsel %vm1086, %v4902, 0
        %v4933 = vsel %vm1086, %v4904, 0
        %4935 = vmatprep.subr.mxu0 0.0
        %4936 = vmatpush1.msra.mxu0 %v4906
        %4937 = vmatprep.subr.mxu0 0.0
        %4938 = vmatpush1.msra.mxu0 %v4908
        %4939 = vmatprep.subr.mxu0 0.0
        %4940 = vmatpush1.msra.mxu0 0.0
        %4941 = vmatprep.subr.mxu0 0.0
        %4942 = vmatpush1.msra.mxu0 0.0
        %4943 = vmatprep.subr.mxu0 0.0
        %4944 = vmatpush1.msra.mxu0 0.0
        %4945 = vmatprep.subr.mxu0 0.0
        %4946 = vmatpush1.msra.mxu0 0.0
        %4947 = vmatprep.subr.mxu0 0.0
        %4948 = vmatpush1.msra.mxu0 0.0
        %4949 = vmatprep.subr.mxu0 0.0
        %4950 = vmatpush1.msra.mxu0 0.0
        %4951 = vmatprep.subr.mxu0 0.0
        %4952 = vmatpush1.msra.mxu0 0.0
        %4953 = vmatprep.subr.mxu0 0.0
        %4954 = vmatpush1.msra.mxu0 0.0
        %4955 = vmatprep.subr.mxu0 0.0
        %4956 = vmatpush1.msra.mxu0 0.0
        %4957 = vmatprep.subr.mxu0 0.0
        %4958 = vmatpush1.msra.mxu0 0.0
        %4959 = vmatprep.subr.mxu0 0.0
        %4960 = vmatpush1.msra.mxu0 0.0
        %4961 = vmatprep.subr.mxu0 0.0
        %4962 = vmatpush1.msra.mxu0 0.0
        %4963 = vmatprep.subr.mxu0 0.0
        %4964 = vmatpush1.msra.mxu0 0.0
        %4965 = vmatprep.subr.mxu0 0.0
        %4966 = vmatpush1.msra.mxu0 0.0
        %4967 = vmatprep.subr.mxu0 0.0
        %4968 = vmatpush1.msra.mxu0 0.0
        %4969 = vmatprep.subr.mxu0 0.0
        %4970 = vmatpush1.msra.mxu0 0.0
        %4971 = vmatprep.subr.mxu0 0.0
        %4972 = vmatpush1.msra.mxu0 0.0
        %4973 = vmatprep.subr.mxu0 0.0
        %4974 = vmatpush1.msra.mxu0 0.0
        %4975 = vmatprep.subr.mxu0 0.0
        %4976 = vmatpush1.msra.mxu0 0.0
        %4977 = vmatprep.subr.mxu0 0.0
        %4978 = vmatpush1.msra.mxu0 0.0
        %4979 = vmatprep.subr.mxu0 0.0
        %4980 = vmatpush1.msra.mxu0 0.0
        %4981 = vmatprep.subr.mxu0 0.0
        %4982 = vmatpush1.msra.mxu0 0.0
        %4983 = vmatprep.subr.mxu0 0.0
        %4984 = vmatpush1.msra.mxu0 0.0
        %4985 = vmatprep.subr.mxu0 0.0
        %4986 = vmatpush1.msra.mxu0 0.0
        %4987 = vmatprep.subr.mxu0 0.0
        %4988 = vmatpush1.msra.mxu0 0.0
        %4989 = vmatprep.subr.mxu0 0.0
        %4990 = vmatpush1.msra.mxu0 0.0
        %4991 = vmatprep.subr.mxu0 0.0
        %4992 = vmatpush1.msra.mxu0 0.0
        %4993 = vmatprep.subr.mxu0 0.0
        %4994 = vmatpush1.msra.mxu0 0.0
        %4995 = vmatprep.subr.mxu0 0.0
        %4996 = vmatpush1.msra.mxu0 0.0
        %4997 = vmatprep.subr.mxu0 0.0
        %4998 = vmatpush1.msra.mxu0 0.0
        %4999 = vmatprep.mubr.f32.mxu0 0.0
        %5000 = vmatmul.mubr.f32.gmra.mrb[0].mxu0 %v4912
        %v5001 = vpop.f32.mrb[0].mxu0
        %v5002 = vadd.f32 0.0, %v5001
        %v5003 = vpop.f32.mrb[0].mxu0
        %5004 = vmatprep.mubr.f32.mxu0 0.0
        %5005 = vmatmul.mubr.f32.gmra.mrb[0].mxu0 %v4915
        %v5006 = vpop.f32.mrb[0].mxu0
        %v5007 = vadd.f32 0.0, %v5006
        %v5008 = vpop.f32.mrb[0].mxu0
        %5009 = vmatprep.mubr.f32.mxu0 0.0
        %5010 = vmatmul.mubr.f32.gmra.mrb[0].mxu0 %v4918
        %v5011 = vpop.f32.mrb[0].mxu0
        %v5012 = vadd.f32 0.0, %v5011
        %v5013 = vpop.f32.mrb[0].mxu0
        %5014 = vmatprep.mubr.f32.mxu0 0.0
        %5015 = vmatmul.mubr.f32.gmra.mrb[0].mxu0 %v4921
        %v5016 = vpop.f32.mrb[0].mxu0
        %v5017 = vadd.f32 0.0, %v5016
        %v5018 = vpop.f32.mrb[0].mxu0
        %5019 = vmatprep.mubr.f32.mxu0 0.0
        %5020 = vmatmul.mubr.f32.gmra.mrb[0].mxu0 %v4924
        %v5021 = vpop.f32.mrb[0].mxu0
        %v5022 = vadd.f32 0.0, %v5021
        %v5023 = vpop.f32.mrb[0].mxu0
        %5024 = vmatprep.mubr.f32.mxu0 0.0
        %5025 = vmatmul.mubr.f32.gmra.mrb[0].mxu0 %v4927
        %v5026 = vpop.f32.mrb[0].mxu0
        %v5027 = vadd.f32 0.0, %v5026
        %v5028 = vpop.f32.mrb[0].mxu0
        %5029 = vmatprep.mubr.f32.mxu0 0.0
        %5030 = vmatmul.mubr.f32.gmra.mrb[0].mxu0 %v4930
        %v5031 = vpop.f32.mrb[0].mxu0
        %v5032 = vadd.f32 0.0, %v5031
        %v5033 = vpop.f32.mrb[0].mxu0
        %5034 = vmatprep.mubr.f32.mxu0 0.0
        %5035 = vmatmul.mubr.f32.gmra.mrb[0].mxu0 %v4933
        %v5036 = vpop.f32.mrb[0].mxu0
        %v5037 = vadd.f32 0.0, %v5036
        %v5038 = vpop.f32.mrb[0].mxu0
        %5039 = vdwg.mxu0
        %v5040 = vmul.f32 %v5002, %v455
        %v5041 = vmul.f32 %v5007, %v460
        %v5042 = vadd.f32 %v5040, %v5041
        %v5043 = vmul.f32 %v5012, %v465
        %v5044 = vadd.f32 %v5042, %v5043
        %v5045 = vmul.f32 %v5017, %v470
        %v5046 = vadd.f32 %v5044, %v5045
        %v5047 = vmul.f32 %v5022, %v475
        %v5048 = vadd.f32 %v5046, %v5047
        %v5049 = vmul.f32 %v5027, %v480
        %v5050 = vadd.f32 %v5048, %v5049
        %v5051 = vmul.f32 %v5032, %v485
        %v5052 = vadd.f32 %v5050, %v5051
        %v5053 = vmul.f32 %v5037, %v490
        %v5054 = vadd.f32 %v5052, %v5053
        %v5055 = vld [vmem:[#allocation8 + $0x8d0] sm:$0xff]
        %v5056 = vld [vmem:[#allocation8 + $0x8d8] sm:$0xff]
        %v5057 = vld [vmem:[#allocation8 + $0x8e0] sm:$0xff]
        %v5058 = vld [vmem:[#allocation8 + $0x8e8] sm:$0xff]
        %v5059 = vld [vmem:[#allocation8 + $0x8f0] sm:$0xff]
        %v5060 = vld [vmem:[#allocation8 + $0x8f8] sm:$0xff]
        %v5061 = vld [vmem:[#allocation8 + $0x900] sm:$0xff]
        %v5062 = vld [vmem:[#allocation8 + $0x908] sm:$0xff]
        %v5063 = vld [vmem:[#allocation8 + $0x910] sm:$0x1]
        %v5064 = vlaneseq
        %v5065 = vshrl.u32 %v5064, 7
        %v5066 = vsub.s32 0, %v5065
        %v5067 = vrot.slane %v5063, %v5066
        %v5069 = vsel %vm584, %v5054, 0
        %5071 = vmatprep.subr.mxu0 0.0
        %5072 = vmatpush1.msra.mxu0 %v5055
        %5073 = vmatprep.subr.mxu0 0.0
        %5074 = vmatpush1.msra.mxu0 %v5056
        %5075 = vmatprep.subr.mxu0 0.0
        %5076 = vmatpush1.msra.mxu0 %v5057
        %5077 = vmatprep.subr.mxu0 0.0
        %5078 = vmatpush1.msra.mxu0 %v5058
        %5079 = vmatprep.subr.mxu0 0.0
        %5080 = vmatpush1.msra.mxu0 %v5059
        %5081 = vmatprep.subr.mxu0 0.0
        %5082 = vmatpush1.msra.mxu0 %v5060
        %5083 = vmatprep.subr.mxu0 0.0
        %5084 = vmatpush1.msra.mxu0 %v5061
        %5085 = vmatprep.subr.mxu0 0.0
        %5086 = vmatpush1.msra.mxu0 %v5062
        %5087 = vmatprep.subr.mxu0 0.0
        %5088 = vmatpush1.msra.mxu0 0.0
        %5089 = vmatprep.subr.mxu0 0.0
        %5090 = vmatpush1.msra.mxu0 0.0
        %5091 = vmatprep.subr.mxu0 0.0
        %5092 = vmatpush1.msra.mxu0 0.0
        %5093 = vmatprep.subr.mxu0 0.0
        %5094 = vmatpush1.msra.mxu0 0.0
        %5095 = vmatprep.subr.mxu0 0.0
        %5096 = vmatpush1.msra.mxu0 0.0
        %5097 = vmatprep.subr.mxu0 0.0
        %5098 = vmatpush1.msra.mxu0 0.0
        %5099 = vmatprep.subr.mxu0 0.0
        %5100 = vmatpush1.msra.mxu0 0.0
        %5101 = vmatprep.subr.mxu0 0.0
        %5102 = vmatpush1.msra.mxu0 0.0
        %5103 = vmatprep.subr.mxu0 0.0
        %5104 = vmatpush1.msra.mxu0 0.0
        %5105 = vmatprep.subr.mxu0 0.0
        %5106 = vmatpush1.msra.mxu0 0.0
        %5107 = vmatprep.subr.mxu0 0.0
        %5108 = vmatpush1.msra.mxu0 0.0
        %5109 = vmatprep.subr.mxu0 0.0
        %5110 = vmatpush1.msra.mxu0 0.0
        %5111 = vmatprep.subr.mxu0 0.0
        %5112 = vmatpush1.msra.mxu0 0.0
        %5113 = vmatprep.subr.mxu0 0.0
        %5114 = vmatpush1.msra.mxu0 0.0
        %5115 = vmatprep.subr.mxu0 0.0
        %5116 = vmatpush1.msra.mxu0 0.0
        %5117 = vmatprep.subr.mxu0 0.0
        %5118 = vmatpush1.msra.mxu0 0.0
        %5119 = vmatprep.subr.mxu0 0.0
        %5120 = vmatpush1.msra.mxu0 0.0
        %5121 = vmatprep.subr.mxu0 0.0
        %5122 = vmatpush1.msra.mxu0 0.0
        %5123 = vmatprep.subr.mxu0 0.0
        %5124 = vmatpush1.msra.mxu0 0.0
        %5125 = vmatprep.subr.mxu0 0.0
        %5126 = vmatpush1.msra.mxu0 0.0
        %5127 = vmatprep.subr.mxu0 0.0
        %5128 = vmatpush1.msra.mxu0 0.0
        %5129 = vmatprep.subr.mxu0 0.0
        %5130 = vmatpush1.msra.mxu0 0.0
        %5131 = vmatprep.subr.mxu0 0.0
        %5132 = vmatpush1.msra.mxu0 0.0
        %5133 = vmatprep.subr.mxu0 0.0
        %5134 = vmatpush1.msra.mxu0 0.0
        %5135 = vmatprep.mubr.f32.mxu0 0.0
        %5136 = vmatmul.mubr.f32.gmra.mrb[0].mxu0 %v5069
        %v5137 = vpop.f32.mrb[0].mxu0
        %v5138 = vadd.f32 %v5067, %v5137
        %v5139 = vpop.f32.mrb[0].mxu0
        %5140 = vdwg.mxu0
        %v5141 = vadd.f32 %v5138, %v4048
        %v5142 = vld [vmem:[#allocation8 + $0x918] sm:$0xff]
        %v5143 = vld [vmem:[#allocation8 + $0x920] sm:$0xff]
        %v5144 = vld [vmem:[#allocation8 + $0x928] sm:$0xff]
        %v5145 = vld [vmem:[#allocation8 + $0x930] sm:$0xff]
        %v5146 = vld [vmem:[#allocation8 + $0x938] sm:$0xff]
        %v5147 = vld [vmem:[#allocation8 + $0x940] sm:$0xff]
        %v5148 = vld [vmem:[#allocation8 + $0x948] sm:$0xff]
        %v5149 = vld [vmem:[#allocation8 + $0x950] sm:$0xff]
        %v5150 = vld [vmem:[#allocation8 + $0x958] sm:$0x1]
        %v5151 = vlaneseq
        %v5152 = vshrl.u32 %v5151, 7
        %v5153 = vsub.s32 0, %v5152
        %v5154 = vrot.slane %v5150, %v5153
        %v5156 = vsel %vm584, %v5141, 0
        %5158 = vmatprep.subr.mxu0 0.0
        %5159 = vmatpush1.msra.mxu0 %v5142
        %5160 = vmatprep.subr.mxu0 0.0
        %5161 = vmatpush1.msra.mxu0 %v5143
        %5162 = vmatprep.subr.mxu0 0.0
        %5163 = vmatpush1.msra.mxu0 %v5144
        %5164 = vmatprep.subr.mxu0 0.0
        %5165 = vmatpush1.msra.mxu0 %v5145
        %5166 = vmatprep.subr.mxu0 0.0
        %5167 = vmatpush1.msra.mxu0 %v5146
        %5168 = vmatprep.subr.mxu0 0.0
        %5169 = vmatpush1.msra.mxu0 %v5147
        %5170 = vmatprep.subr.mxu0 0.0
        %5171 = vmatpush1.msra.mxu0 %v5148
        %5172 = vmatprep.subr.mxu0 0.0
        %5173 = vmatpush1.msra.mxu0 %v5149
        %5174 = vmatprep.subr.mxu0 0.0
        %5175 = vmatpush1.msra.mxu0 0.0
        %5176 = vmatprep.subr.mxu0 0.0
        %5177 = vmatpush1.msra.mxu0 0.0
        %5178 = vmatprep.subr.mxu0 0.0
        %5179 = vmatpush1.msra.mxu0 0.0
        %5180 = vmatprep.subr.mxu0 0.0
        %5181 = vmatpush1.msra.mxu0 0.0
        %5182 = vmatprep.subr.mxu0 0.0
        %5183 = vmatpush1.msra.mxu0 0.0
        %5184 = vmatprep.subr.mxu0 0.0
        %5185 = vmatpush1.msra.mxu0 0.0
        %5186 = vmatprep.subr.mxu0 0.0
        %5187 = vmatpush1.msra.mxu0 0.0
        %5188 = vmatprep.subr.mxu0 0.0
        %5189 = vmatpush1.msra.mxu0 0.0
        %5190 = vmatprep.subr.mxu0 0.0
        %5191 = vmatpush1.msra.mxu0 0.0
        %5192 = vmatprep.subr.mxu0 0.0
        %5193 = vmatpush1.msra.mxu0 0.0
        %5194 = vmatprep.subr.mxu0 0.0
        %5195 = vmatpush1.msra.mxu0 0.0
        %5196 = vmatprep.subr.mxu0 0.0
        %5197 = vmatpush1.msra.mxu0 0.0
        %5198 = vmatprep.subr.mxu0 0.0
        %5199 = vmatpush1.msra.mxu0 0.0
        %5200 = vmatprep.subr.mxu0 0.0
        %5201 = vmatpush1.msra.mxu0 0.0
        %5202 = vmatprep.subr.mxu0 0.0
        %5203 = vmatpush1.msra.mxu0 0.0
        %5204 = vmatprep.subr.mxu0 0.0
        %5205 = vmatpush1.msra.mxu0 0.0
        %5206 = vmatprep.subr.mxu0 0.0
        %5207 = vmatpush1.msra.mxu0 0.0
        %5208 = vmatprep.subr.mxu0 0.0
        %5209 = vmatpush1.msra.mxu0 0.0
        %5210 = vmatprep.subr.mxu0 0.0
        %5211 = vmatpush1.msra.mxu0 0.0
        %5212 = vmatprep.subr.mxu0 0.0
        %5213 = vmatpush1.msra.mxu0 0.0
        %5214 = vmatprep.subr.mxu0 0.0
        %5215 = vmatpush1.msra.mxu0 0.0
        %5216 = vmatprep.subr.mxu0 0.0
        %5217 = vmatpush1.msra.mxu0 0.0
        %5218 = vmatprep.subr.mxu0 0.0
        %5219 = vmatpush1.msra.mxu0 0.0
        %5220 = vmatprep.subr.mxu0 0.0
        %5221 = vmatpush1.msra.mxu0 0.0
        %5222 = vmatprep.mubr.f32.mxu0 0.0
        %5223 = vmatmul.mubr.f32.gmra.mrb[0].mxu0 %v5156
        %v5224 = vpop.f32.mrb[0].mxu0
        %v5225 = vadd.f32 %v5154, %v5224
        %v5226 = vpop.f32.mrb[0].mxu0
        %5227 = vdwg.mxu0
        %v5228 = vld [vmem:[#allocation8 + $0x960] sm:$0xff]
        %v5229 = vld [vmem:[#allocation8 + $0x968] sm:$0xff]
        %v5230 = vld [vmem:[#allocation8 + $0x970] sm:$0xff]
        %v5231 = vld [vmem:[#allocation8 + $0x978] sm:$0xff]
        %v5232 = vld [vmem:[#allocation8 + $0x980] sm:$0xff]
        %v5233 = vld [vmem:[#allocation8 + $0x988] sm:$0xff]
        %v5234 = vld [vmem:[#allocation8 + $0x990] sm:$0xff]
        %v5235 = vld [vmem:[#allocation8 + $0x998] sm:$0xff]
        %v5236 = vld [vmem:[#allocation8 + $0x9a0] sm:$0x1]
        %v5237 = vlaneseq
        %v5238 = vshrl.u32 %v5237, 7
        %v5239 = vsub.s32 0, %v5238
        %v5240 = vrot.slane %v5236, %v5239
        %5241 = vmatprep.subr.mxu0 0.0
        %5242 = vmatpush1.msra.mxu0 %v5228
        %5243 = vmatprep.subr.mxu0 0.0
        %5244 = vmatpush1.msra.mxu0 %v5229
        %5245 = vmatprep.subr.mxu0 0.0
        %5246 = vmatpush1.msra.mxu0 %v5230
        %5247 = vmatprep.subr.mxu0 0.0
        %5248 = vmatpush1.msra.mxu0 %v5231
        %5249 = vmatprep.subr.mxu0 0.0
        %5250 = vmatpush1.msra.mxu0 %v5232
        %5251 = vmatprep.subr.mxu0 0.0
        %5252 = vmatpush1.msra.mxu0 %v5233
        %5253 = vmatprep.subr.mxu0 0.0
        %5254 = vmatpush1.msra.mxu0 %v5234
        %5255 = vmatprep.subr.mxu0 0.0
        %5256 = vmatpush1.msra.mxu0 %v5235
        %5257 = vmatprep.subr.mxu0 0.0
        %5258 = vmatpush1.msra.mxu0 0.0
        %5259 = vmatprep.subr.mxu0 0.0
        %5260 = vmatpush1.msra.mxu0 0.0
        %5261 = vmatprep.subr.mxu0 0.0
        %5262 = vmatpush1.msra.mxu0 0.0
        %5263 = vmatprep.subr.mxu0 0.0
        %5264 = vmatpush1.msra.mxu0 0.0
        %5265 = vmatprep.subr.mxu0 0.0
        %5266 = vmatpush1.msra.mxu0 0.0
        %5267 = vmatprep.subr.mxu0 0.0
        %5268 = vmatpush1.msra.mxu0 0.0
        %5269 = vmatprep.subr.mxu0 0.0
        %5270 = vmatpush1.msra.mxu0 0.0
        %5271 = vmatprep.subr.mxu0 0.0
        %5272 = vmatpush1.msra.mxu0 0.0
        %5273 = vmatprep.subr.mxu0 0.0
        %5274 = vmatpush1.msra.mxu0 0.0
        %5275 = vmatprep.subr.mxu0 0.0
        %5276 = vmatpush1.msra.mxu0 0.0
        %5277 = vmatprep.subr.mxu0 0.0
        %5278 = vmatpush1.msra.mxu0 0.0
        %5279 = vmatprep.subr.mxu0 0.0
        %5280 = vmatpush1.msra.mxu0 0.0
        %5281 = vmatprep.subr.mxu0 0.0
        %5282 = vmatpush1.msra.mxu0 0.0
        %5283 = vmatprep.subr.mxu0 0.0
        %5284 = vmatpush1.msra.mxu0 0.0
        %5285 = vmatprep.subr.mxu0 0.0
        %5286 = vmatpush1.msra.mxu0 0.0
        %5287 = vmatprep.subr.mxu0 0.0
        %5288 = vmatpush1.msra.mxu0 0.0
        %5289 = vmatprep.subr.mxu0 0.0
        %5290 = vmatpush1.msra.mxu0 0.0
        %5291 = vmatprep.subr.mxu0 0.0
        %5292 = vmatpush1.msra.mxu0 0.0
        %5293 = vmatprep.subr.mxu0 0.0
        %5294 = vmatpush1.msra.mxu0 0.0
        %5295 = vmatprep.subr.mxu0 0.0
        %5296 = vmatpush1.msra.mxu0 0.0
        %5297 = vmatprep.subr.mxu0 0.0
        %5298 = vmatpush1.msra.mxu0 0.0
        %5299 = vmatprep.subr.mxu0 0.0
        %5300 = vmatpush1.msra.mxu0 0.0
        %5301 = vmatprep.subr.mxu0 0.0
        %5302 = vmatpush1.msra.mxu0 0.0
        %5303 = vmatprep.subr.mxu0 0.0
        %5304 = vmatpush1.msra.mxu0 0.0
        %5305 = vmatprep.mubr.f32.mxu0 0.0
        %5306 = vmatmul.mubr.f32.gmra.mrb[0].mxu0 %v5156
        %v5307 = vpop.f32.mrb[0].mxu0
        %v5308 = vadd.f32 %v5240, %v5307
        %v5309 = vpop.f32.mrb[0].mxu0
        %5310 = vdwg.mxu0
        %v5311 = vmul.f32 %v5225, %v455
        %v5312 = vmul.f32 %v5225, %v460
        %v5313 = vmul.f32 %v5225, %v465
        %v5314 = vmul.f32 %v5225, %v470
        %v5315 = vmul.f32 %v5225, %v475
        %v5316 = vmul.f32 %v5225, %v480
        %v5317 = vmul.f32 %v5225, %v485
        %v5318 = vmul.f32 %v5225, %v490
        %v5320 = vsel %vm584, %v5311, 0
        %v5323 = vsel %vm584, %v5312, 0
        %v5326 = vsel %vm584, %v5313, 0
        %v5329 = vsel %vm584, %v5314, 0
        %v5332 = vsel %vm584, %v5315, 0
        %v5335 = vsel %vm584, %v5316, 0
        %v5338 = vsel %vm584, %v5317, 0
        %v5341 = vsel %vm584, %v5318, 0
        %v5344 = vsel %vm584, %v5308, 0
        %5346 = vmatprep.subr.mxu0 0.0
        %5347 = vmatpush1.xpose.msra.mxu0 %v5344
        %5348 = vmatprep.subr.mxu0 0.0
        %5349 = vmatpush1.xpose.msra.mxu0 0.0
        %5350 = vmatprep.subr.mxu0 0.0
        %5351 = vmatpush1.xpose.msra.mxu0 0.0
        %5352 = vmatprep.subr.mxu0 0.0
        %5353 = vmatpush1.xpose.msra.mxu0 0.0
        %5354 = vmatprep.subr.mxu0 0.0
        %5355 = vmatpush1.xpose.msra.mxu0 0.0
        %5356 = vmatprep.subr.mxu0 0.0
        %5357 = vmatpush1.xpose.msra.mxu0 0.0
        %5358 = vmatprep.subr.mxu0 0.0
        %5359 = vmatpush1.xpose.msra.mxu0 0.0
        %5360 = vmatprep.subr.mxu0 0.0
        %5361 = vmatpush1.xpose.msra.mxu0 0.0
        %5362 = vmatprep.subr.mxu0 0.0
        %5363 = vmatpush1.xpose.msra.mxu0 0.0
        %5364 = vmatprep.subr.mxu0 0.0
        %5365 = vmatpush1.xpose.msra.mxu0 0.0
        %5366 = vmatprep.subr.mxu0 0.0
        %5367 = vmatpush1.xpose.msra.mxu0 0.0
        %5368 = vmatprep.subr.mxu0 0.0
        %5369 = vmatpush1.xpose.msra.mxu0 0.0
        %5370 = vmatprep.subr.mxu0 0.0
        %5371 = vmatpush1.xpose.msra.mxu0 0.0
        %5372 = vmatprep.subr.mxu0 0.0
        %5373 = vmatpush1.xpose.msra.mxu0 0.0
        %5374 = vmatprep.subr.mxu0 0.0
        %5375 = vmatpush1.xpose.msra.mxu0 0.0
        %5376 = vmatprep.subr.mxu0 0.0
        %5377 = vmatpush1.xpose.msra.mxu0 0.0
        %5378 = vmatprep.subr.mxu0 0.0
        %5379 = vmatpush1.xpose.msra.mxu0 0.0
        %5380 = vmatprep.subr.mxu0 0.0
        %5381 = vmatpush1.xpose.msra.mxu0 0.0
        %5382 = vmatprep.subr.mxu0 0.0
        %5383 = vmatpush1.xpose.msra.mxu0 0.0
        %5384 = vmatprep.subr.mxu0 0.0
        %5385 = vmatpush1.xpose.msra.mxu0 0.0
        %5386 = vmatprep.subr.mxu0 0.0
        %5387 = vmatpush1.xpose.msra.mxu0 0.0
        %5388 = vmatprep.subr.mxu0 0.0
        %5389 = vmatpush1.xpose.msra.mxu0 0.0
        %5390 = vmatprep.subr.mxu0 0.0
        %5391 = vmatpush1.xpose.msra.mxu0 0.0
        %5392 = vmatprep.subr.mxu0 0.0
        %5393 = vmatpush1.xpose.msra.mxu0 0.0
        %5394 = vmatprep.subr.mxu0 0.0
        %5395 = vmatpush1.xpose.msra.mxu0 0.0
        %5396 = vmatprep.subr.mxu0 0.0
        %5397 = vmatpush1.xpose.msra.mxu0 0.0
        %5398 = vmatprep.subr.mxu0 0.0
        %5399 = vmatpush1.xpose.msra.mxu0 0.0
        %5400 = vmatprep.subr.mxu0 0.0
        %5401 = vmatpush1.xpose.msra.mxu0 0.0
        %5402 = vmatprep.subr.mxu0 0.0
        %5403 = vmatpush1.xpose.msra.mxu0 0.0
        %5404 = vmatprep.subr.mxu0 0.0
        %5405 = vmatpush1.xpose.msra.mxu0 0.0
        %5406 = vmatprep.subr.mxu0 0.0
        %5407 = vmatpush1.xpose.msra.mxu0 0.0
        %5408 = vmatprep.subr.mxu0 0.0
        %5409 = vmatpush1.xpose.msra.mxu0 0.0
        %5410 = vmatprep.mubr.f32.mxu0 0.0
        %5411 = vmatmul.mubr.f32.gmra.mrb[0].mxu0 %v5320
        %v5412 = vpop.f32.mrb[0].mxu0
        %v5413 = vadd.f32 0.0, %v5412
        %v5414 = vpop.f32.mrb[0].mxu0
        %5415 = vmatprep.mubr.f32.mxu0 0.0
        %5416 = vmatmul.mubr.f32.gmra.mrb[0].mxu0 %v5323
        %v5417 = vpop.f32.mrb[0].mxu0
        %v5418 = vadd.f32 0.0, %v5417
        %v5419 = vpop.f32.mrb[0].mxu0
        %5420 = vmatprep.mubr.f32.mxu0 0.0
        %5421 = vmatmul.mubr.f32.gmra.mrb[0].mxu0 %v5326
        %v5422 = vpop.f32.mrb[0].mxu0
        %v5423 = vadd.f32 0.0, %v5422
        %v5424 = vpop.f32.mrb[0].mxu0
        %5425 = vmatprep.mubr.f32.mxu0 0.0
        %5426 = vmatmul.mubr.f32.gmra.mrb[0].mxu0 %v5329
        %v5427 = vpop.f32.mrb[0].mxu0
        %v5428 = vadd.f32 0.0, %v5427
        %v5429 = vpop.f32.mrb[0].mxu0
        %5430 = vmatprep.mubr.f32.mxu0 0.0
        %5431 = vmatmul.mubr.f32.gmra.mrb[0].mxu0 %v5332
        %v5432 = vpop.f32.mrb[0].mxu0
        %v5433 = vadd.f32 0.0, %v5432
        %v5434 = vpop.f32.mrb[0].mxu0
        %5435 = vmatprep.mubr.f32.mxu0 0.0
        %5436 = vmatmul.mubr.f32.gmra.mrb[0].mxu0 %v5335
        %v5437 = vpop.f32.mrb[0].mxu0
        %v5438 = vadd.f32 0.0, %v5437
        %v5439 = vpop.f32.mrb[0].mxu0
        %5440 = vmatprep.mubr.f32.mxu0 0.0
        %5441 = vmatmul.mubr.f32.gmra.mrb[0].mxu0 %v5338
        %v5442 = vpop.f32.mrb[0].mxu0
        %v5443 = vadd.f32 0.0, %v5442
        %v5444 = vpop.f32.mrb[0].mxu0
        %5445 = vmatprep.mubr.f32.mxu0 0.0
        %5446 = vmatmul.mubr.f32.gmra.mrb[0].mxu0 %v5341
        %v5447 = vpop.f32.mrb[0].mxu0
        %v5448 = vadd.f32 0.0, %v5447
        %v5449 = vpop.f32.mrb[0].mxu0
        %5450 = vdwg.mxu0
        %v5451 = vsel %vm2841, %v5413, -inf
        %5452 = vmax.xlane.f32.xlu0 %v5451
        %v5453 = vpop.xlane.xlu0 %5452
        %v5454 = vsel %vm2841, %v5418, -inf
        %5455 = vmax.xlane.f32.xlu0 %v5454
        %v5456 = vpop.xlane.xlu0 %5455
        %v5457 = vsel %vm2841, %v5423, -inf
        %5458 = vmax.xlane.f32.xlu0 %v5457
        %v5459 = vpop.xlane.xlu0 %5458
        %v5460 = vsel %vm2841, %v5428, -inf
        %5461 = vmax.xlane.f32.xlu0 %v5460
        %v5462 = vpop.xlane.xlu0 %5461
        %v5463 = vsel %vm2841, %v5433, -inf
        %5464 = vmax.xlane.f32.xlu0 %v5463
        %v5465 = vpop.xlane.xlu0 %5464
        %v5466 = vsel %vm2841, %v5438, -inf
        %5467 = vmax.xlane.f32.xlu0 %v5466
        %v5468 = vpop.xlane.xlu0 %5467
        %v5469 = vsel %vm2841, %v5443, -inf
        %5470 = vmax.xlane.f32.xlu0 %v5469
        %v5471 = vpop.xlane.xlu0 %5470
        %v5472 = vsel %vm2841, %v5448, -inf
        %5473 = vmax.xlane.f32.xlu0 %v5472
        %v5474 = vpop.xlane.xlu0 %5473
        %v5475 = vsub.f32 %v5413, %v5453
        %v5476 = vsub.f32 %v5418, %v5456
        %v5477 = vsub.f32 %v5423, %v5459
        %v5478 = vsub.f32 %v5428, %v5462
        %v5479 = vsub.f32 %v5433, %v5465
        %v5480 = vsub.f32 %v5438, %v5468
        %v5481 = vsub.f32 %v5443, %v5471
        %v5482 = vsub.f32 %v5448, %v5474
        %v5483 = vmul.f32 %v5475, 1.442695
        %v5484 = vpow.pop %v5483
        %v5485 = vmul.f32 %v5476, 1.442695
        %v5486 = vpow.pop %v5485
        %v5487 = vmul.f32 %v5477, 1.442695
        %v5488 = vpow.pop %v5487
        %v5489 = vmul.f32 %v5478, 1.442695
        %v5490 = vpow.pop %v5489
        %v5491 = vmul.f32 %v5479, 1.442695
        %v5492 = vpow.pop %v5491
        %v5493 = vmul.f32 %v5480, 1.442695
        %v5494 = vpow.pop %v5493
        %v5495 = vmul.f32 %v5481, 1.442695
        %v5496 = vpow.pop %v5495
        %v5497 = vmul.f32 %v5482, 1.442695
        %v5498 = vpow.pop %v5497
        %v5499 = vsel %vm2841, %v5484, 0.0
        %5500 = vadd.xlane.f32.xlu0 %v5499
        %v5501 = vpop.xlane.xlu0 %5500
        %v5502 = vsel %vm2841, %v5486, 0.0
        %5503 = vadd.xlane.f32.xlu0 %v5502
        %v5504 = vpop.xlane.xlu0 %5503
        %v5505 = vsel %vm2841, %v5488, 0.0
        %5506 = vadd.xlane.f32.xlu0 %v5505
        %v5507 = vpop.xlane.xlu0 %5506
        %v5508 = vsel %vm2841, %v5490, 0.0
        %5509 = vadd.xlane.f32.xlu0 %v5508
        %v5510 = vpop.xlane.xlu0 %5509
        %v5511 = vsel %vm2841, %v5492, 0.0
        %5512 = vadd.xlane.f32.xlu0 %v5511
        %v5513 = vpop.xlane.xlu0 %5512
        %v5514 = vsel %vm2841, %v5494, 0.0
        %5515 = vadd.xlane.f32.xlu0 %v5514
        %v5516 = vpop.xlane.xlu0 %5515
        %v5517 = vsel %vm2841, %v5496, 0.0
        %5518 = vadd.xlane.f32.xlu0 %v5517
        %v5519 = vpop.xlane.xlu0 %5518
        %v5520 = vsel %vm2841, %v5498, 0.0
        %5521 = vadd.xlane.f32.xlu0 %v5520
        %v5522 = vpop.xlane.xlu0 %5521
        %v5523 = vrcp.pop %v5501
        %v5524 = vmul.f32 %v5484, %v5523
        %v5525 = vrcp.pop %v5504
        %v5526 = vmul.f32 %v5486, %v5525
        %v5527 = vrcp.pop %v5507
        %v5528 = vmul.f32 %v5488, %v5527
        %v5529 = vrcp.pop %v5510
        %v5530 = vmul.f32 %v5490, %v5529
        %v5531 = vrcp.pop %v5513
        %v5532 = vmul.f32 %v5492, %v5531
        %v5533 = vrcp.pop %v5516
        %v5534 = vmul.f32 %v5494, %v5533
        %v5535 = vrcp.pop %v5519
        %v5536 = vmul.f32 %v5496, %v5535
        %v5537 = vrcp.pop %v5522
        %v5538 = vmul.f32 %v5498, %v5537
        %5539 = vrot.lane.b32.xlu0 %v5308, 64
        %v5540 = vpop.permute.xlu0 %5539
        %v5543 = vsel %vm2841, %v5524, 0
        %v5546 = vsel %vm2841, %v5526, 0
        %v5549 = vsel %vm2841, %v5528, 0
        %v5552 = vsel %vm2841, %v5530, 0
        %v5555 = vsel %vm2841, %v5532, 0
        %v5558 = vsel %vm2841, %v5534, 0
        %v5561 = vsel %vm2841, %v5536, 0
        %v5564 = vsel %vm2841, %v5538, 0
        %5566 = vmatprep.subr.mxu0 0.0
        %5567 = vmatpush1.msra.mxu0 %v5540
        %5568 = vmatprep.subr.mxu0 0.0
        %5569 = vmatpush1.msra.mxu0 0.0
        %5570 = vmatprep.subr.mxu0 0.0
        %5571 = vmatpush1.msra.mxu0 0.0
        %5572 = vmatprep.subr.mxu0 0.0
        %5573 = vmatpush1.msra.mxu0 0.0
        %5574 = vmatprep.subr.mxu0 0.0
        %5575 = vmatpush1.msra.mxu0 0.0
        %5576 = vmatprep.subr.mxu0 0.0
        %5577 = vmatpush1.msra.mxu0 0.0
        %5578 = vmatprep.subr.mxu0 0.0
        %5579 = vmatpush1.msra.mxu0 0.0
        %5580 = vmatprep.subr.mxu0 0.0
        %5581 = vmatpush1.msra.mxu0 0.0
        %5582 = vmatprep.subr.mxu0 0.0
        %5583 = vmatpush1.msra.mxu0 0.0
        %5584 = vmatprep.subr.mxu0 0.0
        %5585 = vmatpush1.msra.mxu0 0.0
        %5586 = vmatprep.subr.mxu0 0.0
        %5587 = vmatpush1.msra.mxu0 0.0
        %5588 = vmatprep.subr.mxu0 0.0
        %5589 = vmatpush1.msra.mxu0 0.0
        %5590 = vmatprep.subr.mxu0 0.0
        %5591 = vmatpush1.msra.mxu0 0.0
        %5592 = vmatprep.subr.mxu0 0.0
        %5593 = vmatpush1.msra.mxu0 0.0
        %5594 = vmatprep.subr.mxu0 0.0
        %5595 = vmatpush1.msra.mxu0 0.0
        %5596 = vmatprep.subr.mxu0 0.0
        %5597 = vmatpush1.msra.mxu0 0.0
        %5598 = vmatprep.subr.mxu0 0.0
        %5599 = vmatpush1.msra.mxu0 0.0
        %5600 = vmatprep.subr.mxu0 0.0
        %5601 = vmatpush1.msra.mxu0 0.0
        %5602 = vmatprep.subr.mxu0 0.0
        %5603 = vmatpush1.msra.mxu0 0.0
        %5604 = vmatprep.subr.mxu0 0.0
        %5605 = vmatpush1.msra.mxu0 0.0
        %5606 = vmatprep.subr.mxu0 0.0
        %5607 = vmatpush1.msra.mxu0 0.0
        %5608 = vmatprep.subr.mxu0 0.0
        %5609 = vmatpush1.msra.mxu0 0.0
        %5610 = vmatprep.subr.mxu0 0.0
        %5611 = vmatpush1.msra.mxu0 0.0
        %5612 = vmatprep.subr.mxu0 0.0
        %5613 = vmatpush1.msra.mxu0 0.0
        %5614 = vmatprep.subr.mxu0 0.0
        %5615 = vmatpush1.msra.mxu0 0.0
        %5616 = vmatprep.subr.mxu0 0.0
        %5617 = vmatpush1.msra.mxu0 0.0
        %5618 = vmatprep.subr.mxu0 0.0
        %5619 = vmatpush1.msra.mxu0 0.0
        %5620 = vmatprep.subr.mxu0 0.0
        %5621 = vmatpush1.msra.mxu0 0.0
        %5622 = vmatprep.subr.mxu0 0.0
        %5623 = vmatpush1.msra.mxu0 0.0
        %5624 = vmatprep.subr.mxu0 0.0
        %5625 = vmatpush1.msra.mxu0 0.0
        %5626 = vmatprep.subr.mxu0 0.0
        %5627 = vmatpush1.msra.mxu0 0.0
        %5628 = vmatprep.subr.mxu0 0.0
        %5629 = vmatpush1.msra.mxu0 0.0
        %5630 = vmatprep.mubr.f32.mxu0 0.0
        %5631 = vmatmul.mubr.f32.gmra.mrb[0].mxu0 %v5543
        %v5632 = vpop.f32.mrb[0].mxu0
        %v5633 = vadd.f32 0.0, %v5632
        %v5634 = vpop.f32.mrb[0].mxu0
        %5635 = vmatprep.mubr.f32.mxu0 0.0
        %5636 = vmatmul.mubr.f32.gmra.mrb[0].mxu0 %v5546
        %v5637 = vpop.f32.mrb[0].mxu0
        %v5638 = vadd.f32 0.0, %v5637
        %v5639 = vpop.f32.mrb[0].mxu0
        %5640 = vmatprep.mubr.f32.mxu0 0.0
        %5641 = vmatmul.mubr.f32.gmra.mrb[0].mxu0 %v5549
        %v5642 = vpop.f32.mrb[0].mxu0
        %v5643 = vadd.f32 0.0, %v5642
        %v5644 = vpop.f32.mrb[0].mxu0
        %5645 = vmatprep.mubr.f32.mxu0 0.0
        %5646 = vmatmul.mubr.f32.gmra.mrb[0].mxu0 %v5552
        %v5647 = vpop.f32.mrb[0].mxu0
        %v5648 = vadd.f32 0.0, %v5647
        %v5649 = vpop.f32.mrb[0].mxu0
        %5650 = vmatprep.mubr.f32.mxu0 0.0
        %5651 = vmatmul.mubr.f32.gmra.mrb[0].mxu0 %v5555
        %v5652 = vpop.f32.mrb[0].mxu0
        %v5653 = vadd.f32 0.0, %v5652
        %v5654 = vpop.f32.mrb[0].mxu0
        %5655 = vmatprep.mubr.f32.mxu0 0.0
        %5656 = vmatmul.mubr.f32.gmra.mrb[0].mxu0 %v5558
        %v5657 = vpop.f32.mrb[0].mxu0
        %v5658 = vadd.f32 0.0, %v5657
        %v5659 = vpop.f32.mrb[0].mxu0
        %5660 = vmatprep.mubr.f32.mxu0 0.0
        %5661 = vmatmul.mubr.f32.gmra.mrb[0].mxu0 %v5561
        %v5662 = vpop.f32.mrb[0].mxu0
        %v5663 = vadd.f32 0.0, %v5662
        %v5664 = vpop.f32.mrb[0].mxu0
        %5665 = vmatprep.mubr.f32.mxu0 0.0
        %5666 = vmatmul.mubr.f32.gmra.mrb[0].mxu0 %v5564
        %v5667 = vpop.f32.mrb[0].mxu0
        %v5668 = vadd.f32 0.0, %v5667
        %v5669 = vpop.f32.mrb[0].mxu0
        %5670 = vdwg.mxu0
        %v5671 = vmul.f32 %v5633, %v455
        %v5672 = vmul.f32 %v5638, %v460
        %v5673 = vadd.f32 %v5671, %v5672
        %v5674 = vmul.f32 %v5643, %v465
        %v5675 = vadd.f32 %v5673, %v5674
        %v5676 = vmul.f32 %v5648, %v470
        %v5677 = vadd.f32 %v5675, %v5676
        %v5678 = vmul.f32 %v5653, %v475
        %v5679 = vadd.f32 %v5677, %v5678
        %v5680 = vmul.f32 %v5658, %v480
        %v5681 = vadd.f32 %v5679, %v5680
        %v5682 = vmul.f32 %v5663, %v485
        %v5683 = vadd.f32 %v5681, %v5682
        %v5684 = vmul.f32 %v5668, %v490
        %v5685 = vadd.f32 %v5683, %v5684
        %v5686 = vld [vmem:[#allocation8 + $0x9a8] sm:$0xff]
        %v5687 = vld [vmem:[#allocation8 + $0x9b0] sm:$0xff]
        %v5688 = vld [vmem:[#allocation8 + $0x9b8] sm:$0xff]
        %v5689 = vld [vmem:[#allocation8 + $0x9c0] sm:$0xff]
        %v5690 = vld [vmem:[#allocation8 + $0x9c8] sm:$0xff]
        %v5691 = vld [vmem:[#allocation8 + $0x9d0] sm:$0xff]
        %v5692 = vld [vmem:[#allocation8 + $0x9d8] sm:$0xff]
        %v5693 = vld [vmem:[#allocation8 + $0x9e0] sm:$0xff]
        %v5694 = vld [vmem:[#allocation8 + $0x9e8] sm:$0x1]
        %v5695 = vlaneseq
        %v5696 = vshrl.u32 %v5695, 7
        %v5697 = vsub.s32 0, %v5696
        %v5698 = vrot.slane %v5694, %v5697
        %v5700 = vsel %vm584, %v5685, 0
        %5702 = vmatprep.subr.mxu0 0.0
        %5703 = vmatpush1.msra.mxu0 %v5686
        %5704 = vmatprep.subr.mxu0 0.0
        %5705 = vmatpush1.msra.mxu0 %v5687
        %5706 = vmatprep.subr.mxu0 0.0
        %5707 = vmatpush1.msra.mxu0 %v5688
        %5708 = vmatprep.subr.mxu0 0.0
        %5709 = vmatpush1.msra.mxu0 %v5689
        %5710 = vmatprep.subr.mxu0 0.0
        %5711 = vmatpush1.msra.mxu0 %v5690
        %5712 = vmatprep.subr.mxu0 0.0
        %5713 = vmatpush1.msra.mxu0 %v5691
        %5714 = vmatprep.subr.mxu0 0.0
        %5715 = vmatpush1.msra.mxu0 %v5692
        %5716 = vmatprep.subr.mxu0 0.0
        %5717 = vmatpush1.msra.mxu0 %v5693
        %5718 = vmatprep.subr.mxu0 0.0
        %5719 = vmatpush1.msra.mxu0 0.0
        %5720 = vmatprep.subr.mxu0 0.0
        %5721 = vmatpush1.msra.mxu0 0.0
        %5722 = vmatprep.subr.mxu0 0.0
        %5723 = vmatpush1.msra.mxu0 0.0
        %5724 = vmatprep.subr.mxu0 0.0
        %5725 = vmatpush1.msra.mxu0 0.0
        %5726 = vmatprep.subr.mxu0 0.0
        %5727 = vmatpush1.msra.mxu0 0.0
        %5728 = vmatprep.subr.mxu0 0.0
        %5729 = vmatpush1.msra.mxu0 0.0
        %5730 = vmatprep.subr.mxu0 0.0
        %5731 = vmatpush1.msra.mxu0 0.0
        %5732 = vmatprep.subr.mxu0 0.0
        %5733 = vmatpush1.msra.mxu0 0.0
        %5734 = vmatprep.subr.mxu0 0.0
        %5735 = vmatpush1.msra.mxu0 0.0
        %5736 = vmatprep.subr.mxu0 0.0
        %5737 = vmatpush1.msra.mxu0 0.0
        %5738 = vmatprep.subr.mxu0 0.0
        %5739 = vmatpush1.msra.mxu0 0.0
        %5740 = vmatprep.subr.mxu0 0.0
        %5741 = vmatpush1.msra.mxu0 0.0
        %5742 = vmatprep.subr.mxu0 0.0
        %5743 = vmatpush1.msra.mxu0 0.0
        %5744 = vmatprep.subr.mxu0 0.0
        %5745 = vmatpush1.msra.mxu0 0.0
        %5746 = vmatprep.subr.mxu0 0.0
        %5747 = vmatpush1.msra.mxu0 0.0
        %5748 = vmatprep.subr.mxu0 0.0
        %5749 = vmatpush1.msra.mxu0 0.0
        %5750 = vmatprep.subr.mxu0 0.0
        %5751 = vmatpush1.msra.mxu0 0.0
        %5752 = vmatprep.subr.mxu0 0.0
        %5753 = vmatpush1.msra.mxu0 0.0
        %5754 = vmatprep.subr.mxu0 0.0
        %5755 = vmatpush1.msra.mxu0 0.0
        %5756 = vmatprep.subr.mxu0 0.0
        %5757 = vmatpush1.msra.mxu0 0.0
        %5758 = vmatprep.subr.mxu0 0.0
        %5759 = vmatpush1.msra.mxu0 0.0
        %5760 = vmatprep.subr.mxu0 0.0
        %5761 = vmatpush1.msra.mxu0 0.0
        %5762 = vmatprep.subr.mxu0 0.0
        %5763 = vmatpush1.msra.mxu0 0.0
        %5764 = vmatprep.subr.mxu0 0.0
        %5765 = vmatpush1.msra.mxu0 0.0
        %5766 = vmatprep.mubr.f32.mxu0 0.0
        %5767 = vmatmul.mubr.f32.gmra.mrb[0].mxu0 %v5700
        %v5768 = vpop.f32.mrb[0].mxu0
        %v5769 = vadd.f32 %v5698, %v5768
        %v5770 = vpop.f32.mrb[0].mxu0
        %5771 = vdwg.mxu0
        %v5772 = vadd.f32 %v5769, %v5141
        %v5773 = vld [vmem:[#allocation8 + $0xac8] sm:$0x1]
        %v5774 = vld [vmem:[#allocation8 + $0xad0] sm:$0x1]
        %v5775 = vsel %vm584, %v5772, 0.0
        %5776 = vadd.xlane.f32.xlu0 %v5775
        %v5777 = vpop.xlane.xlu0 %5776
        %v5778 = vmul.f32 %v5777, %v591
        %v5779 = vsub.f32 %v5772, %v5778
        %v5780 = vmul.f32 %v5779, %v5779
        %v5781 = vsel %vm584, %v5780, 0.0
        %5782 = vadd.xlane.f32.xlu0 %v5781
        %v5783 = vpop.xlane.xlu0 %5782
        %v5784 = vmul.f32 %v5783, %v591
        %v5785 = vadd.f32 %v5784, 1e-05
        %v5786 = vrsqrt.pop %v5785
        %v5787 = vmul.f32 %v5779, %v5786
        %v5788 = vlaneseq
        %v5789 = vshrl.u32 %v5788, 7
        %v5790 = vsub.s32 0, %v5789
        %v5791 = vrot.slane %v5773, %v5790
        %v5792 = vmul.f32 %v5787, %v5791
        %v5793 = vlaneseq
        %v5794 = vshrl.u32 %v5793, 7
        %v5795 = vsub.s32 0, %v5794
        %v5796 = vrot.slane %v5774, %v5795
        %v5797 = vadd.f32 %v5792, %v5796
        %v5798 = vld [vmem:[#allocation8 + $0x9f0] sm:$0xff]
        %v5799 = vld [vmem:[#allocation8 + $0x9f8] sm:$0xff]
        %v5800 = vld [vmem:[#allocation8 + $0xa00] sm:$0xff]
        %v5801 = vld [vmem:[#allocation8 + $0xa08] sm:$0xff]
        %v5802 = vld [vmem:[#allocation8 + $0xa10] sm:$0xff]
        %v5803 = vld [vmem:[#allocation8 + $0xa18] sm:$0xff]
        %v5804 = vld [vmem:[#allocation8 + $0xa20] sm:$0xff]
        %v5805 = vld [vmem:[#allocation8 + $0xa28] sm:$0xff]
        %v5806 = vld [vmem:[#allocation8 + $0xa30] sm:$0x1]
        %v5807 = vlaneseq
        %v5808 = vshrl.u32 %v5807, 7
        %v5809 = vsub.s32 0, %v5808
        %v5810 = vrot.slane %v5806, %v5809
        %5811 = vmatprep.subr.mxu0 0.0
        %5812 = vmatpush1.msra.mxu0 %v5798
        %5813 = vmatprep.subr.mxu0 0.0
        %5814 = vmatpush1.msra.mxu0 %v5799
        %5815 = vmatprep.subr.mxu0 0.0
        %5816 = vmatpush1.msra.mxu0 %v5800
        %5817 = vmatprep.subr.mxu0 0.0
        %5818 = vmatpush1.msra.mxu0 %v5801
        %5819 = vmatprep.subr.mxu0 0.0
        %5820 = vmatpush1.msra.mxu0 %v5802
        %5821 = vmatprep.subr.mxu0 0.0
        %5822 = vmatpush1.msra.mxu0 %v5803
        %5823 = vmatprep.subr.mxu0 0.0
        %5824 = vmatpush1.msra.mxu0 %v5804
        %5825 = vmatprep.subr.mxu0 0.0
        %5826 = vmatpush1.msra.mxu0 %v5805
        %5827 = vmatprep.subr.mxu0 0.0
        %5828 = vmatpush1.msra.mxu0 0.0
        %5829 = vmatprep.subr.mxu0 0.0
        %5830 = vmatpush1.msra.mxu0 0.0
        %5831 = vmatprep.subr.mxu0 0.0
        %5832 = vmatpush1.msra.mxu0 0.0
        %5833 = vmatprep.subr.mxu0 0.0
        %5834 = vmatpush1.msra.mxu0 0.0
        %5835 = vmatprep.subr.mxu0 0.0
        %5836 = vmatpush1.msra.mxu0 0.0
        %5837 = vmatprep.subr.mxu0 0.0
        %5838 = vmatpush1.msra.mxu0 0.0
        %5839 = vmatprep.subr.mxu0 0.0
        %5840 = vmatpush1.msra.mxu0 0.0
        %5841 = vmatprep.subr.mxu0 0.0
        %5842 = vmatpush1.msra.mxu0 0.0
        %5843 = vmatprep.subr.mxu0 0.0
        %5844 = vmatpush1.msra.mxu0 0.0
        %5845 = vmatprep.subr.mxu0 0.0
        %5846 = vmatpush1.msra.mxu0 0.0
        %5847 = vmatprep.subr.mxu0 0.0
        %5848 = vmatpush1.msra.mxu0 0.0
        %5849 = vmatprep.subr.mxu0 0.0
        %5850 = vmatpush1.msra.mxu0 0.0
        %5851 = vmatprep.subr.mxu0 0.0
        %5852 = vmatpush1.msra.mxu0 0.0
        %5853 = vmatprep.subr.mxu0 0.0
        %5854 = vmatpush1.msra.mxu0 0.0
        %5855 = vmatprep.subr.mxu0 0.0
        %5856 = vmatpush1.msra.mxu0 0.0
        %5857 = vmatprep.subr.mxu0 0.0
        %5858 = vmatpush1.msra.mxu0 0.0
        %5859 = vmatprep.subr.mxu0 0.0
        %5860 = vmatpush1.msra.mxu0 0.0
        %5861 = vmatprep.subr.mxu0 0.0
        %5862 = vmatpush1.msra.mxu0 0.0
        %5863 = vmatprep.subr.mxu0 0.0
        %5864 = vmatpush1.msra.mxu0 0.0
        %5865 = vmatprep.subr.mxu0 0.0
        %5866 = vmatpush1.msra.mxu0 0.0
        %5867 = vmatprep.subr.mxu0 0.0
        %5868 = vmatpush1.msra.mxu0 0.0
        %5869 = vmatprep.subr.mxu0 0.0
        %5870 = vmatpush1.msra.mxu0 0.0
        %5871 = vmatprep.subr.mxu0 0.0
        %5872 = vmatpush1.msra.mxu0 0.0
        %5873 = vmatprep.subr.mxu0 0.0
        %5874 = vmatpush1.msra.mxu0 0.0
        %5875 = vmatprep.mubr.f32.mxu0 0.0
        %5876 = vmatmul.mubr.f32.gmra.mrb[0].mxu0 %v5156
        %v5877 = vpop.f32.mrb[0].mxu0
        %v5878 = vadd.f32 %v5810, %v5877
        %v5879 = vpop.f32.mrb[0].mxu0
        %5880 = vdwg.mxu0
        %v5881 = vld [vmem:[#allocation8 + $0xa38] sm:$0xff]
        %v5882 = vld [vmem:[#allocation8 + $0xa40] sm:$0xff]
        %v5883 = vld [vmem:[#allocation8 + $0xa48] sm:$0xff]
        %v5884 = vld [vmem:[#allocation8 + $0xa50] sm:$0xff]
        %v5885 = vld [vmem:[#allocation8 + $0xa58] sm:$0xff]
        %v5886 = vld [vmem:[#allocation8 + $0xa60] sm:$0xff]
        %v5887 = vld [vmem:[#allocation8 + $0xa68] sm:$0xff]
        %v5888 = vld [vmem:[#allocation8 + $0xa70] sm:$0xff]
        %v5889 = vld [vmem:[#allocation8 + $0xa78] sm:$0x1]
        %v5890 = vlaneseq
        %v5891 = vshrl.u32 %v5890, 7
        %v5892 = vsub.s32 0, %v5891
        %v5893 = vrot.slane %v5889, %v5892
        %5894 = vmatprep.subr.mxu0 0.0
        %5895 = vmatpush1.msra.mxu0 %v5881
        %5896 = vmatprep.subr.mxu0 0.0
        %5897 = vmatpush1.msra.mxu0 %v5882
        %5898 = vmatprep.subr.mxu0 0.0
        %5899 = vmatpush1.msra.mxu0 %v5883
        %5900 = vmatprep.subr.mxu0 0.0
        %5901 = vmatpush1.msra.mxu0 %v5884
        %5902 = vmatprep.subr.mxu0 0.0
        %5903 = vmatpush1.msra.mxu0 %v5885
        %5904 = vmatprep.subr.mxu0 0.0
        %5905 = vmatpush1.msra.mxu0 %v5886
        %5906 = vmatprep.subr.mxu0 0.0
        %5907 = vmatpush1.msra.mxu0 %v5887
        %5908 = vmatprep.subr.mxu0 0.0
        %5909 = vmatpush1.msra.mxu0 %v5888
        %5910 = vmatprep.subr.mxu0 0.0
        %5911 = vmatpush1.msra.mxu0 0.0
        %5912 = vmatprep.subr.mxu0 0.0
        %5913 = vmatpush1.msra.mxu0 0.0
        %5914 = vmatprep.subr.mxu0 0.0
        %5915 = vmatpush1.msra.mxu0 0.0
        %5916 = vmatprep.subr.mxu0 0.0
        %5917 = vmatpush1.msra.mxu0 0.0
        %5918 = vmatprep.subr.mxu0 0.0
        %5919 = vmatpush1.msra.mxu0 0.0
        %5920 = vmatprep.subr.mxu0 0.0
        %5921 = vmatpush1.msra.mxu0 0.0
        %5922 = vmatprep.subr.mxu0 0.0
        %5923 = vmatpush1.msra.mxu0 0.0
        %5924 = vmatprep.subr.mxu0 0.0
        %5925 = vmatpush1.msra.mxu0 0.0
        %5926 = vmatprep.subr.mxu0 0.0
        %5927 = vmatpush1.msra.mxu0 0.0
        %5928 = vmatprep.subr.mxu0 0.0
        %5929 = vmatpush1.msra.mxu0 0.0
        %5930 = vmatprep.subr.mxu0 0.0
        %5931 = vmatpush1.msra.mxu0 0.0
        %5932 = vmatprep.subr.mxu0 0.0
        %5933 = vmatpush1.msra.mxu0 0.0
        %5934 = vmatprep.subr.mxu0 0.0
        %5935 = vmatpush1.msra.mxu0 0.0
        %5936 = vmatprep.subr.mxu0 0.0
        %5937 = vmatpush1.msra.mxu0 0.0
        %5938 = vmatprep.subr.mxu0 0.0
        %5939 = vmatpush1.msra.mxu0 0.0
        %5940 = vmatprep.subr.mxu0 0.0
        %5941 = vmatpush1.msra.mxu0 0.0
        %5942 = vmatprep.subr.mxu0 0.0
        %5943 = vmatpush1.msra.mxu0 0.0
        %5944 = vmatprep.subr.mxu0 0.0
        %5945 = vmatpush1.msra.mxu0 0.0
        %5946 = vmatprep.subr.mxu0 0.0
        %5947 = vmatpush1.msra.mxu0 0.0
        %5948 = vmatprep.subr.mxu0 0.0
        %5949 = vmatpush1.msra.mxu0 0.0
        %5950 = vmatprep.subr.mxu0 0.0
        %5951 = vmatpush1.msra.mxu0 0.0
        %5952 = vmatprep.subr.mxu0 0.0
        %5953 = vmatpush1.msra.mxu0 0.0
        %5954 = vmatprep.subr.mxu0 0.0
        %5955 = vmatpush1.msra.mxu0 0.0
        %5956 = vmatprep.subr.mxu0 0.0
        %5957 = vmatpush1.msra.mxu0 0.0
        %5958 = vmatprep.mubr.f32.mxu0 0.0
        %5959 = vmatmul.mubr.f32.gmra.mrb[0].mxu0 %v3286
        %v5960 = vpop.f32.mrb[0].mxu0
        %v5961 = vadd.f32 %v5893, %v5960
        %v5962 = vpop.f32.mrb[0].mxu0
        %5963 = vmatprep.mubr.f32.mxu0 0.0
        %5964 = vmatmul.mubr.f32.gmra.mrb[0].mxu0 %v3289
        %v5965 = vpop.f32.mrb[0].mxu0
        %v5966 = vadd.f32 %v5893, %v5965
        %v5967 = vpop.f32.mrb[0].mxu0
        %5968 = vdwg.mxu0
        %v5969 = vmul.f32 %v5878, %v455
        %v5970 = vmul.f32 %v5878, %v460
        %v5971 = vmul.f32 %v5878, %v465
        %v5972 = vmul.f32 %v5878, %v470
        %v5973 = vmul.f32 %v5878, %v475
        %v5974 = vmul.f32 %v5878, %v480
        %v5975 = vmul.f32 %v5878, %v485
        %v5976 = vmul.f32 %v5878, %v490
        %v5978 = vsel %vm584, %v5969, 0
        %v5981 = vsel %vm584, %v5970, 0
        %v5984 = vsel %vm584, %v5971, 0
        %v5987 = vsel %vm584, %v5972, 0
        %v5990 = vsel %vm584, %v5973, 0
        %v5993 = vsel %vm584, %v5974, 0
        %v5996 = vsel %vm584, %v5975, 0
        %v5999 = vsel %vm584, %v5976, 0
        %v6002 = vsel %vm584, %v5961, 0
        %v6005 = vsel %vm584, %v5966, 0
        %6007 = vmatprep.subr.mxu0 0.0
        %6008 = vmatpush1.xpose.msra.mxu0 %v6002
        %6009 = vmatprep.subr.mxu0 0.0
        %6010 = vmatpush1.xpose.msra.mxu0 %v6005
        %6011 = vmatprep.subr.mxu0 0.0
        %6012 = vmatpush1.xpose.msra.mxu0 0.0
        %6013 = vmatprep.subr.mxu0 0.0
        %6014 = vmatpush1.xpose.msra.mxu0 0.0
        %6015 = vmatprep.subr.mxu0 0.0
        %6016 = vmatpush1.xpose.msra.mxu0 0.0
        %6017 = vmatprep.subr.mxu0 0.0
        %6018 = vmatpush1.xpose.msra.mxu0 0.0
        %6019 = vmatprep.subr.mxu0 0.0
        %6020 = vmatpush1.xpose.msra.mxu0 0.0
        %6021 = vmatprep.subr.mxu0 0.0
        %6022 = vmatpush1.xpose.msra.mxu0 0.0
        %6023 = vmatprep.subr.mxu0 0.0
        %6024 = vmatpush1.xpose.msra.mxu0 0.0
        %6025 = vmatprep.subr.mxu0 0.0
        %6026 = vmatpush1.xpose.msra.mxu0 0.0
        %6027 = vmatprep.subr.mxu0 0.0
        %6028 = vmatpush1.xpose.msra.mxu0 0.0
        %6029 = vmatprep.subr.mxu0 0.0
        %6030 = vmatpush1.xpose.msra.mxu0 0.0
        %6031 = vmatprep.subr.mxu0 0.0
        %6032 = vmatpush1.xpose.msra.mxu0 0.0
        %6033 = vmatprep.subr.mxu0 0.0
        %6034 = vmatpush1.xpose.msra.mxu0 0.0
        %6035 = vmatprep.subr.mxu0 0.0
        %6036 = vmatpush1.xpose.msra.mxu0 0.0
        %6037 = vmatprep.subr.mxu0 0.0
        %6038 = vmatpush1.xpose.msra.mxu0 0.0
        %6039 = vmatprep.subr.mxu0 0.0
        %6040 = vmatpush1.xpose.msra.mxu0 0.0
        %6041 = vmatprep.subr.mxu0 0.0
        %6042 = vmatpush1.xpose.msra.mxu0 0.0
        %6043 = vmatprep.subr.mxu0 0.0
        %6044 = vmatpush1.xpose.msra.mxu0 0.0
        %6045 = vmatprep.subr.mxu0 0.0
        %6046 = vmatpush1.xpose.msra.mxu0 0.0
        %6047 = vmatprep.subr.mxu0 0.0
        %6048 = vmatpush1.xpose.msra.mxu0 0.0
        %6049 = vmatprep.subr.mxu0 0.0
        %6050 = vmatpush1.xpose.msra.mxu0 0.0
        %6051 = vmatprep.subr.mxu0 0.0
        %6052 = vmatpush1.xpose.msra.mxu0 0.0
        %6053 = vmatprep.subr.mxu0 0.0
        %6054 = vmatpush1.xpose.msra.mxu0 0.0
        %6055 = vmatprep.subr.mxu0 0.0
        %6056 = vmatpush1.xpose.msra.mxu0 0.0
        %6057 = vmatprep.subr.mxu0 0.0
        %6058 = vmatpush1.xpose.msra.mxu0 0.0
        %6059 = vmatprep.subr.mxu0 0.0
        %6060 = vmatpush1.xpose.msra.mxu0 0.0
        %6061 = vmatprep.subr.mxu0 0.0
        %6062 = vmatpush1.xpose.msra.mxu0 0.0
        %6063 = vmatprep.subr.mxu0 0.0
        %6064 = vmatpush1.xpose.msra.mxu0 0.0
        %6065 = vmatprep.subr.mxu0 0.0
        %6066 = vmatpush1.xpose.msra.mxu0 0.0
        %6067 = vmatprep.subr.mxu0 0.0
        %6068 = vmatpush1.xpose.msra.mxu0 0.0
        %6069 = vmatprep.subr.mxu0 0.0
        %6070 = vmatpush1.xpose.msra.mxu0 0.0
        %6071 = vmatprep.mubr.f32.mxu0 0.0
        %6072 = vmatmul.mubr.f32.gmra.mrb[0].mxu0 %v5978
        %v6073 = vpop.f32.mrb[0].mxu0
        %v6074 = vadd.f32 %v3378, %v6073
        %v6075 = vpop.f32.mrb[0].mxu0
        %6076 = vmatprep.mubr.f32.mxu0 0.0
        %6077 = vmatmul.mubr.f32.gmra.mrb[0].mxu0 %v5981
        %v6078 = vpop.f32.mrb[0].mxu0
        %v6079 = vadd.f32 %v3378, %v6078
        %v6080 = vpop.f32.mrb[0].mxu0
        %6081 = vmatprep.mubr.f32.mxu0 0.0
        %6082 = vmatmul.mubr.f32.gmra.mrb[0].mxu0 %v5984
        %v6083 = vpop.f32.mrb[0].mxu0
        %v6084 = vadd.f32 %v3378, %v6083
        %v6085 = vpop.f32.mrb[0].mxu0
        %6086 = vmatprep.mubr.f32.mxu0 0.0
        %6087 = vmatmul.mubr.f32.gmra.mrb[0].mxu0 %v5987
        %v6088 = vpop.f32.mrb[0].mxu0
        %v6089 = vadd.f32 %v3378, %v6088
        %v6090 = vpop.f32.mrb[0].mxu0
        %6091 = vmatprep.mubr.f32.mxu0 0.0
        %6092 = vmatmul.mubr.f32.gmra.mrb[0].mxu0 %v5990
        %v6093 = vpop.f32.mrb[0].mxu0
        %v6094 = vadd.f32 %v3378, %v6093
        %v6095 = vpop.f32.mrb[0].mxu0
        %6096 = vmatprep.mubr.f32.mxu0 0.0
        %6097 = vmatmul.mubr.f32.gmra.mrb[0].mxu0 %v5993
        %v6098 = vpop.f32.mrb[0].mxu0
        %v6099 = vadd.f32 %v3378, %v6098
        %v6100 = vpop.f32.mrb[0].mxu0
        %6101 = vmatprep.mubr.f32.mxu0 0.0
        %6102 = vmatmul.mubr.f32.gmra.mrb[0].mxu0 %v5996
        %v6103 = vpop.f32.mrb[0].mxu0
        %v6104 = vadd.f32 %v3378, %v6103
        %v6105 = vpop.f32.mrb[0].mxu0
        %6106 = vmatprep.mubr.f32.mxu0 0.0
        %6107 = vmatmul.mubr.f32.gmra.mrb[0].mxu0 %v5999
        %v6108 = vpop.f32.mrb[0].mxu0
        %v6109 = vadd.f32 %v3378, %v6108
        %v6110 = vpop.f32.mrb[0].mxu0
        %6111 = vdwg.mxu0
        %v6112 = vsel %vm3515, %v6074, -inf
        %6113 = vmax.xlane.f32.xlu0 %v6112
        %v6114 = vpop.xlane.xlu0 %6113
        %v6115 = vsel %vm3515, %v6079, -inf
        %6116 = vmax.xlane.f32.xlu0 %v6115
        %v6117 = vpop.xlane.xlu0 %6116
        %v6118 = vsel %vm3515, %v6084, -inf
        %6119 = vmax.xlane.f32.xlu0 %v6118
        %v6120 = vpop.xlane.xlu0 %6119
        %v6121 = vsel %vm3515, %v6089, -inf
        %6122 = vmax.xlane.f32.xlu0 %v6121
        %v6123 = vpop.xlane.xlu0 %6122
        %v6124 = vsel %vm3515, %v6094, -inf
        %6125 = vmax.xlane.f32.xlu0 %v6124
        %v6126 = vpop.xlane.xlu0 %6125
        %v6127 = vsel %vm3515, %v6099, -inf
        %6128 = vmax.xlane.f32.xlu0 %v6127
        %v6129 = vpop.xlane.xlu0 %6128
        %v6130 = vsel %vm3515, %v6104, -inf
        %6131 = vmax.xlane.f32.xlu0 %v6130
        %v6132 = vpop.xlane.xlu0 %6131
        %v6133 = vsel %vm3515, %v6109, -inf
        %6134 = vmax.xlane.f32.xlu0 %v6133
        %v6135 = vpop.xlane.xlu0 %6134
        %v6136 = vsub.f32 %v6074, %v6114
        %v6137 = vsub.f32 %v6079, %v6117
        %v6138 = vsub.f32 %v6084, %v6120
        %v6139 = vsub.f32 %v6089, %v6123
        %v6140 = vsub.f32 %v6094, %v6126
        %v6141 = vsub.f32 %v6099, %v6129
        %v6142 = vsub.f32 %v6104, %v6132
        %v6143 = vsub.f32 %v6109, %v6135
        %v6144 = vmul.f32 %v6136, 1.442695
        %v6145 = vpow.pop %v6144
        %v6146 = vmul.f32 %v6137, 1.442695
        %v6147 = vpow.pop %v6146
        %v6148 = vmul.f32 %v6138, 1.442695
        %v6149 = vpow.pop %v6148
        %v6150 = vmul.f32 %v6139, 1.442695
        %v6151 = vpow.pop %v6150
        %v6152 = vmul.f32 %v6140, 1.442695
        %v6153 = vpow.pop %v6152
        %v6154 = vmul.f32 %v6141, 1.442695
        %v6155 = vpow.pop %v6154
        %v6156 = vmul.f32 %v6142, 1.442695
        %v6157 = vpow.pop %v6156
        %v6158 = vmul.f32 %v6143, 1.442695
        %v6159 = vpow.pop %v6158
        %v6160 = vsel %vm3515, %v6145, 0.0
        %6161 = vadd.xlane.f32.xlu0 %v6160
        %v6162 = vpop.xlane.xlu0 %6161
        %v6163 = vsel %vm3515, %v6147, 0.0
        %6164 = vadd.xlane.f32.xlu0 %v6163
        %v6165 = vpop.xlane.xlu0 %6164
        %v6166 = vsel %vm3515, %v6149, 0.0
        %6167 = vadd.xlane.f32.xlu0 %v6166
        %v6168 = vpop.xlane.xlu0 %6167
        %v6169 = vsel %vm3515, %v6151, 0.0
        %6170 = vadd.xlane.f32.xlu0 %v6169
        %v6171 = vpop.xlane.xlu0 %6170
        %v6172 = vsel %vm3515, %v6153, 0.0
        %6173 = vadd.xlane.f32.xlu0 %v6172
        %v6174 = vpop.xlane.xlu0 %6173
        %v6175 = vsel %vm3515, %v6155, 0.0
        %6176 = vadd.xlane.f32.xlu0 %v6175
        %v6177 = vpop.xlane.xlu0 %6176
        %v6178 = vsel %vm3515, %v6157, 0.0
        %6179 = vadd.xlane.f32.xlu0 %v6178
        %v6180 = vpop.xlane.xlu0 %6179
        %v6181 = vsel %vm3515, %v6159, 0.0
        %6182 = vadd.xlane.f32.xlu0 %v6181
        %v6183 = vpop.xlane.xlu0 %6182
        %v6184 = vrcp.pop %v6162
        %v6185 = vmul.f32 %v6145, %v6184
        %v6186 = vrcp.pop %v6165
        %v6187 = vmul.f32 %v6147, %v6186
        %v6188 = vrcp.pop %v6168
        %v6189 = vmul.f32 %v6149, %v6188
        %v6190 = vrcp.pop %v6171
        %v6191 = vmul.f32 %v6151, %v6190
        %v6192 = vrcp.pop %v6174
        %v6193 = vmul.f32 %v6153, %v6192
        %v6194 = vrcp.pop %v6177
        %v6195 = vmul.f32 %v6155, %v6194
        %v6196 = vrcp.pop %v6180
        %v6197 = vmul.f32 %v6157, %v6196
        %v6198 = vrcp.pop %v6183
        %v6199 = vmul.f32 %v6159, %v6198
        %6200 = vrot.lane.b32.xlu0 %v5961, 64
        %v6201 = vpop.permute.xlu0 %6200
        %6202 = vrot.lane.b32.xlu0 %v5966, 64
        %v6203 = vpop.permute.xlu0 %6202
        %v6206 = vsel %vm3515, %v6185, 0
        %v6209 = vsel %vm3515, %v6187, 0
        %v6212 = vsel %vm3515, %v6189, 0
        %v6215 = vsel %vm3515, %v6191, 0
        %v6218 = vsel %vm3515, %v6193, 0
        %v6221 = vsel %vm3515, %v6195, 0
        %v6224 = vsel %vm3515, %v6197, 0
        %v6227 = vsel %vm3515, %v6199, 0
        %v6229 = vsel %vm3633, %v6203, 0
        %6231 = vmatprep.subr.mxu0 0.0
        %6232 = vmatpush1.msra.mxu0 %v6201
        %6233 = vmatprep.subr.mxu0 0.0
        %6234 = vmatpush1.msra.mxu0 %v6229
        %6235 = vmatprep.subr.mxu0 0.0
        %6236 = vmatpush1.msra.mxu0 0.0
        %6237 = vmatprep.subr.mxu0 0.0
        %6238 = vmatpush1.msra.mxu0 0.0
        %6239 = vmatprep.subr.mxu0 0.0
        %6240 = vmatpush1.msra.mxu0 0.0
        %6241 = vmatprep.subr.mxu0 0.0
        %6242 = vmatpush1.msra.mxu0 0.0
        %6243 = vmatprep.subr.mxu0 0.0
        %6244 = vmatpush1.msra.mxu0 0.0
        %6245 = vmatprep.subr.mxu0 0.0
        %6246 = vmatpush1.msra.mxu0 0.0
        %6247 = vmatprep.subr.mxu0 0.0
        %6248 = vmatpush1.msra.mxu0 0.0
        %6249 = vmatprep.subr.mxu0 0.0
        %6250 = vmatpush1.msra.mxu0 0.0
        %6251 = vmatprep.subr.mxu0 0.0
        %6252 = vmatpush1.msra.mxu0 0.0
        %6253 = vmatprep.subr.mxu0 0.0
        %6254 = vmatpush1.msra.mxu0 0.0
        %6255 = vmatprep.subr.mxu0 0.0
        %6256 = vmatpush1.msra.mxu0 0.0
        %6257 = vmatprep.subr.mxu0 0.0
        %6258 = vmatpush1.msra.mxu0 0.0
        %6259 = vmatprep.subr.mxu0 0.0
        %6260 = vmatpush1.msra.mxu0 0.0
        %6261 = vmatprep.subr.mxu0 0.0
        %6262 = vmatpush1.msra.mxu0 0.0
        %6263 = vmatprep.subr.mxu0 0.0
        %6264 = vmatpush1.msra.mxu0 0.0
        %6265 = vmatprep.subr.mxu0 0.0
        %6266 = vmatpush1.msra.mxu0 0.0
        %6267 = vmatprep.subr.mxu0 0.0
        %6268 = vmatpush1.msra.mxu0 0.0
        %6269 = vmatprep.subr.mxu0 0.0
        %6270 = vmatpush1.msra.mxu0 0.0
        %6271 = vmatprep.subr.mxu0 0.0
        %6272 = vmatpush1.msra.mxu0 0.0
        %6273 = vmatprep.subr.mxu0 0.0
        %6274 = vmatpush1.msra.mxu0 0.0
        %6275 = vmatprep.subr.mxu0 0.0
        %6276 = vmatpush1.msra.mxu0 0.0
        %6277 = vmatprep.subr.mxu0 0.0
        %6278 = vmatpush1.msra.mxu0 0.0
        %6279 = vmatprep.subr.mxu0 0.0
        %6280 = vmatpush1.msra.mxu0 0.0
        %6281 = vmatprep.subr.mxu0 0.0
        %6282 = vmatpush1.msra.mxu0 0.0
        %6283 = vmatprep.subr.mxu0 0.0
        %6284 = vmatpush1.msra.mxu0 0.0
        %6285 = vmatprep.subr.mxu0 0.0
        %6286 = vmatpush1.msra.mxu0 0.0
        %6287 = vmatprep.subr.mxu0 0.0
        %6288 = vmatpush1.msra.mxu0 0.0
        %6289 = vmatprep.subr.mxu0 0.0
        %6290 = vmatpush1.msra.mxu0 0.0
        %6291 = vmatprep.subr.mxu0 0.0
        %6292 = vmatpush1.msra.mxu0 0.0
        %6293 = vmatprep.subr.mxu0 0.0
        %6294 = vmatpush1.msra.mxu0 0.0
        %6295 = vmatprep.mubr.f32.mxu0 0.0
        %6296 = vmatmul.mubr.f32.gmra.mrb[0].mxu0 %v6206
        %v6297 = vpop.f32.mrb[0].mxu0
        %v6298 = vadd.f32 0.0, %v6297
        %v6299 = vpop.f32.mrb[0].mxu0
        %6300 = vmatprep.mubr.f32.mxu0 0.0
        %6301 = vmatmul.mubr.f32.gmra.mrb[0].mxu0 %v6209
        %v6302 = vpop.f32.mrb[0].mxu0
        %v6303 = vadd.f32 0.0, %v6302
        %v6304 = vpop.f32.mrb[0].mxu0
        %6305 = vmatprep.mubr.f32.mxu0 0.0
        %6306 = vmatmul.mubr.f32.gmra.mrb[0].mxu0 %v6212
        %v6307 = vpop.f32.mrb[0].mxu0
        %v6308 = vadd.f32 0.0, %v6307
        %v6309 = vpop.f32.mrb[0].mxu0
        %6310 = vmatprep.mubr.f32.mxu0 0.0
        %6311 = vmatmul.mubr.f32.gmra.mrb[0].mxu0 %v6215
        %v6312 = vpop.f32.mrb[0].mxu0
        %v6313 = vadd.f32 0.0, %v6312
        %v6314 = vpop.f32.mrb[0].mxu0
        %6315 = vmatprep.mubr.f32.mxu0 0.0
        %6316 = vmatmul.mubr.f32.gmra.mrb[0].mxu0 %v6218
        %v6317 = vpop.f32.mrb[0].mxu0
        %v6318 = vadd.f32 0.0, %v6317
        %v6319 = vpop.f32.mrb[0].mxu0
        %6320 = vmatprep.mubr.f32.mxu0 0.0
        %6321 = vmatmul.mubr.f32.gmra.mrb[0].mxu0 %v6221
        %v6322 = vpop.f32.mrb[0].mxu0
        %v6323 = vadd.f32 0.0, %v6322
        %v6324 = vpop.f32.mrb[0].mxu0
        %6325 = vmatprep.mubr.f32.mxu0 0.0
        %6326 = vmatmul.mubr.f32.gmra.mrb[0].mxu0 %v6224
        %v6327 = vpop.f32.mrb[0].mxu0
        %v6328 = vadd.f32 0.0, %v6327
        %v6329 = vpop.f32.mrb[0].mxu0
        %6330 = vmatprep.mubr.f32.mxu0 0.0
        %6331 = vmatmul.mubr.f32.gmra.mrb[0].mxu0 %v6227
        %v6332 = vpop.f32.mrb[0].mxu0
        %v6333 = vadd.f32 0.0, %v6332
        %v6334 = vpop.f32.mrb[0].mxu0
        %6335 = vdwg.mxu0
        %v6336 = vmul.f32 %v6298, %v455
        %v6337 = vmul.f32 %v6303, %v460
        %v6338 = vadd.f32 %v6336, %v6337
        %v6339 = vmul.f32 %v6308, %v465
        %v6340 = vadd.f32 %v6338, %v6339
        %v6341 = vmul.f32 %v6313, %v470
        %v6342 = vadd.f32 %v6340, %v6341
        %v6343 = vmul.f32 %v6318, %v475
        %v6344 = vadd.f32 %v6342, %v6343
        %v6345 = vmul.f32 %v6323, %v480
        %v6346 = vadd.f32 %v6344, %v6345
        %v6347 = vmul.f32 %v6328, %v485
        %v6348 = vadd.f32 %v6346, %v6347
        %v6349 = vmul.f32 %v6333, %v490
        %v6350 = vadd.f32 %v6348, %v6349
        %v6351 = vld [vmem:[#allocation8 + $0xa80] sm:$0xff]
        %v6352 = vld [vmem:[#allocation8 + $0xa88] sm:$0xff]
        %v6353 = vld [vmem:[#allocation8 + $0xa90] sm:$0xff]
        %v6354 = vld [vmem:[#allocation8 + $0xa98] sm:$0xff]
        %v6355 = vld [vmem:[#allocation8 + $0xaa0] sm:$0xff]
        %v6356 = vld [vmem:[#allocation8 + $0xaa8] sm:$0xff]
        %v6357 = vld [vmem:[#allocation8 + $0xab0] sm:$0xff]
        %v6358 = vld [vmem:[#allocation8 + $0xab8] sm:$0xff]
        %v6359 = vld [vmem:[#allocation8 + $0xac0] sm:$0x1]
        %v6360 = vlaneseq
        %v6361 = vshrl.u32 %v6360, 7
        %v6362 = vsub.s32 0, %v6361
        %v6363 = vrot.slane %v6359, %v6362
        %v6365 = vsel %vm584, %v6350, 0
        %6367 = vmatprep.subr.mxu0 0.0
        %6368 = vmatpush1.msra.mxu0 %v6351
        %6369 = vmatprep.subr.mxu0 0.0
        %6370 = vmatpush1.msra.mxu0 %v6352
        %6371 = vmatprep.subr.mxu0 0.0
        %6372 = vmatpush1.msra.mxu0 %v6353
        %6373 = vmatprep.subr.mxu0 0.0
        %6374 = vmatpush1.msra.mxu0 %v6354
        %6375 = vmatprep.subr.mxu0 0.0
        %6376 = vmatpush1.msra.mxu0 %v6355
        %6377 = vmatprep.subr.mxu0 0.0
        %6378 = vmatpush1.msra.mxu0 %v6356
        %6379 = vmatprep.subr.mxu0 0.0
        %6380 = vmatpush1.msra.mxu0 %v6357
        %6381 = vmatprep.subr.mxu0 0.0
        %6382 = vmatpush1.msra.mxu0 %v6358
        %6383 = vmatprep.subr.mxu0 0.0
        %6384 = vmatpush1.msra.mxu0 0.0
        %6385 = vmatprep.subr.mxu0 0.0
        %6386 = vmatpush1.msra.mxu0 0.0
        %6387 = vmatprep.subr.mxu0 0.0
        %6388 = vmatpush1.msra.mxu0 0.0
        %6389 = vmatprep.subr.mxu0 0.0
        %6390 = vmatpush1.msra.mxu0 0.0
        %6391 = vmatprep.subr.mxu0 0.0
        %6392 = vmatpush1.msra.mxu0 0.0
        %6393 = vmatprep.subr.mxu0 0.0
        %6394 = vmatpush1.msra.mxu0 0.0
        %6395 = vmatprep.subr.mxu0 0.0
        %6396 = vmatpush1.msra.mxu0 0.0
        %6397 = vmatprep.subr.mxu0 0.0
        %6398 = vmatpush1.msra.mxu0 0.0
        %6399 = vmatprep.subr.mxu0 0.0
        %6400 = vmatpush1.msra.mxu0 0.0
        %6401 = vmatprep.subr.mxu0 0.0
        %6402 = vmatpush1.msra.mxu0 0.0
        %6403 = vmatprep.subr.mxu0 0.0
        %6404 = vmatpush1.msra.mxu0 0.0
        %6405 = vmatprep.subr.mxu0 0.0
        %6406 = vmatpush1.msra.mxu0 0.0
        %6407 = vmatprep.subr.mxu0 0.0
        %6408 = vmatpush1.msra.mxu0 0.0
        %6409 = vmatprep.subr.mxu0 0.0
        %6410 = vmatpush1.msra.mxu0 0.0
        %6411 = vmatprep.subr.mxu0 0.0
        %6412 = vmatpush1.msra.mxu0 0.0
        %6413 = vmatprep.subr.mxu0 0.0
        %6414 = vmatpush1.msra.mxu0 0.0
        %6415 = vmatprep.subr.mxu0 0.0
        %6416 = vmatpush1.msra.mxu0 0.0
        %6417 = vmatprep.subr.mxu0 0.0
        %6418 = vmatpush1.msra.mxu0 0.0
        %6419 = vmatprep.subr.mxu0 0.0
        %6420 = vmatpush1.msra.mxu0 0.0
        %6421 = vmatprep.subr.mxu0 0.0
        %6422 = vmatpush1.msra.mxu0 0.0
        %6423 = vmatprep.subr.mxu0 0.0
        %6424 = vmatpush1.msra.mxu0 0.0
        %6425 = vmatprep.subr.mxu0 0.0
        %6426 = vmatpush1.msra.mxu0 0.0
        %6427 = vmatprep.subr.mxu0 0.0
        %6428 = vmatpush1.msra.mxu0 0.0
        %6429 = vmatprep.subr.mxu0 0.0
        %6430 = vmatpush1.msra.mxu0 0.0
        %6431 = vmatprep.mubr.f32.mxu0 0.0
        %6432 = vmatmul.mubr.f32.gmra.mrb[0].mxu0 %v6365
        %v6433 = vpop.f32.mrb[0].mxu0
        %v6434 = vadd.f32 %v6363, %v6433
        %v6435 = vpop.f32.mrb[0].mxu0
        %6436 = vdwg.mxu0
        %v6437 = vadd.f32 %v6434, %v5141
        %v6438 = vadd.f32 %v5141, %v6437
        %v6439 = vadd.f32 %v6438, %v5797
        %v6440 = vld [vmem:[#allocation8 + $0xad8] sm:$0xff]
        %v6441 = vld [vmem:[#allocation8 + $0xae0] sm:$0xff]
        %v6442 = vld [vmem:[#allocation8 + $0xae8] sm:$0xff]
        %v6443 = vld [vmem:[#allocation8 + $0xaf0] sm:$0xff]
        %v6444 = vld [vmem:[#allocation8 + $0xaf8] sm:$0xff]
        %v6445 = vld [vmem:[#allocation8 + $0xb00] sm:$0xff]
        %v6446 = vld [vmem:[#allocation8 + $0xb08] sm:$0xff]
        %v6447 = vld [vmem:[#allocation8 + $0xb10] sm:$0xff]
        %v6448 = vld [vmem:[#allocation8 + $0xb18] sm:$0x1]
        %v6449 = vlaneseq
        %v6450 = vshrl.u32 %v6449, 7
        %v6451 = vsub.s32 0, %v6450
        %v6452 = vrot.slane %v6448, %v6451
        %v6454 = vsel %vm584, %v6439, 0
        %6456 = vmatprep.subr.mxu0 0.0
        %6457 = vmatpush1.msra.mxu0 %v6440
        %6458 = vmatprep.subr.mxu0 0.0
        %6459 = vmatpush1.msra.mxu0 %v6441
        %6460 = vmatprep.subr.mxu0 0.0
        %6461 = vmatpush1.msra.mxu0 %v6442
        %6462 = vmatprep.subr.mxu0 0.0
        %6463 = vmatpush1.msra.mxu0 %v6443
        %6464 = vmatprep.subr.mxu0 0.0
        %6465 = vmatpush1.msra.mxu0 %v6444
        %6466 = vmatprep.subr.mxu0 0.0
        %6467 = vmatpush1.msra.mxu0 %v6445
        %6468 = vmatprep.subr.mxu0 0.0
        %6469 = vmatpush1.msra.mxu0 %v6446
        %6470 = vmatprep.subr.mxu0 0.0
        %6471 = vmatpush1.msra.mxu0 %v6447
        %6472 = vmatprep.subr.mxu0 0.0
        %6473 = vmatpush1.msra.mxu0 0.0
        %6474 = vmatprep.subr.mxu0 0.0
        %6475 = vmatpush1.msra.mxu0 0.0
        %6476 = vmatprep.subr.mxu0 0.0
        %6477 = vmatpush1.msra.mxu0 0.0
        %6478 = vmatprep.subr.mxu0 0.0
        %6479 = vmatpush1.msra.mxu0 0.0
        %6480 = vmatprep.subr.mxu0 0.0
        %6481 = vmatpush1.msra.mxu0 0.0
        %6482 = vmatprep.subr.mxu0 0.0
        %6483 = vmatpush1.msra.mxu0 0.0
        %6484 = vmatprep.subr.mxu0 0.0
        %6485 = vmatpush1.msra.mxu0 0.0
        %6486 = vmatprep.subr.mxu0 0.0
        %6487 = vmatpush1.msra.mxu0 0.0
        %6488 = vmatprep.subr.mxu0 0.0
        %6489 = vmatpush1.msra.mxu0 0.0
        %6490 = vmatprep.subr.mxu0 0.0
        %6491 = vmatpush1.msra.mxu0 0.0
        %6492 = vmatprep.subr.mxu0 0.0
        %6493 = vmatpush1.msra.mxu0 0.0
        %6494 = vmatprep.subr.mxu0 0.0
        %6495 = vmatpush1.msra.mxu0 0.0
        %6496 = vmatprep.subr.mxu0 0.0
        %6497 = vmatpush1.msra.mxu0 0.0
        %6498 = vmatprep.subr.mxu0 0.0
        %6499 = vmatpush1.msra.mxu0 0.0
        %6500 = vmatprep.subr.mxu0 0.0
        %6501 = vmatpush1.msra.mxu0 0.0
        %6502 = vmatprep.subr.mxu0 0.0
        %6503 = vmatpush1.msra.mxu0 0.0
        %6504 = vmatprep.subr.mxu0 0.0
        %6505 = vmatpush1.msra.mxu0 0.0
        %6506 = vmatprep.subr.mxu0 0.0
        %6507 = vmatpush1.msra.mxu0 0.0
        %6508 = vmatprep.subr.mxu0 0.0
        %6509 = vmatpush1.msra.mxu0 0.0
        %6510 = vmatprep.subr.mxu0 0.0
        %6511 = vmatpush1.msra.mxu0 0.0
        %6512 = vmatprep.subr.mxu0 0.0
        %6513 = vmatpush1.msra.mxu0 0.0
        %6514 = vmatprep.subr.mxu0 0.0
        %6515 = vmatpush1.msra.mxu0 0.0
        %6516 = vmatprep.subr.mxu0 0.0
        %6517 = vmatpush1.msra.mxu0 0.0
        %6518 = vmatprep.subr.mxu0 0.0
        %6519 = vmatpush1.msra.mxu0 0.0
        %6520 = vmatprep.mubr.f32.mxu0 0.0
        %6521 = vmatmul.mubr.f32.gmra.mrb[0].mxu0 %v6454
        %v6522 = vpop.f32.mrb[0].mxu0
        %v6523 = vadd.f32 %v6452, %v6522
        %v6524 = vpop.f32.mrb[0].mxu0
        %6525 = vdwg.mxu0
        %v6526 = vmax.f32 %v6523, 0.0
        %v6527 = vld [vmem:[#allocation8 + $0xb20] sm:$0xff]
        %v6528 = vld [vmem:[#allocation8 + $0xb28] sm:$0xff]
        %v6529 = vld [vmem:[#allocation8 + $0xb30] sm:$0xff]
        %v6530 = vld [vmem:[#allocation8 + $0xb38] sm:$0xff]
        %v6531 = vld [vmem:[#allocation8 + $0xb40] sm:$0xff]
        %v6532 = vld [vmem:[#allocation8 + $0xb48] sm:$0xff]
        %v6533 = vld [vmem:[#allocation8 + $0xb50] sm:$0xff]
        %v6534 = vld [vmem:[#allocation8 + $0xb58] sm:$0xff]
        %v6535 = vld [vmem:[#allocation8 + $0xb60] sm:$0xff]
        %v6536 = vld [vmem:[#allocation8 + $0xb68] sm:$0xff]
        %v6537 = vld [vmem:[#allocation8 + $0xb70] sm:$0xff]
        %v6538 = vld [vmem:[#allocation8 + $0xb78] sm:$0xff]
        %v6539 = vld [vmem:[#allocation8 + $0xb80] sm:$0xff]
        %v6540 = vld [vmem:[#allocation8 + $0xb88] sm:$0xff]
        %v6541 = vld [vmem:[#allocation8 + $0xb90] sm:$0xff]
        %v6542 = vld [vmem:[#allocation8 + $0xb98] sm:$0xff]
        %v6543 = vld [vmem:[#allocation8 + $0xba0] sm:$0x1]
        %v6544 = vlaneseq
        %v6545 = vshrl.u32 %v6544, 7
        %v6546 = vsub.s32 0, %v6545
        %v6547 = vrot.slane %v6543, %v6546
        %6548 = vmatprep.subr.mxu0 0.0
        %6549 = vmatpush1.msra.mxu0 %v6527
        %6550 = vmatprep.subr.mxu0 0.0
        %6551 = vmatpush1.msra.mxu0 %v6528
        %6552 = vmatprep.subr.mxu0 0.0
        %6553 = vmatpush1.msra.mxu0 %v6529
        %6554 = vmatprep.subr.mxu0 0.0
        %6555 = vmatpush1.msra.mxu0 %v6530
        %6556 = vmatprep.subr.mxu0 0.0
        %6557 = vmatpush1.msra.mxu0 %v6531
        %6558 = vmatprep.subr.mxu0 0.0
        %6559 = vmatpush1.msra.mxu0 %v6532
        %6560 = vmatprep.subr.mxu0 0.0
        %6561 = vmatpush1.msra.mxu0 %v6533
        %6562 = vmatprep.subr.mxu0 0.0
        %6563 = vmatpush1.msra.mxu0 %v6534
        %6564 = vmatprep.subr.mxu0 0.0
        %6565 = vmatpush1.msra.mxu0 %v6535
        %6566 = vmatprep.subr.mxu0 0.0
        %6567 = vmatpush1.msra.mxu0 %v6536
        %6568 = vmatprep.subr.mxu0 0.0
        %6569 = vmatpush1.msra.mxu0 %v6537
        %6570 = vmatprep.subr.mxu0 0.0
        %6571 = vmatpush1.msra.mxu0 %v6538
        %6572 = vmatprep.subr.mxu0 0.0
        %6573 = vmatpush1.msra.mxu0 %v6539
        %6574 = vmatprep.subr.mxu0 0.0
        %6575 = vmatpush1.msra.mxu0 %v6540
        %6576 = vmatprep.subr.mxu0 0.0
        %6577 = vmatpush1.msra.mxu0 %v6541
        %6578 = vmatprep.subr.mxu0 0.0
        %6579 = vmatpush1.msra.mxu0 %v6542
        %6580 = vmatprep.subr.mxu0 0.0
        %6581 = vmatpush1.msra.mxu0 0.0
        %6582 = vmatprep.subr.mxu0 0.0
        %6583 = vmatpush1.msra.mxu0 0.0
        %6584 = vmatprep.subr.mxu0 0.0
        %6585 = vmatpush1.msra.mxu0 0.0
        %6586 = vmatprep.subr.mxu0 0.0
        %6587 = vmatpush1.msra.mxu0 0.0
        %6588 = vmatprep.subr.mxu0 0.0
        %6589 = vmatpush1.msra.mxu0 0.0
        %6590 = vmatprep.subr.mxu0 0.0
        %6591 = vmatpush1.msra.mxu0 0.0
        %6592 = vmatprep.subr.mxu0 0.0
        %6593 = vmatpush1.msra.mxu0 0.0
        %6594 = vmatprep.subr.mxu0 0.0
        %6595 = vmatpush1.msra.mxu0 0.0
        %6596 = vmatprep.subr.mxu0 0.0
        %6597 = vmatpush1.msra.mxu0 0.0
        %6598 = vmatprep.subr.mxu0 0.0
        %6599 = vmatpush1.msra.mxu0 0.0
        %6600 = vmatprep.subr.mxu0 0.0
        %6601 = vmatpush1.msra.mxu0 0.0
        %6602 = vmatprep.subr.mxu0 0.0
        %6603 = vmatpush1.msra.mxu0 0.0
        %6604 = vmatprep.subr.mxu0 0.0
        %6605 = vmatpush1.msra.mxu0 0.0
        %6606 = vmatprep.subr.mxu0 0.0
        %6607 = vmatpush1.msra.mxu0 0.0
        %6608 = vmatprep.subr.mxu0 0.0
        %6609 = vmatpush1.msra.mxu0 0.0
        %6610 = vmatprep.subr.mxu0 0.0
        %6611 = vmatpush1.msra.mxu0 0.0
        %6612 = vmatprep.mubr.f32.mxu0 0.0
        %6613 = vmatmul.mubr.f32.gmra.mrb[0].mxu0 %v6526
        %v6614 = vpop.f32.mrb[0].mxu0
        %v6615 = vadd.f32 %v6547, %v6614
        %v6616 = vpop.f32.mrb[0].mxu0
        %6617 = vdwg.mxu0
        %v6618 = vadd.f32 %v6615, %v6439
        %v6619 = vld [vmem:[#allocation8 + $0xba8] sm:$0x1]
        %v6620 = vld [vmem:[#allocation8 + $0xbb0] sm:$0x1]
        %v6621 = vsel %vm584, %v6618, 0.0
        %6622 = vadd.xlane.f32.xlu0 %v6621
        %v6623 = vpop.xlane.xlu0 %6622
        %v6624 = vmul.f32 %v6623, %v591
        %v6625 = vsub.f32 %v6618, %v6624
        %v6626 = vmul.f32 %v6625, %v6625
        %v6627 = vsel %vm584, %v6626, 0.0
        %6628 = vadd.xlane.f32.xlu0 %v6627
        %v6629 = vpop.xlane.xlu0 %6628
        %v6630 = vmul.f32 %v6629, %v591
        %v6631 = vadd.f32 %v6630, 1e-05
        %v6632 = vrsqrt.pop %v6631
        %v6633 = vmul.f32 %v6625, %v6632
        %v6634 = vlaneseq
        %v6635 = vshrl.u32 %v6634, 7
        %v6636 = vsub.s32 0, %v6635
        %v6637 = vrot.slane %v6619, %v6636
        %v6638 = vmul.f32 %v6633, %v6637
        %v6639 = vlaneseq
        %v6640 = vshrl.u32 %v6639, 7
        %v6641 = vsub.s32 0, %v6640
        %v6642 = vrot.slane %v6620, %v6641
        %v6643 = vadd.f32 %v6638, %v6642
        %v6644 = vld [vmem:[#allocation8 + $0x398] sm:$0x1]
        %v6645 = vld [vmem:[#allocation8 + $0x3a0] sm:$0x1]
        %v6646 = vsel %vm584, %v6643, 0.0
        %6647 = vadd.xlane.f32.xlu0 %v6646
        %v6648 = vpop.xlane.xlu0 %6647
        %v6649 = vmul.f32 %v6648, %v591
        %v6650 = vsub.f32 %v6643, %v6649
        %v6651 = vmul.f32 %v6650, %v6650
        %v6652 = vsel %vm584, %v6651, 0.0
        %6653 = vadd.xlane.f32.xlu0 %v6652
        %v6654 = vpop.xlane.xlu0 %6653
        %v6655 = vmul.f32 %v6654, %v591
        %v6656 = vadd.f32 %v6655, 1e-05
        %v6657 = vrsqrt.pop %v6656
        %v6658 = vmul.f32 %v6650, %v6657
        %v6659 = vlaneseq
        %v6660 = vshrl.u32 %v6659, 7
        %v6661 = vsub.s32 0, %v6660
        %v6662 = vrot.slane %v6644, %v6661
        %v6663 = vmul.f32 %v6658, %v6662
        %v6664 = vlaneseq
        %v6665 = vshrl.u32 %v6664, 7
        %v6666 = vsub.s32 0, %v6665
        %v6667 = vrot.slane %v6645, %v6666
        %v6668 = vadd.f32 %v6663, %v6667
        %v6669 = vld [vmem:[#allocation8 + $0x3a8] sm:$0xff]
        %v6670 = vld [vmem:[#allocation8 + $0x3b0] sm:$0xff]
        %v6671 = vld [vmem:[#allocation8 + $0x3b8] sm:$0xff]
        %v6672 = vld [vmem:[#allocation8 + $0x3c0] sm:$0xff]
        %v6673 = vld [vmem:[#allocation8 + $0x3c8] sm:$0xff]
        %v6674 = vld [vmem:[#allocation8 + $0x3d0] sm:$0xff]
        %v6675 = vld [vmem:[#allocation8 + $0x3d8] sm:$0xff]
        %v6676 = vld [vmem:[#allocation8 + $0x3e0] sm:$0xff]
        %v6677 = vld [vmem:[#allocation8 + $0x3e8] sm:$0x1]
        %v6678 = vlaneseq
        %v6679 = vshrl.u32 %v6678, 7
        %v6680 = vsub.s32 0, %v6679
        %v6681 = vrot.slane %v6677, %v6680
        %v6683 = vsel %vm584, %v6668, 0
        %6685 = vmatprep.subr.mxu0 0.0
        %6686 = vmatpush1.msra.mxu0 %v6669
        %6687 = vmatprep.subr.mxu0 0.0
        %6688 = vmatpush1.msra.mxu0 %v6670
        %6689 = vmatprep.subr.mxu0 0.0
        %6690 = vmatpush1.msra.mxu0 %v6671
        %6691 = vmatprep.subr.mxu0 0.0
        %6692 = vmatpush1.msra.mxu0 %v6672
        %6693 = vmatprep.subr.mxu0 0.0
        %6694 = vmatpush1.msra.mxu0 %v6673
        %6695 = vmatprep.subr.mxu0 0.0
        %6696 = vmatpush1.msra.mxu0 %v6674
        %6697 = vmatprep.subr.mxu0 0.0
        %6698 = vmatpush1.msra.mxu0 %v6675
        %6699 = vmatprep.subr.mxu0 0.0
        %6700 = vmatpush1.msra.mxu0 %v6676
        %6701 = vmatprep.subr.mxu0 0.0
        %6702 = vmatpush1.msra.mxu0 0.0
        %6703 = vmatprep.subr.mxu0 0.0
        %6704 = vmatpush1.msra.mxu0 0.0
        %6705 = vmatprep.subr.mxu0 0.0
        %6706 = vmatpush1.msra.mxu0 0.0
        %6707 = vmatprep.subr.mxu0 0.0
        %6708 = vmatpush1.msra.mxu0 0.0
        %6709 = vmatprep.subr.mxu0 0.0
        %6710 = vmatpush1.msra.mxu0 0.0
        %6711 = vmatprep.subr.mxu0 0.0
        %6712 = vmatpush1.msra.mxu0 0.0
        %6713 = vmatprep.subr.mxu0 0.0
        %6714 = vmatpush1.msra.mxu0 0.0
        %6715 = vmatprep.subr.mxu0 0.0
        %6716 = vmatpush1.msra.mxu0 0.0
        %6717 = vmatprep.subr.mxu0 0.0
        %6718 = vmatpush1.msra.mxu0 0.0
        %6719 = vmatprep.subr.mxu0 0.0
        %6720 = vmatpush1.msra.mxu0 0.0
        %6721 = vmatprep.subr.mxu0 0.0
        %6722 = vmatpush1.msra.mxu0 0.0
        %6723 = vmatprep.subr.mxu0 0.0
        %6724 = vmatpush1.msra.mxu0 0.0
        %6725 = vmatprep.subr.mxu0 0.0
        %6726 = vmatpush1.msra.mxu0 0.0
        %6727 = vmatprep.subr.mxu0 0.0
        %6728 = vmatpush1.msra.mxu0 0.0
        %6729 = vmatprep.subr.mxu0 0.0
        %6730 = vmatpush1.msra.mxu0 0.0
        %6731 = vmatprep.subr.mxu0 0.0
        %6732 = vmatpush1.msra.mxu0 0.0
        %6733 = vmatprep.subr.mxu0 0.0
        %6734 = vmatpush1.msra.mxu0 0.0
        %6735 = vmatprep.subr.mxu0 0.0
        %6736 = vmatpush1.msra.mxu0 0.0
        %6737 = vmatprep.subr.mxu0 0.0
        %6738 = vmatpush1.msra.mxu0 0.0
        %6739 = vmatprep.subr.mxu0 0.0
        %6740 = vmatpush1.msra.mxu0 0.0
        %6741 = vmatprep.subr.mxu0 0.0
        %6742 = vmatpush1.msra.mxu0 0.0
        %6743 = vmatprep.subr.mxu0 0.0
        %6744 = vmatpush1.msra.mxu0 0.0
        %6745 = vmatprep.subr.mxu0 0.0
        %6746 = vmatpush1.msra.mxu0 0.0
        %6747 = vmatprep.subr.mxu0 0.0
        %6748 = vmatpush1.msra.mxu0 0.0
        %6749 = vmatprep.mubr.f32.mxu0 0.0
        %6750 = vmatmul.mubr.f32.gmra.mrb[0].mxu0 %v6683
        %v6751 = vpop.f32.mrb[0].mxu0
        %v6752 = vadd.f32 %v6681, %v6751
        %v6753 = vpop.f32.mrb[0].mxu0
        %6754 = vdwg.mxu0
        %v6755 = vmax.f32 %v6752, 0.0
        %v6756 = vld [vmem:[#allocation8 + $0x3f0] sm:$0xff]
        %v6757 = vld [vmem:[#allocation8 + $0x3f8] sm:$0xff]
        %v6758 = vld [vmem:[#allocation8 + $0x400] sm:$0xff]
        %v6759 = vld [vmem:[#allocation8 + $0x408] sm:$0xff]
        %v6760 = vld [vmem:[#allocation8 + $0x410] sm:$0xff]
        %v6761 = vld [vmem:[#allocation8 + $0x418] sm:$0xff]
        %v6762 = vld [vmem:[#allocation8 + $0x420] sm:$0xff]
        %v6763 = vld [vmem:[#allocation8 + $0x428] sm:$0xff]
        %v6764 = vld [vmem:[#allocation8 + $0x430] sm:$0x1]
        %v6765 = vlaneseq
        %v6766 = vshrl.u32 %v6765, 7
        %v6767 = vsub.s32 0, %v6766
        %v6768 = vrot.slane %v6764, %v6767
        %v6770 = vsel %vm584, %v6755, 0
        %6772 = vmatprep.subr.mxu0 0.0
        %6773 = vmatpush1.msra.mxu0 %v6756
        %6774 = vmatprep.subr.mxu0 0.0
        %6775 = vmatpush1.msra.mxu0 %v6757
        %6776 = vmatprep.subr.mxu0 0.0
        %6777 = vmatpush1.msra.mxu0 %v6758
        %6778 = vmatprep.subr.mxu0 0.0
        %6779 = vmatpush1.msra.mxu0 %v6759
        %6780 = vmatprep.subr.mxu0 0.0
        %6781 = vmatpush1.msra.mxu0 %v6760
        %6782 = vmatprep.subr.mxu0 0.0
        %6783 = vmatpush1.msra.mxu0 %v6761
        %6784 = vmatprep.subr.mxu0 0.0
        %6785 = vmatpush1.msra.mxu0 %v6762
        %6786 = vmatprep.subr.mxu0 0.0
        %6787 = vmatpush1.msra.mxu0 %v6763
        %6788 = vmatprep.subr.mxu0 0.0
        %6789 = vmatpush1.msra.mxu0 0.0
        %6790 = vmatprep.subr.mxu0 0.0
        %6791 = vmatpush1.msra.mxu0 0.0
        %6792 = vmatprep.subr.mxu0 0.0
        %6793 = vmatpush1.msra.mxu0 0.0
        %6794 = vmatprep.subr.mxu0 0.0
        %6795 = vmatpush1.msra.mxu0 0.0
        %6796 = vmatprep.subr.mxu0 0.0
        %6797 = vmatpush1.msra.mxu0 0.0
        %6798 = vmatprep.subr.mxu0 0.0
        %6799 = vmatpush1.msra.mxu0 0.0
        %6800 = vmatprep.subr.mxu0 0.0
        %6801 = vmatpush1.msra.mxu0 0.0
        %6802 = vmatprep.subr.mxu0 0.0
        %6803 = vmatpush1.msra.mxu0 0.0
        %6804 = vmatprep.subr.mxu0 0.0
        %6805 = vmatpush1.msra.mxu0 0.0
        %6806 = vmatprep.subr.mxu0 0.0
        %6807 = vmatpush1.msra.mxu0 0.0
        %6808 = vmatprep.subr.mxu0 0.0
        %6809 = vmatpush1.msra.mxu0 0.0
        %6810 = vmatprep.subr.mxu0 0.0
        %6811 = vmatpush1.msra.mxu0 0.0
        %6812 = vmatprep.subr.mxu0 0.0
        %6813 = vmatpush1.msra.mxu0 0.0
        %6814 = vmatprep.subr.mxu0 0.0
        %6815 = vmatpush1.msra.mxu0 0.0
        %6816 = vmatprep.subr.mxu0 0.0
        %6817 = vmatpush1.msra.mxu0 0.0
        %6818 = vmatprep.subr.mxu0 0.0
        %6819 = vmatpush1.msra.mxu0 0.0
        %6820 = vmatprep.subr.mxu0 0.0
        %6821 = vmatpush1.msra.mxu0 0.0
        %6822 = vmatprep.subr.mxu0 0.0
        %6823 = vmatpush1.msra.mxu0 0.0
        %6824 = vmatprep.subr.mxu0 0.0
        %6825 = vmatpush1.msra.mxu0 0.0
        %6826 = vmatprep.subr.mxu0 0.0
        %6827 = vmatpush1.msra.mxu0 0.0
        %6828 = vmatprep.subr.mxu0 0.0
        %6829 = vmatpush1.msra.mxu0 0.0
        %6830 = vmatprep.subr.mxu0 0.0
        %6831 = vmatpush1.msra.mxu0 0.0
        %6832 = vmatprep.subr.mxu0 0.0
        %6833 = vmatpush1.msra.mxu0 0.0
        %6834 = vmatprep.subr.mxu0 0.0
        %6835 = vmatpush1.msra.mxu0 0.0
        %6836 = vmatprep.mubr.f32.mxu0 0.0
        %6837 = vmatmul.mubr.f32.gmra.mrb[0].mxu0 %v6770
        %v6838 = vpop.f32.mrb[0].mxu0
        %v6839 = vadd.f32 %v6768, %v6838
        %v6840 = vpop.f32.mrb[0].mxu0
        %6841 = vdwg.mxu0
        %6842 = vmatprep.subr.mxu0 0.0
        %6843 = vmatpush1.xpose.msra.mxu0 %v1619
        %6844 = vmatprep.subr.mxu0 0.0
        %6845 = vmatpush1.xpose.msra.mxu0 %v1622
        %6846 = vmatprep.subr.mxu0 0.0
        %6847 = vmatpush1.xpose.msra.mxu0 0.0
        %6848 = vmatprep.subr.mxu0 0.0
        %6849 = vmatpush1.xpose.msra.mxu0 0.0
        %6850 = vmatprep.subr.mxu0 0.0
        %6851 = vmatpush1.xpose.msra.mxu0 0.0
        %6852 = vmatprep.subr.mxu0 0.0
        %6853 = vmatpush1.xpose.msra.mxu0 0.0
        %6854 = vmatprep.subr.mxu0 0.0
        %6855 = vmatpush1.xpose.msra.mxu0 0.0
        %6856 = vmatprep.subr.mxu0 0.0
        %6857 = vmatpush1.xpose.msra.mxu0 0.0
        %6858 = vmatprep.subr.mxu0 0.0
        %6859 = vmatpush1.xpose.msra.mxu0 0.0
        %6860 = vmatprep.subr.mxu0 0.0
        %6861 = vmatpush1.xpose.msra.mxu0 0.0
        %6862 = vmatprep.subr.mxu0 0.0
        %6863 = vmatpush1.xpose.msra.mxu0 0.0
        %6864 = vmatprep.subr.mxu0 0.0
        %6865 = vmatpush1.xpose.msra.mxu0 0.0
        %6866 = vmatprep.subr.mxu0 0.0
        %6867 = vmatpush1.xpose.msra.mxu0 0.0
        %6868 = vmatprep.subr.mxu0 0.0
        %6869 = vmatpush1.xpose.msra.mxu0 0.0
        %6870 = vmatprep.subr.mxu0 0.0
        %6871 = vmatpush1.xpose.msra.mxu0 0.0
        %6872 = vmatprep.subr.mxu0 0.0
        %6873 = vmatpush1.xpose.msra.mxu0 0.0
        %6874 = vmatprep.subr.mxu0 0.0
        %6875 = vmatpush1.xpose.msra.mxu0 0.0
        %6876 = vmatprep.subr.mxu0 0.0
        %6877 = vmatpush1.xpose.msra.mxu0 0.0
        %6878 = vmatprep.subr.mxu0 0.0
        %6879 = vmatpush1.xpose.msra.mxu0 0.0
        %6880 = vmatprep.subr.mxu0 0.0
        %6881 = vmatpush1.xpose.msra.mxu0 0.0
        %6882 = vmatprep.subr.mxu0 0.0
        %6883 = vmatpush1.xpose.msra.mxu0 0.0
        %6884 = vmatprep.subr.mxu0 0.0
        %6885 = vmatpush1.xpose.msra.mxu0 0.0
        %6886 = vmatprep.subr.mxu0 0.0
        %6887 = vmatpush1.xpose.msra.mxu0 0.0
        %6888 = vmatprep.subr.mxu0 0.0
        %6889 = vmatpush1.xpose.msra.mxu0 0.0
        %6890 = vmatprep.subr.mxu0 0.0
        %6891 = vmatpush1.xpose.msra.mxu0 0.0
        %6892 = vmatprep.subr.mxu0 0.0
        %6893 = vmatpush1.xpose.msra.mxu0 0.0
        %6894 = vmatprep.subr.mxu0 0.0
        %6895 = vmatpush1.xpose.msra.mxu0 0.0
        %6896 = vmatprep.subr.mxu0 0.0
        %6897 = vmatpush1.xpose.msra.mxu0 0.0
        %6898 = vmatprep.subr.mxu0 0.0
        %6899 = vmatpush1.xpose.msra.mxu0 0.0
        %6900 = vmatprep.subr.mxu0 0.0
        %6901 = vmatpush1.xpose.msra.mxu0 0.0
        %6902 = vmatprep.subr.mxu0 0.0
        %6903 = vmatpush1.xpose.msra.mxu0 0.0
        %6904 = vmatprep.subr.mxu0 0.0
        %6905 = vmatpush1.xpose.msra.mxu0 0.0
        %6906 = vmatprep.mubr.f32.mxu0 0.0
        %6907 = vmatmul.mubr.f32.gmra.mrb[0].mxu0 %v6683
        %v6908 = vpop.f32.mrb[0].mxu0
        %v6909 = vadd.f32 0.0, %v6908
        %v6910 = vpop.f32.mrb[0].mxu0
        %6911 = vdwg.mxu0
        %v6912 = vld [vmem:[#allocation8 + $0x438] sm:$0xff]
        %v6913 = vld [vmem:[#allocation8 + $0x440] sm:$0xff]
        %v6914 = vld [vmem:[#allocation8 + $0x448] sm:$0xff]
        %v6915 = vld [vmem:[#allocation8 + $0x450] sm:$0xff]
        %v6916 = vld [vmem:[#allocation8 + $0x458] sm:$0xff]
        %v6917 = vld [vmem:[#allocation8 + $0x460] sm:$0xff]
        %v6918 = vld [vmem:[#allocation8 + $0x468] sm:$0xff]
        %v6919 = vld [vmem:[#allocation8 + $0x470] sm:$0xff]
        %v6920 = vld [vmem:[#allocation8 + $0x478] sm:$0x1]
        %v6921 = vlaneseq
        %v6922 = vshrl.u32 %v6921, 7
        %v6923 = vsub.s32 0, %v6922
        %v6924 = vrot.slane %v6920, %v6923
        %v6926 = vsel %vm584, %v6643, 0
        %6928 = vmatprep.subr.mxu0 0.0
        %6929 = vmatpush1.msra.mxu0 %v6912
        %6930 = vmatprep.subr.mxu0 0.0
        %6931 = vmatpush1.msra.mxu0 %v6913
        %6932 = vmatprep.subr.mxu0 0.0
        %6933 = vmatpush1.msra.mxu0 %v6914
        %6934 = vmatprep.subr.mxu0 0.0
        %6935 = vmatpush1.msra.mxu0 %v6915
        %6936 = vmatprep.subr.mxu0 0.0
        %6937 = vmatpush1.msra.mxu0 %v6916
        %6938 = vmatprep.subr.mxu0 0.0
        %6939 = vmatpush1.msra.mxu0 %v6917
        %6940 = vmatprep.subr.mxu0 0.0
        %6941 = vmatpush1.msra.mxu0 %v6918
        %6942 = vmatprep.subr.mxu0 0.0
        %6943 = vmatpush1.msra.mxu0 %v6919
        %6944 = vmatprep.subr.mxu0 0.0
        %6945 = vmatpush1.msra.mxu0 0.0
        %6946 = vmatprep.subr.mxu0 0.0
        %6947 = vmatpush1.msra.mxu0 0.0
        %6948 = vmatprep.subr.mxu0 0.0
        %6949 = vmatpush1.msra.mxu0 0.0
        %6950 = vmatprep.subr.mxu0 0.0
        %6951 = vmatpush1.msra.mxu0 0.0
        %6952 = vmatprep.subr.mxu0 0.0
        %6953 = vmatpush1.msra.mxu0 0.0
        %6954 = vmatprep.subr.mxu0 0.0
        %6955 = vmatpush1.msra.mxu0 0.0
        %6956 = vmatprep.subr.mxu0 0.0
        %6957 = vmatpush1.msra.mxu0 0.0
        %6958 = vmatprep.subr.mxu0 0.0
        %6959 = vmatpush1.msra.mxu0 0.0
        %6960 = vmatprep.subr.mxu0 0.0
        %6961 = vmatpush1.msra.mxu0 0.0
        %6962 = vmatprep.subr.mxu0 0.0
        %6963 = vmatpush1.msra.mxu0 0.0
        %6964 = vmatprep.subr.mxu0 0.0
        %6965 = vmatpush1.msra.mxu0 0.0
        %6966 = vmatprep.subr.mxu0 0.0
        %6967 = vmatpush1.msra.mxu0 0.0
        %6968 = vmatprep.subr.mxu0 0.0
        %6969 = vmatpush1.msra.mxu0 0.0
        %6970 = vmatprep.subr.mxu0 0.0
        %6971 = vmatpush1.msra.mxu0 0.0
        %6972 = vmatprep.subr.mxu0 0.0
        %6973 = vmatpush1.msra.mxu0 0.0
        %6974 = vmatprep.subr.mxu0 0.0
        %6975 = vmatpush1.msra.mxu0 0.0
        %6976 = vmatprep.subr.mxu0 0.0
        %6977 = vmatpush1.msra.mxu0 0.0
        %6978 = vmatprep.subr.mxu0 0.0
        %6979 = vmatpush1.msra.mxu0 0.0
        %6980 = vmatprep.subr.mxu0 0.0
        %6981 = vmatpush1.msra.mxu0 0.0
        %6982 = vmatprep.subr.mxu0 0.0
        %6983 = vmatpush1.msra.mxu0 0.0
        %6984 = vmatprep.subr.mxu0 0.0
        %6985 = vmatpush1.msra.mxu0 0.0
        %6986 = vmatprep.subr.mxu0 0.0
        %6987 = vmatpush1.msra.mxu0 0.0
        %6988 = vmatprep.subr.mxu0 0.0
        %6989 = vmatpush1.msra.mxu0 0.0
        %6990 = vmatprep.subr.mxu0 0.0
        %6991 = vmatpush1.msra.mxu0 0.0
        %6992 = vmatprep.mubr.f32.mxu0 0.0
        %6993 = vmatmul.mubr.f32.gmra.mrb[0].mxu0 %v6926
        %v6994 = vpop.f32.mrb[0].mxu0
        %v6995 = vadd.f32 %v6924, %v6994
        %v6996 = vpop.f32.mrb[0].mxu0
        %6997 = vdwg.mxu0
        %v6998 = vmax.f32 %v6995, 0.0
        %v6999 = vld [vmem:[#allocation8 + $0x480] sm:$0xff]
        %v7000 = vld [vmem:[#allocation8 + $0x488] sm:$0xff]
        %v7001 = vld [vmem:[#allocation8 + $0x490] sm:$0xff]
        %v7002 = vld [vmem:[#allocation8 + $0x498] sm:$0xff]
        %v7003 = vld [vmem:[#allocation8 + $0x4a0] sm:$0xff]
        %v7004 = vld [vmem:[#allocation8 + $0x4a8] sm:$0xff]
        %v7005 = vld [vmem:[#allocation8 + $0x4b0] sm:$0xff]
        %v7006 = vld [vmem:[#allocation8 + $0x4b8] sm:$0xff]
        %v7007 = vld [vmem:[#allocation8 + $0x4c0] sm:$0x1]
        %v7008 = vlaneseq
        %v7009 = vshrl.u32 %v7008, 7
        %v7010 = vsub.s32 0, %v7009
        %v7011 = vrot.slane %v7007, %v7010
        %v7013 = vsel %vm584, %v6998, 0
        %7015 = vmatprep.subr.mxu0 0.0
        %7016 = vmatpush1.msra.mxu0 %v6999
        %7017 = vmatprep.subr.mxu0 0.0
        %7018 = vmatpush1.msra.mxu0 %v7000
        %7019 = vmatprep.subr.mxu0 0.0
        %7020 = vmatpush1.msra.mxu0 %v7001
        %7021 = vmatprep.subr.mxu0 0.0
        %7022 = vmatpush1.msra.mxu0 %v7002
        %7023 = vmatprep.subr.mxu0 0.0
        %7024 = vmatpush1.msra.mxu0 %v7003
        %7025 = vmatprep.subr.mxu0 0.0
        %7026 = vmatpush1.msra.mxu0 %v7004
        %7027 = vmatprep.subr.mxu0 0.0
        %7028 = vmatpush1.msra.mxu0 %v7005
        %7029 = vmatprep.subr.mxu0 0.0
        %7030 = vmatpush1.msra.mxu0 %v7006
        %7031 = vmatprep.subr.mxu0 0.0
        %7032 = vmatpush1.msra.mxu0 0.0
        %7033 = vmatprep.subr.mxu0 0.0
        %7034 = vmatpush1.msra.mxu0 0.0
        %7035 = vmatprep.subr.mxu0 0.0
        %7036 = vmatpush1.msra.mxu0 0.0
        %7037 = vmatprep.subr.mxu0 0.0
        %7038 = vmatpush1.msra.mxu0 0.0
        %7039 = vmatprep.subr.mxu0 0.0
        %7040 = vmatpush1.msra.mxu0 0.0
        %7041 = vmatprep.subr.mxu0 0.0
        %7042 = vmatpush1.msra.mxu0 0.0
        %7043 = vmatprep.subr.mxu0 0.0
        %7044 = vmatpush1.msra.mxu0 0.0
        %7045 = vmatprep.subr.mxu0 0.0
        %7046 = vmatpush1.msra.mxu0 0.0
        %7047 = vmatprep.subr.mxu0 0.0
        %7048 = vmatpush1.msra.mxu0 0.0
        %7049 = vmatprep.subr.mxu0 0.0
        %7050 = vmatpush1.msra.mxu0 0.0
        %7051 = vmatprep.subr.mxu0 0.0
        %7052 = vmatpush1.msra.mxu0 0.0
        %7053 = vmatprep.subr.mxu0 0.0
        %7054 = vmatpush1.msra.mxu0 0.0
        %7055 = vmatprep.subr.mxu0 0.0
        %7056 = vmatpush1.msra.mxu0 0.0
        %7057 = vmatprep.subr.mxu0 0.0
        %7058 = vmatpush1.msra.mxu0 0.0
        %7059 = vmatprep.subr.mxu0 0.0
        %7060 = vmatpush1.msra.mxu0 0.0
        %7061 = vmatprep.subr.mxu0 0.0
        %7062 = vmatpush1.msra.mxu0 0.0
        %7063 = vmatprep.subr.mxu0 0.0
        %7064 = vmatpush1.msra.mxu0 0.0
        %7065 = vmatprep.subr.mxu0 0.0
        %7066 = vmatpush1.msra.mxu0 0.0
        %7067 = vmatprep.subr.mxu0 0.0
        %7068 = vmatpush1.msra.mxu0 0.0
        %7069 = vmatprep.subr.mxu0 0.0
        %7070 = vmatpush1.msra.mxu0 0.0
        %7071 = vmatprep.subr.mxu0 0.0
        %7072 = vmatpush1.msra.mxu0 0.0
        %7073 = vmatprep.subr.mxu0 0.0
        %7074 = vmatpush1.msra.mxu0 0.0
        %7075 = vmatprep.subr.mxu0 0.0
        %7076 = vmatpush1.msra.mxu0 0.0
        %7077 = vmatprep.subr.mxu0 0.0
        %7078 = vmatpush1.msra.mxu0 0.0
        %7079 = vmatprep.mubr.f32.mxu0 0.0
        %7080 = vmatmul.mubr.f32.gmra.mrb[0].mxu0 %v7013
        %v7081 = vpop.f32.mrb[0].mxu0
        %v7082 = vadd.f32 %v7011, %v7081
        %v7083 = vpop.f32.mrb[0].mxu0
        %7084 = vdwg.mxu0
        %7086 = vrot.lane.b32.xlu0 %v6839, 16
        %v7087 = vpop.permute.xlu0 %7086
        %7090 = vrot.lane.b32.xlu0 %v7082, 17
        %v7091 = vpop.permute.xlu0 %7090
        %v7093 = vsel %vm1086, %v6909, %v7087
        %v7094 = vsel %vm1876, %v7093, %v7091
        %v7095 = vsel %vm1878, %v7094, 0.0
        %s7096 = scalar_lea.vmem %s419, 16 [#allocation10]
        %7097 = vst [vmem:[%s7096] sm:$0xff] %v7095
        %s7098 = sand.u32 %s213, 1
        %s7099 = scalar_lea.sflag [#allocation4], %s7098
        %s7100 = sand.u32 %s213, 1
        %s7101 = smul.addr %s7100, 24
        %s7102 = scalar_lea.vmem [#allocation10], %s7101
        // Predicated region
        $region65: #{tpu_custom_call.1} parent=47 // pred_check
          %p7103 = pneg %p223
        $region66: #{tpu_custom_call.1} parent=47 // pred_check_branch
          %7105 = sbr.rel (%p7103) target = $region68
        $region67: #{tpu_custom_call.1} parent=47 // pred_region
          %s7107 = ssub.s32 384, 384
          %7108 = vsyncadd %s7099, %s7107
          %s7109 = smul.addr %s28, 3
          %s7110 = smul.addr %s7109, 128
          %s7111 = scalar_lea.hbm %s7, %s7110
          %s7112 = sshll.u32 %s7102, 4
          %s7113 = int_to_ptr.vmem [resolvable:$true] %s7112
          %7118 = dma.vmem_to_hbm [thread:$0]  %s7113, 384, %s7111, %s7099, 128, 128, 8
        $region68: #{tpu_custom_call.1} parent=47 // pred_fallthru
          _
      $region48: #{tpu_custom_call.1} parent=5 // pred_fallthru
        _
      %p7119 = scmp.le.s32.totalorder 2, %s23
      // Predicated region
      $region69: #{tpu_custom_call.1} parent=5 // pred_check
        %p7120 = pneg %p7119
      $region70: #{tpu_custom_call.1} parent=5 // pred_check_branch
        %7122 = sbr.rel (%p7120) target = $region72
      $region71: #{tpu_custom_call.1} parent=5 // pred_region
        %s7123 = ssub.s32 %s23, 2
        // Predicated region
        $region73: #{tpu_custom_call.1} parent=71 // pred_check
          %p7124 = pneg %p229
        $region74: #{tpu_custom_call.1} parent=71 // pred_check_branch
          %7126 = sbr.rel (%p7124) target = $region76
        $region75: #{tpu_custom_call.1} parent=71 // pred_region
          %s7127 = sand.u32 %s214, 1
          %s7128 = scalar_lea.sflag [#allocation4], %s7127
          %s7129 = sand.u32 %s214, 1
          %s7130 = smul.addr %s7129, 24
          %s7131 = scalar_lea.vmem [#allocation10], %s7130
          %7132 = dma.done %s7128, 384
        $region76: #{tpu_custom_call.1} parent=71 // pred_fallthru
          _
      $region72: #{tpu_custom_call.1} parent=5 // pred_fallthru
        _
    $region6: #{tpu_custom_call.1} parent=1 // loop_footer
      %s27 = sadd.s32 1, %s23
    $region7: #{tpu_custom_call.1} parent=1 // loop_footer_branch
      %22 = sbr.rel target = $region3
    $region8: #{tpu_custom_call.1} parent=1 // loop_exit
      _
    %7133 = vsyncpa [#allocation3], 1
    %s7134 = scalar_lea.sflag [#allocation3], 1
    %7135 = vsyncpa %s7134, 1
    %7136 = vsyncpa [#allocation6], 1
    %s7137 = scalar_lea.sflag [#allocation6], 1
    %7138 = vsyncpa %s7137, 1
    %7139 = vsyncpa [#allocation9], 1
    %7140 = vsyncpa [#allocation4], 1
    %s7141 = scalar_lea.sflag [#allocation4], 1
    %7142 = vsyncpa %s7141, 1

</llo_original>
